<compile_context>
chip_gen: v6e
topology: v6e:2x2x1
jax: 0.10.0
libtpu: 0.0.40
codegen_flags: <defaults>
</compile_context>

<pallas_src>
import math
import functools

import jax
import jax.numpy as jnp
from jax.experimental import pallas as pl
from jax.experimental.pallas import tpu as pltpu

LN_EPS = 1e-12          # config.layer_norm_eps (q/k/v/context/output norms)
TOKEN_LN_EPS = 1e-5     # nn.LayerNorm default used inside Token_for_Attention
WINDOW = 7


# ----------------------------- kernel helpers -------------------------------

def _layernorm(x, w, b, eps):
    mu = jnp.mean(x, axis=-1, keepdims=True)
    var = jnp.mean((x - mu) ** 2, axis=-1, keepdims=True)
    return (x - mu) * jax.lax.rsqrt(var + eps) * w + b


def _rprelu(x, move1, a, move2):
    z = x - move1
    return jnp.where(z >= 0.0, z, a * z) + move2


# ----------------------------- Pallas kernels -------------------------------
#
# attention pack row layout (28, C), all f32:
#   0-1   : token_FA LayerNorm (w, b)
#   2-8   : q branch  (eff_bias, norm_w, norm_b, rp_move1, rp_a, rp_move2, move2)
#   9-15  : k branch  (same layout)
#   16-22 : v branch  (same layout)
#   23-24 : norm_context (w, b)
#   25-27 : rprelu_context (move1, a, move2)

def _attention_kernel(tok_ref, wqkv_ref, p_ref, out_ref, ctx_sc,
                      *, num_heads, head_dim):
    _, nw, N, C = tok_ref.shape
    tok = tok_ref[0]                          # (nw, N, C) f32
    p = p_ref[...]                            # (28, C)    f32
    wqkv = wqkv_ref[...]                      # (C, 3C)    bf16

    # token_FA LayerNorm (applied once to the concatenated window+merge tokens)
    t_ln = _layernorm(tok, p[0], p[1], TOKEN_LN_EPS)          # (nw, N, C)

    # Fused Q|K|V projection, batched over windows (one MXU pass, 3C lanes).
    wqkv_b = jnp.broadcast_to(wqkv[None], (nw,) + wqkv.shape)
    qkv = jnp.einsum("wnc,wcd->wnd",
                     t_ln.astype(jnp.bfloat16), wqkv_b,
                     preferred_element_type=jnp.float32)       # (nw, N, 3C)

    scale = 1.0 / math.sqrt(head_dim)
    mixed = []
    moved16 = []
    for i in range(3):                        # q, k, v branches
        base = 2 + 7 * i
        y = qkv[:, :, i * C:(i + 1) * C] + p[base]             # + eff_bias
        y = _layernorm(y, p[base + 1], p[base + 2], LN_EPS) + t_ln
        m = _rprelu(y, p[base + 3], p[base + 4], p[base + 5])
        mixed.append(m)
        moved = m + p[base + 6]                                # + move2
        if i == 0:
            # Fold the 1/sqrt(head_dim) softmax scale into q (cheaper than
            # scaling the (nw, heads, N, N) score tensor afterwards).
            moved = moved * scale
        moved16.append(moved.astype(jnp.bfloat16))
    mq, mk, mv = mixed
    q16, k16, v16 = moved16

    # TODO(synk): BinaryQuantizer / GSB attention-prob quantizers are skipped
    # because config.input_bits != 1 in this synthetic setup.

    for h in range(num_heads):                # unrolled; batched over windows
        sl = slice(h * head_dim, (h + 1) * head_dim)
        s = jnp.einsum("wqd,wkd->wqk", q16[:, :, sl], k16[:, :, sl],
                       preferred_element_type=jnp.float32)     # pre-scaled q
        s = s - jnp.max(s, axis=-1, keepdims=True)
        e = jnp.exp(s)
        probs = e * pl.reciprocal(jnp.sum(e, axis=-1, keepdims=True),
                                  approx=True)
        pv = jnp.einsum("wqk,wkd->wqd",
                        probs.astype(jnp.bfloat16), v16[:, :, sl],
                        preferred_element_type=jnp.float32)    # (nw, N, hd)
        ctx_sc[:, :, sl] = pv                 # write head slice directly

    ctx = ctx_sc[...]                                          # (nw, N, C)
    ctx = _layernorm(ctx, p[23], p[24], LN_EPS) + mq + mk + mv
    ctx = _rprelu(ctx, p[25], p[26], p[27])
    # TODO(synk): attention/hidden dropout omitted (eval mode, p treated as 0).
    out_ref[0] = ctx


# output pack row layout (8, C):
#   0 eff_bias (dense bias + move@Wd), 1-2 norm (w, b),
#   3-5 rprelu (move1, a, move2), 6 layerscale alpha, 7 layerscale move
def _output_kernel(x_ref, wd_ref, p_ref, out_ref):
    x = x_ref[0]                              # (T, C) f32
    p = p_ref[...]                            # (8, C)
    y = jnp.dot(x.astype(jnp.bfloat16), wd_ref[...],
                preferred_element_type=jnp.float32) + p[0]
    y = _layernorm(y, p[1], p[2], LN_EPS) + x
    y = _rprelu(y, p[3], p[4], p[5])
    out_ref[0] = y * p[6] + p[7]              # LayerScale


# ------------------------------ pallas wrappers ------------------------------

def attention_pallas(token_all, Wqkv, pack, num_heads):
    B, nw, N, C = token_all.shape
    head_dim = C // num_heads
    kernel = functools.partial(_attention_kernel,
                               num_heads=num_heads, head_dim=head_dim)
    return pl.pallas_call(
        kernel,
        out_shape=jax.ShapeDtypeStruct((B, nw, N, C), jnp.float32),
        grid=(B,),
        in_specs=[
            pl.BlockSpec((1, nw, N, C), lambda b: (b, 0, 0, 0)),
            pl.BlockSpec(Wqkv.shape, lambda b: (0, 0)),
            pl.BlockSpec(pack.shape, lambda b: (0, 0)),
        ],
        out_specs=pl.BlockSpec((1, nw, N, C), lambda b: (b, 0, 0, 0)),
        scratch_shapes=[pltpu.VMEM((nw, N, C), jnp.float32)],
        compiler_params=pltpu.CompilerParams(
            dimension_semantics=("parallel",)),   # megacore split on v7x
    )(token_all, Wqkv, pack)


def output_pallas(x, Wd, pack):
    B, T, C = x.shape
    return pl.pallas_call(
        _output_kernel,
        out_shape=jax.ShapeDtypeStruct((B, T, C), jnp.float32),
        grid=(B,),
        in_specs=[
            pl.BlockSpec((1, T, C), lambda b: (b, 0, 0)),
            pl.BlockSpec(Wd.shape, lambda b: (0, 0)),
            pl.BlockSpec(pack.shape, lambda b: (0, 0)),
        ],
        out_specs=pl.BlockSpec((1, T, C), lambda b: (b, 0, 0)),
        compiler_params=pltpu.CompilerParams(
            dimension_semantics=("parallel",)),
    )(x, Wd, pack)


# ------------------------------- plain-JAX glue ------------------------------

def windows_split_batched(x, ws):
    B, C, H, W = x.shape
    x = jnp.transpose(x, (0, 2, 3, 1))
    x = x.reshape(B, H // ws, ws, W // ws, ws, C)
    x = jnp.transpose(x, (0, 1, 3, 2, 4, 5))
    return x.reshape(B, (H // ws) * (W // ws), ws * ws, C)   # (B, nw, 49, C)


def _pools(x, ws, pad):
    # AvgPool2d(ws, ws, pad, count_include_pad=True) & MaxPool2d(ws, ws, pad)
    B, C, H, W = x.shape
    Hm = (H + 2 * pad - ws) // ws + 1
    Wm = (W + 2 * pad - ws) // ws + 1
    xa = jnp.pad(x, ((0, 0), (0, 0), (pad, pad), (pad, pad)))
    xm = jnp.pad(x, ((0, 0), (0, 0), (pad, pad), (pad, pad)),
                 constant_values=-jnp.inf)

    def win(xp):
        return xp[:, :, :Hm * ws, :Wm * ws].reshape(B, C, Hm, ws, Wm, ws)

    avg = jnp.mean(win(xa), axis=(3, 5))    # divisor ws*ws (incl. padded zeros)
    mx = jnp.max(win(xm), axis=(3, 5))
    return avg, mx                          # (B, C, Hm, Wm)


def token_for_attention(x, a1):
    B, C, H, W = x.shape
    ws = WINDOW
    windows = windows_split_batched(x, ws)               # (B, nw, 49, C)
    avg, mx = _pools(x, ws, 3)
    avg = jnp.transpose(avg, (0, 2, 3, 1)).reshape(B, -1, C)
    mx = jnp.transpose(mx, (0, 2, 3, 1)).reshape(B, -1, C)
    merge = a1 * mx + (1.0 - a1) * avg                   # (B, M, C)
    nw = windows.shape[1]
    merge_b = jnp.broadcast_to(merge[:, None], (B, nw, merge.shape[1], C))
    token_all = jnp.concatenate([windows, merge_b], axis=2)   # (B, nw, 49+M, C)
    return token_all, ws * ws                # LayerNorm runs inside the kernel


def token_split(ctx, split_dim, H, W, parm):
    # ctx: (B, nw, N, C) with window-major ordering (hn, wn).
    B, nw, N, C = ctx.shape
    ws = WINDOW
    Hn, Wn = H // ws, W // ws

    x1 = ctx[:, :, :split_dim, :]                        # (B, nw, 49, C)
    x1 = x1.reshape(B, Hn, Wn, ws, ws, C)
    x1 = jnp.transpose(x1, (0, 5, 1, 3, 2, 4)).reshape(B, C, H, W)

    x2 = ctx[:, :, split_dim:, :]                        # (B, nw, M, C)
    x2 = x2.reshape(B, nw, Hn, Wn, C)
    x2 = jnp.mean(x2, axis=1)                            # (B, Hm, Wm, C)
    x2 = jnp.transpose(x2, (0, 3, 1, 2))                 # (B, C, Hm, Wm)
    # torch.nn.functional.interpolate(size=H, mode='nearest') -> (H, H) output;
    # like the PyTorch reference this assumes H == W (asserted in the wrapper).
    idx_h = (jnp.arange(H) * Hn) // H
    idx_w = (jnp.arange(H) * Wn) // H
    x2 = x2[:, :, idx_h, :][:, :, :, idx_w]              # (B, C, H, H)

    return x1 * parm + x2 * (1.0 - parm)


# ------------------------------ parameter setup ------------------------------

def init_params(key, C):
    ks = jax.random.split(key, 8)
    zeros = jnp.zeros((C,), jnp.float32)
    ones = jnp.ones((C,), jnp.float32)
    prelu = jnp.full((C,), 0.25, jnp.float32)            # PReLU default init

    def lin_w(k):
        return jax.random.normal(k, (C, C), jnp.float32) * 0.05

    def lin_b(k):
        return jax.random.normal(k, (C,), jnp.float32) * 0.01

    Wq, Wk, Wv, Wd = lin_w(ks[0]), lin_w(ks[1]), lin_w(ks[2]), lin_w(ks[3])
    bq, bk, bv, bd = lin_b(ks[4]), lin_b(ks[5]), lin_b(ks[6]), lin_b(ks[7])
    moveq = movek = movev = move_out = zeros             # PyTorch init: zeros

    # Fold pre-projection "move" params into effective biases (exact algebra):
    #   (x + m) @ W + b == x @ W + (m @ W + b)
    eff_bq = bq + moveq @ Wq
    eff_bk = bk + movek @ Wk
    eff_bv = bv + movev @ Wv
    eff_bd = bd + move_out @ Wd

    def branch_rows(eff_b):
        # eff_bias, norm_w, norm_b, rp_move1, rp_a, rp_move2, move2
        return [eff_b, ones, zeros, zeros, prelu, zeros, zeros]

    attn_rows = ([ones, zeros]                           # token_FA LayerNorm
                 + branch_rows(eff_bq)
                 + branch_rows(eff_bk)
                 + branch_rows(eff_bv)
                 + [ones, zeros, zeros, prelu, zeros])   # ctx LN + RPReLU
    out_rows = [eff_bd, ones, zeros, zeros, prelu, zeros,
                jnp.full((C,), 0.1, jnp.float32), zeros]  # LN, RPReLU, LayerScale

    return {
        "a1": jnp.full((1, 1, C), 0.5, jnp.float32),
        "parm": jnp.full((1, C, 1, 1), 0.5, jnp.float32),
        # Matmul weights cast once to bf16 (MXU-native on v5e/v6e/v7x).
        "Wqkv": jnp.concatenate([Wq, Wk, Wv], axis=1).astype(jnp.bfloat16),
        "Wd": Wd.astype(jnp.bfloat16),
        "attn_pack": jnp.stack(attn_rows, axis=0),       # (28, C) f32
        "out_pack": jnp.stack(out_rows, axis=0),         # (8, C)  f32
    }


# ------------------------------- full forward --------------------------------

def bhvit_attention_forward(x, params, num_heads):
    B, C, H, W = x.shape
    assert H == W, "reference module assumes square inputs"
    assert H % WINDOW == 0 and C % num_heads == 0

    token_all, split_dim = token_for_attention(x, params["a1"])
    ctx = attention_pallas(token_all, params["Wqkv"], params["attn_pack"],
                           num_heads)                            # (B, nw, N, C)
    ctx = token_split(ctx, split_dim, H, W, params["parm"])      # (B, C, H, W)
    tokens = jnp.transpose(ctx, (0, 2, 3, 1)).reshape(B, H * W, C)
    out = output_pallas(tokens, params["Wd"], params["out_pack"])
    return out                                                   # (B, H*W, C)


# ---------------------------------- main --------------------------------------

if __name__ == "__main__":
    B, C, H, W = 2, 32, 14, 14          # window_size=7 -> 2x2 windows per image
    num_heads = 4

    key = jax.random.PRNGKey(0)
    k_x, k_p = jax.random.split(key)
    x = jax.random.normal(k_x, (B, C, H, W), jnp.float32)
    params = init_params(k_p, C)

    fwd = jax.jit(functools.partial(bhvit_attention_forward,
                                    num_heads=num_heads))
    out = fwd(x, params)
    jax.block_until_ready(out)
    assert out.shape == (B, H * W, C)
    assert bool(jnp.all(jnp.isfinite(out)))
    print("KERNEL_OK")
</pallas_src>

<mosaic_0001>
module attributes {stable_mosaic.version = 11 : i64} {
  func.func @_attention_kernel(%arg0: i32, %arg1: memref<1x4x53x32xf32, #tpu.memory_space<vmem>>, %arg2: memref<32x96xbf16, #tpu.memory_space<vmem>>, %arg3: memref<28x32xf32, #tpu.memory_space<vmem>>, %arg4: memref<1x4x53x32xf32, #tpu.memory_space<vmem>>, %arg5: memref<4x53x32xf32, #tpu.memory_space<vmem>>) attributes {dimension_semantics = [#tpu.dimension_semantics<parallel>], iteration_bounds = array<i64: 2>, scalar_prefetch = 0 : i64, scratch_operands = 1 : i64, tpu.core_type = #tpu.core_type<tc>, window_params = [{transform_indices = @transform_0, window_bounds = array<i64: 1, 4, 53, 32>}, {pipeline_mode = #tpu.pipeline_mode<synchronous>, transform_indices = @transform_1, window_bounds = array<i64: 32, 96>}, {pipeline_mode = #tpu.pipeline_mode<synchronous>, transform_indices = @transform_2, window_bounds = array<i64: 28, 32>}, {transform_indices = @transform_3, window_bounds = array<i64: 1, 4, 53, 32>}]} {
    %c0 = arith.constant 0 : index
    %c0_0 = arith.constant 0 : index
    %c0_1 = arith.constant 0 : index
    %c0_2 = arith.constant 0 : index
    %0 = vector.load %arg1[%c0, %c0_0, %c0_1, %c0_2] : memref<1x4x53x32xf32, #tpu.memory_space<vmem>>, vector<1x4x53x32xf32>
    %1 = vector.shape_cast %0 : vector<1x4x53x32xf32> to vector<4x53x32xf32>
    %c0_3 = arith.constant 0 : index
    %c0_4 = arith.constant 0 : index
    %2 = vector.load %arg3[%c0_3, %c0_4] : memref<28x32xf32, #tpu.memory_space<vmem>>, vector<28x32xf32>
    %c0_5 = arith.constant 0 : index
    %c0_6 = arith.constant 0 : index
    %3 = vector.load %arg2[%c0_5, %c0_6] : memref<32x96xbf16, #tpu.memory_space<vmem>>, vector<32x96xbf16>
    %4 = vector.extract_strided_slice %2 {offsets = [0, 0], sizes = [1, 32], strides = [1, 1]} : vector<28x32xf32> to vector<1x32xf32>
    %5 = vector.shape_cast %4 : vector<1x32xf32> to vector<32xf32>
    %6 = vector.extract_strided_slice %2 {offsets = [1, 0], sizes = [1, 32], strides = [1, 1]} : vector<28x32xf32> to vector<1x32xf32>
    %7 = vector.shape_cast %6 : vector<1x32xf32> to vector<32xf32>
    %cst = arith.constant dense<0.000000e+00> : vector<4x53xf32>
    %8 = vector.multi_reduction <add>, %1, %cst [2] : vector<4x53x32xf32> to vector<4x53xf32>
    %9 = vector.shape_cast %8 : vector<4x53xf32> to vector<4x53x1xf32>
    %cst_7 = arith.constant 3.200000e+01 : f32
    %10 = vector.broadcast %cst_7 : f32 to vector<4x53x1xf32>
    %11 = arith.divf %9, %10 : vector<4x53x1xf32>
    %12 = vector.broadcast %11 : vector<4x53x1xf32> to vector<4x53x32xf32>
    %13 = arith.subf %1, %12 : vector<4x53x32xf32>
    %14 = arith.mulf %13, %13 : vector<4x53x32xf32>
    %cst_8 = arith.constant dense<0.000000e+00> : vector<4x53xf32>
    %15 = vector.multi_reduction <add>, %14, %cst_8 [2] : vector<4x53x32xf32> to vector<4x53xf32>
    %16 = vector.shape_cast %15 : vector<4x53xf32> to vector<4x53x1xf32>
    %cst_9 = arith.constant 3.200000e+01 : f32
    %17 = vector.broadcast %cst_9 : f32 to vector<4x53x1xf32>
    %18 = arith.divf %16, %17 : vector<4x53x1xf32>
    %19 = vector.broadcast %11 : vector<4x53x1xf32> to vector<4x53x32xf32>
    %20 = arith.subf %1, %19 : vector<4x53x32xf32>
    %cst_10 = arith.constant 9.99999974E-6 : f32
    %21 = vector.broadcast %cst_10 : f32 to vector<4x53x1xf32>
    %22 = arith.addf %18, %21 : vector<4x53x1xf32>
    %23 = math.rsqrt %22 : vector<4x53x1xf32>
    %24 = vector.broadcast %23 : vector<4x53x1xf32> to vector<4x53x32xf32>
    %25 = arith.mulf %20, %24 : vector<4x53x32xf32>
    %26 = vector.shape_cast %5 : vector<32xf32> to vector<1x1x32xf32>
    %27 = vector.broadcast %26 : vector<1x1x32xf32> to vector<4x53x32xf32>
    %28 = arith.mulf %25, %27 : vector<4x53x32xf32>
    %29 = vector.shape_cast %7 : vector<32xf32> to vector<1x1x32xf32>
    %30 = vector.broadcast %29 : vector<1x1x32xf32> to vector<4x53x32xf32>
    %31 = arith.addf %28, %30 : vector<4x53x32xf32>
    %32 = vector.shape_cast %3 : vector<32x96xbf16> to vector<1x32x96xbf16>
    %33 = vector.shape_cast %32 : vector<1x32x96xbf16> to vector<1x32x96xbf16>
    %34 = vector.broadcast %33 : vector<1x32x96xbf16> to vector<4x32x96xbf16>
    %35 = arith.truncf %31 : vector<4x53x32xf32> to vector<4x53x32xbf16>
    "tpu.trace_start"() <{level = 10 : i32, message = "wnc,wcd->wnd"}> : () -> ()
    %cst_11 = arith.constant dense<0.000000e+00> : vector<4x53x96xf32>
    %36 = tpu.matmul %35, %34, %cst_11 {dimension_numbers = #tpu.dot_dimension_numbers<[2], [1], [1], [2], [0, 0, 0, 1, 1, 2], [0], [0]>} : vector<4x53x32xbf16>, vector<4x32x96xbf16>, vector<4x53x96xf32> -> vector<4x53x96xf32>
    "tpu.trace_stop"() : () -> ()
    %37 = vector.extract_strided_slice %36 {offsets = [0, 0, 0], sizes = [4, 53, 32], strides = [1, 1, 1]} : vector<4x53x96xf32> to vector<4x53x32xf32>
    %38 = vector.extract_strided_slice %2 {offsets = [2, 0], sizes = [1, 32], strides = [1, 1]} : vector<28x32xf32> to vector<1x32xf32>
    %39 = vector.shape_cast %38 : vector<1x32xf32> to vector<32xf32>
    %40 = vector.shape_cast %39 : vector<32xf32> to vector<1x1x32xf32>
    %41 = vector.broadcast %40 : vector<1x1x32xf32> to vector<4x53x32xf32>
    %42 = arith.addf %37, %41 : vector<4x53x32xf32>
    %43 = vector.extract_strided_slice %2 {offsets = [3, 0], sizes = [1, 32], strides = [1, 1]} : vector<28x32xf32> to vector<1x32xf32>
    %44 = vector.shape_cast %43 : vector<1x32xf32> to vector<32xf32>
    %45 = vector.extract_strided_slice %2 {offsets = [4, 0], sizes = [1, 32], strides = [1, 1]} : vector<28x32xf32> to vector<1x32xf32>
    %46 = vector.shape_cast %45 : vector<1x32xf32> to vector<32xf32>
    %cst_12 = arith.constant dense<0.000000e+00> : vector<4x53xf32>
    %47 = vector.multi_reduction <add>, %42, %cst_12 [2] : vector<4x53x32xf32> to vector<4x53xf32>
    %48 = vector.shape_cast %47 : vector<4x53xf32> to vector<4x53x1xf32>
    %cst_13 = arith.constant 3.200000e+01 : f32
    %49 = vector.broadcast %cst_13 : f32 to vector<4x53x1xf32>
    %50 = arith.divf %48, %49 : vector<4x53x1xf32>
    %51 = vector.broadcast %50 : vector<4x53x1xf32> to vector<4x53x32xf32>
    %52 = arith.subf %42, %51 : vector<4x53x32xf32>
    %53 = arith.mulf %52, %52 : vector<4x53x32xf32>
    %cst_14 = arith.constant dense<0.000000e+00> : vector<4x53xf32>
    %54 = vector.multi_reduction <add>, %53, %cst_14 [2] : vector<4x53x32xf32> to vector<4x53xf32>
    %55 = vector.shape_cast %54 : vector<4x53xf32> to vector<4x53x1xf32>
    %cst_15 = arith.constant 3.200000e+01 : f32
    %56 = vector.broadcast %cst_15 : f32 to vector<4x53x1xf32>
    %57 = arith.divf %55, %56 : vector<4x53x1xf32>
    %58 = vector.broadcast %50 : vector<4x53x1xf32> to vector<4x53x32xf32>
    %59 = arith.subf %42, %58 : vector<4x53x32xf32>
    %cst_16 = arith.constant 9.99999996E-13 : f32
    %60 = vector.broadcast %cst_16 : f32 to vector<4x53x1xf32>
    %61 = arith.addf %57, %60 : vector<4x53x1xf32>
    %62 = math.rsqrt %61 : vector<4x53x1xf32>
    %63 = vector.broadcast %62 : vector<4x53x1xf32> to vector<4x53x32xf32>
    %64 = arith.mulf %59, %63 : vector<4x53x32xf32>
    %65 = vector.shape_cast %44 : vector<32xf32> to vector<1x1x32xf32>
    %66 = vector.broadcast %65 : vector<1x1x32xf32> to vector<4x53x32xf32>
    %67 = arith.mulf %64, %66 : vector<4x53x32xf32>
    %68 = vector.shape_cast %46 : vector<32xf32> to vector<1x1x32xf32>
    %69 = vector.broadcast %68 : vector<1x1x32xf32> to vector<4x53x32xf32>
    %70 = arith.addf %67, %69 : vector<4x53x32xf32>
    %71 = arith.addf %70, %31 : vector<4x53x32xf32>
    %72 = vector.extract_strided_slice %2 {offsets = [5, 0], sizes = [1, 32], strides = [1, 1]} : vector<28x32xf32> to vector<1x32xf32>
    %73 = vector.shape_cast %72 : vector<1x32xf32> to vector<32xf32>
    %74 = vector.extract_strided_slice %2 {offsets = [6, 0], sizes = [1, 32], strides = [1, 1]} : vector<28x32xf32> to vector<1x32xf32>
    %75 = vector.shape_cast %74 : vector<1x32xf32> to vector<32xf32>
    %76 = vector.extract_strided_slice %2 {offsets = [7, 0], sizes = [1, 32], strides = [1, 1]} : vector<28x32xf32> to vector<1x32xf32>
    %77 = vector.shape_cast %76 : vector<1x32xf32> to vector<32xf32>
    %78 = vector.shape_cast %73 : vector<32xf32> to vector<1x1x32xf32>
    %79 = vector.broadcast %78 : vector<1x1x32xf32> to vector<4x53x32xf32>
    %80 = arith.subf %71, %79 : vector<4x53x32xf32>
    %cst_17 = arith.constant 0.000000e+00 : f32
    %81 = vector.broadcast %cst_17 : f32 to vector<4x53x32xf32>
    %82 = arith.cmpf oge, %80, %81 : vector<4x53x32xf32>
    %83 = vector.shape_cast %75 : vector<32xf32> to vector<1x1x32xf32>
    %84 = vector.broadcast %83 : vector<1x1x32xf32> to vector<4x53x32xf32>
    %85 = arith.mulf %84, %80 : vector<4x53x32xf32>
    %86 = arith.select %82, %80, %85 : vector<4x53x32xi1>, vector<4x53x32xf32>
    %87 = vector.shape_cast %77 : vector<32xf32> to vector<1x1x32xf32>
    %88 = vector.broadcast %87 : vector<1x1x32xf32> to vector<4x53x32xf32>
    %89 = arith.addf %86, %88 : vector<4x53x32xf32>
    %90 = vector.extract_strided_slice %2 {offsets = [8, 0], sizes = [1, 32], strides = [1, 1]} : vector<28x32xf32> to vector<1x32xf32>
    %91 = vector.shape_cast %90 : vector<1x32xf32> to vector<32xf32>
    %92 = vector.shape_cast %91 : vector<32xf32> to vector<1x1x32xf32>
    %93 = vector.broadcast %92 : vector<1x1x32xf32> to vector<4x53x32xf32>
    %94 = arith.addf %89, %93 : vector<4x53x32xf32>
    %cst_18 = arith.constant 0.353553385 : f32
    %95 = vector.broadcast %cst_18 : f32 to vector<4x53x32xf32>
    %96 = arith.mulf %94, %95 : vector<4x53x32xf32>
    %97 = arith.truncf %96 : vector<4x53x32xf32> to vector<4x53x32xbf16>
    %98 = vector.extract_strided_slice %36 {offsets = [0, 0, 32], sizes = [4, 53, 32], strides = [1, 1, 1]} : vector<4x53x96xf32> to vector<4x53x32xf32>
    %99 = vector.extract_strided_slice %2 {offsets = [9, 0], sizes = [1, 32], strides = [1, 1]} : vector<28x32xf32> to vector<1x32xf32>
    %100 = vector.shape_cast %99 : vector<1x32xf32> to vector<32xf32>
    %101 = vector.shape_cast %100 : vector<32xf32> to vector<1x1x32xf32>
    %102 = vector.broadcast %101 : vector<1x1x32xf32> to vector<4x53x32xf32>
    %103 = arith.addf %98, %102 : vector<4x53x32xf32>
    %104 = vector.extract_strided_slice %2 {offsets = [10, 0], sizes = [1, 32], strides = [1, 1]} : vector<28x32xf32> to vector<1x32xf32>
    %105 = vector.shape_cast %104 : vector<1x32xf32> to vector<32xf32>
    %106 = vector.extract_strided_slice %2 {offsets = [11, 0], sizes = [1, 32], strides = [1, 1]} : vector<28x32xf32> to vector<1x32xf32>
    %107 = vector.shape_cast %106 : vector<1x32xf32> to vector<32xf32>
    %cst_19 = arith.constant dense<0.000000e+00> : vector<4x53xf32>
    %108 = vector.multi_reduction <add>, %103, %cst_19 [2] : vector<4x53x32xf32> to vector<4x53xf32>
    %109 = vector.shape_cast %108 : vector<4x53xf32> to vector<4x53x1xf32>
    %cst_20 = arith.constant 3.200000e+01 : f32
    %110 = vector.broadcast %cst_20 : f32 to vector<4x53x1xf32>
    %111 = arith.divf %109, %110 : vector<4x53x1xf32>
    %112 = vector.broadcast %111 : vector<4x53x1xf32> to vector<4x53x32xf32>
    %113 = arith.subf %103, %112 : vector<4x53x32xf32>
    %114 = arith.mulf %113, %113 : vector<4x53x32xf32>
    %cst_21 = arith.constant dense<0.000000e+00> : vector<4x53xf32>
    %115 = vector.multi_reduction <add>, %114, %cst_21 [2] : vector<4x53x32xf32> to vector<4x53xf32>
    %116 = vector.shape_cast %115 : vector<4x53xf32> to vector<4x53x1xf32>
    %cst_22 = arith.constant 3.200000e+01 : f32
    %117 = vector.broadcast %cst_22 : f32 to vector<4x53x1xf32>
    %118 = arith.divf %116, %117 : vector<4x53x1xf32>
    %119 = vector.broadcast %111 : vector<4x53x1xf32> to vector<4x53x32xf32>
    %120 = arith.subf %103, %119 : vector<4x53x32xf32>
    %cst_23 = arith.constant 9.99999996E-13 : f32
    %121 = vector.broadcast %cst_23 : f32 to vector<4x53x1xf32>
    %122 = arith.addf %118, %121 : vector<4x53x1xf32>
    %123 = math.rsqrt %122 : vector<4x53x1xf32>
    %124 = vector.broadcast %123 : vector<4x53x1xf32> to vector<4x53x32xf32>
    %125 = arith.mulf %120, %124 : vector<4x53x32xf32>
    %126 = vector.shape_cast %105 : vector<32xf32> to vector<1x1x32xf32>
    %127 = vector.broadcast %126 : vector<1x1x32xf32> to vector<4x53x32xf32>
    %128 = arith.mulf %125, %127 : vector<4x53x32xf32>
    %129 = vector.shape_cast %107 : vector<32xf32> to vector<1x1x32xf32>
    %130 = vector.broadcast %129 : vector<1x1x32xf32> to vector<4x53x32xf32>
    %131 = arith.addf %128, %130 : vector<4x53x32xf32>
    %132 = arith.addf %131, %31 : vector<4x53x32xf32>
    %133 = vector.extract_strided_slice %2 {offsets = [12, 0], sizes = [1, 32], strides = [1, 1]} : vector<28x32xf32> to vector<1x32xf32>
    %134 = vector.shape_cast %133 : vector<1x32xf32> to vector<32xf32>
    %135 = vector.extract_strided_slice %2 {offsets = [13, 0], sizes = [1, 32], strides = [1, 1]} : vector<28x32xf32> to vector<1x32xf32>
    %136 = vector.shape_cast %135 : vector<1x32xf32> to vector<32xf32>
    %137 = vector.extract_strided_slice %2 {offsets = [14, 0], sizes = [1, 32], strides = [1, 1]} : vector<28x32xf32> to vector<1x32xf32>
    %138 = vector.shape_cast %137 : vector<1x32xf32> to vector<32xf32>
    %139 = vector.shape_cast %134 : vector<32xf32> to vector<1x1x32xf32>
    %140 = vector.broadcast %139 : vector<1x1x32xf32> to vector<4x53x32xf32>
    %141 = arith.subf %132, %140 : vector<4x53x32xf32>
    %cst_24 = arith.constant 0.000000e+00 : f32
    %142 = vector.broadcast %cst_24 : f32 to vector<4x53x32xf32>
    %143 = arith.cmpf oge, %141, %142 : vector<4x53x32xf32>
    %144 = vector.shape_cast %136 : vector<32xf32> to vector<1x1x32xf32>
    %145 = vector.broadcast %144 : vector<1x1x32xf32> to vector<4x53x32xf32>
    %146 = arith.mulf %145, %141 : vector<4x53x32xf32>
    %147 = arith.select %143, %141, %146 : vector<4x53x32xi1>, vector<4x53x32xf32>
    %148 = vector.shape_cast %138 : vector<32xf32> to vector<1x1x32xf32>
    %149 = vector.broadcast %148 : vector<1x1x32xf32> to vector<4x53x32xf32>
    %150 = arith.addf %147, %149 : vector<4x53x32xf32>
    %151 = vector.extract_strided_slice %2 {offsets = [15, 0], sizes = [1, 32], strides = [1, 1]} : vector<28x32xf32> to vector<1x32xf32>
    %152 = vector.shape_cast %151 : vector<1x32xf32> to vector<32xf32>
    %153 = vector.shape_cast %152 : vector<32xf32> to vector<1x1x32xf32>
    %154 = vector.broadcast %153 : vector<1x1x32xf32> to vector<4x53x32xf32>
    %155 = arith.addf %150, %154 : vector<4x53x32xf32>
    %156 = arith.truncf %155 : vector<4x53x32xf32> to vector<4x53x32xbf16>
    %157 = vector.extract_strided_slice %36 {offsets = [0, 0, 64], sizes = [4, 53, 32], strides = [1, 1, 1]} : vector<4x53x96xf32> to vector<4x53x32xf32>
    %158 = vector.extract_strided_slice %2 {offsets = [16, 0], sizes = [1, 32], strides = [1, 1]} : vector<28x32xf32> to vector<1x32xf32>
    %159 = vector.shape_cast %158 : vector<1x32xf32> to vector<32xf32>
    %160 = vector.shape_cast %159 : vector<32xf32> to vector<1x1x32xf32>
    %161 = vector.broadcast %160 : vector<1x1x32xf32> to vector<4x53x32xf32>
    %162 = arith.addf %157, %161 : vector<4x53x32xf32>
    %163 = vector.extract_strided_slice %2 {offsets = [17, 0], sizes = [1, 32], strides = [1, 1]} : vector<28x32xf32> to vector<1x32xf32>
    %164 = vector.shape_cast %163 : vector<1x32xf32> to vector<32xf32>
    %165 = vector.extract_strided_slice %2 {offsets = [18, 0], sizes = [1, 32], strides = [1, 1]} : vector<28x32xf32> to vector<1x32xf32>
    %166 = vector.shape_cast %165 : vector<1x32xf32> to vector<32xf32>
    %cst_25 = arith.constant dense<0.000000e+00> : vector<4x53xf32>
    %167 = vector.multi_reduction <add>, %162, %cst_25 [2] : vector<4x53x32xf32> to vector<4x53xf32>
    %168 = vector.shape_cast %167 : vector<4x53xf32> to vector<4x53x1xf32>
    %cst_26 = arith.constant 3.200000e+01 : f32
    %169 = vector.broadcast %cst_26 : f32 to vector<4x53x1xf32>
    %170 = arith.divf %168, %169 : vector<4x53x1xf32>
    %171 = vector.broadcast %170 : vector<4x53x1xf32> to vector<4x53x32xf32>
    %172 = arith.subf %162, %171 : vector<4x53x32xf32>
    %173 = arith.mulf %172, %172 : vector<4x53x32xf32>
    %cst_27 = arith.constant dense<0.000000e+00> : vector<4x53xf32>
    %174 = vector.multi_reduction <add>, %173, %cst_27 [2] : vector<4x53x32xf32> to vector<4x53xf32>
    %175 = vector.shape_cast %174 : vector<4x53xf32> to vector<4x53x1xf32>
    %cst_28 = arith.constant 3.200000e+01 : f32
    %176 = vector.broadcast %cst_28 : f32 to vector<4x53x1xf32>
    %177 = arith.divf %175, %176 : vector<4x53x1xf32>
    %178 = vector.broadcast %170 : vector<4x53x1xf32> to vector<4x53x32xf32>
    %179 = arith.subf %162, %178 : vector<4x53x32xf32>
    %cst_29 = arith.constant 9.99999996E-13 : f32
    %180 = vector.broadcast %cst_29 : f32 to vector<4x53x1xf32>
    %181 = arith.addf %177, %180 : vector<4x53x1xf32>
    %182 = math.rsqrt %181 : vector<4x53x1xf32>
    %183 = vector.broadcast %182 : vector<4x53x1xf32> to vector<4x53x32xf32>
    %184 = arith.mulf %179, %183 : vector<4x53x32xf32>
    %185 = vector.shape_cast %164 : vector<32xf32> to vector<1x1x32xf32>
    %186 = vector.broadcast %185 : vector<1x1x32xf32> to vector<4x53x32xf32>
    %187 = arith.mulf %184, %186 : vector<4x53x32xf32>
    %188 = vector.shape_cast %166 : vector<32xf32> to vector<1x1x32xf32>
    %189 = vector.broadcast %188 : vector<1x1x32xf32> to vector<4x53x32xf32>
    %190 = arith.addf %187, %189 : vector<4x53x32xf32>
    %191 = arith.addf %190, %31 : vector<4x53x32xf32>
    %192 = vector.extract_strided_slice %2 {offsets = [19, 0], sizes = [1, 32], strides = [1, 1]} : vector<28x32xf32> to vector<1x32xf32>
    %193 = vector.shape_cast %192 : vector<1x32xf32> to vector<32xf32>
    %194 = vector.extract_strided_slice %2 {offsets = [20, 0], sizes = [1, 32], strides = [1, 1]} : vector<28x32xf32> to vector<1x32xf32>
    %195 = vector.shape_cast %194 : vector<1x32xf32> to vector<32xf32>
    %196 = vector.extract_strided_slice %2 {offsets = [21, 0], sizes = [1, 32], strides = [1, 1]} : vector<28x32xf32> to vector<1x32xf32>
    %197 = vector.shape_cast %196 : vector<1x32xf32> to vector<32xf32>
    %198 = vector.shape_cast %193 : vector<32xf32> to vector<1x1x32xf32>
    %199 = vector.broadcast %198 : vector<1x1x32xf32> to vector<4x53x32xf32>
    %200 = arith.subf %191, %199 : vector<4x53x32xf32>
    %cst_30 = arith.constant 0.000000e+00 : f32
    %201 = vector.broadcast %cst_30 : f32 to vector<4x53x32xf32>
    %202 = arith.cmpf oge, %200, %201 : vector<4x53x32xf32>
    %203 = vector.shape_cast %195 : vector<32xf32> to vector<1x1x32xf32>
    %204 = vector.broadcast %203 : vector<1x1x32xf32> to vector<4x53x32xf32>
    %205 = arith.mulf %204, %200 : vector<4x53x32xf32>
    %206 = arith.select %202, %200, %205 : vector<4x53x32xi1>, vector<4x53x32xf32>
    %207 = vector.shape_cast %197 : vector<32xf32> to vector<1x1x32xf32>
    %208 = vector.broadcast %207 : vector<1x1x32xf32> to vector<4x53x32xf32>
    %209 = arith.addf %206, %208 : vector<4x53x32xf32>
    %210 = vector.extract_strided_slice %2 {offsets = [22, 0], sizes = [1, 32], strides = [1, 1]} : vector<28x32xf32> to vector<1x32xf32>
    %211 = vector.shape_cast %210 : vector<1x32xf32> to vector<32xf32>
    %212 = vector.shape_cast %211 : vector<32xf32> to vector<1x1x32xf32>
    %213 = vector.broadcast %212 : vector<1x1x32xf32> to vector<4x53x32xf32>
    %214 = arith.addf %209, %213 : vector<4x53x32xf32>
    %215 = arith.truncf %214 : vector<4x53x32xf32> to vector<4x53x32xbf16>
    %216 = vector.extract_strided_slice %97 {offsets = [0, 0, 0], sizes = [4, 53, 8], strides = [1, 1, 1]} : vector<4x53x32xbf16> to vector<4x53x8xbf16>
    %217 = vector.extract_strided_slice %156 {offsets = [0, 0, 0], sizes = [4, 53, 8], strides = [1, 1, 1]} : vector<4x53x32xbf16> to vector<4x53x8xbf16>
    "tpu.trace_start"() <{level = 10 : i32, message = "wqd,wkd->wqk"}> : () -> ()
    %cst_31 = arith.constant dense<0.000000e+00> : vector<4x53x53xf32>
    %218 = tpu.matmul %216, %217, %cst_31 {dimension_numbers = #tpu.dot_dimension_numbers<[2], [2], [1], [1], [0, 0, 0, 1, 1, 1], [0], [0]>} : vector<4x53x8xbf16>, vector<4x53x8xbf16>, vector<4x53x53xf32> -> vector<4x53x53xf32>
    "tpu.trace_stop"() : () -> ()
    %cst_32 = arith.constant dense<0xFF800000> : vector<4x53xf32>
    %219 = vector.multi_reduction <maximumf>, %218, %cst_32 [2] : vector<4x53x53xf32> to vector<4x53xf32>
    %220 = vector.shape_cast %219 : vector<4x53xf32> to vector<4x53x1xf32>
    %221 = vector.broadcast %220 : vector<4x53x1xf32> to vector<4x53x53xf32>
    %222 = arith.subf %218, %221 : vector<4x53x53xf32>
    %223 = math.exp %222 : vector<4x53x53xf32>
    %cst_33 = arith.constant dense<0.000000e+00> : vector<4x53xf32>
    %224 = vector.multi_reduction <add>, %223, %cst_33 [2] : vector<4x53x53xf32> to vector<4x53xf32>
    %225 = vector.shape_cast %224 : vector<4x53xf32> to vector<4x53x1xf32>
    %226 = tpu.reciprocal %225 {approx = true} : vector<4x53x1xf32> -> vector<4x53x1xf32>
    %227 = vector.broadcast %226 : vector<4x53x1xf32> to vector<4x53x53xf32>
    %228 = arith.mulf %223, %227 : vector<4x53x53xf32>
    %229 = arith.truncf %228 : vector<4x53x53xf32> to vector<4x53x53xbf16>
    %230 = vector.extract_strided_slice %215 {offsets = [0, 0, 0], sizes = [4, 53, 8], strides = [1, 1, 1]} : vector<4x53x32xbf16> to vector<4x53x8xbf16>
    "tpu.trace_start"() <{level = 10 : i32, message = "wqk,wkd->wqd"}> : () -> ()
    %cst_34 = arith.constant dense<0.000000e+00> : vector<4x53x8xf32>
    %231 = tpu.matmul %229, %230, %cst_34 {dimension_numbers = #tpu.dot_dimension_numbers<[2], [1], [1], [2], [0, 0, 0, 1, 1, 2], [0], [0]>} : vector<4x53x53xbf16>, vector<4x53x8xbf16>, vector<4x53x8xf32> -> vector<4x53x8xf32>
    "tpu.trace_stop"() : () -> ()
    %c0_35 = arith.constant 0 : index
    %c0_36 = arith.constant 0 : index
    %c0_37 = arith.constant 0 : index
    %232 = vector.load %arg5[%c0_35, %c0_36, %c0_37] : memref<4x53x32xf32, #tpu.memory_space<vmem>>, vector<4x53x8xf32>
    tpu.vector_store %arg5[%c0_35, %c0_36, %c0_37], %231 {strides = array<i32>} : memref<4x53x32xf32, #tpu.memory_space<vmem>>, vector<4x53x8xf32>,
    %233 = vector.extract_strided_slice %97 {offsets = [0, 0, 8], sizes = [4, 53, 8], strides = [1, 1, 1]} : vector<4x53x32xbf16> to vector<4x53x8xbf16>
    %234 = vector.extract_strided_slice %156 {offsets = [0, 0, 8], sizes = [4, 53, 8], strides = [1, 1, 1]} : vector<4x53x32xbf16> to vector<4x53x8xbf16>
    "tpu.trace_start"() <{level = 10 : i32, message = "wqd,wkd->wqk"}> : () -> ()
    %cst_38 = arith.constant dense<0.000000e+00> : vector<4x53x53xf32>
    %235 = tpu.matmul %233, %234, %cst_38 {dimension_numbers = #tpu.dot_dimension_numbers<[2], [2], [1], [1], [0, 0, 0, 1, 1, 1], [0], [0]>} : vector<4x53x8xbf16>, vector<4x53x8xbf16>, vector<4x53x53xf32> -> vector<4x53x53xf32>
    "tpu.trace_stop"() : () -> ()
    %cst_39 = arith.constant dense<0xFF800000> : vector<4x53xf32>
    %236 = vector.multi_reduction <maximumf>, %235, %cst_39 [2] : vector<4x53x53xf32> to vector<4x53xf32>
    %237 = vector.shape_cast %236 : vector<4x53xf32> to vector<4x53x1xf32>
    %238 = vector.broadcast %237 : vector<4x53x1xf32> to vector<4x53x53xf32>
    %239 = arith.subf %235, %238 : vector<4x53x53xf32>
    %240 = math.exp %239 : vector<4x53x53xf32>
    %cst_40 = arith.constant dense<0.000000e+00> : vector<4x53xf32>
    %241 = vector.multi_reduction <add>, %240, %cst_40 [2] : vector<4x53x53xf32> to vector<4x53xf32>
    %242 = vector.shape_cast %241 : vector<4x53xf32> to vector<4x53x1xf32>
    %243 = tpu.reciprocal %242 {approx = true} : vector<4x53x1xf32> -> vector<4x53x1xf32>
    %244 = vector.broadcast %243 : vector<4x53x1xf32> to vector<4x53x53xf32>
    %245 = arith.mulf %240, %244 : vector<4x53x53xf32>
    %246 = arith.truncf %245 : vector<4x53x53xf32> to vector<4x53x53xbf16>
    %247 = vector.extract_strided_slice %215 {offsets = [0, 0, 8], sizes = [4, 53, 8], strides = [1, 1, 1]} : vector<4x53x32xbf16> to vector<4x53x8xbf16>
    "tpu.trace_start"() <{level = 10 : i32, message = "wqk,wkd->wqd"}> : () -> ()
    %cst_41 = arith.constant dense<0.000000e+00> : vector<4x53x8xf32>
    %248 = tpu.matmul %246, %247, %cst_41 {dimension_numbers = #tpu.dot_dimension_numbers<[2], [1], [1], [2], [0, 0, 0, 1, 1, 2], [0], [0]>} : vector<4x53x53xbf16>, vector<4x53x8xbf16>, vector<4x53x8xf32> -> vector<4x53x8xf32>
    "tpu.trace_stop"() : () -> ()
    %c0_42 = arith.constant 0 : index
    %c0_43 = arith.constant 0 : index
    %c8 = arith.constant 8 : index
    %249 = vector.load %arg5[%c0_42, %c0_43, %c8] : memref<4x53x32xf32, #tpu.memory_space<vmem>>, vector<4x53x8xf32>
    tpu.vector_store %arg5[%c0_42, %c0_43, %c8], %248 {strides = array<i32>} : memref<4x53x32xf32, #tpu.memory_space<vmem>>, vector<4x53x8xf32>,
    %250 = vector.extract_strided_slice %97 {offsets = [0, 0, 16], sizes = [4, 53, 8], strides = [1, 1, 1]} : vector<4x53x32xbf16> to vector<4x53x8xbf16>
    %251 = vector.extract_strided_slice %156 {offsets = [0, 0, 16], sizes = [4, 53, 8], strides = [1, 1, 1]} : vector<4x53x32xbf16> to vector<4x53x8xbf16>
    "tpu.trace_start"() <{level = 10 : i32, message = "wqd,wkd->wqk"}> : () -> ()
    %cst_44 = arith.constant dense<0.000000e+00> : vector<4x53x53xf32>
    %252 = tpu.matmul %250, %251, %cst_44 {dimension_numbers = #tpu.dot_dimension_numbers<[2], [2], [1], [1], [0, 0, 0, 1, 1, 1], [0], [0]>} : vector<4x53x8xbf16>, vector<4x53x8xbf16>, vector<4x53x53xf32> -> vector<4x53x53xf32>
    "tpu.trace_stop"() : () -> ()
    %cst_45 = arith.constant dense<0xFF800000> : vector<4x53xf32>
    %253 = vector.multi_reduction <maximumf>, %252, %cst_45 [2] : vector<4x53x53xf32> to vector<4x53xf32>
    %254 = vector.shape_cast %253 : vector<4x53xf32> to vector<4x53x1xf32>
    %255 = vector.broadcast %254 : vector<4x53x1xf32> to vector<4x53x53xf32>
    %256 = arith.subf %252, %255 : vector<4x53x53xf32>
    %257 = math.exp %256 : vector<4x53x53xf32>
    %cst_46 = arith.constant dense<0.000000e+00> : vector<4x53xf32>
    %258 = vector.multi_reduction <add>, %257, %cst_46 [2] : vector<4x53x53xf32> to vector<4x53xf32>
    %259 = vector.shape_cast %258 : vector<4x53xf32> to vector<4x53x1xf32>
    %260 = tpu.reciprocal %259 {approx = true} : vector<4x53x1xf32> -> vector<4x53x1xf32>
    %261 = vector.broadcast %260 : vector<4x53x1xf32> to vector<4x53x53xf32>
    %262 = arith.mulf %257, %261 : vector<4x53x53xf32>
    %263 = arith.truncf %262 : vector<4x53x53xf32> to vector<4x53x53xbf16>
    %264 = vector.extract_strided_slice %215 {offsets = [0, 0, 16], sizes = [4, 53, 8], strides = [1, 1, 1]} : vector<4x53x32xbf16> to vector<4x53x8xbf16>
    "tpu.trace_start"() <{level = 10 : i32, message = "wqk,wkd->wqd"}> : () -> ()
    %cst_47 = arith.constant dense<0.000000e+00> : vector<4x53x8xf32>
    %265 = tpu.matmul %263, %264, %cst_47 {dimension_numbers = #tpu.dot_dimension_numbers<[2], [1], [1], [2], [0, 0, 0, 1, 1, 2], [0], [0]>} : vector<4x53x53xbf16>, vector<4x53x8xbf16>, vector<4x53x8xf32> -> vector<4x53x8xf32>
    "tpu.trace_stop"() : () -> ()
    %c0_48 = arith.constant 0 : index
    %c0_49 = arith.constant 0 : index
    %c16 = arith.constant 16 : index
    %266 = vector.load %arg5[%c0_48, %c0_49, %c16] : memref<4x53x32xf32, #tpu.memory_space<vmem>>, vector<4x53x8xf32>
    tpu.vector_store %arg5[%c0_48, %c0_49, %c16], %265 {strides = array<i32>} : memref<4x53x32xf32, #tpu.memory_space<vmem>>, vector<4x53x8xf32>,
    %267 = vector.extract_strided_slice %97 {offsets = [0, 0, 24], sizes = [4, 53, 8], strides = [1, 1, 1]} : vector<4x53x32xbf16> to vector<4x53x8xbf16>
    %268 = vector.extract_strided_slice %156 {offsets = [0, 0, 24], sizes = [4, 53, 8], strides = [1, 1, 1]} : vector<4x53x32xbf16> to vector<4x53x8xbf16>
    "tpu.trace_start"() <{level = 10 : i32, message = "wqd,wkd->wqk"}> : () -> ()
    %cst_50 = arith.constant dense<0.000000e+00> : vector<4x53x53xf32>
    %269 = tpu.matmul %267, %268, %cst_50 {dimension_numbers = #tpu.dot_dimension_numbers<[2], [2], [1], [1], [0, 0, 0, 1, 1, 1], [0], [0]>} : vector<4x53x8xbf16>, vector<4x53x8xbf16>, vector<4x53x53xf32> -> vector<4x53x53xf32>
    "tpu.trace_stop"() : () -> ()
    %cst_51 = arith.constant dense<0xFF800000> : vector<4x53xf32>
    %270 = vector.multi_reduction <maximumf>, %269, %cst_51 [2] : vector<4x53x53xf32> to vector<4x53xf32>
    %271 = vector.shape_cast %270 : vector<4x53xf32> to vector<4x53x1xf32>
    %272 = vector.broadcast %271 : vector<4x53x1xf32> to vector<4x53x53xf32>
    %273 = arith.subf %269, %272 : vector<4x53x53xf32>
    %274 = math.exp %273 : vector<4x53x53xf32>
    %cst_52 = arith.constant dense<0.000000e+00> : vector<4x53xf32>
    %275 = vector.multi_reduction <add>, %274, %cst_52 [2] : vector<4x53x53xf32> to vector<4x53xf32>
    %276 = vector.shape_cast %275 : vector<4x53xf32> to vector<4x53x1xf32>
    %277 = tpu.reciprocal %276 {approx = true} : vector<4x53x1xf32> -> vector<4x53x1xf32>
    %278 = vector.broadcast %277 : vector<4x53x1xf32> to vector<4x53x53xf32>
    %279 = arith.mulf %274, %278 : vector<4x53x53xf32>
    %280 = arith.truncf %279 : vector<4x53x53xf32> to vector<4x53x53xbf16>
    %281 = vector.extract_strided_slice %215 {offsets = [0, 0, 24], sizes = [4, 53, 8], strides = [1, 1, 1]} : vector<4x53x32xbf16> to vector<4x53x8xbf16>
    "tpu.trace_start"() <{level = 10 : i32, message = "wqk,wkd->wqd"}> : () -> ()
    %cst_53 = arith.constant dense<0.000000e+00> : vector<4x53x8xf32>
    %282 = tpu.matmul %280, %281, %cst_53 {dimension_numbers = #tpu.dot_dimension_numbers<[2], [1], [1], [2], [0, 0, 0, 1, 1, 2], [0], [0]>} : vector<4x53x53xbf16>, vector<4x53x8xbf16>, vector<4x53x8xf32> -> vector<4x53x8xf32>
    "tpu.trace_stop"() : () -> ()
    %c0_54 = arith.constant 0 : index
    %c0_55 = arith.constant 0 : index
    %c24 = arith.constant 24 : index
    %283 = vector.load %arg5[%c0_54, %c0_55, %c24] : memref<4x53x32xf32, #tpu.memory_space<vmem>>, vector<4x53x8xf32>
    tpu.vector_store %arg5[%c0_54, %c0_55, %c24], %282 {strides = array<i32>} : memref<4x53x32xf32, #tpu.memory_space<vmem>>, vector<4x53x8xf32>,
    %c0_56 = arith.constant 0 : index
    %c0_57 = arith.constant 0 : index
    %c0_58 = arith.constant 0 : index
    %284 = vector.load %arg5[%c0_56, %c0_57, %c0_58] : memref<4x53x32xf32, #tpu.memory_space<vmem>>, vector<4x53x32xf32>
    %285 = vector.extract_strided_slice %2 {offsets = [23, 0], sizes = [1, 32], strides = [1, 1]} : vector<28x32xf32> to vector<1x32xf32>
    %286 = vector.shape_cast %285 : vector<1x32xf32> to vector<32xf32>
    %287 = vector.extract_strided_slice %2 {offsets = [24, 0], sizes = [1, 32], strides = [1, 1]} : vector<28x32xf32> to vector<1x32xf32>
    %288 = vector.shape_cast %287 : vector<1x32xf32> to vector<32xf32>
    %cst_59 = arith.constant dense<0.000000e+00> : vector<4x53xf32>
    %289 = vector.multi_reduction <add>, %284, %cst_59 [2] : vector<4x53x32xf32> to vector<4x53xf32>
    %290 = vector.shape_cast %289 : vector<4x53xf32> to vector<4x53x1xf32>
    %cst_60 = arith.constant 3.200000e+01 : f32
    %291 = vector.broadcast %cst_60 : f32 to vector<4x53x1xf32>
    %292 = arith.divf %290, %291 : vector<4x53x1xf32>
    %293 = vector.broadcast %292 : vector<4x53x1xf32> to vector<4x53x32xf32>
    %294 = arith.subf %284, %293 : vector<4x53x32xf32>
    %295 = arith.mulf %294, %294 : vector<4x53x32xf32>
    %cst_61 = arith.constant dense<0.000000e+00> : vector<4x53xf32>
    %296 = vector.multi_reduction <add>, %295, %cst_61 [2] : vector<4x53x32xf32> to vector<4x53xf32>
    %297 = vector.shape_cast %296 : vector<4x53xf32> to vector<4x53x1xf32>
    %cst_62 = arith.constant 3.200000e+01 : f32
    %298 = vector.broadcast %cst_62 : f32 to vector<4x53x1xf32>
    %299 = arith.divf %297, %298 : vector<4x53x1xf32>
    %300 = vector.broadcast %292 : vector<4x53x1xf32> to vector<4x53x32xf32>
    %301 = arith.subf %284, %300 : vector<4x53x32xf32>
    %cst_63 = arith.constant 9.99999996E-13 : f32
    %302 = vector.broadcast %cst_63 : f32 to vector<4x53x1xf32>
    %303 = arith.addf %299, %302 : vector<4x53x1xf32>
    %304 = math.rsqrt %303 : vector<4x53x1xf32>
    %305 = vector.broadcast %304 : vector<4x53x1xf32> to vector<4x53x32xf32>
    %306 = arith.mulf %301, %305 : vector<4x53x32xf32>
    %307 = vector.shape_cast %286 : vector<32xf32> to vector<1x1x32xf32>
    %308 = vector.broadcast %307 : vector<1x1x32xf32> to vector<4x53x32xf32>
    %309 = arith.mulf %306, %308 : vector<4x53x32xf32>
    %310 = vector.shape_cast %288 : vector<32xf32> to vector<1x1x32xf32>
    %311 = vector.broadcast %310 : vector<1x1x32xf32> to vector<4x53x32xf32>
    %312 = arith.addf %309, %311 : vector<4x53x32xf32>
    %313 = arith.addf %312, %89 : vector<4x53x32xf32>
    %314 = arith.addf %313, %150 : vector<4x53x32xf32>
    %315 = arith.addf %314, %209 : vector<4x53x32xf32>
    %316 = vector.extract_strided_slice %2 {offsets = [25, 0], sizes = [1, 32], strides = [1, 1]} : vector<28x32xf32> to vector<1x32xf32>
    %317 = vector.shape_cast %316 : vector<1x32xf32> to vector<32xf32>
    %318 = vector.extract_strided_slice %2 {offsets = [26, 0], sizes = [1, 32], strides = [1, 1]} : vector<28x32xf32> to vector<1x32xf32>
    %319 = vector.shape_cast %318 : vector<1x32xf32> to vector<32xf32>
    %320 = vector.extract_strided_slice %2 {offsets = [27, 0], sizes = [1, 32], strides = [1, 1]} : vector<28x32xf32> to vector<1x32xf32>
    %321 = vector.shape_cast %320 : vector<1x32xf32> to vector<32xf32>
    %322 = vector.shape_cast %317 : vector<32xf32> to vector<1x1x32xf32>
    %323 = vector.broadcast %322 : vector<1x1x32xf32> to vector<4x53x32xf32>
    %324 = arith.subf %315, %323 : vector<4x53x32xf32>
    %cst_64 = arith.constant 0.000000e+00 : f32
    %325 = vector.broadcast %cst_64 : f32 to vector<4x53x32xf32>
    %326 = arith.cmpf oge, %324, %325 : vector<4x53x32xf32>
    %327 = vector.shape_cast %319 : vector<32xf32> to vector<1x1x32xf32>
    %328 = vector.broadcast %327 : vector<1x1x32xf32> to vector<4x53x32xf32>
    %329 = arith.mulf %328, %324 : vector<4x53x32xf32>
    %330 = arith.select %326, %324, %329 : vector<4x53x32xi1>, vector<4x53x32xf32>
    %331 = vector.shape_cast %321 : vector<32xf32> to vector<1x1x32xf32>
    %332 = vector.broadcast %331 : vector<1x1x32xf32> to vector<4x53x32xf32>
    %333 = arith.addf %330, %332 : vector<4x53x32xf32>
    %c0_65 = arith.constant 0 : index
    %c0_66 = arith.constant 0 : index
    %c0_67 = arith.constant 0 : index
    %c0_68 = arith.constant 0 : index
    %334 = vector.load %arg4[%c0_65, %c0_66, %c0_67, %c0_68] : memref<1x4x53x32xf32, #tpu.memory_space<vmem>>, vector<1x4x53x32xf32>
    %335 = vector.shape_cast %334 : vector<1x4x53x32xf32> to vector<4x53x32xf32>
    %336 = vector.shape_cast %333 : vector<4x53x32xf32> to vector<1x4x53x32xf32>
    tpu.vector_store %arg4[%c0_65, %c0_66, %c0_67, %c0_68], %336 {strides = array<i32>} : memref<1x4x53x32xf32, #tpu.memory_space<vmem>>, vector<1x4x53x32xf32>,
    return
  }
  func.func @transform_0(%arg0: i32) -> (i32, i32, i32, i32) {
    %c0_i32 = arith.constant 0 : i32
    %c0_i32_0 = arith.constant 0 : i32
    %c0_i32_1 = arith.constant 0 : i32
    %c0_i32_2 = arith.constant 0 : i32
    return %arg0, %c0_i32, %c0_i32_0, %c0_i32_1 : i32, i32, i32, i32
  }
  func.func @transform_1(%arg0: i32) -> (i32, i32) {
    %c0_i32 = arith.constant 0 : i32
    %c0_i32_0 = arith.constant 0 : i32
    %c0_i32_1 = arith.constant 0 : i32
    return %c0_i32, %c0_i32_0 : i32, i32
  }
  func.func @transform_2(%arg0: i32) -> (i32, i32) {
    %c0_i32 = arith.constant 0 : i32
    %c0_i32_0 = arith.constant 0 : i32
    %c0_i32_1 = arith.constant 0 : i32
    return %c0_i32, %c0_i32_0 : i32, i32
  }
  func.func @transform_3(%arg0: i32) -> (i32, i32, i32, i32) {
    %c0_i32 = arith.constant 0 : i32
    %c0_i32_0 = arith.constant 0 : i32
    %c0_i32_1 = arith.constant 0 : i32
    %c0_i32_2 = arith.constant 0 : i32
    return %arg0, %c0_i32, %c0_i32_0, %c0_i32_1 : i32, i32, i32, i32
  }
}

module attributes {stable_mosaic.version = 11 : i64} {
  func.func @_output_kernel(%arg0: i32, %arg1: memref<1x196x32xf32, #tpu.memory_space<vmem>>, %arg2: memref<32x32xbf16, #tpu.memory_space<vmem>>, %arg3: memref<8x32xf32, #tpu.memory_space<vmem>>, %arg4: memref<1x196x32xf32, #tpu.memory_space<vmem>>) attributes {dimension_semantics = [#tpu.dimension_semantics<parallel>], iteration_bounds = array<i64: 2>, scalar_prefetch = 0 : i64, scratch_operands = 0 : i64, tpu.core_type = #tpu.core_type<tc>, window_params = [{transform_indices = @transform_0, window_bounds = array<i64: 1, 196, 32>}, {pipeline_mode = #tpu.pipeline_mode<synchronous>, transform_indices = @transform_1, window_bounds = array<i64: 32, 32>}, {pipeline_mode = #tpu.pipeline_mode<synchronous>, transform_indices = @transform_2, window_bounds = array<i64: 8, 32>}, {transform_indices = @transform_3, window_bounds = array<i64: 1, 196, 32>}]} {
    %c0 = arith.constant 0 : index
    %c0_0 = arith.constant 0 : index
    %c0_1 = arith.constant 0 : index
    %0 = vector.load %arg1[%c0, %c0_0, %c0_1] : memref<1x196x32xf32, #tpu.memory_space<vmem>>, vector<1x196x32xf32>
    %1 = vector.shape_cast %0 : vector<1x196x32xf32> to vector<196x32xf32>
    %c0_2 = arith.constant 0 : index
    %c0_3 = arith.constant 0 : index
    %2 = vector.load %arg3[%c0_2, %c0_3] : memref<8x32xf32, #tpu.memory_space<vmem>>, vector<8x32xf32>
    %3 = arith.truncf %1 : vector<196x32xf32> to vector<196x32xbf16>
    %c0_4 = arith.constant 0 : index
    %c0_5 = arith.constant 0 : index
    %4 = vector.load %arg2[%c0_4, %c0_5] : memref<32x32xbf16, #tpu.memory_space<vmem>>, vector<32x32xbf16>
    %cst = arith.constant dense<0.000000e+00> : vector<196x32xf32>
    %5 = tpu.matmul %3, %4, %cst {dimension_numbers = #tpu.dot_dimension_numbers<[1], [0], [0], [1], [0, 0, 1, 1], [], []>} : vector<196x32xbf16>, vector<32x32xbf16>, vector<196x32xf32> -> vector<196x32xf32>
    %6 = vector.extract_strided_slice %2 {offsets = [0, 0], sizes = [1, 32], strides = [1, 1]} : vector<8x32xf32> to vector<1x32xf32>
    %7 = vector.shape_cast %6 : vector<1x32xf32> to vector<32xf32>
    %8 = vector.shape_cast %7 : vector<32xf32> to vector<1x32xf32>
    %9 = vector.broadcast %8 : vector<1x32xf32> to vector<196x32xf32>
    %10 = arith.addf %5, %9 : vector<196x32xf32>
    %11 = vector.extract_strided_slice %2 {offsets = [1, 0], sizes = [1, 32], strides = [1, 1]} : vector<8x32xf32> to vector<1x32xf32>
    %12 = vector.shape_cast %11 : vector<1x32xf32> to vector<32xf32>
    %13 = vector.extract_strided_slice %2 {offsets = [2, 0], sizes = [1, 32], strides = [1, 1]} : vector<8x32xf32> to vector<1x32xf32>
    %14 = vector.shape_cast %13 : vector<1x32xf32> to vector<32xf32>
    %cst_6 = arith.constant dense<0.000000e+00> : vector<196xf32>
    %15 = vector.multi_reduction <add>, %10, %cst_6 [1] : vector<196x32xf32> to vector<196xf32>
    %16 = vector.shape_cast %15 : vector<196xf32> to vector<196x1xf32>
    %cst_7 = arith.constant 3.200000e+01 : f32
    %17 = vector.broadcast %cst_7 : f32 to vector<196x1xf32>
    %18 = arith.divf %16, %17 : vector<196x1xf32>
    %19 = vector.broadcast %18 : vector<196x1xf32> to vector<196x32xf32>
    %20 = arith.subf %10, %19 : vector<196x32xf32>
    %21 = arith.mulf %20, %20 : vector<196x32xf32>
    %cst_8 = arith.constant dense<0.000000e+00> : vector<196xf32>
    %22 = vector.multi_reduction <add>, %21, %cst_8 [1] : vector<196x32xf32> to vector<196xf32>
    %23 = vector.shape_cast %22 : vector<196xf32> to vector<196x1xf32>
    %cst_9 = arith.constant 3.200000e+01 : f32
    %24 = vector.broadcast %cst_9 : f32 to vector<196x1xf32>
    %25 = arith.divf %23, %24 : vector<196x1xf32>
    %26 = vector.broadcast %18 : vector<196x1xf32> to vector<196x32xf32>
    %27 = arith.subf %10, %26 : vector<196x32xf32>
    %cst_10 = arith.constant 9.99999996E-13 : f32
    %28 = vector.broadcast %cst_10 : f32 to vector<196x1xf32>
    %29 = arith.addf %25, %28 : vector<196x1xf32>
    %30 = math.rsqrt %29 : vector<196x1xf32>
    %31 = vector.broadcast %30 : vector<196x1xf32> to vector<196x32xf32>
    %32 = arith.mulf %27, %31 : vector<196x32xf32>
    %33 = vector.shape_cast %12 : vector<32xf32> to vector<1x32xf32>
    %34 = vector.broadcast %33 : vector<1x32xf32> to vector<196x32xf32>
    %35 = arith.mulf %32, %34 : vector<196x32xf32>
    %36 = vector.shape_cast %14 : vector<32xf32> to vector<1x32xf32>
    %37 = vector.broadcast %36 : vector<1x32xf32> to vector<196x32xf32>
    %38 = arith.addf %35, %37 : vector<196x32xf32>
    %39 = arith.addf %38, %1 : vector<196x32xf32>
    %40 = vector.extract_strided_slice %2 {offsets = [3, 0], sizes = [1, 32], strides = [1, 1]} : vector<8x32xf32> to vector<1x32xf32>
    %41 = vector.shape_cast %40 : vector<1x32xf32> to vector<32xf32>
    %42 = vector.extract_strided_slice %2 {offsets = [4, 0], sizes = [1, 32], strides = [1, 1]} : vector<8x32xf32> to vector<1x32xf32>
    %43 = vector.shape_cast %42 : vector<1x32xf32> to vector<32xf32>
    %44 = vector.extract_strided_slice %2 {offsets = [5, 0], sizes = [1, 32], strides = [1, 1]} : vector<8x32xf32> to vector<1x32xf32>
    %45 = vector.shape_cast %44 : vector<1x32xf32> to vector<32xf32>
    %46 = vector.shape_cast %41 : vector<32xf32> to vector<1x32xf32>
    %47 = vector.broadcast %46 : vector<1x32xf32> to vector<196x32xf32>
    %48 = arith.subf %39, %47 : vector<196x32xf32>
    %cst_11 = arith.constant 0.000000e+00 : f32
    %49 = vector.broadcast %cst_11 : f32 to vector<196x32xf32>
    %50 = arith.cmpf oge, %48, %49 : vector<196x32xf32>
    %51 = vector.shape_cast %43 : vector<32xf32> to vector<1x32xf32>
    %52 = vector.broadcast %51 : vector<1x32xf32> to vector<196x32xf32>
    %53 = arith.mulf %52, %48 : vector<196x32xf32>
    %54 = arith.select %50, %48, %53 : vector<196x32xi1>, vector<196x32xf32>
    %55 = vector.shape_cast %45 : vector<32xf32> to vector<1x32xf32>
    %56 = vector.broadcast %55 : vector<1x32xf32> to vector<196x32xf32>
    %57 = arith.addf %54, %56 : vector<196x32xf32>
    %58 = vector.extract_strided_slice %2 {offsets = [6, 0], sizes = [1, 32], strides = [1, 1]} : vector<8x32xf32> to vector<1x32xf32>
    %59 = vector.shape_cast %58 : vector<1x32xf32> to vector<32xf32>
    %60 = vector.shape_cast %59 : vector<32xf32> to vector<1x32xf32>
    %61 = vector.broadcast %60 : vector<1x32xf32> to vector<196x32xf32>
    %62 = arith.mulf %57, %61 : vector<196x32xf32>
    %63 = vector.extract_strided_slice %2 {offsets = [7, 0], sizes = [1, 32], strides = [1, 1]} : vector<8x32xf32> to vector<1x32xf32>
    %64 = vector.shape_cast %63 : vector<1x32xf32> to vector<32xf32>
    %65 = vector.shape_cast %64 : vector<32xf32> to vector<1x32xf32>
    %66 = vector.broadcast %65 : vector<1x32xf32> to vector<196x32xf32>
    %67 = arith.addf %62, %66 : vector<196x32xf32>
    %c0_12 = arith.constant 0 : index
    %c0_13 = arith.constant 0 : index
    %c0_14 = arith.constant 0 : index
    %68 = vector.load %arg4[%c0_12, %c0_13, %c0_14] : memref<1x196x32xf32, #tpu.memory_space<vmem>>, vector<1x196x32xf32>
    %69 = vector.shape_cast %68 : vector<1x196x32xf32> to vector<196x32xf32>
    %70 = vector.shape_cast %67 : vector<196x32xf32> to vector<1x196x32xf32>
    tpu.vector_store %arg4[%c0_12, %c0_13, %c0_14], %70 {strides = array<i32>} : memref<1x196x32xf32, #tpu.memory_space<vmem>>, vector<1x196x32xf32>,
    return
  }
  func.func @transform_0(%arg0: i32) -> (i32, i32, i32) {
    %c0_i32 = arith.constant 0 : i32
    %c0_i32_0 = arith.constant 0 : i32
    %c0_i32_1 = arith.constant 0 : i32
    return %arg0, %c0_i32, %c0_i32_0 : i32, i32, i32
  }
  func.func @transform_1(%arg0: i32) -> (i32, i32) {
    %c0_i32 = arith.constant 0 : i32
    %c0_i32_0 = arith.constant 0 : i32
    %c0_i32_1 = arith.constant 0 : i32
    return %c0_i32, %c0_i32_0 : i32, i32
  }
  func.func @transform_2(%arg0: i32) -> (i32, i32) {
    %c0_i32 = arith.constant 0 : i32
    %c0_i32_0 = arith.constant 0 : i32
    %c0_i32_1 = arith.constant 0 : i32
    return %c0_i32, %c0_i32_0 : i32, i32
  }
  func.func @transform_3(%arg0: i32) -> (i32, i32, i32) {
    %c0_i32 = arith.constant 0 : i32
    %c0_i32_0 = arith.constant 0 : i32
    %c0_i32_1 = arith.constant 0 : i32
    return %arg0, %c0_i32, %c0_i32_0 : i32, i32, i32
  }
}

</mosaic_0001>

<llo_original>
// kernel: bhvit_attention_forward.3
$region0: #{bhvit_attention_forward.3}
  #allocation0 [shape = 'u32[]', space=smem, size = 0x4, offset = 0x4, fixed_abs, tag = 'smem constant byte address 0x4 - core index']
  #allocation1 [shape = 'u32[144,128]{1,0:T(1,128)}', space=vmem, size = 0x12000, scoped, tag = 'internal scratch']
  %s0 = inlined_call_operand.vmem [shape: f32[2,196,32], index: 0, kind: input, shape index: {}]
  %s1 = inlined_call_operand.vmem [shape: bf16[32,32], index: 1, kind: input, shape index: {}]
  %s2 = inlined_call_operand.vmem [shape: f32[8,32], index: 2, kind: input, shape index: {}]
  %s3 = inlined_call_operand.vmem [shape: f32[2,196,32], index: 3, kind: output, shape index: {}]
  %s4 = sld [smem:[#allocation0]]
  $region45: #{bhvit_attention_forward.3} parent=0
    _
  %s6 = ssub.s32 1, %s4
  %s7 = scalar_select 0, %s6, %s4
  loop: start=0, step=1, limit=4
  $region2: #{bhvit_attention_forward.3} parent=0 // loop_pre_header
    _
  $region3: #{bhvit_attention_forward.3} parent=0 // loop_header
    %s9 = sphi 0, %s13
    %p10 = scmp.ge.s32.totalorder %s9, 4
    %s19 = sphi 0, %s21
    %s22 = sphi 0, %s19
    %s23 = sphi 0, %s22
    %s39 = sphi 0, %s23
    %s43 = sphi 0, %s43
    %s45 = sphi 0, %s43
    %s46 = sphi 0, %s45
    %s60 = sphi 0, %s46
    %s64 = sphi 0, %s64
    %s66 = sphi 0, %s64
    %s67 = sphi 0, %s66
    %s81 = sphi 0, %s67
    %s87 = sphi 0, %s89
    %s90 = sphi 0, %s87
    %s91 = sphi 0, %s90
    %s107 = sphi 0, %s91
  $region4: #{bhvit_attention_forward.3} parent=0 // loop_header_branch
    %12 = sbr.rel (%p10) target = $region8
  $region5: #{bhvit_attention_forward.3} parent=0 // loop_body
    %s14 = ssub.s32 %s9, 1
    %s15 = ssub.s32 %s9, 2
    %s16 = sadd.s32 %s9, 1
    %s17 = ssub.s32 %s9, %s16
    %p18 = scmp.eq.s32.totalorder %s17, 0
    %s20 = sadd.s32 %s19, 1
    %s21 = scalar_select %p18, %s19, %s20
    %p24 = pneg %p18
    %p25 = scmp.eq.s32.totalorder %s9, 1
    %p26 = por %p24, %p25
    %p27 = scmp.ne.s32.totalorder %s19, %s22
    %p28 = scmp.eq.s32.totalorder %s9, 0
    %p29 = por %p27, %p28
    %p30 = scmp.ne.s32.totalorder %s19, %s22
    %p31 = scmp.eq.s32.totalorder %s14, 1
    %p32 = por %p30, %p31
    %p33 = scmp.ne.s32.totalorder %s22, %s23
    %p34 = scmp.eq.s32.totalorder %s14, 0
    %p35 = por %p33, %p34
    %p36 = scmp.ne.s32.totalorder %s22, %s23
    %p37 = scmp.eq.s32.totalorder %s15, 1
    %p38 = por %p36, %p37
    %p40 = scmp.ne.s32.totalorder %s23, %s39
    %p41 = scmp.eq.s32.totalorder %s15, 0
    %p42 = por %p40, %p41
    %s44 = sadd.s32 %s43, 1
    %p47 = scmp.eq.s32.totalorder %s9, 1
    %p48 = scmp.ne.s32.totalorder %s43, %s45
    %p49 = scmp.eq.s32.totalorder %s9, 0
    %p50 = por %p48, %p49
    %p51 = scmp.ne.s32.totalorder %s43, %s45
    %p52 = scmp.eq.s32.totalorder %s14, 1
    %p53 = por %p51, %p52
    %p54 = scmp.ne.s32.totalorder %s45, %s46
    %p55 = scmp.eq.s32.totalorder %s14, 0
    %p56 = por %p54, %p55
    %p57 = scmp.ne.s32.totalorder %s45, %s46
    %p58 = scmp.eq.s32.totalorder %s15, 1
    %p59 = por %p57, %p58
    %p61 = scmp.ne.s32.totalorder %s46, %s60
    %p62 = scmp.eq.s32.totalorder %s15, 0
    %p63 = por %p61, %p62
    %s65 = sadd.s32 %s64, 1
    %p68 = scmp.eq.s32.totalorder %s9, 1
    %p69 = scmp.ne.s32.totalorder %s64, %s66
    %p70 = scmp.eq.s32.totalorder %s9, 0
    %p71 = por %p69, %p70
    %p72 = scmp.ne.s32.totalorder %s64, %s66
    %p73 = scmp.eq.s32.totalorder %s14, 1
    %p74 = por %p72, %p73
    %p75 = scmp.ne.s32.totalorder %s66, %s67
    %p76 = scmp.eq.s32.totalorder %s14, 0
    %p77 = por %p75, %p76
    %p78 = scmp.ne.s32.totalorder %s66, %s67
    %p79 = scmp.eq.s32.totalorder %s15, 1
    %p80 = por %p78, %p79
    %p82 = scmp.ne.s32.totalorder %s67, %s81
    %p83 = scmp.eq.s32.totalorder %s15, 0
    %p84 = por %p82, %p83
    %s85 = ssub.s32 %s9, %s16
    %p86 = scmp.eq.s32.totalorder %s85, 0
    %s88 = sadd.s32 %s87, 1
    %s89 = scalar_select %p86, %s87, %s88
    %p92 = pneg %p86
    %p93 = scmp.eq.s32.totalorder %s9, 1
    %p94 = por %p92, %p93
    %p95 = scmp.ne.s32.totalorder %s87, %s90
    %p96 = scmp.eq.s32.totalorder %s9, 0
    %p97 = por %p95, %p96
    %p98 = scmp.ne.s32.totalorder %s87, %s90
    %p99 = scmp.eq.s32.totalorder %s14, 1
    %p100 = por %p98, %p99
    %p101 = scmp.ne.s32.totalorder %s90, %s91
    %p102 = scmp.eq.s32.totalorder %s14, 0
    %p103 = por %p101, %p102
    %p104 = scmp.ne.s32.totalorder %s90, %s91
    %p105 = scmp.eq.s32.totalorder %s15, 1
    %p106 = por %p104, %p105
    %p108 = scmp.ne.s32.totalorder %s91, %s107
    %p109 = scmp.eq.s32.totalorder %s15, 0
    %p110 = por %p108, %p109
    %p111 = scmp.le.s32.totalorder 1, %s9
    %p112 = scmp.lt.s32.totalorder %s9, 3
    %p113 = pnand %p111, %p112
    %p114 = pneg %p113
    // Predicated region
    $region9: #{bhvit_attention_forward.3} parent=5 // pred_check
      _
    $region10: #{bhvit_attention_forward.3} parent=5 // pred_check_branch
      %116 = sbr.rel (%p113) target = $region12
    $region11: #{bhvit_attention_forward.3} parent=5 // pred_region
      %s117 = ssub.s32 %s9, 1
      // Predicated region
      $region13: #{bhvit_attention_forward.3} parent=11 // pred_check
        %p118 = pneg %p56
      $region14: #{bhvit_attention_forward.3} parent=11 // pred_check_branch
        %120 = sbr.rel (%p118) target = $region16
      $region15: #{bhvit_attention_forward.3} parent=11 // pred_region
        _
      $region16: #{bhvit_attention_forward.3} parent=11 // pred_fallthru
        _
      // Predicated region
      $region17: #{bhvit_attention_forward.3} parent=11 // pred_check
        %p121 = pneg %p77
      $region18: #{bhvit_attention_forward.3} parent=11 // pred_check_branch
        %123 = sbr.rel (%p121) target = $region20
      $region19: #{bhvit_attention_forward.3} parent=11 // pred_region
        _
      $region20: #{bhvit_attention_forward.3} parent=11 // pred_fallthru
        _
    $region12: #{bhvit_attention_forward.3} parent=5 // pred_fallthru
      _
    %p124 = scmp.lt.s32.totalorder %s9, 2
    // Predicated region
    $region21: #{bhvit_attention_forward.3} parent=5 // pred_check
      %p125 = pneg %p124
    $region22: #{bhvit_attention_forward.3} parent=5 // pred_check_branch
      %127 = sbr.rel (%p125) target = $region24
    $region23: #{bhvit_attention_forward.3} parent=5 // pred_region
      // Predicated region
      $region25: #{bhvit_attention_forward.3} parent=23 // pred_check
        %p128 = pneg %p29
      $region26: #{bhvit_attention_forward.3} parent=23 // pred_check_branch
        %130 = sbr.rel (%p128) target = $region28
      $region27: #{bhvit_attention_forward.3} parent=23 // pred_region
        %p131 = scmp.lt.s32.totalorder %s9, 1
        %s132 = scalar_select %p131, %s9, 1
        %s133 = smul.addr %s132, 25
        %s134 = smul.addr %s133, 8
        %s135 = scalar_lea.vmem %s0, %s134
      $region28: #{bhvit_attention_forward.3} parent=23 // pred_fallthru
        _
    $region24: #{bhvit_attention_forward.3} parent=5 // pred_fallthru
      _
    %p136 = scmp.le.s32.totalorder 1, %s9
    %p137 = scmp.lt.s32.totalorder %s9, 3
    %p138 = pnand %p136, %p137
    %p139 = pneg %p138
    // Predicated region
    $region29: #{bhvit_attention_forward.3} parent=5 // pred_check
      _
    $region30: #{bhvit_attention_forward.3} parent=5 // pred_check_branch
      %141 = sbr.rel (%p138) target = $region32
    $region31: #{bhvit_attention_forward.3} parent=5 // pred_region
      %s142 = ssub.s32 %s9, 1
      %p143 = scmp.lt.s32.totalorder %s14, 1
      %s144 = scalar_select %p143, %s14, 1
      %s145 = smul.addr %s144, 25
      %s146 = smul.addr %s145, 8
      %s147 = scalar_lea.vmem %s0, %s146
      %p148 = pneg %p35
      %p149 = pneg %p32
      %p150 = pneg %p56
      %p151 = pneg %p53
      %p152 = pneg %p77
      %p153 = pneg %p74
      %p154 = pneg %p103
      %p155 = pneg %p100
      %p156 = scmp.lt.s32.totalorder %s14, 1
      %s157 = scalar_select %p156, %s14, 1
      %s158 = smul.addr %s157, 25
      %s159 = smul.addr %s158, 8
      %s160 = scalar_lea.vmem %s3, %s159
      %p161 = scmp.lt.s32.totalorder %s14, 1
      %s162 = scalar_select %p161, %s14, 1
      %s163 = smul.addr %s162, 25
      %s164 = smul.addr %s163, 8
      %s165 = scalar_lea.vmem %s0, %s164
      %p166 = scmp.lt.s32.totalorder %s14, 1
      %s167 = scalar_select %p166, %s14, 1
      %s168 = smul.addr %s167, 25
      %s169 = smul.addr %s168, 8
      %s170 = scalar_lea.vmem %s3, %s169
      %v172 = vld [vmem:[%s165] sm:$0xff]
      %v173 = vld [vmem:[%s165 + $0x8] sm:$0xff]
      %v174 = vld [vmem:[%s165 + $0x10] sm:$0xff]
      %v175 = vld [vmem:[%s165 + $0x18] sm:$0xff]
      %v176 = vld [vmem:[%s165 + $0x20] sm:$0xff]
      %v177 = vld [vmem:[%s165 + $0x28] sm:$0xff]
      %v178 = vld [vmem:[%s165 + $0x30] sm:$0xff]
      %v179 = vld [vmem:[%s165 + $0x38] sm:$0xff]
      %v180 = vld [vmem:[%s165 + $0x40] sm:$0xff]
      %v181 = vld [vmem:[%s165 + $0x48] sm:$0xff]
      %v182 = vld [vmem:[%s165 + $0x50] sm:$0xff]
      %v183 = vld [vmem:[%s165 + $0x58] sm:$0xff]
      %v184 = vld [vmem:[%s165 + $0x60] sm:$0xff]
      %v185 = vld [vmem:[%s165 + $0x68] sm:$0xff]
      %v186 = vld [vmem:[%s165 + $0x70] sm:$0xff]
      %v187 = vld [vmem:[%s165 + $0x78] sm:$0xff]
      %v188 = vld [vmem:[%s165 + $0x80] sm:$0xff]
      %v189 = vld [vmem:[%s165 + $0x88] sm:$0xff]
      %v190 = vld [vmem:[%s165 + $0x90] sm:$0xff]
      %v191 = vld [vmem:[%s165 + $0x98] sm:$0xff]
      %v192 = vld [vmem:[%s165 + $0xa0] sm:$0xff]
      %v193 = vld [vmem:[%s165 + $0xa8] sm:$0xff]
      %v194 = vld [vmem:[%s165 + $0xb0] sm:$0xff]
      %v195 = vld [vmem:[%s165 + $0xb8] sm:$0xff]
      %v196 = vld [vmem:[%s165 + $0xc0] sm:$0xf]
      %v197 = vld [vmem:[%s2] sm:$0xff]
      %v198 = vpack.c.bf16 %v173, %v172
      %v199 = vpack.c.bf16 %v175, %v174
      %v200 = vpack.c.bf16 %v177, %v176
      %v201 = vpack.c.bf16 %v179, %v178
      %v202 = vpack.c.bf16 %v181, %v180
      %v203 = vpack.c.bf16 %v183, %v182
      %v204 = vpack.c.bf16 %v185, %v184
      %v205 = vpack.c.bf16 %v187, %v186
      %v206 = vpack.c.bf16 %v189, %v188
      %v207 = vpack.c.bf16 %v191, %v190
      %v208 = vpack.c.bf16 %v193, %v192
      %v209 = vpack.c.bf16 %v195, %v194
      %v210 = vpack.c.bf16 %v196, %v196
      %v211 = vld [vmem:[%s1] sm:$0xf]
      %v212 = vld [vmem:[%s1 + $0x4] sm:$0xf]
      %v213 = vld [vmem:[%s1 + $0x8] sm:$0xf]
      %v214 = vld [vmem:[%s1 + $0xc] sm:$0xf]
      %v215 = vlaneseq
      %v216 = vshrl.u32 %v215, 7
      %v217 = vsub.s32 0, %v216
      %v218 = vrot.slane %v197, %v217
      %v223 = vunpack.c.l.b16 %v211
      %v224 = vunpack.c.l.b16 %v212
      %v225 = vunpack.c.l.b16 %v213
      %v226 = vunpack.c.l.b16 %v214
      %v227 = vpack.c.b16 %v224, %v223
      %v228 = vpack.c.b16 %v226, %v225
      %vm231 = vcmask 261120
      %v233 = vsel %vm231, %v198, 0
      %v236 = vsel %vm231, %v199, 0
      %v239 = vsel %vm231, %v200, 0
      %v242 = vsel %vm231, %v201, 0
      %v245 = vsel %vm231, %v202, 0
      %v248 = vsel %vm231, %v203, 0
      %v251 = vsel %vm231, %v204, 0
      %v254 = vsel %vm231, %v205, 0
      %v257 = vsel %vm231, %v206, 0
      %v260 = vsel %vm231, %v207, 0
      %v263 = vsel %vm231, %v208, 0
      %v266 = vsel %vm231, %v209, 0
      %v269 = vsel %vm231, %v210, 0
      %271 = vmatprep.subr.bf16.mxu0 0
      %272 = vmatpush1.bf16.msra.mxu0 0
      %273 = vmatprep.subr.bf16.mxu0 0
      %274 = vmatpush1.bf16.msra.mxu0 0
      %275 = vmatprep.subr.bf16.mxu0 0
      %276 = vmatpush1.bf16.msra.mxu0 0
      %277 = vmatprep.subr.bf16.mxu0 0
      %278 = vmatpush1.bf16.msra.mxu0 0
      %279 = vmatprep.subr.bf16.mxu0 0
      %280 = vmatpush1.bf16.msra.mxu0 0
      %281 = vmatprep.subr.bf16.mxu0 0
      %282 = vmatpush1.bf16.msra.mxu0 0
      %283 = vmatprep.subr.bf16.mxu0 0
      %284 = vmatpush1.bf16.msra.mxu0 %v228
      %285 = vmatprep.subr.bf16.mxu0 0
      %286 = vmatpush1.bf16.msra.mxu0 %v227
      %287 = vmatprep.subr.bf16.mxu0 0
      %288 = vmatpush2.bf16.msra.mxu0 0
      %289 = vmatprep.subr.bf16.mxu0 0
      %290 = vmatpush2.bf16.msra.mxu0 0
      %291 = vmatprep.subr.bf16.mxu0 0
      %292 = vmatpush2.bf16.msra.mxu0 0
      %293 = vmatprep.subr.bf16.mxu0 0
      %294 = vmatpush2.bf16.msra.mxu0 0
      %295 = vmatprep.subr.bf16.mxu0 0
      %296 = vmatpush2.bf16.msra.mxu0 0
      %297 = vmatprep.subr.bf16.mxu0 0
      %298 = vmatpush2.bf16.msra.mxu0 0
      %299 = vmatprep.subr.bf16.mxu0 0
      %300 = vmatpush2.bf16.msra.mxu0 0
      %301 = vmatprep.subr.bf16.mxu0 0
      %302 = vmatpush2.bf16.msra.mxu0 0
      %303 = vmatprep.mubr.bf16.mxu0 0
      %304 = vmatmul.mubr.bf16.gmra.mxu0 %v233
      %v305 = vpop.f32.mrf.mxu0
      %v306 = vadd.f32 %v218, %v305
      %v307 = vpop.f32.mrf.mxu0
      %v308 = vpop.f32.mrf.mxu0
      %v309 = vadd.f32 %v218, %v308
      %v310 = vpop.f32.mrf.mxu0
      %311 = vmatprep.mubr.bf16.mxu0 0
      %312 = vmatmul.mubr.bf16.gmra.mxu0 %v236
      %v313 = vpop.f32.mrf.mxu0
      %v314 = vadd.f32 %v218, %v313
      %v315 = vpop.f32.mrf.mxu0
      %v316 = vpop.f32.mrf.mxu0
      %v317 = vadd.f32 %v218, %v316
      %v318 = vpop.f32.mrf.mxu0
      %319 = vmatprep.mubr.bf16.mxu0 0
      %320 = vmatmul.mubr.bf16.gmra.mxu0 %v239
      %v321 = vpop.f32.mrf.mxu0
      %v322 = vadd.f32 %v218, %v321
      %v323 = vpop.f32.mrf.mxu0
      %v324 = vpop.f32.mrf.mxu0
      %v325 = vadd.f32 %v218, %v324
      %v326 = vpop.f32.mrf.mxu0
      %327 = vmatprep.mubr.bf16.mxu0 0
      %328 = vmatmul.mubr.bf16.gmra.mxu0 %v242
      %v329 = vpop.f32.mrf.mxu0
      %v330 = vadd.f32 %v218, %v329
      %v331 = vpop.f32.mrf.mxu0
      %v332 = vpop.f32.mrf.mxu0
      %v333 = vadd.f32 %v218, %v332
      %v334 = vpop.f32.mrf.mxu0
      %335 = vmatprep.mubr.bf16.mxu0 0
      %336 = vmatmul.mubr.bf16.gmra.mxu0 %v245
      %v337 = vpop.f32.mrf.mxu0
      %v338 = vadd.f32 %v218, %v337
      %v339 = vpop.f32.mrf.mxu0
      %v340 = vpop.f32.mrf.mxu0
      %v341 = vadd.f32 %v218, %v340
      %v342 = vpop.f32.mrf.mxu0
      %343 = vmatprep.mubr.bf16.mxu0 0
      %344 = vmatmul.mubr.bf16.gmra.mxu0 %v248
      %v345 = vpop.f32.mrf.mxu0
      %v346 = vadd.f32 %v218, %v345
      %v347 = vpop.f32.mrf.mxu0
      %v348 = vpop.f32.mrf.mxu0
      %v349 = vadd.f32 %v218, %v348
      %v350 = vpop.f32.mrf.mxu0
      %351 = vmatprep.mubr.bf16.mxu0 0
      %352 = vmatmul.mubr.bf16.gmra.mxu0 %v251
      %v353 = vpop.f32.mrf.mxu0
      %v354 = vadd.f32 %v218, %v353
      %v355 = vpop.f32.mrf.mxu0
      %v356 = vpop.f32.mrf.mxu0
      %v357 = vadd.f32 %v218, %v356
      %v358 = vpop.f32.mrf.mxu0
      %359 = vmatprep.mubr.bf16.mxu0 0
      %360 = vmatmul.mubr.bf16.gmra.mxu0 %v254
      %v361 = vpop.f32.mrf.mxu0
      %v362 = vadd.f32 %v218, %v361
      %v363 = vpop.f32.mrf.mxu0
      %v364 = vpop.f32.mrf.mxu0
      %v365 = vadd.f32 %v218, %v364
      %v366 = vpop.f32.mrf.mxu0
      %367 = vmatprep.mubr.bf16.mxu0 0
      %368 = vmatmul.mubr.bf16.gmra.mxu0 %v257
      %v369 = vpop.f32.mrf.mxu0
      %v370 = vadd.f32 %v218, %v369
      %v371 = vpop.f32.mrf.mxu0
      %v372 = vpop.f32.mrf.mxu0
      %v373 = vadd.f32 %v218, %v372
      %v374 = vpop.f32.mrf.mxu0
      %375 = vmatprep.mubr.bf16.mxu0 0
      %376 = vmatmul.mubr.bf16.gmra.mxu0 %v260
      %v377 = vpop.f32.mrf.mxu0
      %v378 = vadd.f32 %v218, %v377
      %v379 = vpop.f32.mrf.mxu0
      %v380 = vpop.f32.mrf.mxu0
      %v381 = vadd.f32 %v218, %v380
      %v382 = vpop.f32.mrf.mxu0
      %383 = vmatprep.mubr.bf16.mxu0 0
      %384 = vmatmul.mubr.bf16.gmra.mxu0 %v263
      %v385 = vpop.f32.mrf.mxu0
      %v386 = vadd.f32 %v218, %v385
      %v387 = vpop.f32.mrf.mxu0
      %v388 = vpop.f32.mrf.mxu0
      %v389 = vadd.f32 %v218, %v388
      %v390 = vpop.f32.mrf.mxu0
      %391 = vmatprep.mubr.bf16.mxu0 0
      %392 = vmatmul.mubr.bf16.gmra.mxu0 %v266
      %v393 = vpop.f32.mrf.mxu0
      %v394 = vadd.f32 %v218, %v393
      %v395 = vpop.f32.mrf.mxu0
      %v396 = vpop.f32.mrf.mxu0
      %v397 = vadd.f32 %v218, %v396
      %v398 = vpop.f32.mrf.mxu0
      %399 = vmatprep.mubr.bf16.mxu0 0
      %400 = vmatmul.mubr.bf16.gmra.mxu0 %v269
      %v401 = vpop.f32.mrf.mxu0
      %v402 = vadd.f32 %v218, %v401
      %v403 = vpop.f32.mrf.mxu0
      %v404 = vpop.f32.mrf.mxu0
      %v405 = vpop.f32.mrf.mxu0
      %406 = vdwg.mxu0
      %v407 = vsel %vm231, %v306, 0.0
      %408 = vadd.xlane.f32.xlu0 %v407
      %v409 = vpop.xlane.xlu0 %408
      %v410 = vsel %vm231, %v309, 0.0
      %411 = vadd.xlane.f32.xlu0 %v410
      %v412 = vpop.xlane.xlu0 %411
      %v413 = vsel %vm231, %v314, 0.0
      %414 = vadd.xlane.f32.xlu0 %v413
      %v415 = vpop.xlane.xlu0 %414
      %v416 = vsel %vm231, %v317, 0.0
      %417 = vadd.xlane.f32.xlu0 %v416
      %v418 = vpop.xlane.xlu0 %417
      %v419 = vsel %vm231, %v322, 0.0
      %420 = vadd.xlane.f32.xlu0 %v419
      %v421 = vpop.xlane.xlu0 %420
      %v422 = vsel %vm231, %v325, 0.0
      %423 = vadd.xlane.f32.xlu0 %v422
      %v424 = vpop.xlane.xlu0 %423
      %v425 = vsel %vm231, %v330, 0.0
      %426 = vadd.xlane.f32.xlu0 %v425
      %v427 = vpop.xlane.xlu0 %426
      %v428 = vsel %vm231, %v333, 0.0
      %429 = vadd.xlane.f32.xlu0 %v428
      %v430 = vpop.xlane.xlu0 %429
      %v431 = vsel %vm231, %v338, 0.0
      %432 = vadd.xlane.f32.xlu0 %v431
      %v433 = vpop.xlane.xlu0 %432
      %v434 = vsel %vm231, %v341, 0.0
      %435 = vadd.xlane.f32.xlu0 %v434
      %v436 = vpop.xlane.xlu0 %435
      %v437 = vsel %vm231, %v346, 0.0
      %438 = vadd.xlane.f32.xlu0 %v437
      %v439 = vpop.xlane.xlu0 %438
      %v440 = vsel %vm231, %v349, 0.0
      %441 = vadd.xlane.f32.xlu0 %v440
      %v442 = vpop.xlane.xlu0 %441
      %v443 = vsel %vm231, %v354, 0.0
      %444 = vadd.xlane.f32.xlu0 %v443
      %v445 = vpop.xlane.xlu0 %444
      %v446 = vsel %vm231, %v357, 0.0
      %447 = vadd.xlane.f32.xlu0 %v446
      %v448 = vpop.xlane.xlu0 %447
      %v449 = vsel %vm231, %v362, 0.0
      %450 = vadd.xlane.f32.xlu0 %v449
      %v451 = vpop.xlane.xlu0 %450
      %v452 = vsel %vm231, %v365, 0.0
      %453 = vadd.xlane.f32.xlu0 %v452
      %v454 = vpop.xlane.xlu0 %453
      %v455 = vsel %vm231, %v370, 0.0
      %456 = vadd.xlane.f32.xlu0 %v455
      %v457 = vpop.xlane.xlu0 %456
      %v458 = vsel %vm231, %v373, 0.0
      %459 = vadd.xlane.f32.xlu0 %v458
      %v460 = vpop.xlane.xlu0 %459
      %v461 = vsel %vm231, %v378, 0.0
      %462 = vadd.xlane.f32.xlu0 %v461
      %v463 = vpop.xlane.xlu0 %462
      %v464 = vsel %vm231, %v381, 0.0
      %465 = vadd.xlane.f32.xlu0 %v464
      %v466 = vpop.xlane.xlu0 %465
      %v467 = vsel %vm231, %v386, 0.0
      %468 = vadd.xlane.f32.xlu0 %v467
      %v469 = vpop.xlane.xlu0 %468
      %v470 = vsel %vm231, %v389, 0.0
      %471 = vadd.xlane.f32.xlu0 %v470
      %v472 = vpop.xlane.xlu0 %471
      %v473 = vsel %vm231, %v394, 0.0
      %474 = vadd.xlane.f32.xlu0 %v473
      %v475 = vpop.xlane.xlu0 %474
      %v476 = vsel %vm231, %v397, 0.0
      %477 = vadd.xlane.f32.xlu0 %v476
      %v478 = vpop.xlane.xlu0 %477
      %vm479 = vcmask 257024
      %v480 = vsel %vm479, %v402, 0.0
      %481 = vadd.xlane.f32.xlu0 %v480
      %v482 = vpop.xlane.xlu0 %481
      %v483 = vrcp.pop 32.0
      %v484 = vmul.f32 %v409, %v483
      %v485 = vmul.f32 %v412, %v483
      %v486 = vmul.f32 %v415, %v483
      %v487 = vmul.f32 %v418, %v483
      %v488 = vmul.f32 %v421, %v483
      %v489 = vmul.f32 %v424, %v483
      %v490 = vmul.f32 %v427, %v483
      %v491 = vmul.f32 %v430, %v483
      %v492 = vmul.f32 %v433, %v483
      %v493 = vmul.f32 %v436, %v483
      %v494 = vmul.f32 %v439, %v483
      %v495 = vmul.f32 %v442, %v483
      %v496 = vmul.f32 %v445, %v483
      %v497 = vmul.f32 %v448, %v483
      %v498 = vmul.f32 %v451, %v483
      %v499 = vmul.f32 %v454, %v483
      %v500 = vmul.f32 %v457, %v483
      %v501 = vmul.f32 %v460, %v483
      %v502 = vmul.f32 %v463, %v483
      %v503 = vmul.f32 %v466, %v483
      %v504 = vmul.f32 %v469, %v483
      %v505 = vmul.f32 %v472, %v483
      %v506 = vmul.f32 %v475, %v483
      %v507 = vmul.f32 %v478, %v483
      %v508 = vmul.f32 %v482, %v483
      %v509 = vsub.f32 %v306, %v484
      %v510 = vsub.f32 %v309, %v485
      %v511 = vsub.f32 %v314, %v486
      %v512 = vsub.f32 %v317, %v487
      %v513 = vsub.f32 %v322, %v488
      %v514 = vsub.f32 %v325, %v489
      %v515 = vsub.f32 %v330, %v490
      %v516 = vsub.f32 %v333, %v491
      %v517 = vsub.f32 %v338, %v492
      %v518 = vsub.f32 %v341, %v493
      %v519 = vsub.f32 %v346, %v494
      %v520 = vsub.f32 %v349, %v495
      %v521 = vsub.f32 %v354, %v496
      %v522 = vsub.f32 %v357, %v497
      %v523 = vsub.f32 %v362, %v498
      %v524 = vsub.f32 %v365, %v499
      %v525 = vsub.f32 %v370, %v500
      %v526 = vsub.f32 %v373, %v501
      %v527 = vsub.f32 %v378, %v502
      %v528 = vsub.f32 %v381, %v503
      %v529 = vsub.f32 %v386, %v504
      %v530 = vsub.f32 %v389, %v505
      %v531 = vsub.f32 %v394, %v506
      %v532 = vsub.f32 %v397, %v507
      %v533 = vsub.f32 %v402, %v508
      %v534 = vmul.f32 %v509, %v509
      %v535 = vmul.f32 %v510, %v510
      %v536 = vmul.f32 %v511, %v511
      %v537 = vmul.f32 %v512, %v512
      %v538 = vmul.f32 %v513, %v513
      %v539 = vmul.f32 %v514, %v514
      %v540 = vmul.f32 %v515, %v515
      %v541 = vmul.f32 %v516, %v516
      %v542 = vmul.f32 %v517, %v517
      %v543 = vmul.f32 %v518, %v518
      %v544 = vmul.f32 %v519, %v519
      %v545 = vmul.f32 %v520, %v520
      %v546 = vmul.f32 %v521, %v521
      %v547 = vmul.f32 %v522, %v522
      %v548 = vmul.f32 %v523, %v523
      %v549 = vmul.f32 %v524, %v524
      %v550 = vmul.f32 %v525, %v525
      %v551 = vmul.f32 %v526, %v526
      %v552 = vmul.f32 %v527, %v527
      %v553 = vmul.f32 %v528, %v528
      %v554 = vmul.f32 %v529, %v529
      %v555 = vmul.f32 %v530, %v530
      %v556 = vmul.f32 %v531, %v531
      %v557 = vmul.f32 %v532, %v532
      %v558 = vmul.f32 %v533, %v533
      %v559 = vsel %vm231, %v534, 0.0
      %560 = vadd.xlane.f32.xlu0 %v559
      %v561 = vpop.xlane.xlu0 %560
      %v562 = vsel %vm231, %v535, 0.0
      %563 = vadd.xlane.f32.xlu0 %v562
      %v564 = vpop.xlane.xlu0 %563
      %v565 = vsel %vm231, %v536, 0.0
      %566 = vadd.xlane.f32.xlu0 %v565
      %v567 = vpop.xlane.xlu0 %566
      %v568 = vsel %vm231, %v537, 0.0
      %569 = vadd.xlane.f32.xlu0 %v568
      %v570 = vpop.xlane.xlu0 %569
      %v571 = vsel %vm231, %v538, 0.0
      %572 = vadd.xlane.f32.xlu0 %v571
      %v573 = vpop.xlane.xlu0 %572
      %v574 = vsel %vm231, %v539, 0.0
      %575 = vadd.xlane.f32.xlu0 %v574
      %v576 = vpop.xlane.xlu0 %575
      %v577 = vsel %vm231, %v540, 0.0
      %578 = vadd.xlane.f32.xlu0 %v577
      %v579 = vpop.xlane.xlu0 %578
      %v580 = vsel %vm231, %v541, 0.0
      %581 = vadd.xlane.f32.xlu0 %v580
      %v582 = vpop.xlane.xlu0 %581
      %v583 = vsel %vm231, %v542, 0.0
      %584 = vadd.xlane.f32.xlu0 %v583
      %v585 = vpop.xlane.xlu0 %584
      %v586 = vsel %vm231, %v543, 0.0
      %587 = vadd.xlane.f32.xlu0 %v586
      %v588 = vpop.xlane.xlu0 %587
      %v589 = vsel %vm231, %v544, 0.0
      %590 = vadd.xlane.f32.xlu0 %v589
      %v591 = vpop.xlane.xlu0 %590
      %v592 = vsel %vm231, %v545, 0.0
      %593 = vadd.xlane.f32.xlu0 %v592
      %v594 = vpop.xlane.xlu0 %593
      %v595 = vsel %vm231, %v546, 0.0
      %596 = vadd.xlane.f32.xlu0 %v595
      %v597 = vpop.xlane.xlu0 %596
      %v598 = vsel %vm231, %v547, 0.0
      %599 = vadd.xlane.f32.xlu0 %v598
      %v600 = vpop.xlane.xlu0 %599
      %v601 = vsel %vm231, %v548, 0.0
      %602 = vadd.xlane.f32.xlu0 %v601
      %v603 = vpop.xlane.xlu0 %602
      %v604 = vsel %vm231, %v549, 0.0
      %605 = vadd.xlane.f32.xlu0 %v604
      %v606 = vpop.xlane.xlu0 %605
      %v607 = vsel %vm231, %v550, 0.0
      %608 = vadd.xlane.f32.xlu0 %v607
      %v609 = vpop.xlane.xlu0 %608
      %v610 = vsel %vm231, %v551, 0.0
      %611 = vadd.xlane.f32.xlu0 %v610
      %v612 = vpop.xlane.xlu0 %611
      %v613 = vsel %vm231, %v552, 0.0
      %614 = vadd.xlane.f32.xlu0 %v613
      %v615 = vpop.xlane.xlu0 %614
      %v616 = vsel %vm231, %v553, 0.0
      %617 = vadd.xlane.f32.xlu0 %v616
      %v618 = vpop.xlane.xlu0 %617
      %v619 = vsel %vm231, %v554, 0.0
      %620 = vadd.xlane.f32.xlu0 %v619
      %v621 = vpop.xlane.xlu0 %620
      %v622 = vsel %vm231, %v555, 0.0
      %623 = vadd.xlane.f32.xlu0 %v622
      %v624 = vpop.xlane.xlu0 %623
      %v625 = vsel %vm231, %v556, 0.0
      %626 = vadd.xlane.f32.xlu0 %v625
      %v627 = vpop.xlane.xlu0 %626
      %v628 = vsel %vm231, %v557, 0.0
      %629 = vadd.xlane.f32.xlu0 %v628
      %v630 = vpop.xlane.xlu0 %629
      %v631 = vsel %vm479, %v558, 0.0
      %632 = vadd.xlane.f32.xlu0 %v631
      %v633 = vpop.xlane.xlu0 %632
      %v634 = vmul.f32 %v561, %v483
      %v635 = vmul.f32 %v564, %v483
      %v636 = vmul.f32 %v567, %v483
      %v637 = vmul.f32 %v570, %v483
      %v638 = vmul.f32 %v573, %v483
      %v639 = vmul.f32 %v576, %v483
      %v640 = vmul.f32 %v579, %v483
      %v641 = vmul.f32 %v582, %v483
      %v642 = vmul.f32 %v585, %v483
      %v643 = vmul.f32 %v588, %v483
      %v644 = vmul.f32 %v591, %v483
      %v645 = vmul.f32 %v594, %v483
      %v646 = vmul.f32 %v597, %v483
      %v647 = vmul.f32 %v600, %v483
      %v648 = vmul.f32 %v603, %v483
      %v649 = vmul.f32 %v606, %v483
      %v650 = vmul.f32 %v609, %v483
      %v651 = vmul.f32 %v612, %v483
      %v652 = vmul.f32 %v615, %v483
      %v653 = vmul.f32 %v618, %v483
      %v654 = vmul.f32 %v621, %v483
      %v655 = vmul.f32 %v624, %v483
      %v656 = vmul.f32 %v627, %v483
      %v657 = vmul.f32 %v630, %v483
      %v658 = vmul.f32 %v633, %v483
      %v659 = vadd.f32 %v634, 1e-12
      %v660 = vadd.f32 %v635, 1e-12
      %v661 = vadd.f32 %v636, 1e-12
      %v662 = vadd.f32 %v637, 1e-12
      %v663 = vadd.f32 %v638, 1e-12
      %v664 = vadd.f32 %v639, 1e-12
      %v665 = vadd.f32 %v640, 1e-12
      %v666 = vadd.f32 %v641, 1e-12
      %v667 = vadd.f32 %v642, 1e-12
      %v668 = vadd.f32 %v643, 1e-12
      %v669 = vadd.f32 %v644, 1e-12
      %v670 = vadd.f32 %v645, 1e-12
      %v671 = vadd.f32 %v646, 1e-12
      %v672 = vadd.f32 %v647, 1e-12
      %v673 = vadd.f32 %v648, 1e-12
      %v674 = vadd.f32 %v649, 1e-12
      %v675 = vadd.f32 %v650, 1e-12
      %v676 = vadd.f32 %v651, 1e-12
      %v677 = vadd.f32 %v652, 1e-12
      %v678 = vadd.f32 %v653, 1e-12
      %v679 = vadd.f32 %v654, 1e-12
      %v680 = vadd.f32 %v655, 1e-12
      %v681 = vadd.f32 %v656, 1e-12
      %v682 = vadd.f32 %v657, 1e-12
      %v683 = vadd.f32 %v658, 1e-12
      %v684 = vrsqrt.pop %v659
      %v685 = vrsqrt.pop %v660
      %v686 = vrsqrt.pop %v661
      %v687 = vrsqrt.pop %v662
      %v688 = vrsqrt.pop %v663
      %v689 = vrsqrt.pop %v664
      %v690 = vrsqrt.pop %v665
      %v691 = vrsqrt.pop %v666
      %v692 = vrsqrt.pop %v667
      %v693 = vrsqrt.pop %v668
      %v694 = vrsqrt.pop %v669
      %v695 = vrsqrt.pop %v670
      %v696 = vrsqrt.pop %v671
      %v697 = vrsqrt.pop %v672
      %v698 = vrsqrt.pop %v673
      %v699 = vrsqrt.pop %v674
      %v700 = vrsqrt.pop %v675
      %v701 = vrsqrt.pop %v676
      %v702 = vrsqrt.pop %v677
      %v703 = vrsqrt.pop %v678
      %v704 = vrsqrt.pop %v679
      %v705 = vrsqrt.pop %v680
      %v706 = vrsqrt.pop %v681
      %v707 = vrsqrt.pop %v682
      %v708 = vrsqrt.pop %v683
      %v709 = vmul.f32 %v509, %v684
      %v710 = vmul.f32 %v510, %v685
      %v711 = vmul.f32 %v511, %v686
      %v712 = vmul.f32 %v512, %v687
      %v713 = vmul.f32 %v513, %v688
      %v714 = vmul.f32 %v514, %v689
      %v715 = vmul.f32 %v515, %v690
      %v716 = vmul.f32 %v516, %v691
      %v717 = vmul.f32 %v517, %v692
      %v718 = vmul.f32 %v518, %v693
      %v719 = vmul.f32 %v519, %v694
      %v720 = vmul.f32 %v520, %v695
      %v721 = vmul.f32 %v521, %v696
      %v722 = vmul.f32 %v522, %v697
      %v723 = vmul.f32 %v523, %v698
      %v724 = vmul.f32 %v524, %v699
      %v725 = vmul.f32 %v525, %v700
      %v726 = vmul.f32 %v526, %v701
      %v727 = vmul.f32 %v527, %v702
      %v728 = vmul.f32 %v528, %v703
      %v729 = vmul.f32 %v529, %v704
      %v730 = vmul.f32 %v530, %v705
      %v731 = vmul.f32 %v531, %v706
      %v732 = vmul.f32 %v532, %v707
      %v733 = vmul.f32 %v533, %v708
      %v734 = vlaneseq
      %v735 = vshrl.u32 %v734, 7
      %v736 = vsub.s32 1, %v735
      %v737 = vrot.slane %v197, %v736
      %v738 = vmul.f32 %v709, %v737
      %v739 = vmul.f32 %v710, %v737
      %v740 = vmul.f32 %v711, %v737
      %v741 = vmul.f32 %v712, %v737
      %v742 = vmul.f32 %v713, %v737
      %v743 = vmul.f32 %v714, %v737
      %v744 = vmul.f32 %v715, %v737
      %v745 = vmul.f32 %v716, %v737
      %v746 = vmul.f32 %v717, %v737
      %v747 = vmul.f32 %v718, %v737
      %v748 = vmul.f32 %v719, %v737
      %v749 = vmul.f32 %v720, %v737
      %v750 = vmul.f32 %v721, %v737
      %v751 = vmul.f32 %v722, %v737
      %v752 = vmul.f32 %v723, %v737
      %v753 = vmul.f32 %v724, %v737
      %v754 = vmul.f32 %v725, %v737
      %v755 = vmul.f32 %v726, %v737
      %v756 = vmul.f32 %v727, %v737
      %v757 = vmul.f32 %v728, %v737
      %v758 = vmul.f32 %v729, %v737
      %v759 = vmul.f32 %v730, %v737
      %v760 = vmul.f32 %v731, %v737
      %v761 = vmul.f32 %v732, %v737
      %v762 = vmul.f32 %v733, %v737
      %v763 = vlaneseq
      %v764 = vshrl.u32 %v763, 7
      %v765 = vsub.s32 2, %v764
      %v766 = vrot.slane %v197, %v765
      %v767 = vadd.f32 %v738, %v766
      %v768 = vadd.f32 %v739, %v766
      %v769 = vadd.f32 %v740, %v766
      %v770 = vadd.f32 %v741, %v766
      %v771 = vadd.f32 %v742, %v766
      %v772 = vadd.f32 %v743, %v766
      %v773 = vadd.f32 %v744, %v766
      %v774 = vadd.f32 %v745, %v766
      %v775 = vadd.f32 %v746, %v766
      %v776 = vadd.f32 %v747, %v766
      %v777 = vadd.f32 %v748, %v766
      %v778 = vadd.f32 %v749, %v766
      %v779 = vadd.f32 %v750, %v766
      %v780 = vadd.f32 %v751, %v766
      %v781 = vadd.f32 %v752, %v766
      %v782 = vadd.f32 %v753, %v766
      %v783 = vadd.f32 %v754, %v766
      %v784 = vadd.f32 %v755, %v766
      %v785 = vadd.f32 %v756, %v766
      %v786 = vadd.f32 %v757, %v766
      %v787 = vadd.f32 %v758, %v766
      %v788 = vadd.f32 %v759, %v766
      %v789 = vadd.f32 %v760, %v766
      %v790 = vadd.f32 %v761, %v766
      %v791 = vadd.f32 %v762, %v766
      %v792 = vadd.f32 %v767, %v172
      %v793 = vadd.f32 %v768, %v173
      %v794 = vadd.f32 %v769, %v174
      %v795 = vadd.f32 %v770, %v175
      %v796 = vadd.f32 %v771, %v176
      %v797 = vadd.f32 %v772, %v177
      %v798 = vadd.f32 %v773, %v178
      %v799 = vadd.f32 %v774, %v179
      %v800 = vadd.f32 %v775, %v180
      %v801 = vadd.f32 %v776, %v181
      %v802 = vadd.f32 %v777, %v182
      %v803 = vadd.f32 %v778, %v183
      %v804 = vadd.f32 %v779, %v184
      %v805 = vadd.f32 %v780, %v185
      %v806 = vadd.f32 %v781, %v186
      %v807 = vadd.f32 %v782, %v187
      %v808 = vadd.f32 %v783, %v188
      %v809 = vadd.f32 %v784, %v189
      %v810 = vadd.f32 %v785, %v190
      %v811 = vadd.f32 %v786, %v191
      %v812 = vadd.f32 %v787, %v192
      %v813 = vadd.f32 %v788, %v193
      %v814 = vadd.f32 %v789, %v194
      %v815 = vadd.f32 %v790, %v195
      %v816 = vadd.f32 %v791, %v196
      %v817 = vlaneseq
      %v818 = vshrl.u32 %v817, 7
      %v819 = vsub.s32 3, %v818
      %v820 = vrot.slane %v197, %v819
      %v821 = vsub.f32 %v792, %v820
      %v822 = vsub.f32 %v793, %v820
      %v823 = vsub.f32 %v794, %v820
      %v824 = vsub.f32 %v795, %v820
      %v825 = vsub.f32 %v796, %v820
      %v826 = vsub.f32 %v797, %v820
      %v827 = vsub.f32 %v798, %v820
      %v828 = vsub.f32 %v799, %v820
      %v829 = vsub.f32 %v800, %v820
      %v830 = vsub.f32 %v801, %v820
      %v831 = vsub.f32 %v802, %v820
      %v832 = vsub.f32 %v803, %v820
      %v833 = vsub.f32 %v804, %v820
      %v834 = vsub.f32 %v805, %v820
      %v835 = vsub.f32 %v806, %v820
      %v836 = vsub.f32 %v807, %v820
      %v837 = vsub.f32 %v808, %v820
      %v838 = vsub.f32 %v809, %v820
      %v839 = vsub.f32 %v810, %v820
      %v840 = vsub.f32 %v811, %v820
      %v841 = vsub.f32 %v812, %v820
      %v842 = vsub.f32 %v813, %v820
      %v843 = vsub.f32 %v814, %v820
      %v844 = vsub.f32 %v815, %v820
      %v845 = vsub.f32 %v816, %v820
      %vm846 = vcmp.ge.f32.partialorder %v821, 0.0
      %vm847 = vcmp.ge.f32.partialorder %v822, 0.0
      %vm848 = vcmp.ge.f32.partialorder %v823, 0.0
      %vm849 = vcmp.ge.f32.partialorder %v824, 0.0
      %vm850 = vcmp.ge.f32.partialorder %v825, 0.0
      %vm851 = vcmp.ge.f32.partialorder %v826, 0.0
      %vm852 = vcmp.ge.f32.partialorder %v827, 0.0
      %vm853 = vcmp.ge.f32.partialorder %v828, 0.0
      %vm854 = vcmp.ge.f32.partialorder %v829, 0.0
      %vm855 = vcmp.ge.f32.partialorder %v830, 0.0
      %vm856 = vcmp.ge.f32.partialorder %v831, 0.0
      %vm857 = vcmp.ge.f32.partialorder %v832, 0.0
      %vm858 = vcmp.ge.f32.partialorder %v833, 0.0
      %vm859 = vcmp.ge.f32.partialorder %v834, 0.0
      %vm860 = vcmp.ge.f32.partialorder %v835, 0.0
      %vm861 = vcmp.ge.f32.partialorder %v836, 0.0
      %vm862 = vcmp.ge.f32.partialorder %v837, 0.0
      %vm863 = vcmp.ge.f32.partialorder %v838, 0.0
      %vm864 = vcmp.ge.f32.partialorder %v839, 0.0
      %vm865 = vcmp.ge.f32.partialorder %v840, 0.0
      %vm866 = vcmp.ge.f32.partialorder %v841, 0.0
      %vm867 = vcmp.ge.f32.partialorder %v842, 0.0
      %vm868 = vcmp.ge.f32.partialorder %v843, 0.0
      %vm869 = vcmp.ge.f32.partialorder %v844, 0.0
      %vm870 = vcmp.ge.f32.partialorder %v845, 0.0
      %v871 = vlaneseq
      %v872 = vshrl.u32 %v871, 7
      %v873 = vsub.s32 4, %v872
      %v874 = vrot.slane %v197, %v873
      %v875 = vmul.f32 %v874, %v821
      %v876 = vmul.f32 %v874, %v822
      %v877 = vmul.f32 %v874, %v823
      %v878 = vmul.f32 %v874, %v824
      %v879 = vmul.f32 %v874, %v825
      %v880 = vmul.f32 %v874, %v826
      %v881 = vmul.f32 %v874, %v827
      %v882 = vmul.f32 %v874, %v828
      %v883 = vmul.f32 %v874, %v829
      %v884 = vmul.f32 %v874, %v830
      %v885 = vmul.f32 %v874, %v831
      %v886 = vmul.f32 %v874, %v832
      %v887 = vmul.f32 %v874, %v833
      %v888 = vmul.f32 %v874, %v834
      %v889 = vmul.f32 %v874, %v835
      %v890 = vmul.f32 %v874, %v836
      %v891 = vmul.f32 %v874, %v837
      %v892 = vmul.f32 %v874, %v838
      %v893 = vmul.f32 %v874, %v839
      %v894 = vmul.f32 %v874, %v840
      %v895 = vmul.f32 %v874, %v841
      %v896 = vmul.f32 %v874, %v842
      %v897 = vmul.f32 %v874, %v843
      %v898 = vmul.f32 %v874, %v844
      %v899 = vmul.f32 %v874, %v845
      %v900 = vsel %vm846, %v821, %v875
      %v901 = vsel %vm847, %v822, %v876
      %v902 = vsel %vm848, %v823, %v877
      %v903 = vsel %vm849, %v824, %v878
      %v904 = vsel %vm850, %v825, %v879
      %v905 = vsel %vm851, %v826, %v880
      %v906 = vsel %vm852, %v827, %v881
      %v907 = vsel %vm853, %v828, %v882
      %v908 = vsel %vm854, %v829, %v883
      %v909 = vsel %vm855, %v830, %v884
      %v910 = vsel %vm856, %v831, %v885
      %v911 = vsel %vm857, %v832, %v886
      %v912 = vsel %vm858, %v833, %v887
      %v913 = vsel %vm859, %v834, %v888
      %v914 = vsel %vm860, %v835, %v889
      %v915 = vsel %vm861, %v836, %v890
      %v916 = vsel %vm862, %v837, %v891
      %v917 = vsel %vm863, %v838, %v892
      %v918 = vsel %vm864, %v839, %v893
      %v919 = vsel %vm865, %v840, %v894
      %v920 = vsel %vm866, %v841, %v895
      %v921 = vsel %vm867, %v842, %v896
      %v922 = vsel %vm868, %v843, %v897
      %v923 = vsel %vm869, %v844, %v898
      %v924 = vsel %vm870, %v845, %v899
      %v925 = vlaneseq
      %v926 = vshrl.u32 %v925, 7
      %v927 = vsub.s32 5, %v926
      %v928 = vrot.slane %v197, %v927
      %v929 = vadd.f32 %v900, %v928
      %v930 = vadd.f32 %v901, %v928
      %v931 = vadd.f32 %v902, %v928
      %v932 = vadd.f32 %v903, %v928
      %v933 = vadd.f32 %v904, %v928
      %v934 = vadd.f32 %v905, %v928
      %v935 = vadd.f32 %v906, %v928
      %v936 = vadd.f32 %v907, %v928
      %v937 = vadd.f32 %v908, %v928
      %v938 = vadd.f32 %v909, %v928
      %v939 = vadd.f32 %v910, %v928
      %v940 = vadd.f32 %v911, %v928
      %v941 = vadd.f32 %v912, %v928
      %v942 = vadd.f32 %v913, %v928
      %v943 = vadd.f32 %v914, %v928
      %v944 = vadd.f32 %v915, %v928
      %v945 = vadd.f32 %v916, %v928
      %v946 = vadd.f32 %v917, %v928
      %v947 = vadd.f32 %v918, %v928
      %v948 = vadd.f32 %v919, %v928
      %v949 = vadd.f32 %v920, %v928
      %v950 = vadd.f32 %v921, %v928
      %v951 = vadd.f32 %v922, %v928
      %v952 = vadd.f32 %v923, %v928
      %v953 = vadd.f32 %v924, %v928
      %v954 = vlaneseq
      %v955 = vshrl.u32 %v954, 7
      %v956 = vsub.s32 6, %v955
      %v957 = vrot.slane %v197, %v956
      %v958 = vmul.f32 %v929, %v957
      %v959 = vmul.f32 %v930, %v957
      %v960 = vmul.f32 %v931, %v957
      %v961 = vmul.f32 %v932, %v957
      %v962 = vmul.f32 %v933, %v957
      %v963 = vmul.f32 %v934, %v957
      %v964 = vmul.f32 %v935, %v957
      %v965 = vmul.f32 %v936, %v957
      %v966 = vmul.f32 %v937, %v957
      %v967 = vmul.f32 %v938, %v957
      %v968 = vmul.f32 %v939, %v957
      %v969 = vmul.f32 %v940, %v957
      %v970 = vmul.f32 %v941, %v957
      %v971 = vmul.f32 %v942, %v957
      %v972 = vmul.f32 %v943, %v957
      %v973 = vmul.f32 %v944, %v957
      %v974 = vmul.f32 %v945, %v957
      %v975 = vmul.f32 %v946, %v957
      %v976 = vmul.f32 %v947, %v957
      %v977 = vmul.f32 %v948, %v957
      %v978 = vmul.f32 %v949, %v957
      %v979 = vmul.f32 %v950, %v957
      %v980 = vmul.f32 %v951, %v957
      %v981 = vmul.f32 %v952, %v957
      %v982 = vmul.f32 %v953, %v957
      %v983 = vlaneseq
      %v984 = vshrl.u32 %v983, 7
      %v985 = vsub.s32 7, %v984
      %v986 = vrot.slane %v197, %v985
      %v987 = vadd.f32 %v958, %v986
      %v988 = vadd.f32 %v959, %v986
      %v989 = vadd.f32 %v960, %v986
      %v990 = vadd.f32 %v961, %v986
      %v991 = vadd.f32 %v962, %v986
      %v992 = vadd.f32 %v963, %v986
      %v993 = vadd.f32 %v964, %v986
      %v994 = vadd.f32 %v965, %v986
      %v995 = vadd.f32 %v966, %v986
      %v996 = vadd.f32 %v967, %v986
      %v997 = vadd.f32 %v968, %v986
      %v998 = vadd.f32 %v969, %v986
      %v999 = vadd.f32 %v970, %v986
      %v1000 = vadd.f32 %v971, %v986
      %v1001 = vadd.f32 %v972, %v986
      %v1002 = vadd.f32 %v973, %v986
      %v1003 = vadd.f32 %v974, %v986
      %v1004 = vadd.f32 %v975, %v986
      %v1005 = vadd.f32 %v976, %v986
      %v1006 = vadd.f32 %v977, %v986
      %v1007 = vadd.f32 %v978, %v986
      %v1008 = vadd.f32 %v979, %v986
      %v1009 = vadd.f32 %v980, %v986
      %v1010 = vadd.f32 %v981, %v986
      %v1011 = vadd.f32 %v982, %v986
      %1012 = vst.msk [vmem:[%s170] sm:$0xff] %vm231, %v987
      %1013 = vst.msk [vmem:[%s170 + $0x8] sm:$0xff] %vm231, %v988
      %1014 = vst.msk [vmem:[%s170 + $0x10] sm:$0xff] %vm231, %v989
      %1015 = vst.msk [vmem:[%s170 + $0x18] sm:$0xff] %vm231, %v990
      %1016 = vst.msk [vmem:[%s170 + $0x20] sm:$0xff] %vm231, %v991
      %1017 = vst.msk [vmem:[%s170 + $0x28] sm:$0xff] %vm231, %v992
      %1018 = vst.msk [vmem:[%s170 + $0x30] sm:$0xff] %vm231, %v993
      %1019 = vst.msk [vmem:[%s170 + $0x38] sm:$0xff] %vm231, %v994
      %1020 = vst.msk [vmem:[%s170 + $0x40] sm:$0xff] %vm231, %v995
      %1021 = vst.msk [vmem:[%s170 + $0x48] sm:$0xff] %vm231, %v996
      %1022 = vst.msk [vmem:[%s170 + $0x50] sm:$0xff] %vm231, %v997
      %1023 = vst.msk [vmem:[%s170 + $0x58] sm:$0xff] %vm231, %v998
      %1024 = vst.msk [vmem:[%s170 + $0x60] sm:$0xff] %vm231, %v999
      %1025 = vst.msk [vmem:[%s170 + $0x68] sm:$0xff] %vm231, %v1000
      %1026 = vst.msk [vmem:[%s170 + $0x70] sm:$0xff] %vm231, %v1001
      %1027 = vst.msk [vmem:[%s170 + $0x78] sm:$0xff] %vm231, %v1002
      %1028 = vst.msk [vmem:[%s170 + $0x80] sm:$0xff] %vm231, %v1003
      %1029 = vst.msk [vmem:[%s170 + $0x88] sm:$0xff] %vm231, %v1004
      %1030 = vst.msk [vmem:[%s170 + $0x90] sm:$0xff] %vm231, %v1005
      %1031 = vst.msk [vmem:[%s170 + $0x98] sm:$0xff] %vm231, %v1006
      %1032 = vst.msk [vmem:[%s170 + $0xa0] sm:$0xff] %vm231, %v1007
      %1033 = vst.msk [vmem:[%s170 + $0xa8] sm:$0xff] %vm231, %v1008
      %1034 = vst.msk [vmem:[%s170 + $0xb0] sm:$0xff] %vm231, %v1009
      %1035 = vst.msk [vmem:[%s170 + $0xb8] sm:$0xff] %vm231, %v1010
      %1036 = vst.msk [vmem:[%s170 + $0xc0] sm:$0xf] %vm479, %v1011
      %p1037 = scmp.lt.s32.totalorder %s14, 1
      %s1038 = scalar_select %p1037, %s14, 1
      %s1039 = smul.addr %s1038, 25
      %s1040 = smul.addr %s1039, 8
      %s1041 = scalar_lea.vmem %s3, %s1040
      // Predicated region
      $region33: #{bhvit_attention_forward.3} parent=31 // pred_check
        %p1042 = pneg %p100
      $region34: #{bhvit_attention_forward.3} parent=31 // pred_check_branch
        %1044 = sbr.rel (%p1042) target = $region36
      $region35: #{bhvit_attention_forward.3} parent=31 // pred_region
        _
      $region36: #{bhvit_attention_forward.3} parent=31 // pred_fallthru
        _
    $region32: #{bhvit_attention_forward.3} parent=5 // pred_fallthru
      _
    %p1045 = scmp.le.s32.totalorder 2, %s9
    // Predicated region
    $region37: #{bhvit_attention_forward.3} parent=5 // pred_check
      %p1046 = pneg %p1045
    $region38: #{bhvit_attention_forward.3} parent=5 // pred_check_branch
      %1048 = sbr.rel (%p1046) target = $region40
    $region39: #{bhvit_attention_forward.3} parent=5 // pred_region
      %s1049 = ssub.s32 %s9, 2
      // Predicated region
      $region41: #{bhvit_attention_forward.3} parent=39 // pred_check
        %p1050 = pneg %p106
      $region42: #{bhvit_attention_forward.3} parent=39 // pred_check_branch
        %1052 = sbr.rel (%p1050) target = $region44
      $region43: #{bhvit_attention_forward.3} parent=39 // pred_region
        %p1053 = scmp.lt.s32.totalorder %s15, 1
        %s1054 = scalar_select %p1053, %s15, 1
        %s1055 = smul.addr %s1054, 25
        %s1056 = smul.addr %s1055, 8
        %s1057 = scalar_lea.vmem %s3, %s1056
      $region44: #{bhvit_attention_forward.3} parent=39 // pred_fallthru
        _
    $region40: #{bhvit_attention_forward.3} parent=5 // pred_fallthru
      _
  $region6: #{bhvit_attention_forward.3} parent=0 // loop_footer
    %s13 = sadd.s32 1, %s9
  $region7: #{bhvit_attention_forward.3} parent=0 // loop_footer_branch
    %8 = sbr.rel target = $region3
  $region8: #{bhvit_attention_forward.3} parent=0 // loop_exit
    _

// kernel: bhvit_attention_forward.2
$region0: #{bhvit_attention_forward.2}
  #allocation0 [shape = 'u32[]', space=smem, size = 0x4, offset = 0x4, fixed_abs, tag = 'smem constant byte address 0x4 - core index']
  #allocation1 [shape = 'u32[144,128]{1,0:T(1,128)}', space=vmem, size = 0x12000, scoped, tag = 'internal scratch']
  #allocation2 [shape = 'f32[4,53,32]{2,1,0:T(8,128)}', space=vmem, size = 0x1c000, scoped, tag = 'scratch operand']
  %s0 = inlined_call_operand.vmem [shape: f32[2,4,53,32], index: 0, kind: input, shape index: {}]
  %s1 = inlined_call_operand.vmem [shape: bf16[32,96], index: 1, kind: input, shape index: {}]
  %s2 = inlined_call_operand.vmem [shape: f32[28,32], index: 2, kind: input, shape index: {}]
  %s3 = inlined_call_operand.vmem [shape: f32[2,4,53,32], index: 3, kind: output, shape index: {}]
  %s4 = sld [smem:[#allocation0]]
  $region45: #{bhvit_attention_forward.2} parent=0
    _
  %s6 = ssub.s32 1, %s4
  %s7 = scalar_select 0, %s6, %s4
  loop: start=0, step=1, limit=4
  $region2: #{bhvit_attention_forward.2} parent=0 // loop_pre_header
    _
  $region3: #{bhvit_attention_forward.2} parent=0 // loop_header
    %s9 = sphi 0, %s13
    %p10 = scmp.ge.s32.totalorder %s9, 4
    %s19 = sphi 0, %s21
    %s22 = sphi 0, %s19
    %s23 = sphi 0, %s22
    %s39 = sphi 0, %s23
    %s43 = sphi 0, %s43
    %s45 = sphi 0, %s43
    %s46 = sphi 0, %s45
    %s60 = sphi 0, %s46
    %s64 = sphi 0, %s64
    %s66 = sphi 0, %s64
    %s67 = sphi 0, %s66
    %s81 = sphi 0, %s67
    %s87 = sphi 0, %s89
    %s90 = sphi 0, %s87
    %s91 = sphi 0, %s90
    %s107 = sphi 0, %s91
  $region4: #{bhvit_attention_forward.2} parent=0 // loop_header_branch
    %12 = sbr.rel (%p10) target = $region8
  $region5: #{bhvit_attention_forward.2} parent=0 // loop_body
    %s14 = ssub.s32 %s9, 1
    %s15 = ssub.s32 %s9, 2
    %s16 = sadd.s32 %s9, 1
    %s17 = ssub.s32 %s9, %s16
    %p18 = scmp.eq.s32.totalorder %s17, 0
    %s20 = sadd.s32 %s19, 1
    %s21 = scalar_select %p18, %s19, %s20
    %p24 = pneg %p18
    %p25 = scmp.eq.s32.totalorder %s9, 1
    %p26 = por %p24, %p25
    %p27 = scmp.ne.s32.totalorder %s19, %s22
    %p28 = scmp.eq.s32.totalorder %s9, 0
    %p29 = por %p27, %p28
    %p30 = scmp.ne.s32.totalorder %s19, %s22
    %p31 = scmp.eq.s32.totalorder %s14, 1
    %p32 = por %p30, %p31
    %p33 = scmp.ne.s32.totalorder %s22, %s23
    %p34 = scmp.eq.s32.totalorder %s14, 0
    %p35 = por %p33, %p34
    %p36 = scmp.ne.s32.totalorder %s22, %s23
    %p37 = scmp.eq.s32.totalorder %s15, 1
    %p38 = por %p36, %p37
    %p40 = scmp.ne.s32.totalorder %s23, %s39
    %p41 = scmp.eq.s32.totalorder %s15, 0
    %p42 = por %p40, %p41
    %s44 = sadd.s32 %s43, 1
    %p47 = scmp.eq.s32.totalorder %s9, 1
    %p48 = scmp.ne.s32.totalorder %s43, %s45
    %p49 = scmp.eq.s32.totalorder %s9, 0
    %p50 = por %p48, %p49
    %p51 = scmp.ne.s32.totalorder %s43, %s45
    %p52 = scmp.eq.s32.totalorder %s14, 1
    %p53 = por %p51, %p52
    %p54 = scmp.ne.s32.totalorder %s45, %s46
    %p55 = scmp.eq.s32.totalorder %s14, 0
    %p56 = por %p54, %p55
    %p57 = scmp.ne.s32.totalorder %s45, %s46
    %p58 = scmp.eq.s32.totalorder %s15, 1
    %p59 = por %p57, %p58
    %p61 = scmp.ne.s32.totalorder %s46, %s60
    %p62 = scmp.eq.s32.totalorder %s15, 0
    %p63 = por %p61, %p62
    %s65 = sadd.s32 %s64, 1
    %p68 = scmp.eq.s32.totalorder %s9, 1
    %p69 = scmp.ne.s32.totalorder %s64, %s66
    %p70 = scmp.eq.s32.totalorder %s9, 0
    %p71 = por %p69, %p70
    %p72 = scmp.ne.s32.totalorder %s64, %s66
    %p73 = scmp.eq.s32.totalorder %s14, 1
    %p74 = por %p72, %p73
    %p75 = scmp.ne.s32.totalorder %s66, %s67
    %p76 = scmp.eq.s32.totalorder %s14, 0
    %p77 = por %p75, %p76
    %p78 = scmp.ne.s32.totalorder %s66, %s67
    %p79 = scmp.eq.s32.totalorder %s15, 1
    %p80 = por %p78, %p79
    %p82 = scmp.ne.s32.totalorder %s67, %s81
    %p83 = scmp.eq.s32.totalorder %s15, 0
    %p84 = por %p82, %p83
    %s85 = ssub.s32 %s9, %s16
    %p86 = scmp.eq.s32.totalorder %s85, 0
    %s88 = sadd.s32 %s87, 1
    %s89 = scalar_select %p86, %s87, %s88
    %p92 = pneg %p86
    %p93 = scmp.eq.s32.totalorder %s9, 1
    %p94 = por %p92, %p93
    %p95 = scmp.ne.s32.totalorder %s87, %s90
    %p96 = scmp.eq.s32.totalorder %s9, 0
    %p97 = por %p95, %p96
    %p98 = scmp.ne.s32.totalorder %s87, %s90
    %p99 = scmp.eq.s32.totalorder %s14, 1
    %p100 = por %p98, %p99
    %p101 = scmp.ne.s32.totalorder %s90, %s91
    %p102 = scmp.eq.s32.totalorder %s14, 0
    %p103 = por %p101, %p102
    %p104 = scmp.ne.s32.totalorder %s90, %s91
    %p105 = scmp.eq.s32.totalorder %s15, 1
    %p106 = por %p104, %p105
    %p108 = scmp.ne.s32.totalorder %s91, %s107
    %p109 = scmp.eq.s32.totalorder %s15, 0
    %p110 = por %p108, %p109
    %p111 = scmp.le.s32.totalorder 1, %s9
    %p112 = scmp.lt.s32.totalorder %s9, 3
    %p113 = pnand %p111, %p112
    %p114 = pneg %p113
    // Predicated region
    $region9: #{bhvit_attention_forward.2} parent=5 // pred_check
      _
    $region10: #{bhvit_attention_forward.2} parent=5 // pred_check_branch
      %116 = sbr.rel (%p113) target = $region12
    $region11: #{bhvit_attention_forward.2} parent=5 // pred_region
      %s117 = ssub.s32 %s9, 1
      // Predicated region
      $region13: #{bhvit_attention_forward.2} parent=11 // pred_check
        %p118 = pneg %p56
      $region14: #{bhvit_attention_forward.2} parent=11 // pred_check_branch
        %120 = sbr.rel (%p118) target = $region16
      $region15: #{bhvit_attention_forward.2} parent=11 // pred_region
        _
      $region16: #{bhvit_attention_forward.2} parent=11 // pred_fallthru
        _
      // Predicated region
      $region17: #{bhvit_attention_forward.2} parent=11 // pred_check
        %p121 = pneg %p77
      $region18: #{bhvit_attention_forward.2} parent=11 // pred_check_branch
        %123 = sbr.rel (%p121) target = $region20
      $region19: #{bhvit_attention_forward.2} parent=11 // pred_region
        _
      $region20: #{bhvit_attention_forward.2} parent=11 // pred_fallthru
        _
    $region12: #{bhvit_attention_forward.2} parent=5 // pred_fallthru
      _
    %p124 = scmp.lt.s32.totalorder %s9, 2
    // Predicated region
    $region21: #{bhvit_attention_forward.2} parent=5 // pred_check
      %p125 = pneg %p124
    $region22: #{bhvit_attention_forward.2} parent=5 // pred_check_branch
      %127 = sbr.rel (%p125) target = $region24
    $region23: #{bhvit_attention_forward.2} parent=5 // pred_region
      // Predicated region
      $region25: #{bhvit_attention_forward.2} parent=23 // pred_check
        %p128 = pneg %p29
      $region26: #{bhvit_attention_forward.2} parent=23 // pred_check_branch
        %130 = sbr.rel (%p128) target = $region28
      $region27: #{bhvit_attention_forward.2} parent=23 // pred_region
        %p131 = scmp.lt.s32.totalorder %s9, 1
        %s132 = scalar_select %p131, %s9, 1
        %s133 = smul.addr %s132, 28
        %s134 = smul.addr %s133, 8
        %s135 = scalar_lea.vmem %s0, %s134
      $region28: #{bhvit_attention_forward.2} parent=23 // pred_fallthru
        _
    $region24: #{bhvit_attention_forward.2} parent=5 // pred_fallthru
      _
    %p136 = scmp.le.s32.totalorder 1, %s9
    %p137 = scmp.lt.s32.totalorder %s9, 3
    %p138 = pnand %p136, %p137
    %p139 = pneg %p138
    // Predicated region
    $region29: #{bhvit_attention_forward.2} parent=5 // pred_check
      _
    $region30: #{bhvit_attention_forward.2} parent=5 // pred_check_branch
      %141 = sbr.rel (%p138) target = $region32
    $region31: #{bhvit_attention_forward.2} parent=5 // pred_region
      %s142 = ssub.s32 %s9, 1
      %p143 = scmp.lt.s32.totalorder %s14, 1
      %s144 = scalar_select %p143, %s14, 1
      %s145 = smul.addr %s144, 28
      %s146 = smul.addr %s145, 8
      %s147 = scalar_lea.vmem %s0, %s146
      %p148 = pneg %p35
      %p149 = pneg %p32
      %p150 = pneg %p56
      %p151 = pneg %p53
      %p152 = pneg %p77
      %p153 = pneg %p74
      %p154 = pneg %p103
      %p155 = pneg %p100
      %p156 = scmp.lt.s32.totalorder %s14, 1
      %s157 = scalar_select %p156, %s14, 1
      %s158 = smul.addr %s157, 28
      %s159 = smul.addr %s158, 8
      %s160 = scalar_lea.vmem %s3, %s159
      %p161 = scmp.lt.s32.totalorder %s14, 1
      %s162 = scalar_select %p161, %s14, 1
      %s163 = smul.addr %s162, 28
      %s164 = smul.addr %s163, 8
      %s165 = scalar_lea.vmem %s0, %s164
      %p166 = scmp.lt.s32.totalorder %s14, 1
      %s167 = scalar_select %p166, %s14, 1
      %s168 = smul.addr %s167, 28
      %s169 = smul.addr %s168, 8
      %s170 = scalar_lea.vmem %s3, %s169
      %v172 = vld [vmem:[%s165] sm:$0xff]
      %v173 = vld [vmem:[%s165 + $0x8] sm:$0xff]
      %v174 = vld [vmem:[%s165 + $0x10] sm:$0xff]
      %v175 = vld [vmem:[%s165 + $0x18] sm:$0xff]
      %v176 = vld [vmem:[%s165 + $0x20] sm:$0xff]
      %v177 = vld [vmem:[%s165 + $0x28] sm:$0xff]
      %v178 = vld [vmem:[%s165 + $0x30] sm:$0x1f]
      %v179 = vld [vmem:[%s165 + $0x38] sm:$0xff]
      %v180 = vld [vmem:[%s165 + $0x40] sm:$0xff]
      %v181 = vld [vmem:[%s165 + $0x48] sm:$0xff]
      %v182 = vld [vmem:[%s165 + $0x50] sm:$0xff]
      %v183 = vld [vmem:[%s165 + $0x58] sm:$0xff]
      %v184 = vld [vmem:[%s165 + $0x60] sm:$0xff]
      %v185 = vld [vmem:[%s165 + $0x68] sm:$0x1f]
      %v186 = vld [vmem:[%s165 + $0x70] sm:$0xff]
      %v187 = vld [vmem:[%s165 + $0x78] sm:$0xff]
      %v188 = vld [vmem:[%s165 + $0x80] sm:$0xff]
      %v189 = vld [vmem:[%s165 + $0x88] sm:$0xff]
      %v190 = vld [vmem:[%s165 + $0x90] sm:$0xff]
      %v191 = vld [vmem:[%s165 + $0x98] sm:$0xff]
      %v192 = vld [vmem:[%s165 + $0xa0] sm:$0x1f]
      %v193 = vld [vmem:[%s165 + $0xa8] sm:$0xff]
      %v194 = vld [vmem:[%s165 + $0xb0] sm:$0xff]
      %v195 = vld [vmem:[%s165 + $0xb8] sm:$0xff]
      %v196 = vld [vmem:[%s165 + $0xc0] sm:$0xff]
      %v197 = vld [vmem:[%s165 + $0xc8] sm:$0xff]
      %v198 = vld [vmem:[%s165 + $0xd0] sm:$0xff]
      %v199 = vld [vmem:[%s165 + $0xd8] sm:$0x1f]
      %v200 = vld [vmem:[%s2] sm:$0xff]
      %v201 = vld [vmem:[%s2 + $0x8] sm:$0xff]
      %v202 = vld [vmem:[%s2 + $0x10] sm:$0xff]
      %v203 = vld [vmem:[%s2 + $0x18] sm:$0xf]
      %v204 = vld [vmem:[%s1] sm:$0xf]
      %v205 = vld [vmem:[%s1 + $0x4] sm:$0xf]
      %v206 = vld [vmem:[%s1 + $0x8] sm:$0xf]
      %v207 = vld [vmem:[%s1 + $0xc] sm:$0xf]
      %vm208 = vcmask 261120
      %v209 = vsel %vm208, %v172, 0.0
      %210 = vadd.xlane.f32.xlu0 %v209
      %v211 = vpop.xlane.xlu0 %210
      %v212 = vsel %vm208, %v173, 0.0
      %213 = vadd.xlane.f32.xlu0 %v212
      %v214 = vpop.xlane.xlu0 %213
      %v215 = vsel %vm208, %v174, 0.0
      %216 = vadd.xlane.f32.xlu0 %v215
      %v217 = vpop.xlane.xlu0 %216
      %v218 = vsel %vm208, %v175, 0.0
      %219 = vadd.xlane.f32.xlu0 %v218
      %v220 = vpop.xlane.xlu0 %219
      %v221 = vsel %vm208, %v176, 0.0
      %222 = vadd.xlane.f32.xlu0 %v221
      %v223 = vpop.xlane.xlu0 %222
      %v224 = vsel %vm208, %v177, 0.0
      %225 = vadd.xlane.f32.xlu0 %v224
      %v226 = vpop.xlane.xlu0 %225
      %vm227 = vcmask 258048
      %v228 = vsel %vm227, %v178, 0.0
      %229 = vadd.xlane.f32.xlu0 %v228
      %v230 = vpop.xlane.xlu0 %229
      %v231 = vsel %vm208, %v179, 0.0
      %232 = vadd.xlane.f32.xlu0 %v231
      %v233 = vpop.xlane.xlu0 %232
      %v234 = vsel %vm208, %v180, 0.0
      %235 = vadd.xlane.f32.xlu0 %v234
      %v236 = vpop.xlane.xlu0 %235
      %v237 = vsel %vm208, %v181, 0.0
      %238 = vadd.xlane.f32.xlu0 %v237
      %v239 = vpop.xlane.xlu0 %238
      %v240 = vsel %vm208, %v182, 0.0
      %241 = vadd.xlane.f32.xlu0 %v240
      %v242 = vpop.xlane.xlu0 %241
      %v243 = vsel %vm208, %v183, 0.0
      %244 = vadd.xlane.f32.xlu0 %v243
      %v245 = vpop.xlane.xlu0 %244
      %v246 = vsel %vm208, %v184, 0.0
      %247 = vadd.xlane.f32.xlu0 %v246
      %v248 = vpop.xlane.xlu0 %247
      %v249 = vsel %vm227, %v185, 0.0
      %250 = vadd.xlane.f32.xlu0 %v249
      %v251 = vpop.xlane.xlu0 %250
      %v252 = vsel %vm208, %v186, 0.0
      %253 = vadd.xlane.f32.xlu0 %v252
      %v254 = vpop.xlane.xlu0 %253
      %v255 = vsel %vm208, %v187, 0.0
      %256 = vadd.xlane.f32.xlu0 %v255
      %v257 = vpop.xlane.xlu0 %256
      %v258 = vsel %vm208, %v188, 0.0
      %259 = vadd.xlane.f32.xlu0 %v258
      %v260 = vpop.xlane.xlu0 %259
      %v261 = vsel %vm208, %v189, 0.0
      %262 = vadd.xlane.f32.xlu0 %v261
      %v263 = vpop.xlane.xlu0 %262
      %v264 = vsel %vm208, %v190, 0.0
      %265 = vadd.xlane.f32.xlu0 %v264
      %v266 = vpop.xlane.xlu0 %265
      %v267 = vsel %vm208, %v191, 0.0
      %268 = vadd.xlane.f32.xlu0 %v267
      %v269 = vpop.xlane.xlu0 %268
      %v270 = vsel %vm227, %v192, 0.0
      %271 = vadd.xlane.f32.xlu0 %v270
      %v272 = vpop.xlane.xlu0 %271
      %v273 = vsel %vm208, %v193, 0.0
      %274 = vadd.xlane.f32.xlu0 %v273
      %v275 = vpop.xlane.xlu0 %274
      %v276 = vsel %vm208, %v194, 0.0
      %277 = vadd.xlane.f32.xlu0 %v276
      %v278 = vpop.xlane.xlu0 %277
      %v279 = vsel %vm208, %v195, 0.0
      %280 = vadd.xlane.f32.xlu0 %v279
      %v281 = vpop.xlane.xlu0 %280
      %v282 = vsel %vm208, %v196, 0.0
      %283 = vadd.xlane.f32.xlu0 %v282
      %v284 = vpop.xlane.xlu0 %283
      %v285 = vsel %vm208, %v197, 0.0
      %286 = vadd.xlane.f32.xlu0 %v285
      %v287 = vpop.xlane.xlu0 %286
      %v288 = vsel %vm208, %v198, 0.0
      %289 = vadd.xlane.f32.xlu0 %v288
      %v290 = vpop.xlane.xlu0 %289
      %v291 = vsel %vm227, %v199, 0.0
      %292 = vadd.xlane.f32.xlu0 %v291
      %v293 = vpop.xlane.xlu0 %292
      %v294 = vrcp.pop 32.0
      %v295 = vmul.f32 %v211, %v294
      %v296 = vmul.f32 %v214, %v294
      %v297 = vmul.f32 %v217, %v294
      %v298 = vmul.f32 %v220, %v294
      %v299 = vmul.f32 %v223, %v294
      %v300 = vmul.f32 %v226, %v294
      %v301 = vmul.f32 %v230, %v294
      %v302 = vmul.f32 %v233, %v294
      %v303 = vmul.f32 %v236, %v294
      %v304 = vmul.f32 %v239, %v294
      %v305 = vmul.f32 %v242, %v294
      %v306 = vmul.f32 %v245, %v294
      %v307 = vmul.f32 %v248, %v294
      %v308 = vmul.f32 %v251, %v294
      %v309 = vmul.f32 %v254, %v294
      %v310 = vmul.f32 %v257, %v294
      %v311 = vmul.f32 %v260, %v294
      %v312 = vmul.f32 %v263, %v294
      %v313 = vmul.f32 %v266, %v294
      %v314 = vmul.f32 %v269, %v294
      %v315 = vmul.f32 %v272, %v294
      %v316 = vmul.f32 %v275, %v294
      %v317 = vmul.f32 %v278, %v294
      %v318 = vmul.f32 %v281, %v294
      %v319 = vmul.f32 %v284, %v294
      %v320 = vmul.f32 %v287, %v294
      %v321 = vmul.f32 %v290, %v294
      %v322 = vmul.f32 %v293, %v294
      %v323 = vsub.f32 %v172, %v295
      %v324 = vsub.f32 %v173, %v296
      %v325 = vsub.f32 %v174, %v297
      %v326 = vsub.f32 %v175, %v298
      %v327 = vsub.f32 %v176, %v299
      %v328 = vsub.f32 %v177, %v300
      %v329 = vsub.f32 %v178, %v301
      %v330 = vsub.f32 %v179, %v302
      %v331 = vsub.f32 %v180, %v303
      %v332 = vsub.f32 %v181, %v304
      %v333 = vsub.f32 %v182, %v305
      %v334 = vsub.f32 %v183, %v306
      %v335 = vsub.f32 %v184, %v307
      %v336 = vsub.f32 %v185, %v308
      %v337 = vsub.f32 %v186, %v309
      %v338 = vsub.f32 %v187, %v310
      %v339 = vsub.f32 %v188, %v311
      %v340 = vsub.f32 %v189, %v312
      %v341 = vsub.f32 %v190, %v313
      %v342 = vsub.f32 %v191, %v314
      %v343 = vsub.f32 %v192, %v315
      %v344 = vsub.f32 %v193, %v316
      %v345 = vsub.f32 %v194, %v317
      %v346 = vsub.f32 %v195, %v318
      %v347 = vsub.f32 %v196, %v319
      %v348 = vsub.f32 %v197, %v320
      %v349 = vsub.f32 %v198, %v321
      %v350 = vsub.f32 %v199, %v322
      %v351 = vmul.f32 %v323, %v323
      %v352 = vmul.f32 %v324, %v324
      %v353 = vmul.f32 %v325, %v325
      %v354 = vmul.f32 %v326, %v326
      %v355 = vmul.f32 %v327, %v327
      %v356 = vmul.f32 %v328, %v328
      %v357 = vmul.f32 %v329, %v329
      %v358 = vmul.f32 %v330, %v330
      %v359 = vmul.f32 %v331, %v331
      %v360 = vmul.f32 %v332, %v332
      %v361 = vmul.f32 %v333, %v333
      %v362 = vmul.f32 %v334, %v334
      %v363 = vmul.f32 %v335, %v335
      %v364 = vmul.f32 %v336, %v336
      %v365 = vmul.f32 %v337, %v337
      %v366 = vmul.f32 %v338, %v338
      %v367 = vmul.f32 %v339, %v339
      %v368 = vmul.f32 %v340, %v340
      %v369 = vmul.f32 %v341, %v341
      %v370 = vmul.f32 %v342, %v342
      %v371 = vmul.f32 %v343, %v343
      %v372 = vmul.f32 %v344, %v344
      %v373 = vmul.f32 %v345, %v345
      %v374 = vmul.f32 %v346, %v346
      %v375 = vmul.f32 %v347, %v347
      %v376 = vmul.f32 %v348, %v348
      %v377 = vmul.f32 %v349, %v349
      %v378 = vmul.f32 %v350, %v350
      %v379 = vsel %vm208, %v351, 0.0
      %380 = vadd.xlane.f32.xlu0 %v379
      %v381 = vpop.xlane.xlu0 %380
      %v382 = vsel %vm208, %v352, 0.0
      %383 = vadd.xlane.f32.xlu0 %v382
      %v384 = vpop.xlane.xlu0 %383
      %v385 = vsel %vm208, %v353, 0.0
      %386 = vadd.xlane.f32.xlu0 %v385
      %v387 = vpop.xlane.xlu0 %386
      %v388 = vsel %vm208, %v354, 0.0
      %389 = vadd.xlane.f32.xlu0 %v388
      %v390 = vpop.xlane.xlu0 %389
      %v391 = vsel %vm208, %v355, 0.0
      %392 = vadd.xlane.f32.xlu0 %v391
      %v393 = vpop.xlane.xlu0 %392
      %v394 = vsel %vm208, %v356, 0.0
      %395 = vadd.xlane.f32.xlu0 %v394
      %v396 = vpop.xlane.xlu0 %395
      %v397 = vsel %vm227, %v357, 0.0
      %398 = vadd.xlane.f32.xlu0 %v397
      %v399 = vpop.xlane.xlu0 %398
      %v400 = vsel %vm208, %v358, 0.0
      %401 = vadd.xlane.f32.xlu0 %v400
      %v402 = vpop.xlane.xlu0 %401
      %v403 = vsel %vm208, %v359, 0.0
      %404 = vadd.xlane.f32.xlu0 %v403
      %v405 = vpop.xlane.xlu0 %404
      %v406 = vsel %vm208, %v360, 0.0
      %407 = vadd.xlane.f32.xlu0 %v406
      %v408 = vpop.xlane.xlu0 %407
      %v409 = vsel %vm208, %v361, 0.0
      %410 = vadd.xlane.f32.xlu0 %v409
      %v411 = vpop.xlane.xlu0 %410
      %v412 = vsel %vm208, %v362, 0.0
      %413 = vadd.xlane.f32.xlu0 %v412
      %v414 = vpop.xlane.xlu0 %413
      %v415 = vsel %vm208, %v363, 0.0
      %416 = vadd.xlane.f32.xlu0 %v415
      %v417 = vpop.xlane.xlu0 %416
      %v418 = vsel %vm227, %v364, 0.0
      %419 = vadd.xlane.f32.xlu0 %v418
      %v420 = vpop.xlane.xlu0 %419
      %v421 = vsel %vm208, %v365, 0.0
      %422 = vadd.xlane.f32.xlu0 %v421
      %v423 = vpop.xlane.xlu0 %422
      %v424 = vsel %vm208, %v366, 0.0
      %425 = vadd.xlane.f32.xlu0 %v424
      %v426 = vpop.xlane.xlu0 %425
      %v427 = vsel %vm208, %v367, 0.0
      %428 = vadd.xlane.f32.xlu0 %v427
      %v429 = vpop.xlane.xlu0 %428
      %v430 = vsel %vm208, %v368, 0.0
      %431 = vadd.xlane.f32.xlu0 %v430
      %v432 = vpop.xlane.xlu0 %431
      %v433 = vsel %vm208, %v369, 0.0
      %434 = vadd.xlane.f32.xlu0 %v433
      %v435 = vpop.xlane.xlu0 %434
      %v436 = vsel %vm208, %v370, 0.0
      %437 = vadd.xlane.f32.xlu0 %v436
      %v438 = vpop.xlane.xlu0 %437
      %v439 = vsel %vm227, %v371, 0.0
      %440 = vadd.xlane.f32.xlu0 %v439
      %v441 = vpop.xlane.xlu0 %440
      %v442 = vsel %vm208, %v372, 0.0
      %443 = vadd.xlane.f32.xlu0 %v442
      %v444 = vpop.xlane.xlu0 %443
      %v445 = vsel %vm208, %v373, 0.0
      %446 = vadd.xlane.f32.xlu0 %v445
      %v447 = vpop.xlane.xlu0 %446
      %v448 = vsel %vm208, %v374, 0.0
      %449 = vadd.xlane.f32.xlu0 %v448
      %v450 = vpop.xlane.xlu0 %449
      %v451 = vsel %vm208, %v375, 0.0
      %452 = vadd.xlane.f32.xlu0 %v451
      %v453 = vpop.xlane.xlu0 %452
      %v454 = vsel %vm208, %v376, 0.0
      %455 = vadd.xlane.f32.xlu0 %v454
      %v456 = vpop.xlane.xlu0 %455
      %v457 = vsel %vm208, %v377, 0.0
      %458 = vadd.xlane.f32.xlu0 %v457
      %v459 = vpop.xlane.xlu0 %458
      %v460 = vsel %vm227, %v378, 0.0
      %461 = vadd.xlane.f32.xlu0 %v460
      %v462 = vpop.xlane.xlu0 %461
      %v463 = vmul.f32 %v381, %v294
      %v464 = vmul.f32 %v384, %v294
      %v465 = vmul.f32 %v387, %v294
      %v466 = vmul.f32 %v390, %v294
      %v467 = vmul.f32 %v393, %v294
      %v468 = vmul.f32 %v396, %v294
      %v469 = vmul.f32 %v399, %v294
      %v470 = vmul.f32 %v402, %v294
      %v471 = vmul.f32 %v405, %v294
      %v472 = vmul.f32 %v408, %v294
      %v473 = vmul.f32 %v411, %v294
      %v474 = vmul.f32 %v414, %v294
      %v475 = vmul.f32 %v417, %v294
      %v476 = vmul.f32 %v420, %v294
      %v477 = vmul.f32 %v423, %v294
      %v478 = vmul.f32 %v426, %v294
      %v479 = vmul.f32 %v429, %v294
      %v480 = vmul.f32 %v432, %v294
      %v481 = vmul.f32 %v435, %v294
      %v482 = vmul.f32 %v438, %v294
      %v483 = vmul.f32 %v441, %v294
      %v484 = vmul.f32 %v444, %v294
      %v485 = vmul.f32 %v447, %v294
      %v486 = vmul.f32 %v450, %v294
      %v487 = vmul.f32 %v453, %v294
      %v488 = vmul.f32 %v456, %v294
      %v489 = vmul.f32 %v459, %v294
      %v490 = vmul.f32 %v462, %v294
      %v491 = vadd.f32 %v463, 1e-05
      %v492 = vadd.f32 %v464, 1e-05
      %v493 = vadd.f32 %v465, 1e-05
      %v494 = vadd.f32 %v466, 1e-05
      %v495 = vadd.f32 %v467, 1e-05
      %v496 = vadd.f32 %v468, 1e-05
      %v497 = vadd.f32 %v469, 1e-05
      %v498 = vadd.f32 %v470, 1e-05
      %v499 = vadd.f32 %v471, 1e-05
      %v500 = vadd.f32 %v472, 1e-05
      %v501 = vadd.f32 %v473, 1e-05
      %v502 = vadd.f32 %v474, 1e-05
      %v503 = vadd.f32 %v475, 1e-05
      %v504 = vadd.f32 %v476, 1e-05
      %v505 = vadd.f32 %v477, 1e-05
      %v506 = vadd.f32 %v478, 1e-05
      %v507 = vadd.f32 %v479, 1e-05
      %v508 = vadd.f32 %v480, 1e-05
      %v509 = vadd.f32 %v481, 1e-05
      %v510 = vadd.f32 %v482, 1e-05
      %v511 = vadd.f32 %v483, 1e-05
      %v512 = vadd.f32 %v484, 1e-05
      %v513 = vadd.f32 %v485, 1e-05
      %v514 = vadd.f32 %v486, 1e-05
      %v515 = vadd.f32 %v487, 1e-05
      %v516 = vadd.f32 %v488, 1e-05
      %v517 = vadd.f32 %v489, 1e-05
      %v518 = vadd.f32 %v490, 1e-05
      %v519 = vrsqrt.pop %v491
      %v520 = vrsqrt.pop %v492
      %v521 = vrsqrt.pop %v493
      %v522 = vrsqrt.pop %v494
      %v523 = vrsqrt.pop %v495
      %v524 = vrsqrt.pop %v496
      %v525 = vrsqrt.pop %v497
      %v526 = vrsqrt.pop %v498
      %v527 = vrsqrt.pop %v499
      %v528 = vrsqrt.pop %v500
      %v529 = vrsqrt.pop %v501
      %v530 = vrsqrt.pop %v502
      %v531 = vrsqrt.pop %v503
      %v532 = vrsqrt.pop %v504
      %v533 = vrsqrt.pop %v505
      %v534 = vrsqrt.pop %v506
      %v535 = vrsqrt.pop %v507
      %v536 = vrsqrt.pop %v508
      %v537 = vrsqrt.pop %v509
      %v538 = vrsqrt.pop %v510
      %v539 = vrsqrt.pop %v511
      %v540 = vrsqrt.pop %v512
      %v541 = vrsqrt.pop %v513
      %v542 = vrsqrt.pop %v514
      %v543 = vrsqrt.pop %v515
      %v544 = vrsqrt.pop %v516
      %v545 = vrsqrt.pop %v517
      %v546 = vrsqrt.pop %v518
      %v547 = vmul.f32 %v323, %v519
      %v548 = vmul.f32 %v324, %v520
      %v549 = vmul.f32 %v325, %v521
      %v550 = vmul.f32 %v326, %v522
      %v551 = vmul.f32 %v327, %v523
      %v552 = vmul.f32 %v328, %v524
      %v553 = vmul.f32 %v329, %v525
      %v554 = vmul.f32 %v330, %v526
      %v555 = vmul.f32 %v331, %v527
      %v556 = vmul.f32 %v332, %v528
      %v557 = vmul.f32 %v333, %v529
      %v558 = vmul.f32 %v334, %v530
      %v559 = vmul.f32 %v335, %v531
      %v560 = vmul.f32 %v336, %v532
      %v561 = vmul.f32 %v337, %v533
      %v562 = vmul.f32 %v338, %v534
      %v563 = vmul.f32 %v339, %v535
      %v564 = vmul.f32 %v340, %v536
      %v565 = vmul.f32 %v341, %v537
      %v566 = vmul.f32 %v342, %v538
      %v567 = vmul.f32 %v343, %v539
      %v568 = vmul.f32 %v344, %v540
      %v569 = vmul.f32 %v345, %v541
      %v570 = vmul.f32 %v346, %v542
      %v571 = vmul.f32 %v347, %v543
      %v572 = vmul.f32 %v348, %v544
      %v573 = vmul.f32 %v349, %v545
      %v574 = vmul.f32 %v350, %v546
      %v575 = vlaneseq
      %v576 = vshrl.u32 %v575, 7
      %v577 = vsub.s32 0, %v576
      %v578 = vrot.slane %v200, %v577
      %v579 = vmul.f32 %v547, %v578
      %v580 = vmul.f32 %v548, %v578
      %v581 = vmul.f32 %v549, %v578
      %v582 = vmul.f32 %v550, %v578
      %v583 = vmul.f32 %v551, %v578
      %v584 = vmul.f32 %v552, %v578
      %v585 = vmul.f32 %v553, %v578
      %v586 = vmul.f32 %v554, %v578
      %v587 = vmul.f32 %v555, %v578
      %v588 = vmul.f32 %v556, %v578
      %v589 = vmul.f32 %v557, %v578
      %v590 = vmul.f32 %v558, %v578
      %v591 = vmul.f32 %v559, %v578
      %v592 = vmul.f32 %v560, %v578
      %v593 = vmul.f32 %v561, %v578
      %v594 = vmul.f32 %v562, %v578
      %v595 = vmul.f32 %v563, %v578
      %v596 = vmul.f32 %v564, %v578
      %v597 = vmul.f32 %v565, %v578
      %v598 = vmul.f32 %v566, %v578
      %v599 = vmul.f32 %v567, %v578
      %v600 = vmul.f32 %v568, %v578
      %v601 = vmul.f32 %v569, %v578
      %v602 = vmul.f32 %v570, %v578
      %v603 = vmul.f32 %v571, %v578
      %v604 = vmul.f32 %v572, %v578
      %v605 = vmul.f32 %v573, %v578
      %v606 = vmul.f32 %v574, %v578
      %v607 = vlaneseq
      %v608 = vshrl.u32 %v607, 7
      %v609 = vsub.s32 1, %v608
      %v610 = vrot.slane %v200, %v609
      %v611 = vadd.f32 %v579, %v610
      %v612 = vadd.f32 %v580, %v610
      %v613 = vadd.f32 %v581, %v610
      %v614 = vadd.f32 %v582, %v610
      %v615 = vadd.f32 %v583, %v610
      %v616 = vadd.f32 %v584, %v610
      %v617 = vadd.f32 %v585, %v610
      %v618 = vadd.f32 %v586, %v610
      %v619 = vadd.f32 %v587, %v610
      %v620 = vadd.f32 %v588, %v610
      %v621 = vadd.f32 %v589, %v610
      %v622 = vadd.f32 %v590, %v610
      %v623 = vadd.f32 %v591, %v610
      %v624 = vadd.f32 %v592, %v610
      %v625 = vadd.f32 %v593, %v610
      %v626 = vadd.f32 %v594, %v610
      %v627 = vadd.f32 %v595, %v610
      %v628 = vadd.f32 %v596, %v610
      %v629 = vadd.f32 %v597, %v610
      %v630 = vadd.f32 %v598, %v610
      %v631 = vadd.f32 %v599, %v610
      %v632 = vadd.f32 %v600, %v610
      %v633 = vadd.f32 %v601, %v610
      %v634 = vadd.f32 %v602, %v610
      %v635 = vadd.f32 %v603, %v610
      %v636 = vadd.f32 %v604, %v610
      %v637 = vadd.f32 %v605, %v610
      %v638 = vadd.f32 %v606, %v610
      %v639 = vpack.c.bf16 %v612, %v611
      %v640 = vpack.c.bf16 %v614, %v613
      %v641 = vpack.c.bf16 %v616, %v615
      %v642 = vpack.c.bf16 %v617, %v617
      %v643 = vpack.c.bf16 %v619, %v618
      %v644 = vpack.c.bf16 %v621, %v620
      %v645 = vpack.c.bf16 %v623, %v622
      %v646 = vpack.c.bf16 %v624, %v624
      %v647 = vpack.c.bf16 %v626, %v625
      %v648 = vpack.c.bf16 %v628, %v627
      %v649 = vpack.c.bf16 %v630, %v629
      %v650 = vpack.c.bf16 %v631, %v631
      %v651 = vpack.c.bf16 %v633, %v632
      %v652 = vpack.c.bf16 %v635, %v634
      %v653 = vpack.c.bf16 %v637, %v636
      %v654 = vpack.c.bf16 %v638, %v638
      %v659 = vunpack.c.l.b16 %v204
      %v660 = vunpack.c.l.b16 %v205
      %v661 = vunpack.c.l.b16 %v206
      %v662 = vunpack.c.l.b16 %v207
      %v663 = vpack.c.b16 %v660, %v659
      %v664 = vpack.c.b16 %v662, %v661
      %v668 = vsel %vm208, %v639, 0
      %v671 = vsel %vm208, %v640, 0
      %v674 = vsel %vm208, %v641, 0
      %v677 = vsel %vm208, %v642, 0
      %679 = vmatprep.subr.bf16.mxu0 0
      %680 = vmatpush1.bf16.msra.mxu0 0
      %681 = vmatprep.subr.bf16.mxu0 0
      %682 = vmatpush1.bf16.msra.mxu0 0
      %683 = vmatprep.subr.bf16.mxu0 0
      %684 = vmatpush1.bf16.msra.mxu0 0
      %685 = vmatprep.subr.bf16.mxu0 0
      %686 = vmatpush1.bf16.msra.mxu0 0
      %687 = vmatprep.subr.bf16.mxu0 0
      %688 = vmatpush1.bf16.msra.mxu0 0
      %689 = vmatprep.subr.bf16.mxu0 0
      %690 = vmatpush1.bf16.msra.mxu0 0
      %691 = vmatprep.subr.bf16.mxu0 0
      %692 = vmatpush1.bf16.msra.mxu0 %v664
      %693 = vmatprep.subr.bf16.mxu0 0
      %694 = vmatpush1.bf16.msra.mxu0 %v663
      %695 = vmatprep.subr.bf16.mxu0 0
      %696 = vmatpush2.bf16.msra.mxu0 0
      %697 = vmatprep.subr.bf16.mxu0 0
      %698 = vmatpush2.bf16.msra.mxu0 0
      %699 = vmatprep.subr.bf16.mxu0 0
      %700 = vmatpush2.bf16.msra.mxu0 0
      %701 = vmatprep.subr.bf16.mxu0 0
      %702 = vmatpush2.bf16.msra.mxu0 0
      %703 = vmatprep.subr.bf16.mxu0 0
      %704 = vmatpush2.bf16.msra.mxu0 0
      %705 = vmatprep.subr.bf16.mxu0 0
      %706 = vmatpush2.bf16.msra.mxu0 0
      %707 = vmatprep.subr.bf16.mxu0 0
      %708 = vmatpush2.bf16.msra.mxu0 0
      %709 = vmatprep.subr.bf16.mxu0 0
      %710 = vmatpush2.bf16.msra.mxu0 0
      %711 = vmatprep.mubr.bf16.mxu0 0
      %712 = vmatmul.mubr.bf16.gmra.mxu0 %v668
      %v713 = vpop.f32.mrf.mxu0
      %v714 = vadd.f32 0.0, %v713
      %v715 = vpop.f32.mrf.mxu0
      %v716 = vpop.f32.mrf.mxu0
      %v717 = vadd.f32 0.0, %v716
      %v718 = vpop.f32.mrf.mxu0
      %719 = vmatprep.mubr.bf16.mxu0 0
      %720 = vmatmul.mubr.bf16.gmra.mxu0 %v671
      %v721 = vpop.f32.mrf.mxu0
      %v722 = vadd.f32 0.0, %v721
      %v723 = vpop.f32.mrf.mxu0
      %v724 = vpop.f32.mrf.mxu0
      %v725 = vadd.f32 0.0, %v724
      %v726 = vpop.f32.mrf.mxu0
      %727 = vmatprep.mubr.bf16.mxu0 0
      %728 = vmatmul.mubr.bf16.gmra.mxu0 %v674
      %v729 = vpop.f32.mrf.mxu0
      %v730 = vadd.f32 0.0, %v729
      %v731 = vpop.f32.mrf.mxu0
      %v732 = vpop.f32.mrf.mxu0
      %v733 = vadd.f32 0.0, %v732
      %v734 = vpop.f32.mrf.mxu0
      %735 = vmatprep.mubr.bf16.mxu0 0
      %736 = vmatmul.mubr.bf16.gmra.mxu0 %v677
      %v737 = vpop.f32.mrf.mxu0
      %v738 = vadd.f32 0.0, %v737
      %v739 = vpop.f32.mrf.mxu0
      %v740 = vpop.f32.mrf.mxu0
      %v741 = vpop.f32.mrf.mxu0
      %742 = vdwg.mxu0
      %v744 = vsel %vm208, %v643, 0
      %v747 = vsel %vm208, %v644, 0
      %v750 = vsel %vm208, %v645, 0
      %v753 = vsel %vm208, %v646, 0
      %755 = vmatprep.subr.bf16.mxu0 0
      %756 = vmatpush1.bf16.msra.mxu0 0
      %757 = vmatprep.subr.bf16.mxu0 0
      %758 = vmatpush1.bf16.msra.mxu0 0
      %759 = vmatprep.subr.bf16.mxu0 0
      %760 = vmatpush1.bf16.msra.mxu0 0
      %761 = vmatprep.subr.bf16.mxu0 0
      %762 = vmatpush1.bf16.msra.mxu0 0
      %763 = vmatprep.subr.bf16.mxu0 0
      %764 = vmatpush1.bf16.msra.mxu0 0
      %765 = vmatprep.subr.bf16.mxu0 0
      %766 = vmatpush1.bf16.msra.mxu0 0
      %767 = vmatprep.subr.bf16.mxu0 0
      %768 = vmatpush1.bf16.msra.mxu0 %v664
      %769 = vmatprep.subr.bf16.mxu0 0
      %770 = vmatpush1.bf16.msra.mxu0 %v663
      %771 = vmatprep.subr.bf16.mxu0 0
      %772 = vmatpush2.bf16.msra.mxu0 0
      %773 = vmatprep.subr.bf16.mxu0 0
      %774 = vmatpush2.bf16.msra.mxu0 0
      %775 = vmatprep.subr.bf16.mxu0 0
      %776 = vmatpush2.bf16.msra.mxu0 0
      %777 = vmatprep.subr.bf16.mxu0 0
      %778 = vmatpush2.bf16.msra.mxu0 0
      %779 = vmatprep.subr.bf16.mxu0 0
      %780 = vmatpush2.bf16.msra.mxu0 0
      %781 = vmatprep.subr.bf16.mxu0 0
      %782 = vmatpush2.bf16.msra.mxu0 0
      %783 = vmatprep.subr.bf16.mxu0 0
      %784 = vmatpush2.bf16.msra.mxu0 0
      %785 = vmatprep.subr.bf16.mxu0 0
      %786 = vmatpush2.bf16.msra.mxu0 0
      %787 = vmatprep.mubr.bf16.mxu0 0
      %788 = vmatmul.mubr.bf16.gmra.mxu0 %v744
      %v789 = vpop.f32.mrf.mxu0
      %v790 = vadd.f32 0.0, %v789
      %v791 = vpop.f32.mrf.mxu0
      %v792 = vpop.f32.mrf.mxu0
      %v793 = vadd.f32 0.0, %v792
      %v794 = vpop.f32.mrf.mxu0
      %795 = vmatprep.mubr.bf16.mxu0 0
      %796 = vmatmul.mubr.bf16.gmra.mxu0 %v747
      %v797 = vpop.f32.mrf.mxu0
      %v798 = vadd.f32 0.0, %v797
      %v799 = vpop.f32.mrf.mxu0
      %v800 = vpop.f32.mrf.mxu0
      %v801 = vadd.f32 0.0, %v800
      %v802 = vpop.f32.mrf.mxu0
      %803 = vmatprep.mubr.bf16.mxu0 0
      %804 = vmatmul.mubr.bf16.gmra.mxu0 %v750
      %v805 = vpop.f32.mrf.mxu0
      %v806 = vadd.f32 0.0, %v805
      %v807 = vpop.f32.mrf.mxu0
      %v808 = vpop.f32.mrf.mxu0
      %v809 = vadd.f32 0.0, %v808
      %v810 = vpop.f32.mrf.mxu0
      %811 = vmatprep.mubr.bf16.mxu0 0
      %812 = vmatmul.mubr.bf16.gmra.mxu0 %v753
      %v813 = vpop.f32.mrf.mxu0
      %v814 = vadd.f32 0.0, %v813
      %v815 = vpop.f32.mrf.mxu0
      %v816 = vpop.f32.mrf.mxu0
      %v817 = vpop.f32.mrf.mxu0
      %818 = vdwg.mxu0
      %v820 = vsel %vm208, %v647, 0
      %v823 = vsel %vm208, %v648, 0
      %v826 = vsel %vm208, %v649, 0
      %v829 = vsel %vm208, %v650, 0
      %831 = vmatprep.subr.bf16.mxu0 0
      %832 = vmatpush1.bf16.msra.mxu0 0
      %833 = vmatprep.subr.bf16.mxu0 0
      %834 = vmatpush1.bf16.msra.mxu0 0
      %835 = vmatprep.subr.bf16.mxu0 0
      %836 = vmatpush1.bf16.msra.mxu0 0
      %837 = vmatprep.subr.bf16.mxu0 0
      %838 = vmatpush1.bf16.msra.mxu0 0
      %839 = vmatprep.subr.bf16.mxu0 0
      %840 = vmatpush1.bf16.msra.mxu0 0
      %841 = vmatprep.subr.bf16.mxu0 0
      %842 = vmatpush1.bf16.msra.mxu0 0
      %843 = vmatprep.subr.bf16.mxu0 0
      %844 = vmatpush1.bf16.msra.mxu0 %v664
      %845 = vmatprep.subr.bf16.mxu0 0
      %846 = vmatpush1.bf16.msra.mxu0 %v663
      %847 = vmatprep.subr.bf16.mxu0 0
      %848 = vmatpush2.bf16.msra.mxu0 0
      %849 = vmatprep.subr.bf16.mxu0 0
      %850 = vmatpush2.bf16.msra.mxu0 0
      %851 = vmatprep.subr.bf16.mxu0 0
      %852 = vmatpush2.bf16.msra.mxu0 0
      %853 = vmatprep.subr.bf16.mxu0 0
      %854 = vmatpush2.bf16.msra.mxu0 0
      %855 = vmatprep.subr.bf16.mxu0 0
      %856 = vmatpush2.bf16.msra.mxu0 0
      %857 = vmatprep.subr.bf16.mxu0 0
      %858 = vmatpush2.bf16.msra.mxu0 0
      %859 = vmatprep.subr.bf16.mxu0 0
      %860 = vmatpush2.bf16.msra.mxu0 0
      %861 = vmatprep.subr.bf16.mxu0 0
      %862 = vmatpush2.bf16.msra.mxu0 0
      %863 = vmatprep.mubr.bf16.mxu0 0
      %864 = vmatmul.mubr.bf16.gmra.mxu0 %v820
      %v865 = vpop.f32.mrf.mxu0
      %v866 = vadd.f32 0.0, %v865
      %v867 = vpop.f32.mrf.mxu0
      %v868 = vpop.f32.mrf.mxu0
      %v869 = vadd.f32 0.0, %v868
      %v870 = vpop.f32.mrf.mxu0
      %871 = vmatprep.mubr.bf16.mxu0 0
      %872 = vmatmul.mubr.bf16.gmra.mxu0 %v823
      %v873 = vpop.f32.mrf.mxu0
      %v874 = vadd.f32 0.0, %v873
      %v875 = vpop.f32.mrf.mxu0
      %v876 = vpop.f32.mrf.mxu0
      %v877 = vadd.f32 0.0, %v876
      %v878 = vpop.f32.mrf.mxu0
      %879 = vmatprep.mubr.bf16.mxu0 0
      %880 = vmatmul.mubr.bf16.gmra.mxu0 %v826
      %v881 = vpop.f32.mrf.mxu0
      %v882 = vadd.f32 0.0, %v881
      %v883 = vpop.f32.mrf.mxu0
      %v884 = vpop.f32.mrf.mxu0
      %v885 = vadd.f32 0.0, %v884
      %v886 = vpop.f32.mrf.mxu0
      %887 = vmatprep.mubr.bf16.mxu0 0
      %888 = vmatmul.mubr.bf16.gmra.mxu0 %v829
      %v889 = vpop.f32.mrf.mxu0
      %v890 = vadd.f32 0.0, %v889
      %v891 = vpop.f32.mrf.mxu0
      %v892 = vpop.f32.mrf.mxu0
      %v893 = vpop.f32.mrf.mxu0
      %894 = vdwg.mxu0
      %v896 = vsel %vm208, %v651, 0
      %v899 = vsel %vm208, %v652, 0
      %v902 = vsel %vm208, %v653, 0
      %v905 = vsel %vm208, %v654, 0
      %907 = vmatprep.subr.bf16.mxu0 0
      %908 = vmatpush1.bf16.msra.mxu0 0
      %909 = vmatprep.subr.bf16.mxu0 0
      %910 = vmatpush1.bf16.msra.mxu0 0
      %911 = vmatprep.subr.bf16.mxu0 0
      %912 = vmatpush1.bf16.msra.mxu0 0
      %913 = vmatprep.subr.bf16.mxu0 0
      %914 = vmatpush1.bf16.msra.mxu0 0
      %915 = vmatprep.subr.bf16.mxu0 0
      %916 = vmatpush1.bf16.msra.mxu0 0
      %917 = vmatprep.subr.bf16.mxu0 0
      %918 = vmatpush1.bf16.msra.mxu0 0
      %919 = vmatprep.subr.bf16.mxu0 0
      %920 = vmatpush1.bf16.msra.mxu0 %v664
      %921 = vmatprep.subr.bf16.mxu0 0
      %922 = vmatpush1.bf16.msra.mxu0 %v663
      %923 = vmatprep.subr.bf16.mxu0 0
      %924 = vmatpush2.bf16.msra.mxu0 0
      %925 = vmatprep.subr.bf16.mxu0 0
      %926 = vmatpush2.bf16.msra.mxu0 0
      %927 = vmatprep.subr.bf16.mxu0 0
      %928 = vmatpush2.bf16.msra.mxu0 0
      %929 = vmatprep.subr.bf16.mxu0 0
      %930 = vmatpush2.bf16.msra.mxu0 0
      %931 = vmatprep.subr.bf16.mxu0 0
      %932 = vmatpush2.bf16.msra.mxu0 0
      %933 = vmatprep.subr.bf16.mxu0 0
      %934 = vmatpush2.bf16.msra.mxu0 0
      %935 = vmatprep.subr.bf16.mxu0 0
      %936 = vmatpush2.bf16.msra.mxu0 0
      %937 = vmatprep.subr.bf16.mxu0 0
      %938 = vmatpush2.bf16.msra.mxu0 0
      %939 = vmatprep.mubr.bf16.mxu0 0
      %940 = vmatmul.mubr.bf16.gmra.mxu0 %v896
      %v941 = vpop.f32.mrf.mxu0
      %v942 = vadd.f32 0.0, %v941
      %v943 = vpop.f32.mrf.mxu0
      %v944 = vpop.f32.mrf.mxu0
      %v945 = vadd.f32 0.0, %v944
      %v946 = vpop.f32.mrf.mxu0
      %947 = vmatprep.mubr.bf16.mxu0 0
      %948 = vmatmul.mubr.bf16.gmra.mxu0 %v899
      %v949 = vpop.f32.mrf.mxu0
      %v950 = vadd.f32 0.0, %v949
      %v951 = vpop.f32.mrf.mxu0
      %v952 = vpop.f32.mrf.mxu0
      %v953 = vadd.f32 0.0, %v952
      %v954 = vpop.f32.mrf.mxu0
      %955 = vmatprep.mubr.bf16.mxu0 0
      %956 = vmatmul.mubr.bf16.gmra.mxu0 %v902
      %v957 = vpop.f32.mrf.mxu0
      %v958 = vadd.f32 0.0, %v957
      %v959 = vpop.f32.mrf.mxu0
      %v960 = vpop.f32.mrf.mxu0
      %v961 = vadd.f32 0.0, %v960
      %v962 = vpop.f32.mrf.mxu0
      %963 = vmatprep.mubr.bf16.mxu0 0
      %964 = vmatmul.mubr.bf16.gmra.mxu0 %v905
      %v965 = vpop.f32.mrf.mxu0
      %v966 = vadd.f32 0.0, %v965
      %v967 = vpop.f32.mrf.mxu0
      %v968 = vpop.f32.mrf.mxu0
      %v969 = vpop.f32.mrf.mxu0
      %970 = vdwg.mxu0
      %v971 = vlaneseq
      %v972 = vshrl.u32 %v971, 7
      %v973 = vsub.s32 2, %v972
      %v974 = vrot.slane %v200, %v973
      %v975 = vadd.f32 %v714, %v974
      %v976 = vadd.f32 %v717, %v974
      %v977 = vadd.f32 %v722, %v974
      %v978 = vadd.f32 %v725, %v974
      %v979 = vadd.f32 %v730, %v974
      %v980 = vadd.f32 %v733, %v974
      %v981 = vadd.f32 %v738, %v974
      %v982 = vadd.f32 %v790, %v974
      %v983 = vadd.f32 %v793, %v974
      %v984 = vadd.f32 %v798, %v974
      %v985 = vadd.f32 %v801, %v974
      %v986 = vadd.f32 %v806, %v974
      %v987 = vadd.f32 %v809, %v974
      %v988 = vadd.f32 %v814, %v974
      %v989 = vadd.f32 %v866, %v974
      %v990 = vadd.f32 %v869, %v974
      %v991 = vadd.f32 %v874, %v974
      %v992 = vadd.f32 %v877, %v974
      %v993 = vadd.f32 %v882, %v974
      %v994 = vadd.f32 %v885, %v974
      %v995 = vadd.f32 %v890, %v974
      %v996 = vadd.f32 %v942, %v974
      %v997 = vadd.f32 %v945, %v974
      %v998 = vadd.f32 %v950, %v974
      %v999 = vadd.f32 %v953, %v974
      %v1000 = vadd.f32 %v958, %v974
      %v1001 = vadd.f32 %v961, %v974
      %v1002 = vadd.f32 %v966, %v974
      %v1003 = vsel %vm208, %v975, 0.0
      %1004 = vadd.xlane.f32.xlu0 %v1003
      %v1005 = vpop.xlane.xlu0 %1004
      %v1006 = vsel %vm208, %v976, 0.0
      %1007 = vadd.xlane.f32.xlu0 %v1006
      %v1008 = vpop.xlane.xlu0 %1007
      %v1009 = vsel %vm208, %v977, 0.0
      %1010 = vadd.xlane.f32.xlu0 %v1009
      %v1011 = vpop.xlane.xlu0 %1010
      %v1012 = vsel %vm208, %v978, 0.0
      %1013 = vadd.xlane.f32.xlu0 %v1012
      %v1014 = vpop.xlane.xlu0 %1013
      %v1015 = vsel %vm208, %v979, 0.0
      %1016 = vadd.xlane.f32.xlu0 %v1015
      %v1017 = vpop.xlane.xlu0 %1016
      %v1018 = vsel %vm208, %v980, 0.0
      %1019 = vadd.xlane.f32.xlu0 %v1018
      %v1020 = vpop.xlane.xlu0 %1019
      %v1021 = vsel %vm227, %v981, 0.0
      %1022 = vadd.xlane.f32.xlu0 %v1021
      %v1023 = vpop.xlane.xlu0 %1022
      %v1024 = vsel %vm208, %v982, 0.0
      %1025 = vadd.xlane.f32.xlu0 %v1024
      %v1026 = vpop.xlane.xlu0 %1025
      %v1027 = vsel %vm208, %v983, 0.0
      %1028 = vadd.xlane.f32.xlu0 %v1027
      %v1029 = vpop.xlane.xlu0 %1028
      %v1030 = vsel %vm208, %v984, 0.0
      %1031 = vadd.xlane.f32.xlu0 %v1030
      %v1032 = vpop.xlane.xlu0 %1031
      %v1033 = vsel %vm208, %v985, 0.0
      %1034 = vadd.xlane.f32.xlu0 %v1033
      %v1035 = vpop.xlane.xlu0 %1034
      %v1036 = vsel %vm208, %v986, 0.0
      %1037 = vadd.xlane.f32.xlu0 %v1036
      %v1038 = vpop.xlane.xlu0 %1037
      %v1039 = vsel %vm208, %v987, 0.0
      %1040 = vadd.xlane.f32.xlu0 %v1039
      %v1041 = vpop.xlane.xlu0 %1040
      %v1042 = vsel %vm227, %v988, 0.0
      %1043 = vadd.xlane.f32.xlu0 %v1042
      %v1044 = vpop.xlane.xlu0 %1043
      %v1045 = vsel %vm208, %v989, 0.0
      %1046 = vadd.xlane.f32.xlu0 %v1045
      %v1047 = vpop.xlane.xlu0 %1046
      %v1048 = vsel %vm208, %v990, 0.0
      %1049 = vadd.xlane.f32.xlu0 %v1048
      %v1050 = vpop.xlane.xlu0 %1049
      %v1051 = vsel %vm208, %v991, 0.0
      %1052 = vadd.xlane.f32.xlu0 %v1051
      %v1053 = vpop.xlane.xlu0 %1052
      %v1054 = vsel %vm208, %v992, 0.0
      %1055 = vadd.xlane.f32.xlu0 %v1054
      %v1056 = vpop.xlane.xlu0 %1055
      %v1057 = vsel %vm208, %v993, 0.0
      %1058 = vadd.xlane.f32.xlu0 %v1057
      %v1059 = vpop.xlane.xlu0 %1058
      %v1060 = vsel %vm208, %v994, 0.0
      %1061 = vadd.xlane.f32.xlu0 %v1060
      %v1062 = vpop.xlane.xlu0 %1061
      %v1063 = vsel %vm227, %v995, 0.0
      %1064 = vadd.xlane.f32.xlu0 %v1063
      %v1065 = vpop.xlane.xlu0 %1064
      %v1066 = vsel %vm208, %v996, 0.0
      %1067 = vadd.xlane.f32.xlu0 %v1066
      %v1068 = vpop.xlane.xlu0 %1067
      %v1069 = vsel %vm208, %v997, 0.0
      %1070 = vadd.xlane.f32.xlu0 %v1069
      %v1071 = vpop.xlane.xlu0 %1070
      %v1072 = vsel %vm208, %v998, 0.0
      %1073 = vadd.xlane.f32.xlu0 %v1072
      %v1074 = vpop.xlane.xlu0 %1073
      %v1075 = vsel %vm208, %v999, 0.0
      %1076 = vadd.xlane.f32.xlu0 %v1075
      %v1077 = vpop.xlane.xlu0 %1076
      %v1078 = vsel %vm208, %v1000, 0.0
      %1079 = vadd.xlane.f32.xlu0 %v1078
      %v1080 = vpop.xlane.xlu0 %1079
      %v1081 = vsel %vm208, %v1001, 0.0
      %1082 = vadd.xlane.f32.xlu0 %v1081
      %v1083 = vpop.xlane.xlu0 %1082
      %v1084 = vsel %vm227, %v1002, 0.0
      %1085 = vadd.xlane.f32.xlu0 %v1084
      %v1086 = vpop.xlane.xlu0 %1085
      %v1087 = vmul.f32 %v1005, %v294
      %v1088 = vmul.f32 %v1008, %v294
      %v1089 = vmul.f32 %v1011, %v294
      %v1090 = vmul.f32 %v1014, %v294
      %v1091 = vmul.f32 %v1017, %v294
      %v1092 = vmul.f32 %v1020, %v294
      %v1093 = vmul.f32 %v1023, %v294
      %v1094 = vmul.f32 %v1026, %v294
      %v1095 = vmul.f32 %v1029, %v294
      %v1096 = vmul.f32 %v1032, %v294
      %v1097 = vmul.f32 %v1035, %v294
      %v1098 = vmul.f32 %v1038, %v294
      %v1099 = vmul.f32 %v1041, %v294
      %v1100 = vmul.f32 %v1044, %v294
      %v1101 = vmul.f32 %v1047, %v294
      %v1102 = vmul.f32 %v1050, %v294
      %v1103 = vmul.f32 %v1053, %v294
      %v1104 = vmul.f32 %v1056, %v294
      %v1105 = vmul.f32 %v1059, %v294
      %v1106 = vmul.f32 %v1062, %v294
      %v1107 = vmul.f32 %v1065, %v294
      %v1108 = vmul.f32 %v1068, %v294
      %v1109 = vmul.f32 %v1071, %v294
      %v1110 = vmul.f32 %v1074, %v294
      %v1111 = vmul.f32 %v1077, %v294
      %v1112 = vmul.f32 %v1080, %v294
      %v1113 = vmul.f32 %v1083, %v294
      %v1114 = vmul.f32 %v1086, %v294
      %v1115 = vsub.f32 %v975, %v1087
      %v1116 = vsub.f32 %v976, %v1088
      %v1117 = vsub.f32 %v977, %v1089
      %v1118 = vsub.f32 %v978, %v1090
      %v1119 = vsub.f32 %v979, %v1091
      %v1120 = vsub.f32 %v980, %v1092
      %v1121 = vsub.f32 %v981, %v1093
      %v1122 = vsub.f32 %v982, %v1094
      %v1123 = vsub.f32 %v983, %v1095
      %v1124 = vsub.f32 %v984, %v1096
      %v1125 = vsub.f32 %v985, %v1097
      %v1126 = vsub.f32 %v986, %v1098
      %v1127 = vsub.f32 %v987, %v1099
      %v1128 = vsub.f32 %v988, %v1100
      %v1129 = vsub.f32 %v989, %v1101
      %v1130 = vsub.f32 %v990, %v1102
      %v1131 = vsub.f32 %v991, %v1103
      %v1132 = vsub.f32 %v992, %v1104
      %v1133 = vsub.f32 %v993, %v1105
      %v1134 = vsub.f32 %v994, %v1106
      %v1135 = vsub.f32 %v995, %v1107
      %v1136 = vsub.f32 %v996, %v1108
      %v1137 = vsub.f32 %v997, %v1109
      %v1138 = vsub.f32 %v998, %v1110
      %v1139 = vsub.f32 %v999, %v1111
      %v1140 = vsub.f32 %v1000, %v1112
      %v1141 = vsub.f32 %v1001, %v1113
      %v1142 = vsub.f32 %v1002, %v1114
      %v1143 = vmul.f32 %v1115, %v1115
      %v1144 = vmul.f32 %v1116, %v1116
      %v1145 = vmul.f32 %v1117, %v1117
      %v1146 = vmul.f32 %v1118, %v1118
      %v1147 = vmul.f32 %v1119, %v1119
      %v1148 = vmul.f32 %v1120, %v1120
      %v1149 = vmul.f32 %v1121, %v1121
      %v1150 = vmul.f32 %v1122, %v1122
      %v1151 = vmul.f32 %v1123, %v1123
      %v1152 = vmul.f32 %v1124, %v1124
      %v1153 = vmul.f32 %v1125, %v1125
      %v1154 = vmul.f32 %v1126, %v1126
      %v1155 = vmul.f32 %v1127, %v1127
      %v1156 = vmul.f32 %v1128, %v1128
      %v1157 = vmul.f32 %v1129, %v1129
      %v1158 = vmul.f32 %v1130, %v1130
      %v1159 = vmul.f32 %v1131, %v1131
      %v1160 = vmul.f32 %v1132, %v1132
      %v1161 = vmul.f32 %v1133, %v1133
      %v1162 = vmul.f32 %v1134, %v1134
      %v1163 = vmul.f32 %v1135, %v1135
      %v1164 = vmul.f32 %v1136, %v1136
      %v1165 = vmul.f32 %v1137, %v1137
      %v1166 = vmul.f32 %v1138, %v1138
      %v1167 = vmul.f32 %v1139, %v1139
      %v1168 = vmul.f32 %v1140, %v1140
      %v1169 = vmul.f32 %v1141, %v1141
      %v1170 = vmul.f32 %v1142, %v1142
      %v1171 = vsel %vm208, %v1143, 0.0
      %1172 = vadd.xlane.f32.xlu0 %v1171
      %v1173 = vpop.xlane.xlu0 %1172
      %v1174 = vsel %vm208, %v1144, 0.0
      %1175 = vadd.xlane.f32.xlu0 %v1174
      %v1176 = vpop.xlane.xlu0 %1175
      %v1177 = vsel %vm208, %v1145, 0.0
      %1178 = vadd.xlane.f32.xlu0 %v1177
      %v1179 = vpop.xlane.xlu0 %1178
      %v1180 = vsel %vm208, %v1146, 0.0
      %1181 = vadd.xlane.f32.xlu0 %v1180
      %v1182 = vpop.xlane.xlu0 %1181
      %v1183 = vsel %vm208, %v1147, 0.0
      %1184 = vadd.xlane.f32.xlu0 %v1183
      %v1185 = vpop.xlane.xlu0 %1184
      %v1186 = vsel %vm208, %v1148, 0.0
      %1187 = vadd.xlane.f32.xlu0 %v1186
      %v1188 = vpop.xlane.xlu0 %1187
      %v1189 = vsel %vm227, %v1149, 0.0
      %1190 = vadd.xlane.f32.xlu0 %v1189
      %v1191 = vpop.xlane.xlu0 %1190
      %v1192 = vsel %vm208, %v1150, 0.0
      %1193 = vadd.xlane.f32.xlu0 %v1192
      %v1194 = vpop.xlane.xlu0 %1193
      %v1195 = vsel %vm208, %v1151, 0.0
      %1196 = vadd.xlane.f32.xlu0 %v1195
      %v1197 = vpop.xlane.xlu0 %1196
      %v1198 = vsel %vm208, %v1152, 0.0
      %1199 = vadd.xlane.f32.xlu0 %v1198
      %v1200 = vpop.xlane.xlu0 %1199
      %v1201 = vsel %vm208, %v1153, 0.0
      %1202 = vadd.xlane.f32.xlu0 %v1201
      %v1203 = vpop.xlane.xlu0 %1202
      %v1204 = vsel %vm208, %v1154, 0.0
      %1205 = vadd.xlane.f32.xlu0 %v1204
      %v1206 = vpop.xlane.xlu0 %1205
      %v1207 = vsel %vm208, %v1155, 0.0
      %1208 = vadd.xlane.f32.xlu0 %v1207
      %v1209 = vpop.xlane.xlu0 %1208
      %v1210 = vsel %vm227, %v1156, 0.0
      %1211 = vadd.xlane.f32.xlu0 %v1210
      %v1212 = vpop.xlane.xlu0 %1211
      %v1213 = vsel %vm208, %v1157, 0.0
      %1214 = vadd.xlane.f32.xlu0 %v1213
      %v1215 = vpop.xlane.xlu0 %1214
      %v1216 = vsel %vm208, %v1158, 0.0
      %1217 = vadd.xlane.f32.xlu0 %v1216
      %v1218 = vpop.xlane.xlu0 %1217
      %v1219 = vsel %vm208, %v1159, 0.0
      %1220 = vadd.xlane.f32.xlu0 %v1219
      %v1221 = vpop.xlane.xlu0 %1220
      %v1222 = vsel %vm208, %v1160, 0.0
      %1223 = vadd.xlane.f32.xlu0 %v1222
      %v1224 = vpop.xlane.xlu0 %1223
      %v1225 = vsel %vm208, %v1161, 0.0
      %1226 = vadd.xlane.f32.xlu0 %v1225
      %v1227 = vpop.xlane.xlu0 %1226
      %v1228 = vsel %vm208, %v1162, 0.0
      %1229 = vadd.xlane.f32.xlu0 %v1228
      %v1230 = vpop.xlane.xlu0 %1229
      %v1231 = vsel %vm227, %v1163, 0.0
      %1232 = vadd.xlane.f32.xlu0 %v1231
      %v1233 = vpop.xlane.xlu0 %1232
      %v1234 = vsel %vm208, %v1164, 0.0
      %1235 = vadd.xlane.f32.xlu0 %v1234
      %v1236 = vpop.xlane.xlu0 %1235
      %v1237 = vsel %vm208, %v1165, 0.0
      %1238 = vadd.xlane.f32.xlu0 %v1237
      %v1239 = vpop.xlane.xlu0 %1238
      %v1240 = vsel %vm208, %v1166, 0.0
      %1241 = vadd.xlane.f32.xlu0 %v1240
      %v1242 = vpop.xlane.xlu0 %1241
      %v1243 = vsel %vm208, %v1167, 0.0
      %1244 = vadd.xlane.f32.xlu0 %v1243
      %v1245 = vpop.xlane.xlu0 %1244
      %v1246 = vsel %vm208, %v1168, 0.0
      %1247 = vadd.xlane.f32.xlu0 %v1246
      %v1248 = vpop.xlane.xlu0 %1247
      %v1249 = vsel %vm208, %v1169, 0.0
      %1250 = vadd.xlane.f32.xlu0 %v1249
      %v1251 = vpop.xlane.xlu0 %1250
      %v1252 = vsel %vm227, %v1170, 0.0
      %1253 = vadd.xlane.f32.xlu0 %v1252
      %v1254 = vpop.xlane.xlu0 %1253
      %v1255 = vmul.f32 %v1173, %v294
      %v1256 = vmul.f32 %v1176, %v294
      %v1257 = vmul.f32 %v1179, %v294
      %v1258 = vmul.f32 %v1182, %v294
      %v1259 = vmul.f32 %v1185, %v294
      %v1260 = vmul.f32 %v1188, %v294
      %v1261 = vmul.f32 %v1191, %v294
      %v1262 = vmul.f32 %v1194, %v294
      %v1263 = vmul.f32 %v1197, %v294
      %v1264 = vmul.f32 %v1200, %v294
      %v1265 = vmul.f32 %v1203, %v294
      %v1266 = vmul.f32 %v1206, %v294
      %v1267 = vmul.f32 %v1209, %v294
      %v1268 = vmul.f32 %v1212, %v294
      %v1269 = vmul.f32 %v1215, %v294
      %v1270 = vmul.f32 %v1218, %v294
      %v1271 = vmul.f32 %v1221, %v294
      %v1272 = vmul.f32 %v1224, %v294
      %v1273 = vmul.f32 %v1227, %v294
      %v1274 = vmul.f32 %v1230, %v294
      %v1275 = vmul.f32 %v1233, %v294
      %v1276 = vmul.f32 %v1236, %v294
      %v1277 = vmul.f32 %v1239, %v294
      %v1278 = vmul.f32 %v1242, %v294
      %v1279 = vmul.f32 %v1245, %v294
      %v1280 = vmul.f32 %v1248, %v294
      %v1281 = vmul.f32 %v1251, %v294
      %v1282 = vmul.f32 %v1254, %v294
      %v1283 = vadd.f32 %v1255, 1e-12
      %v1284 = vadd.f32 %v1256, 1e-12
      %v1285 = vadd.f32 %v1257, 1e-12
      %v1286 = vadd.f32 %v1258, 1e-12
      %v1287 = vadd.f32 %v1259, 1e-12
      %v1288 = vadd.f32 %v1260, 1e-12
      %v1289 = vadd.f32 %v1261, 1e-12
      %v1290 = vadd.f32 %v1262, 1e-12
      %v1291 = vadd.f32 %v1263, 1e-12
      %v1292 = vadd.f32 %v1264, 1e-12
      %v1293 = vadd.f32 %v1265, 1e-12
      %v1294 = vadd.f32 %v1266, 1e-12
      %v1295 = vadd.f32 %v1267, 1e-12
      %v1296 = vadd.f32 %v1268, 1e-12
      %v1297 = vadd.f32 %v1269, 1e-12
      %v1298 = vadd.f32 %v1270, 1e-12
      %v1299 = vadd.f32 %v1271, 1e-12
      %v1300 = vadd.f32 %v1272, 1e-12
      %v1301 = vadd.f32 %v1273, 1e-12
      %v1302 = vadd.f32 %v1274, 1e-12
      %v1303 = vadd.f32 %v1275, 1e-12
      %v1304 = vadd.f32 %v1276, 1e-12
      %v1305 = vadd.f32 %v1277, 1e-12
      %v1306 = vadd.f32 %v1278, 1e-12
      %v1307 = vadd.f32 %v1279, 1e-12
      %v1308 = vadd.f32 %v1280, 1e-12
      %v1309 = vadd.f32 %v1281, 1e-12
      %v1310 = vadd.f32 %v1282, 1e-12
      %v1311 = vrsqrt.pop %v1283
      %v1312 = vrsqrt.pop %v1284
      %v1313 = vrsqrt.pop %v1285
      %v1314 = vrsqrt.pop %v1286
      %v1315 = vrsqrt.pop %v1287
      %v1316 = vrsqrt.pop %v1288
      %v1317 = vrsqrt.pop %v1289
      %v1318 = vrsqrt.pop %v1290
      %v1319 = vrsqrt.pop %v1291
      %v1320 = vrsqrt.pop %v1292
      %v1321 = vrsqrt.pop %v1293
      %v1322 = vrsqrt.pop %v1294
      %v1323 = vrsqrt.pop %v1295
      %v1324 = vrsqrt.pop %v1296
      %v1325 = vrsqrt.pop %v1297
      %v1326 = vrsqrt.pop %v1298
      %v1327 = vrsqrt.pop %v1299
      %v1328 = vrsqrt.pop %v1300
      %v1329 = vrsqrt.pop %v1301
      %v1330 = vrsqrt.pop %v1302
      %v1331 = vrsqrt.pop %v1303
      %v1332 = vrsqrt.pop %v1304
      %v1333 = vrsqrt.pop %v1305
      %v1334 = vrsqrt.pop %v1306
      %v1335 = vrsqrt.pop %v1307
      %v1336 = vrsqrt.pop %v1308
      %v1337 = vrsqrt.pop %v1309
      %v1338 = vrsqrt.pop %v1310
      %v1339 = vmul.f32 %v1115, %v1311
      %v1340 = vmul.f32 %v1116, %v1312
      %v1341 = vmul.f32 %v1117, %v1313
      %v1342 = vmul.f32 %v1118, %v1314
      %v1343 = vmul.f32 %v1119, %v1315
      %v1344 = vmul.f32 %v1120, %v1316
      %v1345 = vmul.f32 %v1121, %v1317
      %v1346 = vmul.f32 %v1122, %v1318
      %v1347 = vmul.f32 %v1123, %v1319
      %v1348 = vmul.f32 %v1124, %v1320
      %v1349 = vmul.f32 %v1125, %v1321
      %v1350 = vmul.f32 %v1126, %v1322
      %v1351 = vmul.f32 %v1127, %v1323
      %v1352 = vmul.f32 %v1128, %v1324
      %v1353 = vmul.f32 %v1129, %v1325
      %v1354 = vmul.f32 %v1130, %v1326
      %v1355 = vmul.f32 %v1131, %v1327
      %v1356 = vmul.f32 %v1132, %v1328
      %v1357 = vmul.f32 %v1133, %v1329
      %v1358 = vmul.f32 %v1134, %v1330
      %v1359 = vmul.f32 %v1135, %v1331
      %v1360 = vmul.f32 %v1136, %v1332
      %v1361 = vmul.f32 %v1137, %v1333
      %v1362 = vmul.f32 %v1138, %v1334
      %v1363 = vmul.f32 %v1139, %v1335
      %v1364 = vmul.f32 %v1140, %v1336
      %v1365 = vmul.f32 %v1141, %v1337
      %v1366 = vmul.f32 %v1142, %v1338
      %v1367 = vlaneseq
      %v1368 = vshrl.u32 %v1367, 7
      %v1369 = vsub.s32 3, %v1368
      %v1370 = vrot.slane %v200, %v1369
      %v1371 = vmul.f32 %v1339, %v1370
      %v1372 = vmul.f32 %v1340, %v1370
      %v1373 = vmul.f32 %v1341, %v1370
      %v1374 = vmul.f32 %v1342, %v1370
      %v1375 = vmul.f32 %v1343, %v1370
      %v1376 = vmul.f32 %v1344, %v1370
      %v1377 = vmul.f32 %v1345, %v1370
      %v1378 = vmul.f32 %v1346, %v1370
      %v1379 = vmul.f32 %v1347, %v1370
      %v1380 = vmul.f32 %v1348, %v1370
      %v1381 = vmul.f32 %v1349, %v1370
      %v1382 = vmul.f32 %v1350, %v1370
      %v1383 = vmul.f32 %v1351, %v1370
      %v1384 = vmul.f32 %v1352, %v1370
      %v1385 = vmul.f32 %v1353, %v1370
      %v1386 = vmul.f32 %v1354, %v1370
      %v1387 = vmul.f32 %v1355, %v1370
      %v1388 = vmul.f32 %v1356, %v1370
      %v1389 = vmul.f32 %v1357, %v1370
      %v1390 = vmul.f32 %v1358, %v1370
      %v1391 = vmul.f32 %v1359, %v1370
      %v1392 = vmul.f32 %v1360, %v1370
      %v1393 = vmul.f32 %v1361, %v1370
      %v1394 = vmul.f32 %v1362, %v1370
      %v1395 = vmul.f32 %v1363, %v1370
      %v1396 = vmul.f32 %v1364, %v1370
      %v1397 = vmul.f32 %v1365, %v1370
      %v1398 = vmul.f32 %v1366, %v1370
      %v1399 = vlaneseq
      %v1400 = vshrl.u32 %v1399, 7
      %v1401 = vsub.s32 4, %v1400
      %v1402 = vrot.slane %v200, %v1401
      %v1403 = vadd.f32 %v1371, %v1402
      %v1404 = vadd.f32 %v1372, %v1402
      %v1405 = vadd.f32 %v1373, %v1402
      %v1406 = vadd.f32 %v1374, %v1402
      %v1407 = vadd.f32 %v1375, %v1402
      %v1408 = vadd.f32 %v1376, %v1402
      %v1409 = vadd.f32 %v1377, %v1402
      %v1410 = vadd.f32 %v1378, %v1402
      %v1411 = vadd.f32 %v1379, %v1402
      %v1412 = vadd.f32 %v1380, %v1402
      %v1413 = vadd.f32 %v1381, %v1402
      %v1414 = vadd.f32 %v1382, %v1402
      %v1415 = vadd.f32 %v1383, %v1402
      %v1416 = vadd.f32 %v1384, %v1402
      %v1417 = vadd.f32 %v1385, %v1402
      %v1418 = vadd.f32 %v1386, %v1402
      %v1419 = vadd.f32 %v1387, %v1402
      %v1420 = vadd.f32 %v1388, %v1402
      %v1421 = vadd.f32 %v1389, %v1402
      %v1422 = vadd.f32 %v1390, %v1402
      %v1423 = vadd.f32 %v1391, %v1402
      %v1424 = vadd.f32 %v1392, %v1402
      %v1425 = vadd.f32 %v1393, %v1402
      %v1426 = vadd.f32 %v1394, %v1402
      %v1427 = vadd.f32 %v1395, %v1402
      %v1428 = vadd.f32 %v1396, %v1402
      %v1429 = vadd.f32 %v1397, %v1402
      %v1430 = vadd.f32 %v1398, %v1402
      %v1431 = vadd.f32 %v1403, %v611
      %v1432 = vadd.f32 %v1404, %v612
      %v1433 = vadd.f32 %v1405, %v613
      %v1434 = vadd.f32 %v1406, %v614
      %v1435 = vadd.f32 %v1407, %v615
      %v1436 = vadd.f32 %v1408, %v616
      %v1437 = vadd.f32 %v1409, %v617
      %v1438 = vadd.f32 %v1410, %v618
      %v1439 = vadd.f32 %v1411, %v619
      %v1440 = vadd.f32 %v1412, %v620
      %v1441 = vadd.f32 %v1413, %v621
      %v1442 = vadd.f32 %v1414, %v622
      %v1443 = vadd.f32 %v1415, %v623
      %v1444 = vadd.f32 %v1416, %v624
      %v1445 = vadd.f32 %v1417, %v625
      %v1446 = vadd.f32 %v1418, %v626
      %v1447 = vadd.f32 %v1419, %v627
      %v1448 = vadd.f32 %v1420, %v628
      %v1449 = vadd.f32 %v1421, %v629
      %v1450 = vadd.f32 %v1422, %v630
      %v1451 = vadd.f32 %v1423, %v631
      %v1452 = vadd.f32 %v1424, %v632
      %v1453 = vadd.f32 %v1425, %v633
      %v1454 = vadd.f32 %v1426, %v634
      %v1455 = vadd.f32 %v1427, %v635
      %v1456 = vadd.f32 %v1428, %v636
      %v1457 = vadd.f32 %v1429, %v637
      %v1458 = vadd.f32 %v1430, %v638
      %v1459 = vlaneseq
      %v1460 = vshrl.u32 %v1459, 7
      %v1461 = vsub.s32 5, %v1460
      %v1462 = vrot.slane %v200, %v1461
      %v1463 = vsub.f32 %v1431, %v1462
      %v1464 = vsub.f32 %v1432, %v1462
      %v1465 = vsub.f32 %v1433, %v1462
      %v1466 = vsub.f32 %v1434, %v1462
      %v1467 = vsub.f32 %v1435, %v1462
      %v1468 = vsub.f32 %v1436, %v1462
      %v1469 = vsub.f32 %v1437, %v1462
      %v1470 = vsub.f32 %v1438, %v1462
      %v1471 = vsub.f32 %v1439, %v1462
      %v1472 = vsub.f32 %v1440, %v1462
      %v1473 = vsub.f32 %v1441, %v1462
      %v1474 = vsub.f32 %v1442, %v1462
      %v1475 = vsub.f32 %v1443, %v1462
      %v1476 = vsub.f32 %v1444, %v1462
      %v1477 = vsub.f32 %v1445, %v1462
      %v1478 = vsub.f32 %v1446, %v1462
      %v1479 = vsub.f32 %v1447, %v1462
      %v1480 = vsub.f32 %v1448, %v1462
      %v1481 = vsub.f32 %v1449, %v1462
      %v1482 = vsub.f32 %v1450, %v1462
      %v1483 = vsub.f32 %v1451, %v1462
      %v1484 = vsub.f32 %v1452, %v1462
      %v1485 = vsub.f32 %v1453, %v1462
      %v1486 = vsub.f32 %v1454, %v1462
      %v1487 = vsub.f32 %v1455, %v1462
      %v1488 = vsub.f32 %v1456, %v1462
      %v1489 = vsub.f32 %v1457, %v1462
      %v1490 = vsub.f32 %v1458, %v1462
      %vm1491 = vcmp.ge.f32.partialorder %v1463, 0.0
      %vm1492 = vcmp.ge.f32.partialorder %v1464, 0.0
      %vm1493 = vcmp.ge.f32.partialorder %v1465, 0.0
      %vm1494 = vcmp.ge.f32.partialorder %v1466, 0.0
      %vm1495 = vcmp.ge.f32.partialorder %v1467, 0.0
      %vm1496 = vcmp.ge.f32.partialorder %v1468, 0.0
      %vm1497 = vcmp.ge.f32.partialorder %v1469, 0.0
      %vm1498 = vcmp.ge.f32.partialorder %v1470, 0.0
      %vm1499 = vcmp.ge.f32.partialorder %v1471, 0.0
      %vm1500 = vcmp.ge.f32.partialorder %v1472, 0.0
      %vm1501 = vcmp.ge.f32.partialorder %v1473, 0.0
      %vm1502 = vcmp.ge.f32.partialorder %v1474, 0.0
      %vm1503 = vcmp.ge.f32.partialorder %v1475, 0.0
      %vm1504 = vcmp.ge.f32.partialorder %v1476, 0.0
      %vm1505 = vcmp.ge.f32.partialorder %v1477, 0.0
      %vm1506 = vcmp.ge.f32.partialorder %v1478, 0.0
      %vm1507 = vcmp.ge.f32.partialorder %v1479, 0.0
      %vm1508 = vcmp.ge.f32.partialorder %v1480, 0.0
      %vm1509 = vcmp.ge.f32.partialorder %v1481, 0.0
      %vm1510 = vcmp.ge.f32.partialorder %v1482, 0.0
      %vm1511 = vcmp.ge.f32.partialorder %v1483, 0.0
      %vm1512 = vcmp.ge.f32.partialorder %v1484, 0.0
      %vm1513 = vcmp.ge.f32.partialorder %v1485, 0.0
      %vm1514 = vcmp.ge.f32.partialorder %v1486, 0.0
      %vm1515 = vcmp.ge.f32.partialorder %v1487, 0.0
      %vm1516 = vcmp.ge.f32.partialorder %v1488, 0.0
      %vm1517 = vcmp.ge.f32.partialorder %v1489, 0.0
      %vm1518 = vcmp.ge.f32.partialorder %v1490, 0.0
      %v1519 = vlaneseq
      %v1520 = vshrl.u32 %v1519, 7
      %v1521 = vsub.s32 6, %v1520
      %v1522 = vrot.slane %v200, %v1521
      %v1523 = vmul.f32 %v1522, %v1463
      %v1524 = vmul.f32 %v1522, %v1464
      %v1525 = vmul.f32 %v1522, %v1465
      %v1526 = vmul.f32 %v1522, %v1466
      %v1527 = vmul.f32 %v1522, %v1467
      %v1528 = vmul.f32 %v1522, %v1468
      %v1529 = vmul.f32 %v1522, %v1469
      %v1530 = vmul.f32 %v1522, %v1470
      %v1531 = vmul.f32 %v1522, %v1471
      %v1532 = vmul.f32 %v1522, %v1472
      %v1533 = vmul.f32 %v1522, %v1473
      %v1534 = vmul.f32 %v1522, %v1474
      %v1535 = vmul.f32 %v1522, %v1475
      %v1536 = vmul.f32 %v1522, %v1476
      %v1537 = vmul.f32 %v1522, %v1477
      %v1538 = vmul.f32 %v1522, %v1478
      %v1539 = vmul.f32 %v1522, %v1479
      %v1540 = vmul.f32 %v1522, %v1480
      %v1541 = vmul.f32 %v1522, %v1481
      %v1542 = vmul.f32 %v1522, %v1482
      %v1543 = vmul.f32 %v1522, %v1483
      %v1544 = vmul.f32 %v1522, %v1484
      %v1545 = vmul.f32 %v1522, %v1485
      %v1546 = vmul.f32 %v1522, %v1486
      %v1547 = vmul.f32 %v1522, %v1487
      %v1548 = vmul.f32 %v1522, %v1488
      %v1549 = vmul.f32 %v1522, %v1489
      %v1550 = vmul.f32 %v1522, %v1490
      %v1551 = vsel %vm1491, %v1463, %v1523
      %v1552 = vsel %vm1492, %v1464, %v1524
      %v1553 = vsel %vm1493, %v1465, %v1525
      %v1554 = vsel %vm1494, %v1466, %v1526
      %v1555 = vsel %vm1495, %v1467, %v1527
      %v1556 = vsel %vm1496, %v1468, %v1528
      %v1557 = vsel %vm1497, %v1469, %v1529
      %v1558 = vsel %vm1498, %v1470, %v1530
      %v1559 = vsel %vm1499, %v1471, %v1531
      %v1560 = vsel %vm1500, %v1472, %v1532
      %v1561 = vsel %vm1501, %v1473, %v1533
      %v1562 = vsel %vm1502, %v1474, %v1534
      %v1563 = vsel %vm1503, %v1475, %v1535
      %v1564 = vsel %vm1504, %v1476, %v1536
      %v1565 = vsel %vm1505, %v1477, %v1537
      %v1566 = vsel %vm1506, %v1478, %v1538
      %v1567 = vsel %vm1507, %v1479, %v1539
      %v1568 = vsel %vm1508, %v1480, %v1540
      %v1569 = vsel %vm1509, %v1481, %v1541
      %v1570 = vsel %vm1510, %v1482, %v1542
      %v1571 = vsel %vm1511, %v1483, %v1543
      %v1572 = vsel %vm1512, %v1484, %v1544
      %v1573 = vsel %vm1513, %v1485, %v1545
      %v1574 = vsel %vm1514, %v1486, %v1546
      %v1575 = vsel %vm1515, %v1487, %v1547
      %v1576 = vsel %vm1516, %v1488, %v1548
      %v1577 = vsel %vm1517, %v1489, %v1549
      %v1578 = vsel %vm1518, %v1490, %v1550
      %v1579 = vlaneseq
      %v1580 = vshrl.u32 %v1579, 7
      %v1581 = vsub.s32 7, %v1580
      %v1582 = vrot.slane %v200, %v1581
      %v1583 = vadd.f32 %v1551, %v1582
      %v1584 = vadd.f32 %v1552, %v1582
      %v1585 = vadd.f32 %v1553, %v1582
      %v1586 = vadd.f32 %v1554, %v1582
      %v1587 = vadd.f32 %v1555, %v1582
      %v1588 = vadd.f32 %v1556, %v1582
      %v1589 = vadd.f32 %v1557, %v1582
      %v1590 = vadd.f32 %v1558, %v1582
      %v1591 = vadd.f32 %v1559, %v1582
      %v1592 = vadd.f32 %v1560, %v1582
      %v1593 = vadd.f32 %v1561, %v1582
      %v1594 = vadd.f32 %v1562, %v1582
      %v1595 = vadd.f32 %v1563, %v1582
      %v1596 = vadd.f32 %v1564, %v1582
      %v1597 = vadd.f32 %v1565, %v1582
      %v1598 = vadd.f32 %v1566, %v1582
      %v1599 = vadd.f32 %v1567, %v1582
      %v1600 = vadd.f32 %v1568, %v1582
      %v1601 = vadd.f32 %v1569, %v1582
      %v1602 = vadd.f32 %v1570, %v1582
      %v1603 = vadd.f32 %v1571, %v1582
      %v1604 = vadd.f32 %v1572, %v1582
      %v1605 = vadd.f32 %v1573, %v1582
      %v1606 = vadd.f32 %v1574, %v1582
      %v1607 = vadd.f32 %v1575, %v1582
      %v1608 = vadd.f32 %v1576, %v1582
      %v1609 = vadd.f32 %v1577, %v1582
      %v1610 = vadd.f32 %v1578, %v1582
      %v1611 = vlaneseq
      %v1612 = vshrl.u32 %v1611, 7
      %v1613 = vsub.s32 0, %v1612
      %v1614 = vrot.slane %v201, %v1613
      %v1615 = vadd.f32 %v1583, %v1614
      %v1616 = vadd.f32 %v1584, %v1614
      %v1617 = vadd.f32 %v1585, %v1614
      %v1618 = vadd.f32 %v1586, %v1614
      %v1619 = vadd.f32 %v1587, %v1614
      %v1620 = vadd.f32 %v1588, %v1614
      %v1621 = vadd.f32 %v1589, %v1614
      %v1622 = vadd.f32 %v1590, %v1614
      %v1623 = vadd.f32 %v1591, %v1614
      %v1624 = vadd.f32 %v1592, %v1614
      %v1625 = vadd.f32 %v1593, %v1614
      %v1626 = vadd.f32 %v1594, %v1614
      %v1627 = vadd.f32 %v1595, %v1614
      %v1628 = vadd.f32 %v1596, %v1614
      %v1629 = vadd.f32 %v1597, %v1614
      %v1630 = vadd.f32 %v1598, %v1614
      %v1631 = vadd.f32 %v1599, %v1614
      %v1632 = vadd.f32 %v1600, %v1614
      %v1633 = vadd.f32 %v1601, %v1614
      %v1634 = vadd.f32 %v1602, %v1614
      %v1635 = vadd.f32 %v1603, %v1614
      %v1636 = vadd.f32 %v1604, %v1614
      %v1637 = vadd.f32 %v1605, %v1614
      %v1638 = vadd.f32 %v1606, %v1614
      %v1639 = vadd.f32 %v1607, %v1614
      %v1640 = vadd.f32 %v1608, %v1614
      %v1641 = vadd.f32 %v1609, %v1614
      %v1642 = vadd.f32 %v1610, %v1614
      %v1643 = vmul.f32 %v1615, 0.35355338
      %v1644 = vmul.f32 %v1616, 0.35355338
      %v1645 = vmul.f32 %v1617, 0.35355338
      %v1646 = vmul.f32 %v1618, 0.35355338
      %v1647 = vmul.f32 %v1619, 0.35355338
      %v1648 = vmul.f32 %v1620, 0.35355338
      %v1649 = vmul.f32 %v1621, 0.35355338
      %v1650 = vmul.f32 %v1622, 0.35355338
      %v1651 = vmul.f32 %v1623, 0.35355338
      %v1652 = vmul.f32 %v1624, 0.35355338
      %v1653 = vmul.f32 %v1625, 0.35355338
      %v1654 = vmul.f32 %v1626, 0.35355338
      %v1655 = vmul.f32 %v1627, 0.35355338
      %v1656 = vmul.f32 %v1628, 0.35355338
      %v1657 = vmul.f32 %v1629, 0.35355338
      %v1658 = vmul.f32 %v1630, 0.35355338
      %v1659 = vmul.f32 %v1631, 0.35355338
      %v1660 = vmul.f32 %v1632, 0.35355338
      %v1661 = vmul.f32 %v1633, 0.35355338
      %v1662 = vmul.f32 %v1634, 0.35355338
      %v1663 = vmul.f32 %v1635, 0.35355338
      %v1664 = vmul.f32 %v1636, 0.35355338
      %v1665 = vmul.f32 %v1637, 0.35355338
      %v1666 = vmul.f32 %v1638, 0.35355338
      %v1667 = vmul.f32 %v1639, 0.35355338
      %v1668 = vmul.f32 %v1640, 0.35355338
      %v1669 = vmul.f32 %v1641, 0.35355338
      %v1670 = vmul.f32 %v1642, 0.35355338
      %v1671 = vpack.c.bf16 %v1644, %v1643
      %v1672 = vpack.c.bf16 %v1646, %v1645
      %v1673 = vpack.c.bf16 %v1648, %v1647
      %v1674 = vpack.c.bf16 %v1649, %v1649
      %v1675 = vpack.c.bf16 %v1651, %v1650
      %v1676 = vpack.c.bf16 %v1653, %v1652
      %v1677 = vpack.c.bf16 %v1655, %v1654
      %v1678 = vpack.c.bf16 %v1656, %v1656
      %v1679 = vpack.c.bf16 %v1658, %v1657
      %v1680 = vpack.c.bf16 %v1660, %v1659
      %v1681 = vpack.c.bf16 %v1662, %v1661
      %v1682 = vpack.c.bf16 %v1663, %v1663
      %v1683 = vpack.c.bf16 %v1665, %v1664
      %v1684 = vpack.c.bf16 %v1667, %v1666
      %v1685 = vpack.c.bf16 %v1669, %v1668
      %v1686 = vpack.c.bf16 %v1670, %v1670
      %v1687 = vlaneseq
      %v1688 = vshrl.u32 %v1687, 7
      %v1689 = vsub.s32 1, %v1688
      %v1690 = vrot.slane %v201, %v1689
      %1692 = vrot.lane.b32.xlu0 %v1690, 32
      %v1693 = vpop.permute.xlu0 %1692
      %v1695 = vadd.f32 %v714, %v1693
      %v1696 = vadd.f32 %v717, %v1693
      %v1697 = vadd.f32 %v722, %v1693
      %v1698 = vadd.f32 %v725, %v1693
      %v1699 = vadd.f32 %v730, %v1693
      %v1700 = vadd.f32 %v733, %v1693
      %v1701 = vadd.f32 %v738, %v1693
      %v1702 = vadd.f32 %v790, %v1693
      %v1703 = vadd.f32 %v793, %v1693
      %v1704 = vadd.f32 %v798, %v1693
      %v1705 = vadd.f32 %v801, %v1693
      %v1706 = vadd.f32 %v806, %v1693
      %v1707 = vadd.f32 %v809, %v1693
      %v1708 = vadd.f32 %v814, %v1693
      %v1709 = vadd.f32 %v866, %v1693
      %v1710 = vadd.f32 %v869, %v1693
      %v1711 = vadd.f32 %v874, %v1693
      %v1712 = vadd.f32 %v877, %v1693
      %v1713 = vadd.f32 %v882, %v1693
      %v1714 = vadd.f32 %v885, %v1693
      %v1715 = vadd.f32 %v890, %v1693
      %v1716 = vadd.f32 %v942, %v1693
      %v1717 = vadd.f32 %v945, %v1693
      %v1718 = vadd.f32 %v950, %v1693
      %v1719 = vadd.f32 %v953, %v1693
      %v1720 = vadd.f32 %v958, %v1693
      %v1721 = vadd.f32 %v961, %v1693
      %v1722 = vadd.f32 %v966, %v1693
      %1751 = vrot.lane.b32.xlu0 %v1695, 96
      %v1752 = vpop.permute.xlu0 %1751
      %1753 = vrot.lane.b32.xlu0 %v1696, 96
      %v1754 = vpop.permute.xlu0 %1753
      %1755 = vrot.lane.b32.xlu0 %v1697, 96
      %v1756 = vpop.permute.xlu0 %1755
      %1757 = vrot.lane.b32.xlu0 %v1698, 96
      %v1758 = vpop.permute.xlu0 %1757
      %1759 = vrot.lane.b32.xlu0 %v1699, 96
      %v1760 = vpop.permute.xlu0 %1759
      %1761 = vrot.lane.b32.xlu0 %v1700, 96
      %v1762 = vpop.permute.xlu0 %1761
      %1763 = vrot.lane.b32.xlu0 %v1701, 96
      %v1764 = vpop.permute.xlu0 %1763
      %1765 = vrot.lane.b32.xlu0 %v1702, 96
      %v1766 = vpop.permute.xlu0 %1765
      %1767 = vrot.lane.b32.xlu0 %v1703, 96
      %v1768 = vpop.permute.xlu0 %1767
      %1769 = vrot.lane.b32.xlu0 %v1704, 96
      %v1770 = vpop.permute.xlu0 %1769
      %1771 = vrot.lane.b32.xlu0 %v1705, 96
      %v1772 = vpop.permute.xlu0 %1771
      %1773 = vrot.lane.b32.xlu0 %v1706, 96
      %v1774 = vpop.permute.xlu0 %1773
      %1775 = vrot.lane.b32.xlu0 %v1707, 96
      %v1776 = vpop.permute.xlu0 %1775
      %1777 = vrot.lane.b32.xlu0 %v1708, 96
      %v1778 = vpop.permute.xlu0 %1777
      %1779 = vrot.lane.b32.xlu0 %v1709, 96
      %v1780 = vpop.permute.xlu0 %1779
      %1781 = vrot.lane.b32.xlu0 %v1710, 96
      %v1782 = vpop.permute.xlu0 %1781
      %1783 = vrot.lane.b32.xlu0 %v1711, 96
      %v1784 = vpop.permute.xlu0 %1783
      %1785 = vrot.lane.b32.xlu0 %v1712, 96
      %v1786 = vpop.permute.xlu0 %1785
      %1787 = vrot.lane.b32.xlu0 %v1713, 96
      %v1788 = vpop.permute.xlu0 %1787
      %1789 = vrot.lane.b32.xlu0 %v1714, 96
      %v1790 = vpop.permute.xlu0 %1789
      %1791 = vrot.lane.b32.xlu0 %v1715, 96
      %v1792 = vpop.permute.xlu0 %1791
      %1793 = vrot.lane.b32.xlu0 %v1716, 96
      %v1794 = vpop.permute.xlu0 %1793
      %1795 = vrot.lane.b32.xlu0 %v1717, 96
      %v1796 = vpop.permute.xlu0 %1795
      %1797 = vrot.lane.b32.xlu0 %v1718, 96
      %v1798 = vpop.permute.xlu0 %1797
      %1799 = vrot.lane.b32.xlu0 %v1719, 96
      %v1800 = vpop.permute.xlu0 %1799
      %1801 = vrot.lane.b32.xlu0 %v1720, 96
      %v1802 = vpop.permute.xlu0 %1801
      %1803 = vrot.lane.b32.xlu0 %v1721, 96
      %v1804 = vpop.permute.xlu0 %1803
      %1805 = vrot.lane.b32.xlu0 %v1722, 96
      %v1806 = vpop.permute.xlu0 %1805
      %v1835 = vsel %vm208, %v1752, 0.0
      %1836 = vadd.xlane.f32.xlu0 %v1835
      %v1837 = vpop.xlane.xlu0 %1836
      %v1838 = vsel %vm208, %v1754, 0.0
      %1839 = vadd.xlane.f32.xlu0 %v1838
      %v1840 = vpop.xlane.xlu0 %1839
      %v1841 = vsel %vm208, %v1756, 0.0
      %1842 = vadd.xlane.f32.xlu0 %v1841
      %v1843 = vpop.xlane.xlu0 %1842
      %v1844 = vsel %vm208, %v1758, 0.0
      %1845 = vadd.xlane.f32.xlu0 %v1844
      %v1846 = vpop.xlane.xlu0 %1845
      %v1847 = vsel %vm208, %v1760, 0.0
      %1848 = vadd.xlane.f32.xlu0 %v1847
      %v1849 = vpop.xlane.xlu0 %1848
      %v1850 = vsel %vm208, %v1762, 0.0
      %1851 = vadd.xlane.f32.xlu0 %v1850
      %v1852 = vpop.xlane.xlu0 %1851
      %v1853 = vsel %vm227, %v1764, 0.0
      %1854 = vadd.xlane.f32.xlu0 %v1853
      %v1855 = vpop.xlane.xlu0 %1854
      %v1856 = vsel %vm208, %v1766, 0.0
      %1857 = vadd.xlane.f32.xlu0 %v1856
      %v1858 = vpop.xlane.xlu0 %1857
      %v1859 = vsel %vm208, %v1768, 0.0
      %1860 = vadd.xlane.f32.xlu0 %v1859
      %v1861 = vpop.xlane.xlu0 %1860
      %v1862 = vsel %vm208, %v1770, 0.0
      %1863 = vadd.xlane.f32.xlu0 %v1862
      %v1864 = vpop.xlane.xlu0 %1863
      %v1865 = vsel %vm208, %v1772, 0.0
      %1866 = vadd.xlane.f32.xlu0 %v1865
      %v1867 = vpop.xlane.xlu0 %1866
      %v1868 = vsel %vm208, %v1774, 0.0
      %1869 = vadd.xlane.f32.xlu0 %v1868
      %v1870 = vpop.xlane.xlu0 %1869
      %v1871 = vsel %vm208, %v1776, 0.0
      %1872 = vadd.xlane.f32.xlu0 %v1871
      %v1873 = vpop.xlane.xlu0 %1872
      %v1874 = vsel %vm227, %v1778, 0.0
      %1875 = vadd.xlane.f32.xlu0 %v1874
      %v1876 = vpop.xlane.xlu0 %1875
      %v1877 = vsel %vm208, %v1780, 0.0
      %1878 = vadd.xlane.f32.xlu0 %v1877
      %v1879 = vpop.xlane.xlu0 %1878
      %v1880 = vsel %vm208, %v1782, 0.0
      %1881 = vadd.xlane.f32.xlu0 %v1880
      %v1882 = vpop.xlane.xlu0 %1881
      %v1883 = vsel %vm208, %v1784, 0.0
      %1884 = vadd.xlane.f32.xlu0 %v1883
      %v1885 = vpop.xlane.xlu0 %1884
      %v1886 = vsel %vm208, %v1786, 0.0
      %1887 = vadd.xlane.f32.xlu0 %v1886
      %v1888 = vpop.xlane.xlu0 %1887
      %v1889 = vsel %vm208, %v1788, 0.0
      %1890 = vadd.xlane.f32.xlu0 %v1889
      %v1891 = vpop.xlane.xlu0 %1890
      %v1892 = vsel %vm208, %v1790, 0.0
      %1893 = vadd.xlane.f32.xlu0 %v1892
      %v1894 = vpop.xlane.xlu0 %1893
      %v1895 = vsel %vm227, %v1792, 0.0
      %1896 = vadd.xlane.f32.xlu0 %v1895
      %v1897 = vpop.xlane.xlu0 %1896
      %v1898 = vsel %vm208, %v1794, 0.0
      %1899 = vadd.xlane.f32.xlu0 %v1898
      %v1900 = vpop.xlane.xlu0 %1899
      %v1901 = vsel %vm208, %v1796, 0.0
      %1902 = vadd.xlane.f32.xlu0 %v1901
      %v1903 = vpop.xlane.xlu0 %1902
      %v1904 = vsel %vm208, %v1798, 0.0
      %1905 = vadd.xlane.f32.xlu0 %v1904
      %v1906 = vpop.xlane.xlu0 %1905
      %v1907 = vsel %vm208, %v1800, 0.0
      %1908 = vadd.xlane.f32.xlu0 %v1907
      %v1909 = vpop.xlane.xlu0 %1908
      %v1910 = vsel %vm208, %v1802, 0.0
      %1911 = vadd.xlane.f32.xlu0 %v1910
      %v1912 = vpop.xlane.xlu0 %1911
      %v1913 = vsel %vm208, %v1804, 0.0
      %1914 = vadd.xlane.f32.xlu0 %v1913
      %v1915 = vpop.xlane.xlu0 %1914
      %v1916 = vsel %vm227, %v1806, 0.0
      %1917 = vadd.xlane.f32.xlu0 %v1916
      %v1918 = vpop.xlane.xlu0 %1917
      %v1919 = vmul.f32 %v1837, %v294
      %v1920 = vmul.f32 %v1840, %v294
      %v1921 = vmul.f32 %v1843, %v294
      %v1922 = vmul.f32 %v1846, %v294
      %v1923 = vmul.f32 %v1849, %v294
      %v1924 = vmul.f32 %v1852, %v294
      %v1925 = vmul.f32 %v1855, %v294
      %v1926 = vmul.f32 %v1858, %v294
      %v1927 = vmul.f32 %v1861, %v294
      %v1928 = vmul.f32 %v1864, %v294
      %v1929 = vmul.f32 %v1867, %v294
      %v1930 = vmul.f32 %v1870, %v294
      %v1931 = vmul.f32 %v1873, %v294
      %v1932 = vmul.f32 %v1876, %v294
      %v1933 = vmul.f32 %v1879, %v294
      %v1934 = vmul.f32 %v1882, %v294
      %v1935 = vmul.f32 %v1885, %v294
      %v1936 = vmul.f32 %v1888, %v294
      %v1937 = vmul.f32 %v1891, %v294
      %v1938 = vmul.f32 %v1894, %v294
      %v1939 = vmul.f32 %v1897, %v294
      %v1940 = vmul.f32 %v1900, %v294
      %v1941 = vmul.f32 %v1903, %v294
      %v1942 = vmul.f32 %v1906, %v294
      %v1943 = vmul.f32 %v1909, %v294
      %v1944 = vmul.f32 %v1912, %v294
      %v1945 = vmul.f32 %v1915, %v294
      %v1946 = vmul.f32 %v1918, %v294
      %v1947 = vsub.f32 %v1695, %v1919
      %v1948 = vsub.f32 %v1696, %v1920
      %v1949 = vsub.f32 %v1697, %v1921
      %v1950 = vsub.f32 %v1698, %v1922
      %v1951 = vsub.f32 %v1699, %v1923
      %v1952 = vsub.f32 %v1700, %v1924
      %v1953 = vsub.f32 %v1701, %v1925
      %v1954 = vsub.f32 %v1702, %v1926
      %v1955 = vsub.f32 %v1703, %v1927
      %v1956 = vsub.f32 %v1704, %v1928
      %v1957 = vsub.f32 %v1705, %v1929
      %v1958 = vsub.f32 %v1706, %v1930
      %v1959 = vsub.f32 %v1707, %v1931
      %v1960 = vsub.f32 %v1708, %v1932
      %v1961 = vsub.f32 %v1709, %v1933
      %v1962 = vsub.f32 %v1710, %v1934
      %v1963 = vsub.f32 %v1711, %v1935
      %v1964 = vsub.f32 %v1712, %v1936
      %v1965 = vsub.f32 %v1713, %v1937
      %v1966 = vsub.f32 %v1714, %v1938
      %v1967 = vsub.f32 %v1715, %v1939
      %v1968 = vsub.f32 %v1716, %v1940
      %v1969 = vsub.f32 %v1717, %v1941
      %v1970 = vsub.f32 %v1718, %v1942
      %v1971 = vsub.f32 %v1719, %v1943
      %v1972 = vsub.f32 %v1720, %v1944
      %v1973 = vsub.f32 %v1721, %v1945
      %v1974 = vsub.f32 %v1722, %v1946
      %v1975 = vmul.f32 %v1947, %v1947
      %v1976 = vmul.f32 %v1948, %v1948
      %v1977 = vmul.f32 %v1949, %v1949
      %v1978 = vmul.f32 %v1950, %v1950
      %v1979 = vmul.f32 %v1951, %v1951
      %v1980 = vmul.f32 %v1952, %v1952
      %v1981 = vmul.f32 %v1953, %v1953
      %v1982 = vmul.f32 %v1954, %v1954
      %v1983 = vmul.f32 %v1955, %v1955
      %v1984 = vmul.f32 %v1956, %v1956
      %v1985 = vmul.f32 %v1957, %v1957
      %v1986 = vmul.f32 %v1958, %v1958
      %v1987 = vmul.f32 %v1959, %v1959
      %v1988 = vmul.f32 %v1960, %v1960
      %v1989 = vmul.f32 %v1961, %v1961
      %v1990 = vmul.f32 %v1962, %v1962
      %v1991 = vmul.f32 %v1963, %v1963
      %v1992 = vmul.f32 %v1964, %v1964
      %v1993 = vmul.f32 %v1965, %v1965
      %v1994 = vmul.f32 %v1966, %v1966
      %v1995 = vmul.f32 %v1967, %v1967
      %v1996 = vmul.f32 %v1968, %v1968
      %v1997 = vmul.f32 %v1969, %v1969
      %v1998 = vmul.f32 %v1970, %v1970
      %v1999 = vmul.f32 %v1971, %v1971
      %v2000 = vmul.f32 %v1972, %v1972
      %v2001 = vmul.f32 %v1973, %v1973
      %v2002 = vmul.f32 %v1974, %v1974
      %2031 = vrot.lane.b32.xlu0 %v1975, 96
      %v2032 = vpop.permute.xlu0 %2031
      %2033 = vrot.lane.b32.xlu0 %v1976, 96
      %v2034 = vpop.permute.xlu0 %2033
      %2035 = vrot.lane.b32.xlu0 %v1977, 96
      %v2036 = vpop.permute.xlu0 %2035
      %2037 = vrot.lane.b32.xlu0 %v1978, 96
      %v2038 = vpop.permute.xlu0 %2037
      %2039 = vrot.lane.b32.xlu0 %v1979, 96
      %v2040 = vpop.permute.xlu0 %2039
      %2041 = vrot.lane.b32.xlu0 %v1980, 96
      %v2042 = vpop.permute.xlu0 %2041
      %2043 = vrot.lane.b32.xlu0 %v1981, 96
      %v2044 = vpop.permute.xlu0 %2043
      %2045 = vrot.lane.b32.xlu0 %v1982, 96
      %v2046 = vpop.permute.xlu0 %2045
      %2047 = vrot.lane.b32.xlu0 %v1983, 96
      %v2048 = vpop.permute.xlu0 %2047
      %2049 = vrot.lane.b32.xlu0 %v1984, 96
      %v2050 = vpop.permute.xlu0 %2049
      %2051 = vrot.lane.b32.xlu0 %v1985, 96
      %v2052 = vpop.permute.xlu0 %2051
      %2053 = vrot.lane.b32.xlu0 %v1986, 96
      %v2054 = vpop.permute.xlu0 %2053
      %2055 = vrot.lane.b32.xlu0 %v1987, 96
      %v2056 = vpop.permute.xlu0 %2055
      %2057 = vrot.lane.b32.xlu0 %v1988, 96
      %v2058 = vpop.permute.xlu0 %2057
      %2059 = vrot.lane.b32.xlu0 %v1989, 96
      %v2060 = vpop.permute.xlu0 %2059
      %2061 = vrot.lane.b32.xlu0 %v1990, 96
      %v2062 = vpop.permute.xlu0 %2061
      %2063 = vrot.lane.b32.xlu0 %v1991, 96
      %v2064 = vpop.permute.xlu0 %2063
      %2065 = vrot.lane.b32.xlu0 %v1992, 96
      %v2066 = vpop.permute.xlu0 %2065
      %2067 = vrot.lane.b32.xlu0 %v1993, 96
      %v2068 = vpop.permute.xlu0 %2067
      %2069 = vrot.lane.b32.xlu0 %v1994, 96
      %v2070 = vpop.permute.xlu0 %2069
      %2071 = vrot.lane.b32.xlu0 %v1995, 96
      %v2072 = vpop.permute.xlu0 %2071
      %2073 = vrot.lane.b32.xlu0 %v1996, 96
      %v2074 = vpop.permute.xlu0 %2073
      %2075 = vrot.lane.b32.xlu0 %v1997, 96
      %v2076 = vpop.permute.xlu0 %2075
      %2077 = vrot.lane.b32.xlu0 %v1998, 96
      %v2078 = vpop.permute.xlu0 %2077
      %2079 = vrot.lane.b32.xlu0 %v1999, 96
      %v2080 = vpop.permute.xlu0 %2079
      %2081 = vrot.lane.b32.xlu0 %v2000, 96
      %v2082 = vpop.permute.xlu0 %2081
      %2083 = vrot.lane.b32.xlu0 %v2001, 96
      %v2084 = vpop.permute.xlu0 %2083
      %2085 = vrot.lane.b32.xlu0 %v2002, 96
      %v2086 = vpop.permute.xlu0 %2085
      %v2115 = vsel %vm208, %v2032, 0.0
      %2116 = vadd.xlane.f32.xlu0 %v2115
      %v2117 = vpop.xlane.xlu0 %2116
      %v2118 = vsel %vm208, %v2034, 0.0
      %2119 = vadd.xlane.f32.xlu0 %v2118
      %v2120 = vpop.xlane.xlu0 %2119
      %v2121 = vsel %vm208, %v2036, 0.0
      %2122 = vadd.xlane.f32.xlu0 %v2121
      %v2123 = vpop.xlane.xlu0 %2122
      %v2124 = vsel %vm208, %v2038, 0.0
      %2125 = vadd.xlane.f32.xlu0 %v2124
      %v2126 = vpop.xlane.xlu0 %2125
      %v2127 = vsel %vm208, %v2040, 0.0
      %2128 = vadd.xlane.f32.xlu0 %v2127
      %v2129 = vpop.xlane.xlu0 %2128
      %v2130 = vsel %vm208, %v2042, 0.0
      %2131 = vadd.xlane.f32.xlu0 %v2130
      %v2132 = vpop.xlane.xlu0 %2131
      %v2133 = vsel %vm227, %v2044, 0.0
      %2134 = vadd.xlane.f32.xlu0 %v2133
      %v2135 = vpop.xlane.xlu0 %2134
      %v2136 = vsel %vm208, %v2046, 0.0
      %2137 = vadd.xlane.f32.xlu0 %v2136
      %v2138 = vpop.xlane.xlu0 %2137
      %v2139 = vsel %vm208, %v2048, 0.0
      %2140 = vadd.xlane.f32.xlu0 %v2139
      %v2141 = vpop.xlane.xlu0 %2140
      %v2142 = vsel %vm208, %v2050, 0.0
      %2143 = vadd.xlane.f32.xlu0 %v2142
      %v2144 = vpop.xlane.xlu0 %2143
      %v2145 = vsel %vm208, %v2052, 0.0
      %2146 = vadd.xlane.f32.xlu0 %v2145
      %v2147 = vpop.xlane.xlu0 %2146
      %v2148 = vsel %vm208, %v2054, 0.0
      %2149 = vadd.xlane.f32.xlu0 %v2148
      %v2150 = vpop.xlane.xlu0 %2149
      %v2151 = vsel %vm208, %v2056, 0.0
      %2152 = vadd.xlane.f32.xlu0 %v2151
      %v2153 = vpop.xlane.xlu0 %2152
      %v2154 = vsel %vm227, %v2058, 0.0
      %2155 = vadd.xlane.f32.xlu0 %v2154
      %v2156 = vpop.xlane.xlu0 %2155
      %v2157 = vsel %vm208, %v2060, 0.0
      %2158 = vadd.xlane.f32.xlu0 %v2157
      %v2159 = vpop.xlane.xlu0 %2158
      %v2160 = vsel %vm208, %v2062, 0.0
      %2161 = vadd.xlane.f32.xlu0 %v2160
      %v2162 = vpop.xlane.xlu0 %2161
      %v2163 = vsel %vm208, %v2064, 0.0
      %2164 = vadd.xlane.f32.xlu0 %v2163
      %v2165 = vpop.xlane.xlu0 %2164
      %v2166 = vsel %vm208, %v2066, 0.0
      %2167 = vadd.xlane.f32.xlu0 %v2166
      %v2168 = vpop.xlane.xlu0 %2167
      %v2169 = vsel %vm208, %v2068, 0.0
      %2170 = vadd.xlane.f32.xlu0 %v2169
      %v2171 = vpop.xlane.xlu0 %2170
      %v2172 = vsel %vm208, %v2070, 0.0
      %2173 = vadd.xlane.f32.xlu0 %v2172
      %v2174 = vpop.xlane.xlu0 %2173
      %v2175 = vsel %vm227, %v2072, 0.0
      %2176 = vadd.xlane.f32.xlu0 %v2175
      %v2177 = vpop.xlane.xlu0 %2176
      %v2178 = vsel %vm208, %v2074, 0.0
      %2179 = vadd.xlane.f32.xlu0 %v2178
      %v2180 = vpop.xlane.xlu0 %2179
      %v2181 = vsel %vm208, %v2076, 0.0
      %2182 = vadd.xlane.f32.xlu0 %v2181
      %v2183 = vpop.xlane.xlu0 %2182
      %v2184 = vsel %vm208, %v2078, 0.0
      %2185 = vadd.xlane.f32.xlu0 %v2184
      %v2186 = vpop.xlane.xlu0 %2185
      %v2187 = vsel %vm208, %v2080, 0.0
      %2188 = vadd.xlane.f32.xlu0 %v2187
      %v2189 = vpop.xlane.xlu0 %2188
      %v2190 = vsel %vm208, %v2082, 0.0
      %2191 = vadd.xlane.f32.xlu0 %v2190
      %v2192 = vpop.xlane.xlu0 %2191
      %v2193 = vsel %vm208, %v2084, 0.0
      %2194 = vadd.xlane.f32.xlu0 %v2193
      %v2195 = vpop.xlane.xlu0 %2194
      %v2196 = vsel %vm227, %v2086, 0.0
      %2197 = vadd.xlane.f32.xlu0 %v2196
      %v2198 = vpop.xlane.xlu0 %2197
      %v2199 = vmul.f32 %v2117, %v294
      %v2200 = vmul.f32 %v2120, %v294
      %v2201 = vmul.f32 %v2123, %v294
      %v2202 = vmul.f32 %v2126, %v294
      %v2203 = vmul.f32 %v2129, %v294
      %v2204 = vmul.f32 %v2132, %v294
      %v2205 = vmul.f32 %v2135, %v294
      %v2206 = vmul.f32 %v2138, %v294
      %v2207 = vmul.f32 %v2141, %v294
      %v2208 = vmul.f32 %v2144, %v294
      %v2209 = vmul.f32 %v2147, %v294
      %v2210 = vmul.f32 %v2150, %v294
      %v2211 = vmul.f32 %v2153, %v294
      %v2212 = vmul.f32 %v2156, %v294
      %v2213 = vmul.f32 %v2159, %v294
      %v2214 = vmul.f32 %v2162, %v294
      %v2215 = vmul.f32 %v2165, %v294
      %v2216 = vmul.f32 %v2168, %v294
      %v2217 = vmul.f32 %v2171, %v294
      %v2218 = vmul.f32 %v2174, %v294
      %v2219 = vmul.f32 %v2177, %v294
      %v2220 = vmul.f32 %v2180, %v294
      %v2221 = vmul.f32 %v2183, %v294
      %v2222 = vmul.f32 %v2186, %v294
      %v2223 = vmul.f32 %v2189, %v294
      %v2224 = vmul.f32 %v2192, %v294
      %v2225 = vmul.f32 %v2195, %v294
      %v2226 = vmul.f32 %v2198, %v294
      %v2227 = vadd.f32 %v2199, 1e-12
      %v2228 = vadd.f32 %v2200, 1e-12
      %v2229 = vadd.f32 %v2201, 1e-12
      %v2230 = vadd.f32 %v2202, 1e-12
      %v2231 = vadd.f32 %v2203, 1e-12
      %v2232 = vadd.f32 %v2204, 1e-12
      %v2233 = vadd.f32 %v2205, 1e-12
      %v2234 = vadd.f32 %v2206, 1e-12
      %v2235 = vadd.f32 %v2207, 1e-12
      %v2236 = vadd.f32 %v2208, 1e-12
      %v2237 = vadd.f32 %v2209, 1e-12
      %v2238 = vadd.f32 %v2210, 1e-12
      %v2239 = vadd.f32 %v2211, 1e-12
      %v2240 = vadd.f32 %v2212, 1e-12
      %v2241 = vadd.f32 %v2213, 1e-12
      %v2242 = vadd.f32 %v2214, 1e-12
      %v2243 = vadd.f32 %v2215, 1e-12
      %v2244 = vadd.f32 %v2216, 1e-12
      %v2245 = vadd.f32 %v2217, 1e-12
      %v2246 = vadd.f32 %v2218, 1e-12
      %v2247 = vadd.f32 %v2219, 1e-12
      %v2248 = vadd.f32 %v2220, 1e-12
      %v2249 = vadd.f32 %v2221, 1e-12
      %v2250 = vadd.f32 %v2222, 1e-12
      %v2251 = vadd.f32 %v2223, 1e-12
      %v2252 = vadd.f32 %v2224, 1e-12
      %v2253 = vadd.f32 %v2225, 1e-12
      %v2254 = vadd.f32 %v2226, 1e-12
      %v2255 = vrsqrt.pop %v2227
      %v2256 = vrsqrt.pop %v2228
      %v2257 = vrsqrt.pop %v2229
      %v2258 = vrsqrt.pop %v2230
      %v2259 = vrsqrt.pop %v2231
      %v2260 = vrsqrt.pop %v2232
      %v2261 = vrsqrt.pop %v2233
      %v2262 = vrsqrt.pop %v2234
      %v2263 = vrsqrt.pop %v2235
      %v2264 = vrsqrt.pop %v2236
      %v2265 = vrsqrt.pop %v2237
      %v2266 = vrsqrt.pop %v2238
      %v2267 = vrsqrt.pop %v2239
      %v2268 = vrsqrt.pop %v2240
      %v2269 = vrsqrt.pop %v2241
      %v2270 = vrsqrt.pop %v2242
      %v2271 = vrsqrt.pop %v2243
      %v2272 = vrsqrt.pop %v2244
      %v2273 = vrsqrt.pop %v2245
      %v2274 = vrsqrt.pop %v2246
      %v2275 = vrsqrt.pop %v2247
      %v2276 = vrsqrt.pop %v2248
      %v2277 = vrsqrt.pop %v2249
      %v2278 = vrsqrt.pop %v2250
      %v2279 = vrsqrt.pop %v2251
      %v2280 = vrsqrt.pop %v2252
      %v2281 = vrsqrt.pop %v2253
      %v2282 = vrsqrt.pop %v2254
      %v2283 = vmul.f32 %v1947, %v2255
      %v2284 = vmul.f32 %v1948, %v2256
      %v2285 = vmul.f32 %v1949, %v2257
      %v2286 = vmul.f32 %v1950, %v2258
      %v2287 = vmul.f32 %v1951, %v2259
      %v2288 = vmul.f32 %v1952, %v2260
      %v2289 = vmul.f32 %v1953, %v2261
      %v2290 = vmul.f32 %v1954, %v2262
      %v2291 = vmul.f32 %v1955, %v2263
      %v2292 = vmul.f32 %v1956, %v2264
      %v2293 = vmul.f32 %v1957, %v2265
      %v2294 = vmul.f32 %v1958, %v2266
      %v2295 = vmul.f32 %v1959, %v2267
      %v2296 = vmul.f32 %v1960, %v2268
      %v2297 = vmul.f32 %v1961, %v2269
      %v2298 = vmul.f32 %v1962, %v2270
      %v2299 = vmul.f32 %v1963, %v2271
      %v2300 = vmul.f32 %v1964, %v2272
      %v2301 = vmul.f32 %v1965, %v2273
      %v2302 = vmul.f32 %v1966, %v2274
      %v2303 = vmul.f32 %v1967, %v2275
      %v2304 = vmul.f32 %v1968, %v2276
      %v2305 = vmul.f32 %v1969, %v2277
      %v2306 = vmul.f32 %v1970, %v2278
      %v2307 = vmul.f32 %v1971, %v2279
      %v2308 = vmul.f32 %v1972, %v2280
      %v2309 = vmul.f32 %v1973, %v2281
      %v2310 = vmul.f32 %v1974, %v2282
      %v2311 = vlaneseq
      %v2312 = vshrl.u32 %v2311, 7
      %v2313 = vsub.s32 2, %v2312
      %v2314 = vrot.slane %v201, %v2313
      %2316 = vrot.lane.b32.xlu0 %v2314, 32
      %v2317 = vpop.permute.xlu0 %2316
      %v2319 = vmul.f32 %v2283, %v2317
      %v2320 = vmul.f32 %v2284, %v2317
      %v2321 = vmul.f32 %v2285, %v2317
      %v2322 = vmul.f32 %v2286, %v2317
      %v2323 = vmul.f32 %v2287, %v2317
      %v2324 = vmul.f32 %v2288, %v2317
      %v2325 = vmul.f32 %v2289, %v2317
      %v2326 = vmul.f32 %v2290, %v2317
      %v2327 = vmul.f32 %v2291, %v2317
      %v2328 = vmul.f32 %v2292, %v2317
      %v2329 = vmul.f32 %v2293, %v2317
      %v2330 = vmul.f32 %v2294, %v2317
      %v2331 = vmul.f32 %v2295, %v2317
      %v2332 = vmul.f32 %v2296, %v2317
      %v2333 = vmul.f32 %v2297, %v2317
      %v2334 = vmul.f32 %v2298, %v2317
      %v2335 = vmul.f32 %v2299, %v2317
      %v2336 = vmul.f32 %v2300, %v2317
      %v2337 = vmul.f32 %v2301, %v2317
      %v2338 = vmul.f32 %v2302, %v2317
      %v2339 = vmul.f32 %v2303, %v2317
      %v2340 = vmul.f32 %v2304, %v2317
      %v2341 = vmul.f32 %v2305, %v2317
      %v2342 = vmul.f32 %v2306, %v2317
      %v2343 = vmul.f32 %v2307, %v2317
      %v2344 = vmul.f32 %v2308, %v2317
      %v2345 = vmul.f32 %v2309, %v2317
      %v2346 = vmul.f32 %v2310, %v2317
      %v2347 = vlaneseq
      %v2348 = vshrl.u32 %v2347, 7
      %v2349 = vsub.s32 3, %v2348
      %v2350 = vrot.slane %v201, %v2349
      %2352 = vrot.lane.b32.xlu0 %v2350, 32
      %v2353 = vpop.permute.xlu0 %2352
      %v2355 = vadd.f32 %v2319, %v2353
      %v2356 = vadd.f32 %v2320, %v2353
      %v2357 = vadd.f32 %v2321, %v2353
      %v2358 = vadd.f32 %v2322, %v2353
      %v2359 = vadd.f32 %v2323, %v2353
      %v2360 = vadd.f32 %v2324, %v2353
      %v2361 = vadd.f32 %v2325, %v2353
      %v2362 = vadd.f32 %v2326, %v2353
      %v2363 = vadd.f32 %v2327, %v2353
      %v2364 = vadd.f32 %v2328, %v2353
      %v2365 = vadd.f32 %v2329, %v2353
      %v2366 = vadd.f32 %v2330, %v2353
      %v2367 = vadd.f32 %v2331, %v2353
      %v2368 = vadd.f32 %v2332, %v2353
      %v2369 = vadd.f32 %v2333, %v2353
      %v2370 = vadd.f32 %v2334, %v2353
      %v2371 = vadd.f32 %v2335, %v2353
      %v2372 = vadd.f32 %v2336, %v2353
      %v2373 = vadd.f32 %v2337, %v2353
      %v2374 = vadd.f32 %v2338, %v2353
      %v2375 = vadd.f32 %v2339, %v2353
      %v2376 = vadd.f32 %v2340, %v2353
      %v2377 = vadd.f32 %v2341, %v2353
      %v2378 = vadd.f32 %v2342, %v2353
      %v2379 = vadd.f32 %v2343, %v2353
      %v2380 = vadd.f32 %v2344, %v2353
      %v2381 = vadd.f32 %v2345, %v2353
      %v2382 = vadd.f32 %v2346, %v2353
      %2411 = vrot.lane.b32.xlu0 %v611, 32
      %v2412 = vpop.permute.xlu0 %2411
      %2413 = vrot.lane.b32.xlu0 %v612, 32
      %v2414 = vpop.permute.xlu0 %2413
      %2415 = vrot.lane.b32.xlu0 %v613, 32
      %v2416 = vpop.permute.xlu0 %2415
      %2417 = vrot.lane.b32.xlu0 %v614, 32
      %v2418 = vpop.permute.xlu0 %2417
      %2419 = vrot.lane.b32.xlu0 %v615, 32
      %v2420 = vpop.permute.xlu0 %2419
      %2421 = vrot.lane.b32.xlu0 %v616, 32
      %v2422 = vpop.permute.xlu0 %2421
      %2423 = vrot.lane.b32.xlu0 %v617, 32
      %v2424 = vpop.permute.xlu0 %2423
      %2425 = vrot.lane.b32.xlu0 %v618, 32
      %v2426 = vpop.permute.xlu0 %2425
      %2427 = vrot.lane.b32.xlu0 %v619, 32
      %v2428 = vpop.permute.xlu0 %2427
      %2429 = vrot.lane.b32.xlu0 %v620, 32
      %v2430 = vpop.permute.xlu0 %2429
      %2431 = vrot.lane.b32.xlu0 %v621, 32
      %v2432 = vpop.permute.xlu0 %2431
      %2433 = vrot.lane.b32.xlu0 %v622, 32
      %v2434 = vpop.permute.xlu0 %2433
      %2435 = vrot.lane.b32.xlu0 %v623, 32
      %v2436 = vpop.permute.xlu0 %2435
      %2437 = vrot.lane.b32.xlu0 %v624, 32
      %v2438 = vpop.permute.xlu0 %2437
      %2439 = vrot.lane.b32.xlu0 %v625, 32
      %v2440 = vpop.permute.xlu0 %2439
      %2441 = vrot.lane.b32.xlu0 %v626, 32
      %v2442 = vpop.permute.xlu0 %2441
      %2443 = vrot.lane.b32.xlu0 %v627, 32
      %v2444 = vpop.permute.xlu0 %2443
      %2445 = vrot.lane.b32.xlu0 %v628, 32
      %v2446 = vpop.permute.xlu0 %2445
      %2447 = vrot.lane.b32.xlu0 %v629, 32
      %v2448 = vpop.permute.xlu0 %2447
      %2449 = vrot.lane.b32.xlu0 %v630, 32
      %v2450 = vpop.permute.xlu0 %2449
      %2451 = vrot.lane.b32.xlu0 %v631, 32
      %v2452 = vpop.permute.xlu0 %2451
      %2453 = vrot.lane.b32.xlu0 %v632, 32
      %v2454 = vpop.permute.xlu0 %2453
      %2455 = vrot.lane.b32.xlu0 %v633, 32
      %v2456 = vpop.permute.xlu0 %2455
      %2457 = vrot.lane.b32.xlu0 %v634, 32
      %v2458 = vpop.permute.xlu0 %2457
      %2459 = vrot.lane.b32.xlu0 %v635, 32
      %v2460 = vpop.permute.xlu0 %2459
      %2461 = vrot.lane.b32.xlu0 %v636, 32
      %v2462 = vpop.permute.xlu0 %2461
      %2463 = vrot.lane.b32.xlu0 %v637, 32
      %v2464 = vpop.permute.xlu0 %2463
      %2465 = vrot.lane.b32.xlu0 %v638, 32
      %v2466 = vpop.permute.xlu0 %2465
      %v2495 = vadd.f32 %v2355, %v2412
      %v2496 = vadd.f32 %v2356, %v2414
      %v2497 = vadd.f32 %v2357, %v2416
      %v2498 = vadd.f32 %v2358, %v2418
      %v2499 = vadd.f32 %v2359, %v2420
      %v2500 = vadd.f32 %v2360, %v2422
      %v2501 = vadd.f32 %v2361, %v2424
      %v2502 = vadd.f32 %v2362, %v2426
      %v2503 = vadd.f32 %v2363, %v2428
      %v2504 = vadd.f32 %v2364, %v2430
      %v2505 = vadd.f32 %v2365, %v2432
      %v2506 = vadd.f32 %v2366, %v2434
      %v2507 = vadd.f32 %v2367, %v2436
      %v2508 = vadd.f32 %v2368, %v2438
      %v2509 = vadd.f32 %v2369, %v2440
      %v2510 = vadd.f32 %v2370, %v2442
      %v2511 = vadd.f32 %v2371, %v2444
      %v2512 = vadd.f32 %v2372, %v2446
      %v2513 = vadd.f32 %v2373, %v2448
      %v2514 = vadd.f32 %v2374, %v2450
      %v2515 = vadd.f32 %v2375, %v2452
      %v2516 = vadd.f32 %v2376, %v2454
      %v2517 = vadd.f32 %v2377, %v2456
      %v2518 = vadd.f32 %v2378, %v2458
      %v2519 = vadd.f32 %v2379, %v2460
      %v2520 = vadd.f32 %v2380, %v2462
      %v2521 = vadd.f32 %v2381, %v2464
      %v2522 = vadd.f32 %v2382, %v2466
      %v2523 = vlaneseq
      %v2524 = vshrl.u32 %v2523, 7
      %v2525 = vsub.s32 4, %v2524
      %v2526 = vrot.slane %v201, %v2525
      %2528 = vrot.lane.b32.xlu0 %v2526, 32
      %v2529 = vpop.permute.xlu0 %2528
      %v2531 = vsub.f32 %v2495, %v2529
      %v2532 = vsub.f32 %v2496, %v2529
      %v2533 = vsub.f32 %v2497, %v2529
      %v2534 = vsub.f32 %v2498, %v2529
      %v2535 = vsub.f32 %v2499, %v2529
      %v2536 = vsub.f32 %v2500, %v2529
      %v2537 = vsub.f32 %v2501, %v2529
      %v2538 = vsub.f32 %v2502, %v2529
      %v2539 = vsub.f32 %v2503, %v2529
      %v2540 = vsub.f32 %v2504, %v2529
      %v2541 = vsub.f32 %v2505, %v2529
      %v2542 = vsub.f32 %v2506, %v2529
      %v2543 = vsub.f32 %v2507, %v2529
      %v2544 = vsub.f32 %v2508, %v2529
      %v2545 = vsub.f32 %v2509, %v2529
      %v2546 = vsub.f32 %v2510, %v2529
      %v2547 = vsub.f32 %v2511, %v2529
      %v2548 = vsub.f32 %v2512, %v2529
      %v2549 = vsub.f32 %v2513, %v2529
      %v2550 = vsub.f32 %v2514, %v2529
      %v2551 = vsub.f32 %v2515, %v2529
      %v2552 = vsub.f32 %v2516, %v2529
      %v2553 = vsub.f32 %v2517, %v2529
      %v2554 = vsub.f32 %v2518, %v2529
      %v2555 = vsub.f32 %v2519, %v2529
      %v2556 = vsub.f32 %v2520, %v2529
      %v2557 = vsub.f32 %v2521, %v2529
      %v2558 = vsub.f32 %v2522, %v2529
      %vm2559 = vcmp.ge.f32.partialorder %v2531, 0.0
      %vm2560 = vcmp.ge.f32.partialorder %v2532, 0.0
      %vm2561 = vcmp.ge.f32.partialorder %v2533, 0.0
      %vm2562 = vcmp.ge.f32.partialorder %v2534, 0.0
      %vm2563 = vcmp.ge.f32.partialorder %v2535, 0.0
      %vm2564 = vcmp.ge.f32.partialorder %v2536, 0.0
      %vm2565 = vcmp.ge.f32.partialorder %v2537, 0.0
      %vm2566 = vcmp.ge.f32.partialorder %v2538, 0.0
      %vm2567 = vcmp.ge.f32.partialorder %v2539, 0.0
      %vm2568 = vcmp.ge.f32.partialorder %v2540, 0.0
      %vm2569 = vcmp.ge.f32.partialorder %v2541, 0.0
      %vm2570 = vcmp.ge.f32.partialorder %v2542, 0.0
      %vm2571 = vcmp.ge.f32.partialorder %v2543, 0.0
      %vm2572 = vcmp.ge.f32.partialorder %v2544, 0.0
      %vm2573 = vcmp.ge.f32.partialorder %v2545, 0.0
      %vm2574 = vcmp.ge.f32.partialorder %v2546, 0.0
      %vm2575 = vcmp.ge.f32.partialorder %v2547, 0.0
      %vm2576 = vcmp.ge.f32.partialorder %v2548, 0.0
      %vm2577 = vcmp.ge.f32.partialorder %v2549, 0.0
      %vm2578 = vcmp.ge.f32.partialorder %v2550, 0.0
      %vm2579 = vcmp.ge.f32.partialorder %v2551, 0.0
      %vm2580 = vcmp.ge.f32.partialorder %v2552, 0.0
      %vm2581 = vcmp.ge.f32.partialorder %v2553, 0.0
      %vm2582 = vcmp.ge.f32.partialorder %v2554, 0.0
      %vm2583 = vcmp.ge.f32.partialorder %v2555, 0.0
      %vm2584 = vcmp.ge.f32.partialorder %v2556, 0.0
      %vm2585 = vcmp.ge.f32.partialorder %v2557, 0.0
      %vm2586 = vcmp.ge.f32.partialorder %v2558, 0.0
      %v2587 = vlaneseq
      %v2588 = vshrl.u32 %v2587, 7
      %v2589 = vsub.s32 5, %v2588
      %v2590 = vrot.slane %v201, %v2589
      %2619 = vrot.lane.b32.xlu0 %v2531, 96
      %v2620 = vpop.permute.xlu0 %2619
      %2621 = vrot.lane.b32.xlu0 %v2532, 96
      %v2622 = vpop.permute.xlu0 %2621
      %2623 = vrot.lane.b32.xlu0 %v2533, 96
      %v2624 = vpop.permute.xlu0 %2623
      %2625 = vrot.lane.b32.xlu0 %v2534, 96
      %v2626 = vpop.permute.xlu0 %2625
      %2627 = vrot.lane.b32.xlu0 %v2535, 96
      %v2628 = vpop.permute.xlu0 %2627
      %2629 = vrot.lane.b32.xlu0 %v2536, 96
      %v2630 = vpop.permute.xlu0 %2629
      %2631 = vrot.lane.b32.xlu0 %v2537, 96
      %v2632 = vpop.permute.xlu0 %2631
      %2633 = vrot.lane.b32.xlu0 %v2538, 96
      %v2634 = vpop.permute.xlu0 %2633
      %2635 = vrot.lane.b32.xlu0 %v2539, 96
      %v2636 = vpop.permute.xlu0 %2635
      %2637 = vrot.lane.b32.xlu0 %v2540, 96
      %v2638 = vpop.permute.xlu0 %2637
      %2639 = vrot.lane.b32.xlu0 %v2541, 96
      %v2640 = vpop.permute.xlu0 %2639
      %2641 = vrot.lane.b32.xlu0 %v2542, 96
      %v2642 = vpop.permute.xlu0 %2641
      %2643 = vrot.lane.b32.xlu0 %v2543, 96
      %v2644 = vpop.permute.xlu0 %2643
      %2645 = vrot.lane.b32.xlu0 %v2544, 96
      %v2646 = vpop.permute.xlu0 %2645
      %2647 = vrot.lane.b32.xlu0 %v2545, 96
      %v2648 = vpop.permute.xlu0 %2647
      %2649 = vrot.lane.b32.xlu0 %v2546, 96
      %v2650 = vpop.permute.xlu0 %2649
      %2651 = vrot.lane.b32.xlu0 %v2547, 96
      %v2652 = vpop.permute.xlu0 %2651
      %2653 = vrot.lane.b32.xlu0 %v2548, 96
      %v2654 = vpop.permute.xlu0 %2653
      %2655 = vrot.lane.b32.xlu0 %v2549, 96
      %v2656 = vpop.permute.xlu0 %2655
      %2657 = vrot.lane.b32.xlu0 %v2550, 96
      %v2658 = vpop.permute.xlu0 %2657
      %2659 = vrot.lane.b32.xlu0 %v2551, 96
      %v2660 = vpop.permute.xlu0 %2659
      %2661 = vrot.lane.b32.xlu0 %v2552, 96
      %v2662 = vpop.permute.xlu0 %2661
      %2663 = vrot.lane.b32.xlu0 %v2553, 96
      %v2664 = vpop.permute.xlu0 %2663
      %2665 = vrot.lane.b32.xlu0 %v2554, 96
      %v2666 = vpop.permute.xlu0 %2665
      %2667 = vrot.lane.b32.xlu0 %v2555, 96
      %v2668 = vpop.permute.xlu0 %2667
      %2669 = vrot.lane.b32.xlu0 %v2556, 96
      %v2670 = vpop.permute.xlu0 %2669
      %2671 = vrot.lane.b32.xlu0 %v2557, 96
      %v2672 = vpop.permute.xlu0 %2671
      %2673 = vrot.lane.b32.xlu0 %v2558, 96
      %v2674 = vpop.permute.xlu0 %2673
      %v2703 = vmul.f32 %v2590, %v2620
      %v2704 = vmul.f32 %v2590, %v2622
      %v2705 = vmul.f32 %v2590, %v2624
      %v2706 = vmul.f32 %v2590, %v2626
      %v2707 = vmul.f32 %v2590, %v2628
      %v2708 = vmul.f32 %v2590, %v2630
      %v2709 = vmul.f32 %v2590, %v2632
      %v2710 = vmul.f32 %v2590, %v2634
      %v2711 = vmul.f32 %v2590, %v2636
      %v2712 = vmul.f32 %v2590, %v2638
      %v2713 = vmul.f32 %v2590, %v2640
      %v2714 = vmul.f32 %v2590, %v2642
      %v2715 = vmul.f32 %v2590, %v2644
      %v2716 = vmul.f32 %v2590, %v2646
      %v2717 = vmul.f32 %v2590, %v2648
      %v2718 = vmul.f32 %v2590, %v2650
      %v2719 = vmul.f32 %v2590, %v2652
      %v2720 = vmul.f32 %v2590, %v2654
      %v2721 = vmul.f32 %v2590, %v2656
      %v2722 = vmul.f32 %v2590, %v2658
      %v2723 = vmul.f32 %v2590, %v2660
      %v2724 = vmul.f32 %v2590, %v2662
      %v2725 = vmul.f32 %v2590, %v2664
      %v2726 = vmul.f32 %v2590, %v2666
      %v2727 = vmul.f32 %v2590, %v2668
      %v2728 = vmul.f32 %v2590, %v2670
      %v2729 = vmul.f32 %v2590, %v2672
      %v2730 = vmul.f32 %v2590, %v2674
      %2759 = vrot.lane.b32.xlu0 %v2703, 32
      %v2760 = vpop.permute.xlu0 %2759
      %2761 = vrot.lane.b32.xlu0 %v2704, 32
      %v2762 = vpop.permute.xlu0 %2761
      %2763 = vrot.lane.b32.xlu0 %v2705, 32
      %v2764 = vpop.permute.xlu0 %2763
      %2765 = vrot.lane.b32.xlu0 %v2706, 32
      %v2766 = vpop.permute.xlu0 %2765
      %2767 = vrot.lane.b32.xlu0 %v2707, 32
      %v2768 = vpop.permute.xlu0 %2767
      %2769 = vrot.lane.b32.xlu0 %v2708, 32
      %v2770 = vpop.permute.xlu0 %2769
      %2771 = vrot.lane.b32.xlu0 %v2709, 32
      %v2772 = vpop.permute.xlu0 %2771
      %2773 = vrot.lane.b32.xlu0 %v2710, 32
      %v2774 = vpop.permute.xlu0 %2773
      %2775 = vrot.lane.b32.xlu0 %v2711, 32
      %v2776 = vpop.permute.xlu0 %2775
      %2777 = vrot.lane.b32.xlu0 %v2712, 32
      %v2778 = vpop.permute.xlu0 %2777
      %2779 = vrot.lane.b32.xlu0 %v2713, 32
      %v2780 = vpop.permute.xlu0 %2779
      %2781 = vrot.lane.b32.xlu0 %v2714, 32
      %v2782 = vpop.permute.xlu0 %2781
      %2783 = vrot.lane.b32.xlu0 %v2715, 32
      %v2784 = vpop.permute.xlu0 %2783
      %2785 = vrot.lane.b32.xlu0 %v2716, 32
      %v2786 = vpop.permute.xlu0 %2785
      %2787 = vrot.lane.b32.xlu0 %v2717, 32
      %v2788 = vpop.permute.xlu0 %2787
      %2789 = vrot.lane.b32.xlu0 %v2718, 32
      %v2790 = vpop.permute.xlu0 %2789
      %2791 = vrot.lane.b32.xlu0 %v2719, 32
      %v2792 = vpop.permute.xlu0 %2791
      %2793 = vrot.lane.b32.xlu0 %v2720, 32
      %v2794 = vpop.permute.xlu0 %2793
      %2795 = vrot.lane.b32.xlu0 %v2721, 32
      %v2796 = vpop.permute.xlu0 %2795
      %2797 = vrot.lane.b32.xlu0 %v2722, 32
      %v2798 = vpop.permute.xlu0 %2797
      %2799 = vrot.lane.b32.xlu0 %v2723, 32
      %v2800 = vpop.permute.xlu0 %2799
      %2801 = vrot.lane.b32.xlu0 %v2724, 32
      %v2802 = vpop.permute.xlu0 %2801
      %2803 = vrot.lane.b32.xlu0 %v2725, 32
      %v2804 = vpop.permute.xlu0 %2803
      %2805 = vrot.lane.b32.xlu0 %v2726, 32
      %v2806 = vpop.permute.xlu0 %2805
      %2807 = vrot.lane.b32.xlu0 %v2727, 32
      %v2808 = vpop.permute.xlu0 %2807
      %2809 = vrot.lane.b32.xlu0 %v2728, 32
      %v2810 = vpop.permute.xlu0 %2809
      %2811 = vrot.lane.b32.xlu0 %v2729, 32
      %v2812 = vpop.permute.xlu0 %2811
      %2813 = vrot.lane.b32.xlu0 %v2730, 32
      %v2814 = vpop.permute.xlu0 %2813
      %v2843 = vsel %vm2559, %v2531, %v2760
      %v2844 = vsel %vm2560, %v2532, %v2762
      %v2845 = vsel %vm2561, %v2533, %v2764
      %v2846 = vsel %vm2562, %v2534, %v2766
      %v2847 = vsel %vm2563, %v2535, %v2768
      %v2848 = vsel %vm2564, %v2536, %v2770
      %v2849 = vsel %vm2565, %v2537, %v2772
      %v2850 = vsel %vm2566, %v2538, %v2774
      %v2851 = vsel %vm2567, %v2539, %v2776
      %v2852 = vsel %vm2568, %v2540, %v2778
      %v2853 = vsel %vm2569, %v2541, %v2780
      %v2854 = vsel %vm2570, %v2542, %v2782
      %v2855 = vsel %vm2571, %v2543, %v2784
      %v2856 = vsel %vm2572, %v2544, %v2786
      %v2857 = vsel %vm2573, %v2545, %v2788
      %v2858 = vsel %vm2574, %v2546, %v2790
      %v2859 = vsel %vm2575, %v2547, %v2792
      %v2860 = vsel %vm2576, %v2548, %v2794
      %v2861 = vsel %vm2577, %v2549, %v2796
      %v2862 = vsel %vm2578, %v2550, %v2798
      %v2863 = vsel %vm2579, %v2551, %v2800
      %v2864 = vsel %vm2580, %v2552, %v2802
      %v2865 = vsel %vm2581, %v2553, %v2804
      %v2866 = vsel %vm2582, %v2554, %v2806
      %v2867 = vsel %vm2583, %v2555, %v2808
      %v2868 = vsel %vm2584, %v2556, %v2810
      %v2869 = vsel %vm2585, %v2557, %v2812
      %v2870 = vsel %vm2586, %v2558, %v2814
      %v2871 = vlaneseq
      %v2872 = vshrl.u32 %v2871, 7
      %v2873 = vsub.s32 6, %v2872
      %v2874 = vrot.slane %v201, %v2873
      %2876 = vrot.lane.b32.xlu0 %v2874, 32
      %v2877 = vpop.permute.xlu0 %2876
      %v2879 = vadd.f32 %v2843, %v2877
      %v2880 = vadd.f32 %v2844, %v2877
      %v2881 = vadd.f32 %v2845, %v2877
      %v2882 = vadd.f32 %v2846, %v2877
      %v2883 = vadd.f32 %v2847, %v2877
      %v2884 = vadd.f32 %v2848, %v2877
      %v2885 = vadd.f32 %v2849, %v2877
      %v2886 = vadd.f32 %v2850, %v2877
      %v2887 = vadd.f32 %v2851, %v2877
      %v2888 = vadd.f32 %v2852, %v2877
      %v2889 = vadd.f32 %v2853, %v2877
      %v2890 = vadd.f32 %v2854, %v2877
      %v2891 = vadd.f32 %v2855, %v2877
      %v2892 = vadd.f32 %v2856, %v2877
      %v2893 = vadd.f32 %v2857, %v2877
      %v2894 = vadd.f32 %v2858, %v2877
      %v2895 = vadd.f32 %v2859, %v2877
      %v2896 = vadd.f32 %v2860, %v2877
      %v2897 = vadd.f32 %v2861, %v2877
      %v2898 = vadd.f32 %v2862, %v2877
      %v2899 = vadd.f32 %v2863, %v2877
      %v2900 = vadd.f32 %v2864, %v2877
      %v2901 = vadd.f32 %v2865, %v2877
      %v2902 = vadd.f32 %v2866, %v2877
      %v2903 = vadd.f32 %v2867, %v2877
      %v2904 = vadd.f32 %v2868, %v2877
      %v2905 = vadd.f32 %v2869, %v2877
      %v2906 = vadd.f32 %v2870, %v2877
      %v2907 = vlaneseq
      %v2908 = vshrl.u32 %v2907, 7
      %v2909 = vsub.s32 7, %v2908
      %v2910 = vrot.slane %v201, %v2909
      %2912 = vrot.lane.b32.xlu0 %v2910, 32
      %v2913 = vpop.permute.xlu0 %2912
      %v2915 = vadd.f32 %v2879, %v2913
      %v2916 = vadd.f32 %v2880, %v2913
      %v2917 = vadd.f32 %v2881, %v2913
      %v2918 = vadd.f32 %v2882, %v2913
      %v2919 = vadd.f32 %v2883, %v2913
      %v2920 = vadd.f32 %v2884, %v2913
      %v2921 = vadd.f32 %v2885, %v2913
      %v2922 = vadd.f32 %v2886, %v2913
      %v2923 = vadd.f32 %v2887, %v2913
      %v2924 = vadd.f32 %v2888, %v2913
      %v2925 = vadd.f32 %v2889, %v2913
      %v2926 = vadd.f32 %v2890, %v2913
      %v2927 = vadd.f32 %v2891, %v2913
      %v2928 = vadd.f32 %v2892, %v2913
      %v2929 = vadd.f32 %v2893, %v2913
      %v2930 = vadd.f32 %v2894, %v2913
      %v2931 = vadd.f32 %v2895, %v2913
      %v2932 = vadd.f32 %v2896, %v2913
      %v2933 = vadd.f32 %v2897, %v2913
      %v2934 = vadd.f32 %v2898, %v2913
      %v2935 = vadd.f32 %v2899, %v2913
      %v2936 = vadd.f32 %v2900, %v2913
      %v2937 = vadd.f32 %v2901, %v2913
      %v2938 = vadd.f32 %v2902, %v2913
      %v2939 = vadd.f32 %v2903, %v2913
      %v2940 = vadd.f32 %v2904, %v2913
      %v2941 = vadd.f32 %v2905, %v2913
      %v2942 = vadd.f32 %v2906, %v2913
      %v2943 = vpack.c.bf16 %v2916, %v2915
      %v2944 = vpack.c.bf16 %v2918, %v2917
      %v2945 = vpack.c.bf16 %v2920, %v2919
      %v2946 = vpack.c.bf16 %v2921, %v2921
      %v2947 = vpack.c.bf16 %v2923, %v2922
      %v2948 = vpack.c.bf16 %v2925, %v2924
      %v2949 = vpack.c.bf16 %v2927, %v2926
      %v2950 = vpack.c.bf16 %v2928, %v2928
      %v2951 = vpack.c.bf16 %v2930, %v2929
      %v2952 = vpack.c.bf16 %v2932, %v2931
      %v2953 = vpack.c.bf16 %v2934, %v2933
      %v2954 = vpack.c.bf16 %v2935, %v2935
      %v2955 = vpack.c.bf16 %v2937, %v2936
      %v2956 = vpack.c.bf16 %v2939, %v2938
      %v2957 = vpack.c.bf16 %v2941, %v2940
      %v2958 = vpack.c.bf16 %v2942, %v2942
      %v2959 = vlaneseq
      %v2960 = vshrl.u32 %v2959, 7
      %v2961 = vsub.s32 0, %v2960
      %v2962 = vrot.slane %v202, %v2961
      %2964 = vrot.lane.b32.xlu0 %v2962, 64
      %v2965 = vpop.permute.xlu0 %2964
      %v2967 = vadd.f32 %v714, %v2965
      %v2968 = vadd.f32 %v717, %v2965
      %v2969 = vadd.f32 %v722, %v2965
      %v2970 = vadd.f32 %v725, %v2965
      %v2971 = vadd.f32 %v730, %v2965
      %v2972 = vadd.f32 %v733, %v2965
      %v2973 = vadd.f32 %v738, %v2965
      %v2974 = vadd.f32 %v790, %v2965
      %v2975 = vadd.f32 %v793, %v2965
      %v2976 = vadd.f32 %v798, %v2965
      %v2977 = vadd.f32 %v801, %v2965
      %v2978 = vadd.f32 %v806, %v2965
      %v2979 = vadd.f32 %v809, %v2965
      %v2980 = vadd.f32 %v814, %v2965
      %v2981 = vadd.f32 %v866, %v2965
      %v2982 = vadd.f32 %v869, %v2965
      %v2983 = vadd.f32 %v874, %v2965
      %v2984 = vadd.f32 %v877, %v2965
      %v2985 = vadd.f32 %v882, %v2965
      %v2986 = vadd.f32 %v885, %v2965
      %v2987 = vadd.f32 %v890, %v2965
      %v2988 = vadd.f32 %v942, %v2965
      %v2989 = vadd.f32 %v945, %v2965
      %v2990 = vadd.f32 %v950, %v2965
      %v2991 = vadd.f32 %v953, %v2965
      %v2992 = vadd.f32 %v958, %v2965
      %v2993 = vadd.f32 %v961, %v2965
      %v2994 = vadd.f32 %v966, %v2965
      %3023 = vrot.lane.b32.xlu0 %v2967, 64
      %v3024 = vpop.permute.xlu0 %3023
      %3025 = vrot.lane.b32.xlu0 %v2968, 64
      %v3026 = vpop.permute.xlu0 %3025
      %3027 = vrot.lane.b32.xlu0 %v2969, 64
      %v3028 = vpop.permute.xlu0 %3027
      %3029 = vrot.lane.b32.xlu0 %v2970, 64
      %v3030 = vpop.permute.xlu0 %3029
      %3031 = vrot.lane.b32.xlu0 %v2971, 64
      %v3032 = vpop.permute.xlu0 %3031
      %3033 = vrot.lane.b32.xlu0 %v2972, 64
      %v3034 = vpop.permute.xlu0 %3033
      %3035 = vrot.lane.b32.xlu0 %v2973, 64
      %v3036 = vpop.permute.xlu0 %3035
      %3037 = vrot.lane.b32.xlu0 %v2974, 64
      %v3038 = vpop.permute.xlu0 %3037
      %3039 = vrot.lane.b32.xlu0 %v2975, 64
      %v3040 = vpop.permute.xlu0 %3039
      %3041 = vrot.lane.b32.xlu0 %v2976, 64
      %v3042 = vpop.permute.xlu0 %3041
      %3043 = vrot.lane.b32.xlu0 %v2977, 64
      %v3044 = vpop.permute.xlu0 %3043
      %3045 = vrot.lane.b32.xlu0 %v2978, 64
      %v3046 = vpop.permute.xlu0 %3045
      %3047 = vrot.lane.b32.xlu0 %v2979, 64
      %v3048 = vpop.permute.xlu0 %3047
      %3049 = vrot.lane.b32.xlu0 %v2980, 64
      %v3050 = vpop.permute.xlu0 %3049
      %3051 = vrot.lane.b32.xlu0 %v2981, 64
      %v3052 = vpop.permute.xlu0 %3051
      %3053 = vrot.lane.b32.xlu0 %v2982, 64
      %v3054 = vpop.permute.xlu0 %3053
      %3055 = vrot.lane.b32.xlu0 %v2983, 64
      %v3056 = vpop.permute.xlu0 %3055
      %3057 = vrot.lane.b32.xlu0 %v2984, 64
      %v3058 = vpop.permute.xlu0 %3057
      %3059 = vrot.lane.b32.xlu0 %v2985, 64
      %v3060 = vpop.permute.xlu0 %3059
      %3061 = vrot.lane.b32.xlu0 %v2986, 64
      %v3062 = vpop.permute.xlu0 %3061
      %3063 = vrot.lane.b32.xlu0 %v2987, 64
      %v3064 = vpop.permute.xlu0 %3063
      %3065 = vrot.lane.b32.xlu0 %v2988, 64
      %v3066 = vpop.permute.xlu0 %3065
      %3067 = vrot.lane.b32.xlu0 %v2989, 64
      %v3068 = vpop.permute.xlu0 %3067
      %3069 = vrot.lane.b32.xlu0 %v2990, 64
      %v3070 = vpop.permute.xlu0 %3069
      %3071 = vrot.lane.b32.xlu0 %v2991, 64
      %v3072 = vpop.permute.xlu0 %3071
      %3073 = vrot.lane.b32.xlu0 %v2992, 64
      %v3074 = vpop.permute.xlu0 %3073
      %3075 = vrot.lane.b32.xlu0 %v2993, 64
      %v3076 = vpop.permute.xlu0 %3075
      %3077 = vrot.lane.b32.xlu0 %v2994, 64
      %v3078 = vpop.permute.xlu0 %3077
      %v3107 = vsel %vm208, %v3024, 0.0
      %3108 = vadd.xlane.f32.xlu0 %v3107
      %v3109 = vpop.xlane.xlu0 %3108
      %v3110 = vsel %vm208, %v3026, 0.0
      %3111 = vadd.xlane.f32.xlu0 %v3110
      %v3112 = vpop.xlane.xlu0 %3111
      %v3113 = vsel %vm208, %v3028, 0.0
      %3114 = vadd.xlane.f32.xlu0 %v3113
      %v3115 = vpop.xlane.xlu0 %3114
      %v3116 = vsel %vm208, %v3030, 0.0
      %3117 = vadd.xlane.f32.xlu0 %v3116
      %v3118 = vpop.xlane.xlu0 %3117
      %v3119 = vsel %vm208, %v3032, 0.0
      %3120 = vadd.xlane.f32.xlu0 %v3119
      %v3121 = vpop.xlane.xlu0 %3120
      %v3122 = vsel %vm208, %v3034, 0.0
      %3123 = vadd.xlane.f32.xlu0 %v3122
      %v3124 = vpop.xlane.xlu0 %3123
      %v3125 = vsel %vm227, %v3036, 0.0
      %3126 = vadd.xlane.f32.xlu0 %v3125
      %v3127 = vpop.xlane.xlu0 %3126
      %v3128 = vsel %vm208, %v3038, 0.0
      %3129 = vadd.xlane.f32.xlu0 %v3128
      %v3130 = vpop.xlane.xlu0 %3129
      %v3131 = vsel %vm208, %v3040, 0.0
      %3132 = vadd.xlane.f32.xlu0 %v3131
      %v3133 = vpop.xlane.xlu0 %3132
      %v3134 = vsel %vm208, %v3042, 0.0
      %3135 = vadd.xlane.f32.xlu0 %v3134
      %v3136 = vpop.xlane.xlu0 %3135
      %v3137 = vsel %vm208, %v3044, 0.0
      %3138 = vadd.xlane.f32.xlu0 %v3137
      %v3139 = vpop.xlane.xlu0 %3138
      %v3140 = vsel %vm208, %v3046, 0.0
      %3141 = vadd.xlane.f32.xlu0 %v3140
      %v3142 = vpop.xlane.xlu0 %3141
      %v3143 = vsel %vm208, %v3048, 0.0
      %3144 = vadd.xlane.f32.xlu0 %v3143
      %v3145 = vpop.xlane.xlu0 %3144
      %v3146 = vsel %vm227, %v3050, 0.0
      %3147 = vadd.xlane.f32.xlu0 %v3146
      %v3148 = vpop.xlane.xlu0 %3147
      %v3149 = vsel %vm208, %v3052, 0.0
      %3150 = vadd.xlane.f32.xlu0 %v3149
      %v3151 = vpop.xlane.xlu0 %3150
      %v3152 = vsel %vm208, %v3054, 0.0
      %3153 = vadd.xlane.f32.xlu0 %v3152
      %v3154 = vpop.xlane.xlu0 %3153
      %v3155 = vsel %vm208, %v3056, 0.0
      %3156 = vadd.xlane.f32.xlu0 %v3155
      %v3157 = vpop.xlane.xlu0 %3156
      %v3158 = vsel %vm208, %v3058, 0.0
      %3159 = vadd.xlane.f32.xlu0 %v3158
      %v3160 = vpop.xlane.xlu0 %3159
      %v3161 = vsel %vm208, %v3060, 0.0
      %3162 = vadd.xlane.f32.xlu0 %v3161
      %v3163 = vpop.xlane.xlu0 %3162
      %v3164 = vsel %vm208, %v3062, 0.0
      %3165 = vadd.xlane.f32.xlu0 %v3164
      %v3166 = vpop.xlane.xlu0 %3165
      %v3167 = vsel %vm227, %v3064, 0.0
      %3168 = vadd.xlane.f32.xlu0 %v3167
      %v3169 = vpop.xlane.xlu0 %3168
      %v3170 = vsel %vm208, %v3066, 0.0
      %3171 = vadd.xlane.f32.xlu0 %v3170
      %v3172 = vpop.xlane.xlu0 %3171
      %v3173 = vsel %vm208, %v3068, 0.0
      %3174 = vadd.xlane.f32.xlu0 %v3173
      %v3175 = vpop.xlane.xlu0 %3174
      %v3176 = vsel %vm208, %v3070, 0.0
      %3177 = vadd.xlane.f32.xlu0 %v3176
      %v3178 = vpop.xlane.xlu0 %3177
      %v3179 = vsel %vm208, %v3072, 0.0
      %3180 = vadd.xlane.f32.xlu0 %v3179
      %v3181 = vpop.xlane.xlu0 %3180
      %v3182 = vsel %vm208, %v3074, 0.0
      %3183 = vadd.xlane.f32.xlu0 %v3182
      %v3184 = vpop.xlane.xlu0 %3183
      %v3185 = vsel %vm208, %v3076, 0.0
      %3186 = vadd.xlane.f32.xlu0 %v3185
      %v3187 = vpop.xlane.xlu0 %3186
      %v3188 = vsel %vm227, %v3078, 0.0
      %3189 = vadd.xlane.f32.xlu0 %v3188
      %v3190 = vpop.xlane.xlu0 %3189
      %v3191 = vmul.f32 %v3109, %v294
      %v3192 = vmul.f32 %v3112, %v294
      %v3193 = vmul.f32 %v3115, %v294
      %v3194 = vmul.f32 %v3118, %v294
      %v3195 = vmul.f32 %v3121, %v294
      %v3196 = vmul.f32 %v3124, %v294
      %v3197 = vmul.f32 %v3127, %v294
      %v3198 = vmul.f32 %v3130, %v294
      %v3199 = vmul.f32 %v3133, %v294
      %v3200 = vmul.f32 %v3136, %v294
      %v3201 = vmul.f32 %v3139, %v294
      %v3202 = vmul.f32 %v3142, %v294
      %v3203 = vmul.f32 %v3145, %v294
      %v3204 = vmul.f32 %v3148, %v294
      %v3205 = vmul.f32 %v3151, %v294
      %v3206 = vmul.f32 %v3154, %v294
      %v3207 = vmul.f32 %v3157, %v294
      %v3208 = vmul.f32 %v3160, %v294
      %v3209 = vmul.f32 %v3163, %v294
      %v3210 = vmul.f32 %v3166, %v294
      %v3211 = vmul.f32 %v3169, %v294
      %v3212 = vmul.f32 %v3172, %v294
      %v3213 = vmul.f32 %v3175, %v294
      %v3214 = vmul.f32 %v3178, %v294
      %v3215 = vmul.f32 %v3181, %v294
      %v3216 = vmul.f32 %v3184, %v294
      %v3217 = vmul.f32 %v3187, %v294
      %v3218 = vmul.f32 %v3190, %v294
      %v3219 = vsub.f32 %v2967, %v3191
      %v3220 = vsub.f32 %v2968, %v3192
      %v3221 = vsub.f32 %v2969, %v3193
      %v3222 = vsub.f32 %v2970, %v3194
      %v3223 = vsub.f32 %v2971, %v3195
      %v3224 = vsub.f32 %v2972, %v3196
      %v3225 = vsub.f32 %v2973, %v3197
      %v3226 = vsub.f32 %v2974, %v3198
      %v3227 = vsub.f32 %v2975, %v3199
      %v3228 = vsub.f32 %v2976, %v3200
      %v3229 = vsub.f32 %v2977, %v3201
      %v3230 = vsub.f32 %v2978, %v3202
      %v3231 = vsub.f32 %v2979, %v3203
      %v3232 = vsub.f32 %v2980, %v3204
      %v3233 = vsub.f32 %v2981, %v3205
      %v3234 = vsub.f32 %v2982, %v3206
      %v3235 = vsub.f32 %v2983, %v3207
      %v3236 = vsub.f32 %v2984, %v3208
      %v3237 = vsub.f32 %v2985, %v3209
      %v3238 = vsub.f32 %v2986, %v3210
      %v3239 = vsub.f32 %v2987, %v3211
      %v3240 = vsub.f32 %v2988, %v3212
      %v3241 = vsub.f32 %v2989, %v3213
      %v3242 = vsub.f32 %v2990, %v3214
      %v3243 = vsub.f32 %v2991, %v3215
      %v3244 = vsub.f32 %v2992, %v3216
      %v3245 = vsub.f32 %v2993, %v3217
      %v3246 = vsub.f32 %v2994, %v3218
      %v3247 = vmul.f32 %v3219, %v3219
      %v3248 = vmul.f32 %v3220, %v3220
      %v3249 = vmul.f32 %v3221, %v3221
      %v3250 = vmul.f32 %v3222, %v3222
      %v3251 = vmul.f32 %v3223, %v3223
      %v3252 = vmul.f32 %v3224, %v3224
      %v3253 = vmul.f32 %v3225, %v3225
      %v3254 = vmul.f32 %v3226, %v3226
      %v3255 = vmul.f32 %v3227, %v3227
      %v3256 = vmul.f32 %v3228, %v3228
      %v3257 = vmul.f32 %v3229, %v3229
      %v3258 = vmul.f32 %v3230, %v3230
      %v3259 = vmul.f32 %v3231, %v3231
      %v3260 = vmul.f32 %v3232, %v3232
      %v3261 = vmul.f32 %v3233, %v3233
      %v3262 = vmul.f32 %v3234, %v3234
      %v3263 = vmul.f32 %v3235, %v3235
      %v3264 = vmul.f32 %v3236, %v3236
      %v3265 = vmul.f32 %v3237, %v3237
      %v3266 = vmul.f32 %v3238, %v3238
      %v3267 = vmul.f32 %v3239, %v3239
      %v3268 = vmul.f32 %v3240, %v3240
      %v3269 = vmul.f32 %v3241, %v3241
      %v3270 = vmul.f32 %v3242, %v3242
      %v3271 = vmul.f32 %v3243, %v3243
      %v3272 = vmul.f32 %v3244, %v3244
      %v3273 = vmul.f32 %v3245, %v3245
      %v3274 = vmul.f32 %v3246, %v3246
      %3303 = vrot.lane.b32.xlu0 %v3247, 64
      %v3304 = vpop.permute.xlu0 %3303
      %3305 = vrot.lane.b32.xlu0 %v3248, 64
      %v3306 = vpop.permute.xlu0 %3305
      %3307 = vrot.lane.b32.xlu0 %v3249, 64
      %v3308 = vpop.permute.xlu0 %3307
      %3309 = vrot.lane.b32.xlu0 %v3250, 64
      %v3310 = vpop.permute.xlu0 %3309
      %3311 = vrot.lane.b32.xlu0 %v3251, 64
      %v3312 = vpop.permute.xlu0 %3311
      %3313 = vrot.lane.b32.xlu0 %v3252, 64
      %v3314 = vpop.permute.xlu0 %3313
      %3315 = vrot.lane.b32.xlu0 %v3253, 64
      %v3316 = vpop.permute.xlu0 %3315
      %3317 = vrot.lane.b32.xlu0 %v3254, 64
      %v3318 = vpop.permute.xlu0 %3317
      %3319 = vrot.lane.b32.xlu0 %v3255, 64
      %v3320 = vpop.permute.xlu0 %3319
      %3321 = vrot.lane.b32.xlu0 %v3256, 64
      %v3322 = vpop.permute.xlu0 %3321
      %3323 = vrot.lane.b32.xlu0 %v3257, 64
      %v3324 = vpop.permute.xlu0 %3323
      %3325 = vrot.lane.b32.xlu0 %v3258, 64
      %v3326 = vpop.permute.xlu0 %3325
      %3327 = vrot.lane.b32.xlu0 %v3259, 64
      %v3328 = vpop.permute.xlu0 %3327
      %3329 = vrot.lane.b32.xlu0 %v3260, 64
      %v3330 = vpop.permute.xlu0 %3329
      %3331 = vrot.lane.b32.xlu0 %v3261, 64
      %v3332 = vpop.permute.xlu0 %3331
      %3333 = vrot.lane.b32.xlu0 %v3262, 64
      %v3334 = vpop.permute.xlu0 %3333
      %3335 = vrot.lane.b32.xlu0 %v3263, 64
      %v3336 = vpop.permute.xlu0 %3335
      %3337 = vrot.lane.b32.xlu0 %v3264, 64
      %v3338 = vpop.permute.xlu0 %3337
      %3339 = vrot.lane.b32.xlu0 %v3265, 64
      %v3340 = vpop.permute.xlu0 %3339
      %3341 = vrot.lane.b32.xlu0 %v3266, 64
      %v3342 = vpop.permute.xlu0 %3341
      %3343 = vrot.lane.b32.xlu0 %v3267, 64
      %v3344 = vpop.permute.xlu0 %3343
      %3345 = vrot.lane.b32.xlu0 %v3268, 64
      %v3346 = vpop.permute.xlu0 %3345
      %3347 = vrot.lane.b32.xlu0 %v3269, 64
      %v3348 = vpop.permute.xlu0 %3347
      %3349 = vrot.lane.b32.xlu0 %v3270, 64
      %v3350 = vpop.permute.xlu0 %3349
      %3351 = vrot.lane.b32.xlu0 %v3271, 64
      %v3352 = vpop.permute.xlu0 %3351
      %3353 = vrot.lane.b32.xlu0 %v3272, 64
      %v3354 = vpop.permute.xlu0 %3353
      %3355 = vrot.lane.b32.xlu0 %v3273, 64
      %v3356 = vpop.permute.xlu0 %3355
      %3357 = vrot.lane.b32.xlu0 %v3274, 64
      %v3358 = vpop.permute.xlu0 %3357
      %v3387 = vsel %vm208, %v3304, 0.0
      %3388 = vadd.xlane.f32.xlu0 %v3387
      %v3389 = vpop.xlane.xlu0 %3388
      %v3390 = vsel %vm208, %v3306, 0.0
      %3391 = vadd.xlane.f32.xlu0 %v3390
      %v3392 = vpop.xlane.xlu0 %3391
      %v3393 = vsel %vm208, %v3308, 0.0
      %3394 = vadd.xlane.f32.xlu0 %v3393
      %v3395 = vpop.xlane.xlu0 %3394
      %v3396 = vsel %vm208, %v3310, 0.0
      %3397 = vadd.xlane.f32.xlu0 %v3396
      %v3398 = vpop.xlane.xlu0 %3397
      %v3399 = vsel %vm208, %v3312, 0.0
      %3400 = vadd.xlane.f32.xlu0 %v3399
      %v3401 = vpop.xlane.xlu0 %3400
      %v3402 = vsel %vm208, %v3314, 0.0
      %3403 = vadd.xlane.f32.xlu0 %v3402
      %v3404 = vpop.xlane.xlu0 %3403
      %v3405 = vsel %vm227, %v3316, 0.0
      %3406 = vadd.xlane.f32.xlu0 %v3405
      %v3407 = vpop.xlane.xlu0 %3406
      %v3408 = vsel %vm208, %v3318, 0.0
      %3409 = vadd.xlane.f32.xlu0 %v3408
      %v3410 = vpop.xlane.xlu0 %3409
      %v3411 = vsel %vm208, %v3320, 0.0
      %3412 = vadd.xlane.f32.xlu0 %v3411
      %v3413 = vpop.xlane.xlu0 %3412
      %v3414 = vsel %vm208, %v3322, 0.0
      %3415 = vadd.xlane.f32.xlu0 %v3414
      %v3416 = vpop.xlane.xlu0 %3415
      %v3417 = vsel %vm208, %v3324, 0.0
      %3418 = vadd.xlane.f32.xlu0 %v3417
      %v3419 = vpop.xlane.xlu0 %3418
      %v3420 = vsel %vm208, %v3326, 0.0
      %3421 = vadd.xlane.f32.xlu0 %v3420
      %v3422 = vpop.xlane.xlu0 %3421
      %v3423 = vsel %vm208, %v3328, 0.0
      %3424 = vadd.xlane.f32.xlu0 %v3423
      %v3425 = vpop.xlane.xlu0 %3424
      %v3426 = vsel %vm227, %v3330, 0.0
      %3427 = vadd.xlane.f32.xlu0 %v3426
      %v3428 = vpop.xlane.xlu0 %3427
      %v3429 = vsel %vm208, %v3332, 0.0
      %3430 = vadd.xlane.f32.xlu0 %v3429
      %v3431 = vpop.xlane.xlu0 %3430
      %v3432 = vsel %vm208, %v3334, 0.0
      %3433 = vadd.xlane.f32.xlu0 %v3432
      %v3434 = vpop.xlane.xlu0 %3433
      %v3435 = vsel %vm208, %v3336, 0.0
      %3436 = vadd.xlane.f32.xlu0 %v3435
      %v3437 = vpop.xlane.xlu0 %3436
      %v3438 = vsel %vm208, %v3338, 0.0
      %3439 = vadd.xlane.f32.xlu0 %v3438
      %v3440 = vpop.xlane.xlu0 %3439
      %v3441 = vsel %vm208, %v3340, 0.0
      %3442 = vadd.xlane.f32.xlu0 %v3441
      %v3443 = vpop.xlane.xlu0 %3442
      %v3444 = vsel %vm208, %v3342, 0.0
      %3445 = vadd.xlane.f32.xlu0 %v3444
      %v3446 = vpop.xlane.xlu0 %3445
      %v3447 = vsel %vm227, %v3344, 0.0
      %3448 = vadd.xlane.f32.xlu0 %v3447
      %v3449 = vpop.xlane.xlu0 %3448
      %v3450 = vsel %vm208, %v3346, 0.0
      %3451 = vadd.xlane.f32.xlu0 %v3450
      %v3452 = vpop.xlane.xlu0 %3451
      %v3453 = vsel %vm208, %v3348, 0.0
      %3454 = vadd.xlane.f32.xlu0 %v3453
      %v3455 = vpop.xlane.xlu0 %3454
      %v3456 = vsel %vm208, %v3350, 0.0
      %3457 = vadd.xlane.f32.xlu0 %v3456
      %v3458 = vpop.xlane.xlu0 %3457
      %v3459 = vsel %vm208, %v3352, 0.0
      %3460 = vadd.xlane.f32.xlu0 %v3459
      %v3461 = vpop.xlane.xlu0 %3460
      %v3462 = vsel %vm208, %v3354, 0.0
      %3463 = vadd.xlane.f32.xlu0 %v3462
      %v3464 = vpop.xlane.xlu0 %3463
      %v3465 = vsel %vm208, %v3356, 0.0
      %3466 = vadd.xlane.f32.xlu0 %v3465
      %v3467 = vpop.xlane.xlu0 %3466
      %v3468 = vsel %vm227, %v3358, 0.0
      %3469 = vadd.xlane.f32.xlu0 %v3468
      %v3470 = vpop.xlane.xlu0 %3469
      %v3471 = vmul.f32 %v3389, %v294
      %v3472 = vmul.f32 %v3392, %v294
      %v3473 = vmul.f32 %v3395, %v294
      %v3474 = vmul.f32 %v3398, %v294
      %v3475 = vmul.f32 %v3401, %v294
      %v3476 = vmul.f32 %v3404, %v294
      %v3477 = vmul.f32 %v3407, %v294
      %v3478 = vmul.f32 %v3410, %v294
      %v3479 = vmul.f32 %v3413, %v294
      %v3480 = vmul.f32 %v3416, %v294
      %v3481 = vmul.f32 %v3419, %v294
      %v3482 = vmul.f32 %v3422, %v294
      %v3483 = vmul.f32 %v3425, %v294
      %v3484 = vmul.f32 %v3428, %v294
      %v3485 = vmul.f32 %v3431, %v294
      %v3486 = vmul.f32 %v3434, %v294
      %v3487 = vmul.f32 %v3437, %v294
      %v3488 = vmul.f32 %v3440, %v294
      %v3489 = vmul.f32 %v3443, %v294
      %v3490 = vmul.f32 %v3446, %v294
      %v3491 = vmul.f32 %v3449, %v294
      %v3492 = vmul.f32 %v3452, %v294
      %v3493 = vmul.f32 %v3455, %v294
      %v3494 = vmul.f32 %v3458, %v294
      %v3495 = vmul.f32 %v3461, %v294
      %v3496 = vmul.f32 %v3464, %v294
      %v3497 = vmul.f32 %v3467, %v294
      %v3498 = vmul.f32 %v3470, %v294
      %v3499 = vadd.f32 %v3471, 1e-12
      %v3500 = vadd.f32 %v3472, 1e-12
      %v3501 = vadd.f32 %v3473, 1e-12
      %v3502 = vadd.f32 %v3474, 1e-12
      %v3503 = vadd.f32 %v3475, 1e-12
      %v3504 = vadd.f32 %v3476, 1e-12
      %v3505 = vadd.f32 %v3477, 1e-12
      %v3506 = vadd.f32 %v3478, 1e-12
      %v3507 = vadd.f32 %v3479, 1e-12
      %v3508 = vadd.f32 %v3480, 1e-12
      %v3509 = vadd.f32 %v3481, 1e-12
      %v3510 = vadd.f32 %v3482, 1e-12
      %v3511 = vadd.f32 %v3483, 1e-12
      %v3512 = vadd.f32 %v3484, 1e-12
      %v3513 = vadd.f32 %v3485, 1e-12
      %v3514 = vadd.f32 %v3486, 1e-12
      %v3515 = vadd.f32 %v3487, 1e-12
      %v3516 = vadd.f32 %v3488, 1e-12
      %v3517 = vadd.f32 %v3489, 1e-12
      %v3518 = vadd.f32 %v3490, 1e-12
      %v3519 = vadd.f32 %v3491, 1e-12
      %v3520 = vadd.f32 %v3492, 1e-12
      %v3521 = vadd.f32 %v3493, 1e-12
      %v3522 = vadd.f32 %v3494, 1e-12
      %v3523 = vadd.f32 %v3495, 1e-12
      %v3524 = vadd.f32 %v3496, 1e-12
      %v3525 = vadd.f32 %v3497, 1e-12
      %v3526 = vadd.f32 %v3498, 1e-12
      %v3527 = vrsqrt.pop %v3499
      %v3528 = vrsqrt.pop %v3500
      %v3529 = vrsqrt.pop %v3501
      %v3530 = vrsqrt.pop %v3502
      %v3531 = vrsqrt.pop %v3503
      %v3532 = vrsqrt.pop %v3504
      %v3533 = vrsqrt.pop %v3505
      %v3534 = vrsqrt.pop %v3506
      %v3535 = vrsqrt.pop %v3507
      %v3536 = vrsqrt.pop %v3508
      %v3537 = vrsqrt.pop %v3509
      %v3538 = vrsqrt.pop %v3510
      %v3539 = vrsqrt.pop %v3511
      %v3540 = vrsqrt.pop %v3512
      %v3541 = vrsqrt.pop %v3513
      %v3542 = vrsqrt.pop %v3514
      %v3543 = vrsqrt.pop %v3515
      %v3544 = vrsqrt.pop %v3516
      %v3545 = vrsqrt.pop %v3517
      %v3546 = vrsqrt.pop %v3518
      %v3547 = vrsqrt.pop %v3519
      %v3548 = vrsqrt.pop %v3520
      %v3549 = vrsqrt.pop %v3521
      %v3550 = vrsqrt.pop %v3522
      %v3551 = vrsqrt.pop %v3523
      %v3552 = vrsqrt.pop %v3524
      %v3553 = vrsqrt.pop %v3525
      %v3554 = vrsqrt.pop %v3526
      %v3555 = vmul.f32 %v3219, %v3527
      %v3556 = vmul.f32 %v3220, %v3528
      %v3557 = vmul.f32 %v3221, %v3529
      %v3558 = vmul.f32 %v3222, %v3530
      %v3559 = vmul.f32 %v3223, %v3531
      %v3560 = vmul.f32 %v3224, %v3532
      %v3561 = vmul.f32 %v3225, %v3533
      %v3562 = vmul.f32 %v3226, %v3534
      %v3563 = vmul.f32 %v3227, %v3535
      %v3564 = vmul.f32 %v3228, %v3536
      %v3565 = vmul.f32 %v3229, %v3537
      %v3566 = vmul.f32 %v3230, %v3538
      %v3567 = vmul.f32 %v3231, %v3539
      %v3568 = vmul.f32 %v3232, %v3540
      %v3569 = vmul.f32 %v3233, %v3541
      %v3570 = vmul.f32 %v3234, %v3542
      %v3571 = vmul.f32 %v3235, %v3543
      %v3572 = vmul.f32 %v3236, %v3544
      %v3573 = vmul.f32 %v3237, %v3545
      %v3574 = vmul.f32 %v3238, %v3546
      %v3575 = vmul.f32 %v3239, %v3547
      %v3576 = vmul.f32 %v3240, %v3548
      %v3577 = vmul.f32 %v3241, %v3549
      %v3578 = vmul.f32 %v3242, %v3550
      %v3579 = vmul.f32 %v3243, %v3551
      %v3580 = vmul.f32 %v3244, %v3552
      %v3581 = vmul.f32 %v3245, %v3553
      %v3582 = vmul.f32 %v3246, %v3554
      %v3583 = vlaneseq
      %v3584 = vshrl.u32 %v3583, 7
      %v3585 = vsub.s32 1, %v3584
      %v3586 = vrot.slane %v202, %v3585
      %3588 = vrot.lane.b32.xlu0 %v3586, 64
      %v3589 = vpop.permute.xlu0 %3588
      %v3591 = vmul.f32 %v3555, %v3589
      %v3592 = vmul.f32 %v3556, %v3589
      %v3593 = vmul.f32 %v3557, %v3589
      %v3594 = vmul.f32 %v3558, %v3589
      %v3595 = vmul.f32 %v3559, %v3589
      %v3596 = vmul.f32 %v3560, %v3589
      %v3597 = vmul.f32 %v3561, %v3589
      %v3598 = vmul.f32 %v3562, %v3589
      %v3599 = vmul.f32 %v3563, %v3589
      %v3600 = vmul.f32 %v3564, %v3589
      %v3601 = vmul.f32 %v3565, %v3589
      %v3602 = vmul.f32 %v3566, %v3589
      %v3603 = vmul.f32 %v3567, %v3589
      %v3604 = vmul.f32 %v3568, %v3589
      %v3605 = vmul.f32 %v3569, %v3589
      %v3606 = vmul.f32 %v3570, %v3589
      %v3607 = vmul.f32 %v3571, %v3589
      %v3608 = vmul.f32 %v3572, %v3589
      %v3609 = vmul.f32 %v3573, %v3589
      %v3610 = vmul.f32 %v3574, %v3589
      %v3611 = vmul.f32 %v3575, %v3589
      %v3612 = vmul.f32 %v3576, %v3589
      %v3613 = vmul.f32 %v3577, %v3589
      %v3614 = vmul.f32 %v3578, %v3589
      %v3615 = vmul.f32 %v3579, %v3589
      %v3616 = vmul.f32 %v3580, %v3589
      %v3617 = vmul.f32 %v3581, %v3589
      %v3618 = vmul.f32 %v3582, %v3589
      %v3619 = vlaneseq
      %v3620 = vshrl.u32 %v3619, 7
      %v3621 = vsub.s32 2, %v3620
      %v3622 = vrot.slane %v202, %v3621
      %3624 = vrot.lane.b32.xlu0 %v3622, 64
      %v3625 = vpop.permute.xlu0 %3624
      %v3627 = vadd.f32 %v3591, %v3625
      %v3628 = vadd.f32 %v3592, %v3625
      %v3629 = vadd.f32 %v3593, %v3625
      %v3630 = vadd.f32 %v3594, %v3625
      %v3631 = vadd.f32 %v3595, %v3625
      %v3632 = vadd.f32 %v3596, %v3625
      %v3633 = vadd.f32 %v3597, %v3625
      %v3634 = vadd.f32 %v3598, %v3625
      %v3635 = vadd.f32 %v3599, %v3625
      %v3636 = vadd.f32 %v3600, %v3625
      %v3637 = vadd.f32 %v3601, %v3625
      %v3638 = vadd.f32 %v3602, %v3625
      %v3639 = vadd.f32 %v3603, %v3625
      %v3640 = vadd.f32 %v3604, %v3625
      %v3641 = vadd.f32 %v3605, %v3625
      %v3642 = vadd.f32 %v3606, %v3625
      %v3643 = vadd.f32 %v3607, %v3625
      %v3644 = vadd.f32 %v3608, %v3625
      %v3645 = vadd.f32 %v3609, %v3625
      %v3646 = vadd.f32 %v3610, %v3625
      %v3647 = vadd.f32 %v3611, %v3625
      %v3648 = vadd.f32 %v3612, %v3625
      %v3649 = vadd.f32 %v3613, %v3625
      %v3650 = vadd.f32 %v3614, %v3625
      %v3651 = vadd.f32 %v3615, %v3625
      %v3652 = vadd.f32 %v3616, %v3625
      %v3653 = vadd.f32 %v3617, %v3625
      %v3654 = vadd.f32 %v3618, %v3625
      %3655 = vrot.lane.b32.xlu0 %v611, 64
      %v3656 = vpop.permute.xlu0 %3655
      %3657 = vrot.lane.b32.xlu0 %v612, 64
      %v3658 = vpop.permute.xlu0 %3657
      %3659 = vrot.lane.b32.xlu0 %v613, 64
      %v3660 = vpop.permute.xlu0 %3659
      %3661 = vrot.lane.b32.xlu0 %v614, 64
      %v3662 = vpop.permute.xlu0 %3661
      %3663 = vrot.lane.b32.xlu0 %v615, 64
      %v3664 = vpop.permute.xlu0 %3663
      %3665 = vrot.lane.b32.xlu0 %v616, 64
      %v3666 = vpop.permute.xlu0 %3665
      %3667 = vrot.lane.b32.xlu0 %v617, 64
      %v3668 = vpop.permute.xlu0 %3667
      %3669 = vrot.lane.b32.xlu0 %v618, 64
      %v3670 = vpop.permute.xlu0 %3669
      %3671 = vrot.lane.b32.xlu0 %v619, 64
      %v3672 = vpop.permute.xlu0 %3671
      %3673 = vrot.lane.b32.xlu0 %v620, 64
      %v3674 = vpop.permute.xlu0 %3673
      %3675 = vrot.lane.b32.xlu0 %v621, 64
      %v3676 = vpop.permute.xlu0 %3675
      %3677 = vrot.lane.b32.xlu0 %v622, 64
      %v3678 = vpop.permute.xlu0 %3677
      %3679 = vrot.lane.b32.xlu0 %v623, 64
      %v3680 = vpop.permute.xlu0 %3679
      %3681 = vrot.lane.b32.xlu0 %v624, 64
      %v3682 = vpop.permute.xlu0 %3681
      %3683 = vrot.lane.b32.xlu0 %v625, 64
      %v3684 = vpop.permute.xlu0 %3683
      %3685 = vrot.lane.b32.xlu0 %v626, 64
      %v3686 = vpop.permute.xlu0 %3685
      %3687 = vrot.lane.b32.xlu0 %v627, 64
      %v3688 = vpop.permute.xlu0 %3687
      %3689 = vrot.lane.b32.xlu0 %v628, 64
      %v3690 = vpop.permute.xlu0 %3689
      %3691 = vrot.lane.b32.xlu0 %v629, 64
      %v3692 = vpop.permute.xlu0 %3691
      %3693 = vrot.lane.b32.xlu0 %v630, 64
      %v3694 = vpop.permute.xlu0 %3693
      %3695 = vrot.lane.b32.xlu0 %v631, 64
      %v3696 = vpop.permute.xlu0 %3695
      %3697 = vrot.lane.b32.xlu0 %v632, 64
      %v3698 = vpop.permute.xlu0 %3697
      %3699 = vrot.lane.b32.xlu0 %v633, 64
      %v3700 = vpop.permute.xlu0 %3699
      %3701 = vrot.lane.b32.xlu0 %v634, 64
      %v3702 = vpop.permute.xlu0 %3701
      %3703 = vrot.lane.b32.xlu0 %v635, 64
      %v3704 = vpop.permute.xlu0 %3703
      %3705 = vrot.lane.b32.xlu0 %v636, 64
      %v3706 = vpop.permute.xlu0 %3705
      %3707 = vrot.lane.b32.xlu0 %v637, 64
      %v3708 = vpop.permute.xlu0 %3707
      %3709 = vrot.lane.b32.xlu0 %v638, 64
      %v3710 = vpop.permute.xlu0 %3709
      %v3739 = vadd.f32 %v3627, %v3656
      %v3740 = vadd.f32 %v3628, %v3658
      %v3741 = vadd.f32 %v3629, %v3660
      %v3742 = vadd.f32 %v3630, %v3662
      %v3743 = vadd.f32 %v3631, %v3664
      %v3744 = vadd.f32 %v3632, %v3666
      %v3745 = vadd.f32 %v3633, %v3668
      %v3746 = vadd.f32 %v3634, %v3670
      %v3747 = vadd.f32 %v3635, %v3672
      %v3748 = vadd.f32 %v3636, %v3674
      %v3749 = vadd.f32 %v3637, %v3676
      %v3750 = vadd.f32 %v3638, %v3678
      %v3751 = vadd.f32 %v3639, %v3680
      %v3752 = vadd.f32 %v3640, %v3682
      %v3753 = vadd.f32 %v3641, %v3684
      %v3754 = vadd.f32 %v3642, %v3686
      %v3755 = vadd.f32 %v3643, %v3688
      %v3756 = vadd.f32 %v3644, %v3690
      %v3757 = vadd.f32 %v3645, %v3692
      %v3758 = vadd.f32 %v3646, %v3694
      %v3759 = vadd.f32 %v3647, %v3696
      %v3760 = vadd.f32 %v3648, %v3698
      %v3761 = vadd.f32 %v3649, %v3700
      %v3762 = vadd.f32 %v3650, %v3702
      %v3763 = vadd.f32 %v3651, %v3704
      %v3764 = vadd.f32 %v3652, %v3706
      %v3765 = vadd.f32 %v3653, %v3708
      %v3766 = vadd.f32 %v3654, %v3710
      %v3767 = vlaneseq
      %v3768 = vshrl.u32 %v3767, 7
      %v3769 = vsub.s32 3, %v3768
      %v3770 = vrot.slane %v202, %v3769
      %3772 = vrot.lane.b32.xlu0 %v3770, 64
      %v3773 = vpop.permute.xlu0 %3772
      %v3775 = vsub.f32 %v3739, %v3773
      %v3776 = vsub.f32 %v3740, %v3773
      %v3777 = vsub.f32 %v3741, %v3773
      %v3778 = vsub.f32 %v3742, %v3773
      %v3779 = vsub.f32 %v3743, %v3773
      %v3780 = vsub.f32 %v3744, %v3773
      %v3781 = vsub.f32 %v3745, %v3773
      %v3782 = vsub.f32 %v3746, %v3773
      %v3783 = vsub.f32 %v3747, %v3773
      %v3784 = vsub.f32 %v3748, %v3773
      %v3785 = vsub.f32 %v3749, %v3773
      %v3786 = vsub.f32 %v3750, %v3773
      %v3787 = vsub.f32 %v3751, %v3773
      %v3788 = vsub.f32 %v3752, %v3773
      %v3789 = vsub.f32 %v3753, %v3773
      %v3790 = vsub.f32 %v3754, %v3773
      %v3791 = vsub.f32 %v3755, %v3773
      %v3792 = vsub.f32 %v3756, %v3773
      %v3793 = vsub.f32 %v3757, %v3773
      %v3794 = vsub.f32 %v3758, %v3773
      %v3795 = vsub.f32 %v3759, %v3773
      %v3796 = vsub.f32 %v3760, %v3773
      %v3797 = vsub.f32 %v3761, %v3773
      %v3798 = vsub.f32 %v3762, %v3773
      %v3799 = vsub.f32 %v3763, %v3773
      %v3800 = vsub.f32 %v3764, %v3773
      %v3801 = vsub.f32 %v3765, %v3773
      %v3802 = vsub.f32 %v3766, %v3773
      %vm3803 = vcmp.ge.f32.partialorder %v3775, 0.0
      %vm3804 = vcmp.ge.f32.partialorder %v3776, 0.0
      %vm3805 = vcmp.ge.f32.partialorder %v3777, 0.0
      %vm3806 = vcmp.ge.f32.partialorder %v3778, 0.0
      %vm3807 = vcmp.ge.f32.partialorder %v3779, 0.0
      %vm3808 = vcmp.ge.f32.partialorder %v3780, 0.0
      %vm3809 = vcmp.ge.f32.partialorder %v3781, 0.0
      %vm3810 = vcmp.ge.f32.partialorder %v3782, 0.0
      %vm3811 = vcmp.ge.f32.partialorder %v3783, 0.0
      %vm3812 = vcmp.ge.f32.partialorder %v3784, 0.0
      %vm3813 = vcmp.ge.f32.partialorder %v3785, 0.0
      %vm3814 = vcmp.ge.f32.partialorder %v3786, 0.0
      %vm3815 = vcmp.ge.f32.partialorder %v3787, 0.0
      %vm3816 = vcmp.ge.f32.partialorder %v3788, 0.0
      %vm3817 = vcmp.ge.f32.partialorder %v3789, 0.0
      %vm3818 = vcmp.ge.f32.partialorder %v3790, 0.0
      %vm3819 = vcmp.ge.f32.partialorder %v3791, 0.0
      %vm3820 = vcmp.ge.f32.partialorder %v3792, 0.0
      %vm3821 = vcmp.ge.f32.partialorder %v3793, 0.0
      %vm3822 = vcmp.ge.f32.partialorder %v3794, 0.0
      %vm3823 = vcmp.ge.f32.partialorder %v3795, 0.0
      %vm3824 = vcmp.ge.f32.partialorder %v3796, 0.0
      %vm3825 = vcmp.ge.f32.partialorder %v3797, 0.0
      %vm3826 = vcmp.ge.f32.partialorder %v3798, 0.0
      %vm3827 = vcmp.ge.f32.partialorder %v3799, 0.0
      %vm3828 = vcmp.ge.f32.partialorder %v3800, 0.0
      %vm3829 = vcmp.ge.f32.partialorder %v3801, 0.0
      %vm3830 = vcmp.ge.f32.partialorder %v3802, 0.0
      %v3831 = vlaneseq
      %v3832 = vshrl.u32 %v3831, 7
      %v3833 = vsub.s32 4, %v3832
      %v3834 = vrot.slane %v202, %v3833
      %3863 = vrot.lane.b32.xlu0 %v3775, 64
      %v3864 = vpop.permute.xlu0 %3863
      %3865 = vrot.lane.b32.xlu0 %v3776, 64
      %v3866 = vpop.permute.xlu0 %3865
      %3867 = vrot.lane.b32.xlu0 %v3777, 64
      %v3868 = vpop.permute.xlu0 %3867
      %3869 = vrot.lane.b32.xlu0 %v3778, 64
      %v3870 = vpop.permute.xlu0 %3869
      %3871 = vrot.lane.b32.xlu0 %v3779, 64
      %v3872 = vpop.permute.xlu0 %3871
      %3873 = vrot.lane.b32.xlu0 %v3780, 64
      %v3874 = vpop.permute.xlu0 %3873
      %3875 = vrot.lane.b32.xlu0 %v3781, 64
      %v3876 = vpop.permute.xlu0 %3875
      %3877 = vrot.lane.b32.xlu0 %v3782, 64
      %v3878 = vpop.permute.xlu0 %3877
      %3879 = vrot.lane.b32.xlu0 %v3783, 64
      %v3880 = vpop.permute.xlu0 %3879
      %3881 = vrot.lane.b32.xlu0 %v3784, 64
      %v3882 = vpop.permute.xlu0 %3881
      %3883 = vrot.lane.b32.xlu0 %v3785, 64
      %v3884 = vpop.permute.xlu0 %3883
      %3885 = vrot.lane.b32.xlu0 %v3786, 64
      %v3886 = vpop.permute.xlu0 %3885
      %3887 = vrot.lane.b32.xlu0 %v3787, 64
      %v3888 = vpop.permute.xlu0 %3887
      %3889 = vrot.lane.b32.xlu0 %v3788, 64
      %v3890 = vpop.permute.xlu0 %3889
      %3891 = vrot.lane.b32.xlu0 %v3789, 64
      %v3892 = vpop.permute.xlu0 %3891
      %3893 = vrot.lane.b32.xlu0 %v3790, 64
      %v3894 = vpop.permute.xlu0 %3893
      %3895 = vrot.lane.b32.xlu0 %v3791, 64
      %v3896 = vpop.permute.xlu0 %3895
      %3897 = vrot.lane.b32.xlu0 %v3792, 64
      %v3898 = vpop.permute.xlu0 %3897
      %3899 = vrot.lane.b32.xlu0 %v3793, 64
      %v3900 = vpop.permute.xlu0 %3899
      %3901 = vrot.lane.b32.xlu0 %v3794, 64
      %v3902 = vpop.permute.xlu0 %3901
      %3903 = vrot.lane.b32.xlu0 %v3795, 64
      %v3904 = vpop.permute.xlu0 %3903
      %3905 = vrot.lane.b32.xlu0 %v3796, 64
      %v3906 = vpop.permute.xlu0 %3905
      %3907 = vrot.lane.b32.xlu0 %v3797, 64
      %v3908 = vpop.permute.xlu0 %3907
      %3909 = vrot.lane.b32.xlu0 %v3798, 64
      %v3910 = vpop.permute.xlu0 %3909
      %3911 = vrot.lane.b32.xlu0 %v3799, 64
      %v3912 = vpop.permute.xlu0 %3911
      %3913 = vrot.lane.b32.xlu0 %v3800, 64
      %v3914 = vpop.permute.xlu0 %3913
      %3915 = vrot.lane.b32.xlu0 %v3801, 64
      %v3916 = vpop.permute.xlu0 %3915
      %3917 = vrot.lane.b32.xlu0 %v3802, 64
      %v3918 = vpop.permute.xlu0 %3917
      %v3947 = vmul.f32 %v3834, %v3864
      %v3948 = vmul.f32 %v3834, %v3866
      %v3949 = vmul.f32 %v3834, %v3868
      %v3950 = vmul.f32 %v3834, %v3870
      %v3951 = vmul.f32 %v3834, %v3872
      %v3952 = vmul.f32 %v3834, %v3874
      %v3953 = vmul.f32 %v3834, %v3876
      %v3954 = vmul.f32 %v3834, %v3878
      %v3955 = vmul.f32 %v3834, %v3880
      %v3956 = vmul.f32 %v3834, %v3882
      %v3957 = vmul.f32 %v3834, %v3884
      %v3958 = vmul.f32 %v3834, %v3886
      %v3959 = vmul.f32 %v3834, %v3888
      %v3960 = vmul.f32 %v3834, %v3890
      %v3961 = vmul.f32 %v3834, %v3892
      %v3962 = vmul.f32 %v3834, %v3894
      %v3963 = vmul.f32 %v3834, %v3896
      %v3964 = vmul.f32 %v3834, %v3898
      %v3965 = vmul.f32 %v3834, %v3900
      %v3966 = vmul.f32 %v3834, %v3902
      %v3967 = vmul.f32 %v3834, %v3904
      %v3968 = vmul.f32 %v3834, %v3906
      %v3969 = vmul.f32 %v3834, %v3908
      %v3970 = vmul.f32 %v3834, %v3910
      %v3971 = vmul.f32 %v3834, %v3912
      %v3972 = vmul.f32 %v3834, %v3914
      %v3973 = vmul.f32 %v3834, %v3916
      %v3974 = vmul.f32 %v3834, %v3918
      %4003 = vrot.lane.b32.xlu0 %v3947, 64
      %v4004 = vpop.permute.xlu0 %4003
      %4005 = vrot.lane.b32.xlu0 %v3948, 64
      %v4006 = vpop.permute.xlu0 %4005
      %4007 = vrot.lane.b32.xlu0 %v3949, 64
      %v4008 = vpop.permute.xlu0 %4007
      %4009 = vrot.lane.b32.xlu0 %v3950, 64
      %v4010 = vpop.permute.xlu0 %4009
      %4011 = vrot.lane.b32.xlu0 %v3951, 64
      %v4012 = vpop.permute.xlu0 %4011
      %4013 = vrot.lane.b32.xlu0 %v3952, 64
      %v4014 = vpop.permute.xlu0 %4013
      %4015 = vrot.lane.b32.xlu0 %v3953, 64
      %v4016 = vpop.permute.xlu0 %4015
      %4017 = vrot.lane.b32.xlu0 %v3954, 64
      %v4018 = vpop.permute.xlu0 %4017
      %4019 = vrot.lane.b32.xlu0 %v3955, 64
      %v4020 = vpop.permute.xlu0 %4019
      %4021 = vrot.lane.b32.xlu0 %v3956, 64
      %v4022 = vpop.permute.xlu0 %4021
      %4023 = vrot.lane.b32.xlu0 %v3957, 64
      %v4024 = vpop.permute.xlu0 %4023
      %4025 = vrot.lane.b32.xlu0 %v3958, 64
      %v4026 = vpop.permute.xlu0 %4025
      %4027 = vrot.lane.b32.xlu0 %v3959, 64
      %v4028 = vpop.permute.xlu0 %4027
      %4029 = vrot.lane.b32.xlu0 %v3960, 64
      %v4030 = vpop.permute.xlu0 %4029
      %4031 = vrot.lane.b32.xlu0 %v3961, 64
      %v4032 = vpop.permute.xlu0 %4031
      %4033 = vrot.lane.b32.xlu0 %v3962, 64
      %v4034 = vpop.permute.xlu0 %4033
      %4035 = vrot.lane.b32.xlu0 %v3963, 64
      %v4036 = vpop.permute.xlu0 %4035
      %4037 = vrot.lane.b32.xlu0 %v3964, 64
      %v4038 = vpop.permute.xlu0 %4037
      %4039 = vrot.lane.b32.xlu0 %v3965, 64
      %v4040 = vpop.permute.xlu0 %4039
      %4041 = vrot.lane.b32.xlu0 %v3966, 64
      %v4042 = vpop.permute.xlu0 %4041
      %4043 = vrot.lane.b32.xlu0 %v3967, 64
      %v4044 = vpop.permute.xlu0 %4043
      %4045 = vrot.lane.b32.xlu0 %v3968, 64
      %v4046 = vpop.permute.xlu0 %4045
      %4047 = vrot.lane.b32.xlu0 %v3969, 64
      %v4048 = vpop.permute.xlu0 %4047
      %4049 = vrot.lane.b32.xlu0 %v3970, 64
      %v4050 = vpop.permute.xlu0 %4049
      %4051 = vrot.lane.b32.xlu0 %v3971, 64
      %v4052 = vpop.permute.xlu0 %4051
      %4053 = vrot.lane.b32.xlu0 %v3972, 64
      %v4054 = vpop.permute.xlu0 %4053
      %4055 = vrot.lane.b32.xlu0 %v3973, 64
      %v4056 = vpop.permute.xlu0 %4055
      %4057 = vrot.lane.b32.xlu0 %v3974, 64
      %v4058 = vpop.permute.xlu0 %4057
      %v4087 = vsel %vm3803, %v3775, %v4004
      %v4088 = vsel %vm3804, %v3776, %v4006
      %v4089 = vsel %vm3805, %v3777, %v4008
      %v4090 = vsel %vm3806, %v3778, %v4010
      %v4091 = vsel %vm3807, %v3779, %v4012
      %v4092 = vsel %vm3808, %v3780, %v4014
      %v4093 = vsel %vm3809, %v3781, %v4016
      %v4094 = vsel %vm3810, %v3782, %v4018
      %v4095 = vsel %vm3811, %v3783, %v4020
      %v4096 = vsel %vm3812, %v3784, %v4022
      %v4097 = vsel %vm3813, %v3785, %v4024
      %v4098 = vsel %vm3814, %v3786, %v4026
      %v4099 = vsel %vm3815, %v3787, %v4028
      %v4100 = vsel %vm3816, %v3788, %v4030
      %v4101 = vsel %vm3817, %v3789, %v4032
      %v4102 = vsel %vm3818, %v3790, %v4034
      %v4103 = vsel %vm3819, %v3791, %v4036
      %v4104 = vsel %vm3820, %v3792, %v4038
      %v4105 = vsel %vm3821, %v3793, %v4040
      %v4106 = vsel %vm3822, %v3794, %v4042
      %v4107 = vsel %vm3823, %v3795, %v4044
      %v4108 = vsel %vm3824, %v3796, %v4046
      %v4109 = vsel %vm3825, %v3797, %v4048
      %v4110 = vsel %vm3826, %v3798, %v4050
      %v4111 = vsel %vm3827, %v3799, %v4052
      %v4112 = vsel %vm3828, %v3800, %v4054
      %v4113 = vsel %vm3829, %v3801, %v4056
      %v4114 = vsel %vm3830, %v3802, %v4058
      %v4115 = vlaneseq
      %v4116 = vshrl.u32 %v4115, 7
      %v4117 = vsub.s32 5, %v4116
      %v4118 = vrot.slane %v202, %v4117
      %4120 = vrot.lane.b32.xlu0 %v4118, 64
      %v4121 = vpop.permute.xlu0 %4120
      %v4123 = vadd.f32 %v4087, %v4121
      %v4124 = vadd.f32 %v4088, %v4121
      %v4125 = vadd.f32 %v4089, %v4121
      %v4126 = vadd.f32 %v4090, %v4121
      %v4127 = vadd.f32 %v4091, %v4121
      %v4128 = vadd.f32 %v4092, %v4121
      %v4129 = vadd.f32 %v4093, %v4121
      %v4130 = vadd.f32 %v4094, %v4121
      %v4131 = vadd.f32 %v4095, %v4121
      %v4132 = vadd.f32 %v4096, %v4121
      %v4133 = vadd.f32 %v4097, %v4121
      %v4134 = vadd.f32 %v4098, %v4121
      %v4135 = vadd.f32 %v4099, %v4121
      %v4136 = vadd.f32 %v4100, %v4121
      %v4137 = vadd.f32 %v4101, %v4121
      %v4138 = vadd.f32 %v4102, %v4121
      %v4139 = vadd.f32 %v4103, %v4121
      %v4140 = vadd.f32 %v4104, %v4121
      %v4141 = vadd.f32 %v4105, %v4121
      %v4142 = vadd.f32 %v4106, %v4121
      %v4143 = vadd.f32 %v4107, %v4121
      %v4144 = vadd.f32 %v4108, %v4121
      %v4145 = vadd.f32 %v4109, %v4121
      %v4146 = vadd.f32 %v4110, %v4121
      %v4147 = vadd.f32 %v4111, %v4121
      %v4148 = vadd.f32 %v4112, %v4121
      %v4149 = vadd.f32 %v4113, %v4121
      %v4150 = vadd.f32 %v4114, %v4121
      %v4151 = vlaneseq
      %v4152 = vshrl.u32 %v4151, 7
      %v4153 = vsub.s32 6, %v4152
      %v4154 = vrot.slane %v202, %v4153
      %4156 = vrot.lane.b32.xlu0 %v4154, 64
      %v4157 = vpop.permute.xlu0 %4156
      %v4159 = vadd.f32 %v4123, %v4157
      %v4160 = vadd.f32 %v4124, %v4157
      %v4161 = vadd.f32 %v4125, %v4157
      %v4162 = vadd.f32 %v4126, %v4157
      %v4163 = vadd.f32 %v4127, %v4157
      %v4164 = vadd.f32 %v4128, %v4157
      %v4165 = vadd.f32 %v4129, %v4157
      %v4166 = vadd.f32 %v4130, %v4157
      %v4167 = vadd.f32 %v4131, %v4157
      %v4168 = vadd.f32 %v4132, %v4157
      %v4169 = vadd.f32 %v4133, %v4157
      %v4170 = vadd.f32 %v4134, %v4157
      %v4171 = vadd.f32 %v4135, %v4157
      %v4172 = vadd.f32 %v4136, %v4157
      %v4173 = vadd.f32 %v4137, %v4157
      %v4174 = vadd.f32 %v4138, %v4157
      %v4175 = vadd.f32 %v4139, %v4157
      %v4176 = vadd.f32 %v4140, %v4157
      %v4177 = vadd.f32 %v4141, %v4157
      %v4178 = vadd.f32 %v4142, %v4157
      %v4179 = vadd.f32 %v4143, %v4157
      %v4180 = vadd.f32 %v4144, %v4157
      %v4181 = vadd.f32 %v4145, %v4157
      %v4182 = vadd.f32 %v4146, %v4157
      %v4183 = vadd.f32 %v4147, %v4157
      %v4184 = vadd.f32 %v4148, %v4157
      %v4185 = vadd.f32 %v4149, %v4157
      %v4186 = vadd.f32 %v4150, %v4157
      %v4187 = vpack.c.bf16 %v4160, %v4159
      %v4188 = vpack.c.bf16 %v4162, %v4161
      %v4189 = vpack.c.bf16 %v4164, %v4163
      %v4190 = vpack.c.bf16 %v4165, %v4165
      %v4191 = vpack.c.bf16 %v4167, %v4166
      %v4192 = vpack.c.bf16 %v4169, %v4168
      %v4193 = vpack.c.bf16 %v4171, %v4170
      %v4194 = vpack.c.bf16 %v4172, %v4172
      %v4195 = vpack.c.bf16 %v4174, %v4173
      %v4196 = vpack.c.bf16 %v4176, %v4175
      %v4197 = vpack.c.bf16 %v4178, %v4177
      %v4198 = vpack.c.bf16 %v4179, %v4179
      %v4199 = vpack.c.bf16 %v4181, %v4180
      %v4200 = vpack.c.bf16 %v4183, %v4182
      %v4201 = vpack.c.bf16 %v4185, %v4184
      %v4202 = vpack.c.bf16 %v4186, %v4186
      %4207 = vrot.lane.b32.xlu0 %v2943, 96
      %v4208 = vpop.permute.xlu0 %4207
      %4209 = vrot.lane.b32.xlu0 %v2944, 96
      %v4210 = vpop.permute.xlu0 %4209
      %4211 = vrot.lane.b32.xlu0 %v2945, 96
      %v4212 = vpop.permute.xlu0 %4211
      %4213 = vrot.lane.b32.xlu0 %v2946, 96
      %v4214 = vpop.permute.xlu0 %4213
      %vm4215 = vcmask 64512
      %v4217 = vsel %vm4215, %v1671, 0
      %v4220 = vsel %vm4215, %v1672, 0
      %v4223 = vsel %vm4215, %v1673, 0
      %v4226 = vsel %vm4215, %v1674, 0
      %v4229 = vsel %vm4215, %v4208, 0
      %v4232 = vsel %vm4215, %v4210, 0
      %v4235 = vsel %vm4215, %v4212, 0
      %v4238 = vsel %vm4215, %v4214, 0
      %4240 = vmatprep.subr.bf16.mxu0 0
      %4241 = vmatpush1.bf16.xpose.msra.mxu0 0
      %4242 = vmatprep.subr.bf16.mxu0 0
      %4243 = vmatpush1.bf16.xpose.msra.mxu0 0
      %4244 = vmatprep.subr.bf16.mxu0 0
      %4245 = vmatpush1.bf16.xpose.msra.mxu0 0
      %4246 = vmatprep.subr.bf16.mxu0 0
      %4247 = vmatpush1.bf16.xpose.msra.mxu0 0
      %4248 = vmatprep.subr.bf16.mxu0 0
      %4249 = vmatpush1.bf16.xpose.msra.mxu0 %v4238
      %4250 = vmatprep.subr.bf16.mxu0 0
      %4251 = vmatpush1.bf16.xpose.msra.mxu0 %v4235
      %4252 = vmatprep.subr.bf16.mxu0 0
      %4253 = vmatpush1.bf16.xpose.msra.mxu0 %v4232
      %4254 = vmatprep.subr.bf16.mxu0 0
      %4255 = vmatpush1.bf16.xpose.msra.mxu0 %v4229
      %4256 = vmatprep.subr.bf16.mxu0 0
      %4257 = vmatpush2.bf16.xpose.msra.mxu0 0
      %4258 = vmatprep.subr.bf16.mxu0 0
      %4259 = vmatpush2.bf16.xpose.msra.mxu0 0
      %4260 = vmatprep.subr.bf16.mxu0 0
      %4261 = vmatpush2.bf16.xpose.msra.mxu0 0
      %4262 = vmatprep.subr.bf16.mxu0 0
      %4263 = vmatpush2.bf16.xpose.msra.mxu0 0
      %4264 = vmatprep.subr.bf16.mxu0 0
      %4265 = vmatpush2.bf16.xpose.msra.mxu0 0
      %4266 = vmatprep.subr.bf16.mxu0 0
      %4267 = vmatpush2.bf16.xpose.msra.mxu0 0
      %4268 = vmatprep.subr.bf16.mxu0 0
      %4269 = vmatpush2.bf16.xpose.msra.mxu0 0
      %4270 = vmatprep.subr.bf16.mxu0 0
      %4271 = vmatpush2.bf16.xpose.msra.mxu0 0
      %4272 = vmatprep.mubr.bf16.mxu0 0
      %4273 = vmatmul.mubr.bf16.gmra.mxu0 %v4217
      %v4274 = vpop.f32.mrf.mxu0
      %v4275 = vadd.f32 0.0, %v4274
      %v4276 = vpop.f32.mrf.mxu0
      %v4277 = vpop.f32.mrf.mxu0
      %v4278 = vadd.f32 0.0, %v4277
      %v4279 = vpop.f32.mrf.mxu0
      %4280 = vmatprep.mubr.bf16.mxu0 0
      %4281 = vmatmul.mubr.bf16.gmra.mxu0 %v4220
      %v4282 = vpop.f32.mrf.mxu0
      %v4283 = vadd.f32 0.0, %v4282
      %v4284 = vpop.f32.mrf.mxu0
      %v4285 = vpop.f32.mrf.mxu0
      %v4286 = vadd.f32 0.0, %v4285
      %v4287 = vpop.f32.mrf.mxu0
      %4288 = vmatprep.mubr.bf16.mxu0 0
      %4289 = vmatmul.mubr.bf16.gmra.mxu0 %v4223
      %v4290 = vpop.f32.mrf.mxu0
      %v4291 = vadd.f32 0.0, %v4290
      %v4292 = vpop.f32.mrf.mxu0
      %v4293 = vpop.f32.mrf.mxu0
      %v4294 = vadd.f32 0.0, %v4293
      %v4295 = vpop.f32.mrf.mxu0
      %4296 = vmatprep.mubr.bf16.mxu0 0
      %4297 = vmatmul.mubr.bf16.gmra.mxu0 %v4226
      %v4298 = vpop.f32.mrf.mxu0
      %v4299 = vadd.f32 0.0, %v4298
      %v4300 = vpop.f32.mrf.mxu0
      %v4301 = vpop.f32.mrf.mxu0
      %v4302 = vpop.f32.mrf.mxu0
      %4303 = vdwg.mxu0
      %4308 = vrot.lane.b32.xlu0 %v2947, 96
      %v4309 = vpop.permute.xlu0 %4308
      %4310 = vrot.lane.b32.xlu0 %v2948, 96
      %v4311 = vpop.permute.xlu0 %4310
      %4312 = vrot.lane.b32.xlu0 %v2949, 96
      %v4313 = vpop.permute.xlu0 %4312
      %4314 = vrot.lane.b32.xlu0 %v2950, 96
      %v4315 = vpop.permute.xlu0 %4314
      %v4317 = vsel %vm4215, %v1675, 0
      %v4320 = vsel %vm4215, %v1676, 0
      %v4323 = vsel %vm4215, %v1677, 0
      %v4326 = vsel %vm4215, %v1678, 0
      %v4329 = vsel %vm4215, %v4309, 0
      %v4332 = vsel %vm4215, %v4311, 0
      %v4335 = vsel %vm4215, %v4313, 0
      %v4338 = vsel %vm4215, %v4315, 0
      %4340 = vmatprep.subr.bf16.mxu0 0
      %4341 = vmatpush1.bf16.xpose.msra.mxu0 0
      %4342 = vmatprep.subr.bf16.mxu0 0
      %4343 = vmatpush1.bf16.xpose.msra.mxu0 0
      %4344 = vmatprep.subr.bf16.mxu0 0
      %4345 = vmatpush1.bf16.xpose.msra.mxu0 0
      %4346 = vmatprep.subr.bf16.mxu0 0
      %4347 = vmatpush1.bf16.xpose.msra.mxu0 0
      %4348 = vmatprep.subr.bf16.mxu0 0
      %4349 = vmatpush1.bf16.xpose.msra.mxu0 %v4338
      %4350 = vmatprep.subr.bf16.mxu0 0
      %4351 = vmatpush1.bf16.xpose.msra.mxu0 %v4335
      %4352 = vmatprep.subr.bf16.mxu0 0
      %4353 = vmatpush1.bf16.xpose.msra.mxu0 %v4332
      %4354 = vmatprep.subr.bf16.mxu0 0
      %4355 = vmatpush1.bf16.xpose.msra.mxu0 %v4329
      %4356 = vmatprep.subr.bf16.mxu0 0
      %4357 = vmatpush2.bf16.xpose.msra.mxu0 0
      %4358 = vmatprep.subr.bf16.mxu0 0
      %4359 = vmatpush2.bf16.xpose.msra.mxu0 0
      %4360 = vmatprep.subr.bf16.mxu0 0
      %4361 = vmatpush2.bf16.xpose.msra.mxu0 0
      %4362 = vmatprep.subr.bf16.mxu0 0
      %4363 = vmatpush2.bf16.xpose.msra.mxu0 0
      %4364 = vmatprep.subr.bf16.mxu0 0
      %4365 = vmatpush2.bf16.xpose.msra.mxu0 0
      %4366 = vmatprep.subr.bf16.mxu0 0
      %4367 = vmatpush2.bf16.xpose.msra.mxu0 0
      %4368 = vmatprep.subr.bf16.mxu0 0
      %4369 = vmatpush2.bf16.xpose.msra.mxu0 0
      %4370 = vmatprep.subr.bf16.mxu0 0
      %4371 = vmatpush2.bf16.xpose.msra.mxu0 0
      %4372 = vmatprep.mubr.bf16.mxu0 0
      %4373 = vmatmul.mubr.bf16.gmra.mxu0 %v4317
      %v4374 = vpop.f32.mrf.mxu0
      %v4375 = vadd.f32 0.0, %v4374
      %v4376 = vpop.f32.mrf.mxu0
      %v4377 = vpop.f32.mrf.mxu0
      %v4378 = vadd.f32 0.0, %v4377
      %v4379 = vpop.f32.mrf.mxu0
      %4380 = vmatprep.mubr.bf16.mxu0 0
      %4381 = vmatmul.mubr.bf16.gmra.mxu0 %v4320
      %v4382 = vpop.f32.mrf.mxu0
      %v4383 = vadd.f32 0.0, %v4382
      %v4384 = vpop.f32.mrf.mxu0
      %v4385 = vpop.f32.mrf.mxu0
      %v4386 = vadd.f32 0.0, %v4385
      %v4387 = vpop.f32.mrf.mxu0
      %4388 = vmatprep.mubr.bf16.mxu0 0
      %4389 = vmatmul.mubr.bf16.gmra.mxu0 %v4323
      %v4390 = vpop.f32.mrf.mxu0
      %v4391 = vadd.f32 0.0, %v4390
      %v4392 = vpop.f32.mrf.mxu0
      %v4393 = vpop.f32.mrf.mxu0
      %v4394 = vadd.f32 0.0, %v4393
      %v4395 = vpop.f32.mrf.mxu0
      %4396 = vmatprep.mubr.bf16.mxu0 0
      %4397 = vmatmul.mubr.bf16.gmra.mxu0 %v4326
      %v4398 = vpop.f32.mrf.mxu0
      %v4399 = vadd.f32 0.0, %v4398
      %v4400 = vpop.f32.mrf.mxu0
      %v4401 = vpop.f32.mrf.mxu0
      %v4402 = vpop.f32.mrf.mxu0
      %4403 = vdwg.mxu0
      %4408 = vrot.lane.b32.xlu0 %v2951, 96
      %v4409 = vpop.permute.xlu0 %4408
      %4410 = vrot.lane.b32.xlu0 %v2952, 96
      %v4411 = vpop.permute.xlu0 %4410
      %4412 = vrot.lane.b32.xlu0 %v2953, 96
      %v4413 = vpop.permute.xlu0 %4412
      %4414 = vrot.lane.b32.xlu0 %v2954, 96
      %v4415 = vpop.permute.xlu0 %4414
      %v4417 = vsel %vm4215, %v1679, 0
      %v4420 = vsel %vm4215, %v1680, 0
      %v4423 = vsel %vm4215, %v1681, 0
      %v4426 = vsel %vm4215, %v1682, 0
      %v4429 = vsel %vm4215, %v4409, 0
      %v4432 = vsel %vm4215, %v4411, 0
      %v4435 = vsel %vm4215, %v4413, 0
      %v4438 = vsel %vm4215, %v4415, 0
      %4440 = vmatprep.subr.bf16.mxu0 0
      %4441 = vmatpush1.bf16.xpose.msra.mxu0 0
      %4442 = vmatprep.subr.bf16.mxu0 0
      %4443 = vmatpush1.bf16.xpose.msra.mxu0 0
      %4444 = vmatprep.subr.bf16.mxu0 0
      %4445 = vmatpush1.bf16.xpose.msra.mxu0 0
      %4446 = vmatprep.subr.bf16.mxu0 0
      %4447 = vmatpush1.bf16.xpose.msra.mxu0 0
      %4448 = vmatprep.subr.bf16.mxu0 0
      %4449 = vmatpush1.bf16.xpose.msra.mxu0 %v4438
      %4450 = vmatprep.subr.bf16.mxu0 0
      %4451 = vmatpush1.bf16.xpose.msra.mxu0 %v4435
      %4452 = vmatprep.subr.bf16.mxu0 0
      %4453 = vmatpush1.bf16.xpose.msra.mxu0 %v4432
      %4454 = vmatprep.subr.bf16.mxu0 0
      %4455 = vmatpush1.bf16.xpose.msra.mxu0 %v4429
      %4456 = vmatprep.subr.bf16.mxu0 0
      %4457 = vmatpush2.bf16.xpose.msra.mxu0 0
      %4458 = vmatprep.subr.bf16.mxu0 0
      %4459 = vmatpush2.bf16.xpose.msra.mxu0 0
      %4460 = vmatprep.subr.bf16.mxu0 0
      %4461 = vmatpush2.bf16.xpose.msra.mxu0 0
      %4462 = vmatprep.subr.bf16.mxu0 0
      %4463 = vmatpush2.bf16.xpose.msra.mxu0 0
      %4464 = vmatprep.subr.bf16.mxu0 0
      %4465 = vmatpush2.bf16.xpose.msra.mxu0 0
      %4466 = vmatprep.subr.bf16.mxu0 0
      %4467 = vmatpush2.bf16.xpose.msra.mxu0 0
      %4468 = vmatprep.subr.bf16.mxu0 0
      %4469 = vmatpush2.bf16.xpose.msra.mxu0 0
      %4470 = vmatprep.subr.bf16.mxu0 0
      %4471 = vmatpush2.bf16.xpose.msra.mxu0 0
      %4472 = vmatprep.mubr.bf16.mxu0 0
      %4473 = vmatmul.mubr.bf16.gmra.mxu0 %v4417
      %v4474 = vpop.f32.mrf.mxu0
      %v4475 = vadd.f32 0.0, %v4474
      %v4476 = vpop.f32.mrf.mxu0
      %v4477 = vpop.f32.mrf.mxu0
      %v4478 = vadd.f32 0.0, %v4477
      %v4479 = vpop.f32.mrf.mxu0
      %4480 = vmatprep.mubr.bf16.mxu0 0
      %4481 = vmatmul.mubr.bf16.gmra.mxu0 %v4420
      %v4482 = vpop.f32.mrf.mxu0
      %v4483 = vadd.f32 0.0, %v4482
      %v4484 = vpop.f32.mrf.mxu0
      %v4485 = vpop.f32.mrf.mxu0
      %v4486 = vadd.f32 0.0, %v4485
      %v4487 = vpop.f32.mrf.mxu0
      %4488 = vmatprep.mubr.bf16.mxu0 0
      %4489 = vmatmul.mubr.bf16.gmra.mxu0 %v4423
      %v4490 = vpop.f32.mrf.mxu0
      %v4491 = vadd.f32 0.0, %v4490
      %v4492 = vpop.f32.mrf.mxu0
      %v4493 = vpop.f32.mrf.mxu0
      %v4494 = vadd.f32 0.0, %v4493
      %v4495 = vpop.f32.mrf.mxu0
      %4496 = vmatprep.mubr.bf16.mxu0 0
      %4497 = vmatmul.mubr.bf16.gmra.mxu0 %v4426
      %v4498 = vpop.f32.mrf.mxu0
      %v4499 = vadd.f32 0.0, %v4498
      %v4500 = vpop.f32.mrf.mxu0
      %v4501 = vpop.f32.mrf.mxu0
      %v4502 = vpop.f32.mrf.mxu0
      %4503 = vdwg.mxu0
      %4508 = vrot.lane.b32.xlu0 %v2955, 96
      %v4509 = vpop.permute.xlu0 %4508
      %4510 = vrot.lane.b32.xlu0 %v2956, 96
      %v4511 = vpop.permute.xlu0 %4510
      %4512 = vrot.lane.b32.xlu0 %v2957, 96
      %v4513 = vpop.permute.xlu0 %4512
      %4514 = vrot.lane.b32.xlu0 %v2958, 96
      %v4515 = vpop.permute.xlu0 %4514
      %v4517 = vsel %vm4215, %v1683, 0
      %v4520 = vsel %vm4215, %v1684, 0
      %v4523 = vsel %vm4215, %v1685, 0
      %v4526 = vsel %vm4215, %v1686, 0
      %v4529 = vsel %vm4215, %v4509, 0
      %v4532 = vsel %vm4215, %v4511, 0
      %v4535 = vsel %vm4215, %v4513, 0
      %v4538 = vsel %vm4215, %v4515, 0
      %4540 = vmatprep.subr.bf16.mxu0 0
      %4541 = vmatpush1.bf16.xpose.msra.mxu0 0
      %4542 = vmatprep.subr.bf16.mxu0 0
      %4543 = vmatpush1.bf16.xpose.msra.mxu0 0
      %4544 = vmatprep.subr.bf16.mxu0 0
      %4545 = vmatpush1.bf16.xpose.msra.mxu0 0
      %4546 = vmatprep.subr.bf16.mxu0 0
      %4547 = vmatpush1.bf16.xpose.msra.mxu0 0
      %4548 = vmatprep.subr.bf16.mxu0 0
      %4549 = vmatpush1.bf16.xpose.msra.mxu0 %v4538
      %4550 = vmatprep.subr.bf16.mxu0 0
      %4551 = vmatpush1.bf16.xpose.msra.mxu0 %v4535
      %4552 = vmatprep.subr.bf16.mxu0 0
      %4553 = vmatpush1.bf16.xpose.msra.mxu0 %v4532
      %4554 = vmatprep.subr.bf16.mxu0 0
      %4555 = vmatpush1.bf16.xpose.msra.mxu0 %v4529
      %4556 = vmatprep.subr.bf16.mxu0 0
      %4557 = vmatpush2.bf16.xpose.msra.mxu0 0
      %4558 = vmatprep.subr.bf16.mxu0 0
      %4559 = vmatpush2.bf16.xpose.msra.mxu0 0
      %4560 = vmatprep.subr.bf16.mxu0 0
      %4561 = vmatpush2.bf16.xpose.msra.mxu0 0
      %4562 = vmatprep.subr.bf16.mxu0 0
      %4563 = vmatpush2.bf16.xpose.msra.mxu0 0
      %4564 = vmatprep.subr.bf16.mxu0 0
      %4565 = vmatpush2.bf16.xpose.msra.mxu0 0
      %4566 = vmatprep.subr.bf16.mxu0 0
      %4567 = vmatpush2.bf16.xpose.msra.mxu0 0
      %4568 = vmatprep.subr.bf16.mxu0 0
      %4569 = vmatpush2.bf16.xpose.msra.mxu0 0
      %4570 = vmatprep.subr.bf16.mxu0 0
      %4571 = vmatpush2.bf16.xpose.msra.mxu0 0
      %4572 = vmatprep.mubr.bf16.mxu0 0
      %4573 = vmatmul.mubr.bf16.gmra.mxu0 %v4517
      %v4574 = vpop.f32.mrf.mxu0
      %v4575 = vadd.f32 0.0, %v4574
      %v4576 = vpop.f32.mrf.mxu0
      %v4577 = vpop.f32.mrf.mxu0
      %v4578 = vadd.f32 0.0, %v4577
      %v4579 = vpop.f32.mrf.mxu0
      %4580 = vmatprep.mubr.bf16.mxu0 0
      %4581 = vmatmul.mubr.bf16.gmra.mxu0 %v4520
      %v4582 = vpop.f32.mrf.mxu0
      %v4583 = vadd.f32 0.0, %v4582
      %v4584 = vpop.f32.mrf.mxu0
      %v4585 = vpop.f32.mrf.mxu0
      %v4586 = vadd.f32 0.0, %v4585
      %v4587 = vpop.f32.mrf.mxu0
      %4588 = vmatprep.mubr.bf16.mxu0 0
      %4589 = vmatmul.mubr.bf16.gmra.mxu0 %v4523
      %v4590 = vpop.f32.mrf.mxu0
      %v4591 = vadd.f32 0.0, %v4590
      %v4592 = vpop.f32.mrf.mxu0
      %v4593 = vpop.f32.mrf.mxu0
      %v4594 = vadd.f32 0.0, %v4593
      %v4595 = vpop.f32.mrf.mxu0
      %4596 = vmatprep.mubr.bf16.mxu0 0
      %4597 = vmatmul.mubr.bf16.gmra.mxu0 %v4526
      %v4598 = vpop.f32.mrf.mxu0
      %v4599 = vadd.f32 0.0, %v4598
      %v4600 = vpop.f32.mrf.mxu0
      %v4601 = vpop.f32.mrf.mxu0
      %v4602 = vpop.f32.mrf.mxu0
      %4603 = vdwg.mxu0
      %vm4604 = vcmask 433152
      %v4605 = vsel %vm4604, %v4275, -inf
      %4606 = vmax.xlane.f32.xlu0 %v4605
      %v4607 = vpop.xlane.xlu0 %4606
      %v4608 = vsel %vm4604, %v4278, -inf
      %4609 = vmax.xlane.f32.xlu0 %v4608
      %v4610 = vpop.xlane.xlu0 %4609
      %v4611 = vsel %vm4604, %v4283, -inf
      %4612 = vmax.xlane.f32.xlu0 %v4611
      %v4613 = vpop.xlane.xlu0 %4612
      %v4614 = vsel %vm4604, %v4286, -inf
      %4615 = vmax.xlane.f32.xlu0 %v4614
      %v4616 = vpop.xlane.xlu0 %4615
      %v4617 = vsel %vm4604, %v4291, -inf
      %4618 = vmax.xlane.f32.xlu0 %v4617
      %v4619 = vpop.xlane.xlu0 %4618
      %v4620 = vsel %vm4604, %v4294, -inf
      %4621 = vmax.xlane.f32.xlu0 %v4620
      %v4622 = vpop.xlane.xlu0 %4621
      %vm4623 = vcmask 430080
      %v4624 = vsel %vm4623, %v4299, -inf
      %4625 = vmax.xlane.f32.xlu0 %v4624
      %v4626 = vpop.xlane.xlu0 %4625
      %v4627 = vsel %vm4604, %v4375, -inf
      %4628 = vmax.xlane.f32.xlu0 %v4627
      %v4629 = vpop.xlane.xlu0 %4628
      %v4630 = vsel %vm4604, %v4378, -inf
      %4631 = vmax.xlane.f32.xlu0 %v4630
      %v4632 = vpop.xlane.xlu0 %4631
      %v4633 = vsel %vm4604, %v4383, -inf
      %4634 = vmax.xlane.f32.xlu0 %v4633
      %v4635 = vpop.xlane.xlu0 %4634
      %v4636 = vsel %vm4604, %v4386, -inf
      %4637 = vmax.xlane.f32.xlu0 %v4636
      %v4638 = vpop.xlane.xlu0 %4637
      %v4639 = vsel %vm4604, %v4391, -inf
      %4640 = vmax.xlane.f32.xlu0 %v4639
      %v4641 = vpop.xlane.xlu0 %4640
      %v4642 = vsel %vm4604, %v4394, -inf
      %4643 = vmax.xlane.f32.xlu0 %v4642
      %v4644 = vpop.xlane.xlu0 %4643
      %v4645 = vsel %vm4623, %v4399, -inf
      %4646 = vmax.xlane.f32.xlu0 %v4645
      %v4647 = vpop.xlane.xlu0 %4646
      %v4648 = vsel %vm4604, %v4475, -inf
      %4649 = vmax.xlane.f32.xlu0 %v4648
      %v4650 = vpop.xlane.xlu0 %4649
      %v4651 = vsel %vm4604, %v4478, -inf
      %4652 = vmax.xlane.f32.xlu0 %v4651
      %v4653 = vpop.xlane.xlu0 %4652
      %v4654 = vsel %vm4604, %v4483, -inf
      %4655 = vmax.xlane.f32.xlu0 %v4654
      %v4656 = vpop.xlane.xlu0 %4655
      %v4657 = vsel %vm4604, %v4486, -inf
      %4658 = vmax.xlane.f32.xlu0 %v4657
      %v4659 = vpop.xlane.xlu0 %4658
      %v4660 = vsel %vm4604, %v4491, -inf
      %4661 = vmax.xlane.f32.xlu0 %v4660
      %v4662 = vpop.xlane.xlu0 %4661
      %v4663 = vsel %vm4604, %v4494, -inf
      %4664 = vmax.xlane.f32.xlu0 %v4663
      %v4665 = vpop.xlane.xlu0 %4664
      %v4666 = vsel %vm4623, %v4499, -inf
      %4667 = vmax.xlane.f32.xlu0 %v4666
      %v4668 = vpop.xlane.xlu0 %4667
      %v4669 = vsel %vm4604, %v4575, -inf
      %4670 = vmax.xlane.f32.xlu0 %v4669
      %v4671 = vpop.xlane.xlu0 %4670
      %v4672 = vsel %vm4604, %v4578, -inf
      %4673 = vmax.xlane.f32.xlu0 %v4672
      %v4674 = vpop.xlane.xlu0 %4673
      %v4675 = vsel %vm4604, %v4583, -inf
      %4676 = vmax.xlane.f32.xlu0 %v4675
      %v4677 = vpop.xlane.xlu0 %4676
      %v4678 = vsel %vm4604, %v4586, -inf
      %4679 = vmax.xlane.f32.xlu0 %v4678
      %v4680 = vpop.xlane.xlu0 %4679
      %v4681 = vsel %vm4604, %v4591, -inf
      %4682 = vmax.xlane.f32.xlu0 %v4681
      %v4683 = vpop.xlane.xlu0 %4682
      %v4684 = vsel %vm4604, %v4594, -inf
      %4685 = vmax.xlane.f32.xlu0 %v4684
      %v4686 = vpop.xlane.xlu0 %4685
      %v4687 = vsel %vm4623, %v4599, -inf
      %4688 = vmax.xlane.f32.xlu0 %v4687
      %v4689 = vpop.xlane.xlu0 %4688
      %v4690 = vsub.f32 %v4275, %v4607
      %v4691 = vsub.f32 %v4278, %v4610
      %v4692 = vsub.f32 %v4283, %v4613
      %v4693 = vsub.f32 %v4286, %v4616
      %v4694 = vsub.f32 %v4291, %v4619
      %v4695 = vsub.f32 %v4294, %v4622
      %v4696 = vsub.f32 %v4299, %v4626
      %v4697 = vsub.f32 %v4375, %v4629
      %v4698 = vsub.f32 %v4378, %v4632
      %v4699 = vsub.f32 %v4383, %v4635
      %v4700 = vsub.f32 %v4386, %v4638
      %v4701 = vsub.f32 %v4391, %v4641
      %v4702 = vsub.f32 %v4394, %v4644
      %v4703 = vsub.f32 %v4399, %v4647
      %v4704 = vsub.f32 %v4475, %v4650
      %v4705 = vsub.f32 %v4478, %v4653
      %v4706 = vsub.f32 %v4483, %v4656
      %v4707 = vsub.f32 %v4486, %v4659
      %v4708 = vsub.f32 %v4491, %v4662
      %v4709 = vsub.f32 %v4494, %v4665
      %v4710 = vsub.f32 %v4499, %v4668
      %v4711 = vsub.f32 %v4575, %v4671
      %v4712 = vsub.f32 %v4578, %v4674
      %v4713 = vsub.f32 %v4583, %v4677
      %v4714 = vsub.f32 %v4586, %v4680
      %v4715 = vsub.f32 %v4591, %v4683
      %v4716 = vsub.f32 %v4594, %v4686
      %v4717 = vsub.f32 %v4599, %v4689
      %v4718 = vmul.f32 %v4690, 1.442695
      %v4719 = vpow.pop %v4718
      %v4720 = vmul.f32 %v4691, 1.442695
      %v4721 = vpow.pop %v4720
      %v4722 = vmul.f32 %v4692, 1.442695
      %v4723 = vpow.pop %v4722
      %v4724 = vmul.f32 %v4693, 1.442695
      %v4725 = vpow.pop %v4724
      %v4726 = vmul.f32 %v4694, 1.442695
      %v4727 = vpow.pop %v4726
      %v4728 = vmul.f32 %v4695, 1.442695
      %v4729 = vpow.pop %v4728
      %v4730 = vmul.f32 %v4696, 1.442695
      %v4731 = vpow.pop %v4730
      %v4732 = vmul.f32 %v4697, 1.442695
      %v4733 = vpow.pop %v4732
      %v4734 = vmul.f32 %v4698, 1.442695
      %v4735 = vpow.pop %v4734
      %v4736 = vmul.f32 %v4699, 1.442695
      %v4737 = vpow.pop %v4736
      %v4738 = vmul.f32 %v4700, 1.442695
      %v4739 = vpow.pop %v4738
      %v4740 = vmul.f32 %v4701, 1.442695
      %v4741 = vpow.pop %v4740
      %v4742 = vmul.f32 %v4702, 1.442695
      %v4743 = vpow.pop %v4742
      %v4744 = vmul.f32 %v4703, 1.442695
      %v4745 = vpow.pop %v4744
      %v4746 = vmul.f32 %v4704, 1.442695
      %v4747 = vpow.pop %v4746
      %v4748 = vmul.f32 %v4705, 1.442695
      %v4749 = vpow.pop %v4748
      %v4750 = vmul.f32 %v4706, 1.442695
      %v4751 = vpow.pop %v4750
      %v4752 = vmul.f32 %v4707, 1.442695
      %v4753 = vpow.pop %v4752
      %v4754 = vmul.f32 %v4708, 1.442695
      %v4755 = vpow.pop %v4754
      %v4756 = vmul.f32 %v4709, 1.442695
      %v4757 = vpow.pop %v4756
      %v4758 = vmul.f32 %v4710, 1.442695
      %v4759 = vpow.pop %v4758
      %v4760 = vmul.f32 %v4711, 1.442695
      %v4761 = vpow.pop %v4760
      %v4762 = vmul.f32 %v4712, 1.442695
      %v4763 = vpow.pop %v4762
      %v4764 = vmul.f32 %v4713, 1.442695
      %v4765 = vpow.pop %v4764
      %v4766 = vmul.f32 %v4714, 1.442695
      %v4767 = vpow.pop %v4766
      %v4768 = vmul.f32 %v4715, 1.442695
      %v4769 = vpow.pop %v4768
      %v4770 = vmul.f32 %v4716, 1.442695
      %v4771 = vpow.pop %v4770
      %v4772 = vmul.f32 %v4717, 1.442695
      %v4773 = vpow.pop %v4772
      %v4774 = vsel %vm4604, %v4719, 0.0
      %4775 = vadd.xlane.f32.xlu0 %v4774
      %v4776 = vpop.xlane.xlu0 %4775
      %v4777 = vsel %vm4604, %v4721, 0.0
      %4778 = vadd.xlane.f32.xlu0 %v4777
      %v4779 = vpop.xlane.xlu0 %4778
      %v4780 = vsel %vm4604, %v4723, 0.0
      %4781 = vadd.xlane.f32.xlu0 %v4780
      %v4782 = vpop.xlane.xlu0 %4781
      %v4783 = vsel %vm4604, %v4725, 0.0
      %4784 = vadd.xlane.f32.xlu0 %v4783
      %v4785 = vpop.xlane.xlu0 %4784
      %v4786 = vsel %vm4604, %v4727, 0.0
      %4787 = vadd.xlane.f32.xlu0 %v4786
      %v4788 = vpop.xlane.xlu0 %4787
      %v4789 = vsel %vm4604, %v4729, 0.0
      %4790 = vadd.xlane.f32.xlu0 %v4789
      %v4791 = vpop.xlane.xlu0 %4790
      %v4792 = vsel %vm4623, %v4731, 0.0
      %4793 = vadd.xlane.f32.xlu0 %v4792
      %v4794 = vpop.xlane.xlu0 %4793
      %v4795 = vsel %vm4604, %v4733, 0.0
      %4796 = vadd.xlane.f32.xlu0 %v4795
      %v4797 = vpop.xlane.xlu0 %4796
      %v4798 = vsel %vm4604, %v4735, 0.0
      %4799 = vadd.xlane.f32.xlu0 %v4798
      %v4800 = vpop.xlane.xlu0 %4799
      %v4801 = vsel %vm4604, %v4737, 0.0
      %4802 = vadd.xlane.f32.xlu0 %v4801
      %v4803 = vpop.xlane.xlu0 %4802
      %v4804 = vsel %vm4604, %v4739, 0.0
      %4805 = vadd.xlane.f32.xlu0 %v4804
      %v4806 = vpop.xlane.xlu0 %4805
      %v4807 = vsel %vm4604, %v4741, 0.0
      %4808 = vadd.xlane.f32.xlu0 %v4807
      %v4809 = vpop.xlane.xlu0 %4808
      %v4810 = vsel %vm4604, %v4743, 0.0
      %4811 = vadd.xlane.f32.xlu0 %v4810
      %v4812 = vpop.xlane.xlu0 %4811
      %v4813 = vsel %vm4623, %v4745, 0.0
      %4814 = vadd.xlane.f32.xlu0 %v4813
      %v4815 = vpop.xlane.xlu0 %4814
      %v4816 = vsel %vm4604, %v4747, 0.0
      %4817 = vadd.xlane.f32.xlu0 %v4816
      %v4818 = vpop.xlane.xlu0 %4817
      %v4819 = vsel %vm4604, %v4749, 0.0
      %4820 = vadd.xlane.f32.xlu0 %v4819
      %v4821 = vpop.xlane.xlu0 %4820
      %v4822 = vsel %vm4604, %v4751, 0.0
      %4823 = vadd.xlane.f32.xlu0 %v4822
      %v4824 = vpop.xlane.xlu0 %4823
      %v4825 = vsel %vm4604, %v4753, 0.0
      %4826 = vadd.xlane.f32.xlu0 %v4825
      %v4827 = vpop.xlane.xlu0 %4826
      %v4828 = vsel %vm4604, %v4755, 0.0
      %4829 = vadd.xlane.f32.xlu0 %v4828
      %v4830 = vpop.xlane.xlu0 %4829
      %v4831 = vsel %vm4604, %v4757, 0.0
      %4832 = vadd.xlane.f32.xlu0 %v4831
      %v4833 = vpop.xlane.xlu0 %4832
      %v4834 = vsel %vm4623, %v4759, 0.0
      %4835 = vadd.xlane.f32.xlu0 %v4834
      %v4836 = vpop.xlane.xlu0 %4835
      %v4837 = vsel %vm4604, %v4761, 0.0
      %4838 = vadd.xlane.f32.xlu0 %v4837
      %v4839 = vpop.xlane.xlu0 %4838
      %v4840 = vsel %vm4604, %v4763, 0.0
      %4841 = vadd.xlane.f32.xlu0 %v4840
      %v4842 = vpop.xlane.xlu0 %4841
      %v4843 = vsel %vm4604, %v4765, 0.0
      %4844 = vadd.xlane.f32.xlu0 %v4843
      %v4845 = vpop.xlane.xlu0 %4844
      %v4846 = vsel %vm4604, %v4767, 0.0
      %4847 = vadd.xlane.f32.xlu0 %v4846
      %v4848 = vpop.xlane.xlu0 %4847
      %v4849 = vsel %vm4604, %v4769, 0.0
      %4850 = vadd.xlane.f32.xlu0 %v4849
      %v4851 = vpop.xlane.xlu0 %4850
      %v4852 = vsel %vm4604, %v4771, 0.0
      %4853 = vadd.xlane.f32.xlu0 %v4852
      %v4854 = vpop.xlane.xlu0 %4853
      %v4855 = vsel %vm4623, %v4773, 0.0
      %4856 = vadd.xlane.f32.xlu0 %v4855
      %v4857 = vpop.xlane.xlu0 %4856
      %v4858 = vrcp.pop %v4776
      %v4859 = vrcp.pop %v4779
      %v4860 = vrcp.pop %v4782
      %v4861 = vrcp.pop %v4785
      %v4862 = vrcp.pop %v4788
      %v4863 = vrcp.pop %v4791
      %v4864 = vrcp.pop %v4794
      %v4865 = vrcp.pop %v4797
      %v4866 = vrcp.pop %v4800
      %v4867 = vrcp.pop %v4803
      %v4868 = vrcp.pop %v4806
      %v4869 = vrcp.pop %v4809
      %v4870 = vrcp.pop %v4812
      %v4871 = vrcp.pop %v4815
      %v4872 = vrcp.pop %v4818
      %v4873 = vrcp.pop %v4821
      %v4874 = vrcp.pop %v4824
      %v4875 = vrcp.pop %v4827
      %v4876 = vrcp.pop %v4830
      %v4877 = vrcp.pop %v4833
      %v4878 = vrcp.pop %v4836
      %v4879 = vrcp.pop %v4839
      %v4880 = vrcp.pop %v4842
      %v4881 = vrcp.pop %v4845
      %v4882 = vrcp.pop %v4848
      %v4883 = vrcp.pop %v4851
      %v4884 = vrcp.pop %v4854
      %v4885 = vrcp.pop %v4857
      %v4886 = vmul.f32 %v4719, %v4858
      %v4887 = vmul.f32 %v4721, %v4859
      %v4888 = vmul.f32 %v4723, %v4860
      %v4889 = vmul.f32 %v4725, %v4861
      %v4890 = vmul.f32 %v4727, %v4862
      %v4891 = vmul.f32 %v4729, %v4863
      %v4892 = vmul.f32 %v4731, %v4864
      %v4893 = vmul.f32 %v4733, %v4865
      %v4894 = vmul.f32 %v4735, %v4866
      %v4895 = vmul.f32 %v4737, %v4867
      %v4896 = vmul.f32 %v4739, %v4868
      %v4897 = vmul.f32 %v4741, %v4869
      %v4898 = vmul.f32 %v4743, %v4870
      %v4899 = vmul.f32 %v4745, %v4871
      %v4900 = vmul.f32 %v4747, %v4872
      %v4901 = vmul.f32 %v4749, %v4873
      %v4902 = vmul.f32 %v4751, %v4874
      %v4903 = vmul.f32 %v4753, %v4875
      %v4904 = vmul.f32 %v4755, %v4876
      %v4905 = vmul.f32 %v4757, %v4877
      %v4906 = vmul.f32 %v4759, %v4878
      %v4907 = vmul.f32 %v4761, %v4879
      %v4908 = vmul.f32 %v4763, %v4880
      %v4909 = vmul.f32 %v4765, %v4881
      %v4910 = vmul.f32 %v4767, %v4882
      %v4911 = vmul.f32 %v4769, %v4883
      %v4912 = vmul.f32 %v4771, %v4884
      %v4913 = vmul.f32 %v4773, %v4885
      %v4914 = vpack.c.bf16 %v4887, %v4886
      %v4915 = vpack.c.bf16 %v4889, %v4888
      %v4916 = vpack.c.bf16 %v4891, %v4890
      %v4917 = vpack.c.bf16 %v4892, %v4892
      %v4918 = vpack.c.bf16 %v4894, %v4893
      %v4919 = vpack.c.bf16 %v4896, %v4895
      %v4920 = vpack.c.bf16 %v4898, %v4897
      %v4921 = vpack.c.bf16 %v4899, %v4899
      %v4922 = vpack.c.bf16 %v4901, %v4900
      %v4923 = vpack.c.bf16 %v4903, %v4902
      %v4924 = vpack.c.bf16 %v4905, %v4904
      %v4925 = vpack.c.bf16 %v4906, %v4906
      %v4926 = vpack.c.bf16 %v4908, %v4907
      %v4927 = vpack.c.bf16 %v4910, %v4909
      %v4928 = vpack.c.bf16 %v4912, %v4911
      %v4929 = vpack.c.bf16 %v4913, %v4913
      %4934 = vrot.lane.b32.xlu0 %v4187, 64
      %v4935 = vpop.permute.xlu0 %4934
      %4936 = vrot.lane.b32.xlu0 %v4188, 64
      %v4937 = vpop.permute.xlu0 %4936
      %4938 = vrot.lane.b32.xlu0 %v4189, 64
      %v4939 = vpop.permute.xlu0 %4938
      %4940 = vrot.lane.b32.xlu0 %v4190, 64
      %v4941 = vpop.permute.xlu0 %4940
      %v4946 = vsel %vm4604, %v4914, 0
      %v4949 = vsel %vm4604, %v4915, 0
      %v4952 = vsel %vm4604, %v4916, 0
      %v4955 = vsel %vm4604, %v4917, 0
      %vm4957 = vcmask 1041408
      %vm4958 = vcmask 1042432
      %v4959 = vsel %vm4957, 4294967295, 65535
      %v4960 = vsel %vm4958, %v4959, 0
      %v4962 = vand.u32 %v4941, %v4960
      %4964 = vmatprep.subr.bf16.mxu0 0
      %4965 = vmatpush1.bf16.msra.mxu0 0
      %4966 = vmatprep.subr.bf16.mxu0 0
      %4967 = vmatpush1.bf16.msra.mxu0 0
      %4968 = vmatprep.subr.bf16.mxu0 0
      %4969 = vmatpush1.bf16.msra.mxu0 0
      %4970 = vmatprep.subr.bf16.mxu0 0
      %4971 = vmatpush1.bf16.msra.mxu0 0
      %4972 = vmatprep.subr.bf16.mxu0 0
      %4973 = vmatpush1.bf16.msra.mxu0 %v4962
      %4974 = vmatprep.subr.bf16.mxu0 0
      %4975 = vmatpush1.bf16.msra.mxu0 %v4939
      %4976 = vmatprep.subr.bf16.mxu0 0
      %4977 = vmatpush1.bf16.msra.mxu0 %v4937
      %4978 = vmatprep.subr.bf16.mxu0 0
      %4979 = vmatpush1.bf16.msra.mxu0 %v4935
      %4980 = vmatprep.subr.bf16.mxu0 0
      %4981 = vmatpush2.bf16.msra.mxu0 0
      %4982 = vmatprep.subr.bf16.mxu0 0
      %4983 = vmatpush2.bf16.msra.mxu0 0
      %4984 = vmatprep.subr.bf16.mxu0 0
      %4985 = vmatpush2.bf16.msra.mxu0 0
      %4986 = vmatprep.subr.bf16.mxu0 0
      %4987 = vmatpush2.bf16.msra.mxu0 0
      %4988 = vmatprep.subr.bf16.mxu0 0
      %4989 = vmatpush2.bf16.msra.mxu0 0
      %4990 = vmatprep.subr.bf16.mxu0 0
      %4991 = vmatpush2.bf16.msra.mxu0 0
      %4992 = vmatprep.subr.bf16.mxu0 0
      %4993 = vmatpush2.bf16.msra.mxu0 0
      %4994 = vmatprep.subr.bf16.mxu0 0
      %4995 = vmatpush2.bf16.msra.mxu0 0
      %4996 = vmatprep.mubr.bf16.mxu0 0
      %4997 = vmatmul.mubr.bf16.gmra.mxu0 %v4946
      %v4998 = vpop.f32.mrf.mxu0
      %v4999 = vadd.f32 0.0, %v4998
      %v5000 = vpop.f32.mrf.mxu0
      %v5001 = vpop.f32.mrf.mxu0
      %v5002 = vadd.f32 0.0, %v5001
      %v5003 = vpop.f32.mrf.mxu0
      %5004 = vmatprep.mubr.bf16.mxu0 0
      %5005 = vmatmul.mubr.bf16.gmra.mxu0 %v4949
      %v5006 = vpop.f32.mrf.mxu0
      %v5007 = vadd.f32 0.0, %v5006
      %v5008 = vpop.f32.mrf.mxu0
      %v5009 = vpop.f32.mrf.mxu0
      %v5010 = vadd.f32 0.0, %v5009
      %v5011 = vpop.f32.mrf.mxu0
      %5012 = vmatprep.mubr.bf16.mxu0 0
      %5013 = vmatmul.mubr.bf16.gmra.mxu0 %v4952
      %v5014 = vpop.f32.mrf.mxu0
      %v5015 = vadd.f32 0.0, %v5014
      %v5016 = vpop.f32.mrf.mxu0
      %v5017 = vpop.f32.mrf.mxu0
      %v5018 = vadd.f32 0.0, %v5017
      %v5019 = vpop.f32.mrf.mxu0
      %5020 = vmatprep.mubr.bf16.mxu0 0
      %5021 = vmatmul.mubr.bf16.gmra.mxu0 %v4955
      %v5022 = vpop.f32.mrf.mxu0
      %v5023 = vadd.f32 0.0, %v5022
      %v5024 = vpop.f32.mrf.mxu0
      %v5025 = vpop.f32.mrf.mxu0
      %v5026 = vpop.f32.mrf.mxu0
      %5027 = vdwg.mxu0
      %5032 = vrot.lane.b32.xlu0 %v4191, 64
      %v5033 = vpop.permute.xlu0 %5032
      %5034 = vrot.lane.b32.xlu0 %v4192, 64
      %v5035 = vpop.permute.xlu0 %5034
      %5036 = vrot.lane.b32.xlu0 %v4193, 64
      %v5037 = vpop.permute.xlu0 %5036
      %5038 = vrot.lane.b32.xlu0 %v4194, 64
      %v5039 = vpop.permute.xlu0 %5038
      %v5044 = vsel %vm4604, %v4918, 0
      %v5047 = vsel %vm4604, %v4919, 0
      %v5050 = vsel %vm4604, %v4920, 0
      %v5053 = vsel %vm4604, %v4921, 0
      %v5056 = vand.u32 %v5039, %v4960
      %5058 = vmatprep.subr.bf16.mxu0 0
      %5059 = vmatpush1.bf16.msra.mxu0 0
      %5060 = vmatprep.subr.bf16.mxu0 0
      %5061 = vmatpush1.bf16.msra.mxu0 0
      %5062 = vmatprep.subr.bf16.mxu0 0
      %5063 = vmatpush1.bf16.msra.mxu0 0
      %5064 = vmatprep.subr.bf16.mxu0 0
      %5065 = vmatpush1.bf16.msra.mxu0 0
      %5066 = vmatprep.subr.bf16.mxu0 0
      %5067 = vmatpush1.bf16.msra.mxu0 %v5056
      %5068 = vmatprep.subr.bf16.mxu0 0
      %5069 = vmatpush1.bf16.msra.mxu0 %v5037
      %5070 = vmatprep.subr.bf16.mxu0 0
      %5071 = vmatpush1.bf16.msra.mxu0 %v5035
      %5072 = vmatprep.subr.bf16.mxu0 0
      %5073 = vmatpush1.bf16.msra.mxu0 %v5033
      %5074 = vmatprep.subr.bf16.mxu0 0
      %5075 = vmatpush2.bf16.msra.mxu0 0
      %5076 = vmatprep.subr.bf16.mxu0 0
      %5077 = vmatpush2.bf16.msra.mxu0 0
      %5078 = vmatprep.subr.bf16.mxu0 0
      %5079 = vmatpush2.bf16.msra.mxu0 0
      %5080 = vmatprep.subr.bf16.mxu0 0
      %5081 = vmatpush2.bf16.msra.mxu0 0
      %5082 = vmatprep.subr.bf16.mxu0 0
      %5083 = vmatpush2.bf16.msra.mxu0 0
      %5084 = vmatprep.subr.bf16.mxu0 0
      %5085 = vmatpush2.bf16.msra.mxu0 0
      %5086 = vmatprep.subr.bf16.mxu0 0
      %5087 = vmatpush2.bf16.msra.mxu0 0
      %5088 = vmatprep.subr.bf16.mxu0 0
      %5089 = vmatpush2.bf16.msra.mxu0 0
      %5090 = vmatprep.mubr.bf16.mxu0 0
      %5091 = vmatmul.mubr.bf16.gmra.mxu0 %v5044
      %v5092 = vpop.f32.mrf.mxu0
      %v5093 = vadd.f32 0.0, %v5092
      %v5094 = vpop.f32.mrf.mxu0
      %v5095 = vpop.f32.mrf.mxu0
      %v5096 = vadd.f32 0.0, %v5095
      %v5097 = vpop.f32.mrf.mxu0
      %5098 = vmatprep.mubr.bf16.mxu0 0
      %5099 = vmatmul.mubr.bf16.gmra.mxu0 %v5047
      %v5100 = vpop.f32.mrf.mxu0
      %v5101 = vadd.f32 0.0, %v5100
      %v5102 = vpop.f32.mrf.mxu0
      %v5103 = vpop.f32.mrf.mxu0
      %v5104 = vadd.f32 0.0, %v5103
      %v5105 = vpop.f32.mrf.mxu0
      %5106 = vmatprep.mubr.bf16.mxu0 0
      %5107 = vmatmul.mubr.bf16.gmra.mxu0 %v5050
      %v5108 = vpop.f32.mrf.mxu0
      %v5109 = vadd.f32 0.0, %v5108
      %v5110 = vpop.f32.mrf.mxu0
      %v5111 = vpop.f32.mrf.mxu0
      %v5112 = vadd.f32 0.0, %v5111
      %v5113 = vpop.f32.mrf.mxu0
      %5114 = vmatprep.mubr.bf16.mxu0 0
      %5115 = vmatmul.mubr.bf16.gmra.mxu0 %v5053
      %v5116 = vpop.f32.mrf.mxu0
      %v5117 = vadd.f32 0.0, %v5116
      %v5118 = vpop.f32.mrf.mxu0
      %v5119 = vpop.f32.mrf.mxu0
      %v5120 = vpop.f32.mrf.mxu0
      %5121 = vdwg.mxu0
      %5126 = vrot.lane.b32.xlu0 %v4195, 64
      %v5127 = vpop.permute.xlu0 %5126
      %5128 = vrot.lane.b32.xlu0 %v4196, 64
      %v5129 = vpop.permute.xlu0 %5128
      %5130 = vrot.lane.b32.xlu0 %v4197, 64
      %v5131 = vpop.permute.xlu0 %5130
      %5132 = vrot.lane.b32.xlu0 %v4198, 64
      %v5133 = vpop.permute.xlu0 %5132
      %v5138 = vsel %vm4604, %v4922, 0
      %v5141 = vsel %vm4604, %v4923, 0
      %v5144 = vsel %vm4604, %v4924, 0
      %v5147 = vsel %vm4604, %v4925, 0
      %v5150 = vand.u32 %v5133, %v4960
      %5152 = vmatprep.subr.bf16.mxu0 0
      %5153 = vmatpush1.bf16.msra.mxu0 0
      %5154 = vmatprep.subr.bf16.mxu0 0
      %5155 = vmatpush1.bf16.msra.mxu0 0
      %5156 = vmatprep.subr.bf16.mxu0 0
      %5157 = vmatpush1.bf16.msra.mxu0 0
      %5158 = vmatprep.subr.bf16.mxu0 0
      %5159 = vmatpush1.bf16.msra.mxu0 0
      %5160 = vmatprep.subr.bf16.mxu0 0
      %5161 = vmatpush1.bf16.msra.mxu0 %v5150
      %5162 = vmatprep.subr.bf16.mxu0 0
      %5163 = vmatpush1.bf16.msra.mxu0 %v5131
      %5164 = vmatprep.subr.bf16.mxu0 0
      %5165 = vmatpush1.bf16.msra.mxu0 %v5129
      %5166 = vmatprep.subr.bf16.mxu0 0
      %5167 = vmatpush1.bf16.msra.mxu0 %v5127
      %5168 = vmatprep.subr.bf16.mxu0 0
      %5169 = vmatpush2.bf16.msra.mxu0 0
      %5170 = vmatprep.subr.bf16.mxu0 0
      %5171 = vmatpush2.bf16.msra.mxu0 0
      %5172 = vmatprep.subr.bf16.mxu0 0
      %5173 = vmatpush2.bf16.msra.mxu0 0
      %5174 = vmatprep.subr.bf16.mxu0 0
      %5175 = vmatpush2.bf16.msra.mxu0 0
      %5176 = vmatprep.subr.bf16.mxu0 0
      %5177 = vmatpush2.bf16.msra.mxu0 0
      %5178 = vmatprep.subr.bf16.mxu0 0
      %5179 = vmatpush2.bf16.msra.mxu0 0
      %5180 = vmatprep.subr.bf16.mxu0 0
      %5181 = vmatpush2.bf16.msra.mxu0 0
      %5182 = vmatprep.subr.bf16.mxu0 0
      %5183 = vmatpush2.bf16.msra.mxu0 0
      %5184 = vmatprep.mubr.bf16.mxu0 0
      %5185 = vmatmul.mubr.bf16.gmra.mxu0 %v5138
      %v5186 = vpop.f32.mrf.mxu0
      %v5187 = vadd.f32 0.0, %v5186
      %v5188 = vpop.f32.mrf.mxu0
      %v5189 = vpop.f32.mrf.mxu0
      %v5190 = vadd.f32 0.0, %v5189
      %v5191 = vpop.f32.mrf.mxu0
      %5192 = vmatprep.mubr.bf16.mxu0 0
      %5193 = vmatmul.mubr.bf16.gmra.mxu0 %v5141
      %v5194 = vpop.f32.mrf.mxu0
      %v5195 = vadd.f32 0.0, %v5194
      %v5196 = vpop.f32.mrf.mxu0
      %v5197 = vpop.f32.mrf.mxu0
      %v5198 = vadd.f32 0.0, %v5197
      %v5199 = vpop.f32.mrf.mxu0
      %5200 = vmatprep.mubr.bf16.mxu0 0
      %5201 = vmatmul.mubr.bf16.gmra.mxu0 %v5144
      %v5202 = vpop.f32.mrf.mxu0
      %v5203 = vadd.f32 0.0, %v5202
      %v5204 = vpop.f32.mrf.mxu0
      %v5205 = vpop.f32.mrf.mxu0
      %v5206 = vadd.f32 0.0, %v5205
      %v5207 = vpop.f32.mrf.mxu0
      %5208 = vmatprep.mubr.bf16.mxu0 0
      %5209 = vmatmul.mubr.bf16.gmra.mxu0 %v5147
      %v5210 = vpop.f32.mrf.mxu0
      %v5211 = vadd.f32 0.0, %v5210
      %v5212 = vpop.f32.mrf.mxu0
      %v5213 = vpop.f32.mrf.mxu0
      %v5214 = vpop.f32.mrf.mxu0
      %5215 = vdwg.mxu0
      %5220 = vrot.lane.b32.xlu0 %v4199, 64
      %v5221 = vpop.permute.xlu0 %5220
      %5222 = vrot.lane.b32.xlu0 %v4200, 64
      %v5223 = vpop.permute.xlu0 %5222
      %5224 = vrot.lane.b32.xlu0 %v4201, 64
      %v5225 = vpop.permute.xlu0 %5224
      %5226 = vrot.lane.b32.xlu0 %v4202, 64
      %v5227 = vpop.permute.xlu0 %5226
      %v5232 = vsel %vm4604, %v4926, 0
      %v5235 = vsel %vm4604, %v4927, 0
      %v5238 = vsel %vm4604, %v4928, 0
      %v5241 = vsel %vm4604, %v4929, 0
      %v5244 = vand.u32 %v5227, %v4960
      %5246 = vmatprep.subr.bf16.mxu0 0
      %5247 = vmatpush1.bf16.msra.mxu0 0
      %5248 = vmatprep.subr.bf16.mxu0 0
      %5249 = vmatpush1.bf16.msra.mxu0 0
      %5250 = vmatprep.subr.bf16.mxu0 0
      %5251 = vmatpush1.bf16.msra.mxu0 0
      %5252 = vmatprep.subr.bf16.mxu0 0
      %5253 = vmatpush1.bf16.msra.mxu0 0
      %5254 = vmatprep.subr.bf16.mxu0 0
      %5255 = vmatpush1.bf16.msra.mxu0 %v5244
      %5256 = vmatprep.subr.bf16.mxu0 0
      %5257 = vmatpush1.bf16.msra.mxu0 %v5225
      %5258 = vmatprep.subr.bf16.mxu0 0
      %5259 = vmatpush1.bf16.msra.mxu0 %v5223
      %5260 = vmatprep.subr.bf16.mxu0 0
      %5261 = vmatpush1.bf16.msra.mxu0 %v5221
      %5262 = vmatprep.subr.bf16.mxu0 0
      %5263 = vmatpush2.bf16.msra.mxu0 0
      %5264 = vmatprep.subr.bf16.mxu0 0
      %5265 = vmatpush2.bf16.msra.mxu0 0
      %5266 = vmatprep.subr.bf16.mxu0 0
      %5267 = vmatpush2.bf16.msra.mxu0 0
      %5268 = vmatprep.subr.bf16.mxu0 0
      %5269 = vmatpush2.bf16.msra.mxu0 0
      %5270 = vmatprep.subr.bf16.mxu0 0
      %5271 = vmatpush2.bf16.msra.mxu0 0
      %5272 = vmatprep.subr.bf16.mxu0 0
      %5273 = vmatpush2.bf16.msra.mxu0 0
      %5274 = vmatprep.subr.bf16.mxu0 0
      %5275 = vmatpush2.bf16.msra.mxu0 0
      %5276 = vmatprep.subr.bf16.mxu0 0
      %5277 = vmatpush2.bf16.msra.mxu0 0
      %5278 = vmatprep.mubr.bf16.mxu0 0
      %5279 = vmatmul.mubr.bf16.gmra.mxu0 %v5232
      %v5280 = vpop.f32.mrf.mxu0
      %v5281 = vadd.f32 0.0, %v5280
      %v5282 = vpop.f32.mrf.mxu0
      %v5283 = vpop.f32.mrf.mxu0
      %v5284 = vadd.f32 0.0, %v5283
      %v5285 = vpop.f32.mrf.mxu0
      %5286 = vmatprep.mubr.bf16.mxu0 0
      %5287 = vmatmul.mubr.bf16.gmra.mxu0 %v5235
      %v5288 = vpop.f32.mrf.mxu0
      %v5289 = vadd.f32 0.0, %v5288
      %v5290 = vpop.f32.mrf.mxu0
      %v5291 = vpop.f32.mrf.mxu0
      %v5292 = vadd.f32 0.0, %v5291
      %v5293 = vpop.f32.mrf.mxu0
      %5294 = vmatprep.mubr.bf16.mxu0 0
      %5295 = vmatmul.mubr.bf16.gmra.mxu0 %v5238
      %v5296 = vpop.f32.mrf.mxu0
      %v5297 = vadd.f32 0.0, %v5296
      %v5298 = vpop.f32.mrf.mxu0
      %v5299 = vpop.f32.mrf.mxu0
      %v5300 = vadd.f32 0.0, %v5299
      %v5301 = vpop.f32.mrf.mxu0
      %5302 = vmatprep.mubr.bf16.mxu0 0
      %5303 = vmatmul.mubr.bf16.gmra.mxu0 %v5241
      %v5304 = vpop.f32.mrf.mxu0
      %v5305 = vadd.f32 0.0, %v5304
      %v5306 = vpop.f32.mrf.mxu0
      %v5307 = vpop.f32.mrf.mxu0
      %v5308 = vpop.f32.mrf.mxu0
      %5309 = vdwg.mxu0
      %5310 = vst.msk [vmem:[#allocation2] sm:$0xff] %vm4215, %v4999
      %5311 = vst.msk [vmem:[#allocation2 + $0x8] sm:$0xff] %vm4215, %v5002
      %5312 = vst.msk [vmem:[#allocation2 + $0x10] sm:$0xff] %vm4215, %v5007
      %5313 = vst.msk [vmem:[#allocation2 + $0x18] sm:$0xff] %vm4215, %v5010
      %5314 = vst.msk [vmem:[#allocation2 + $0x20] sm:$0xff] %vm4215, %v5015
      %5315 = vst.msk [vmem:[#allocation2 + $0x28] sm:$0xff] %vm4215, %v5018
      %vm5316 = vcmask 61440
      %5317 = vst.msk [vmem:[#allocation2 + $0x30] sm:$0x1f] %vm5316, %v5023
      %5318 = vst.msk [vmem:[#allocation2 + $0x38] sm:$0xff] %vm4215, %v5093
      %5319 = vst.msk [vmem:[#allocation2 + $0x40] sm:$0xff] %vm4215, %v5096
      %5320 = vst.msk [vmem:[#allocation2 + $0x48] sm:$0xff] %vm4215, %v5101
      %5321 = vst.msk [vmem:[#allocation2 + $0x50] sm:$0xff] %vm4215, %v5104
      %5322 = vst.msk [vmem:[#allocation2 + $0x58] sm:$0xff] %vm4215, %v5109
      %5323 = vst.msk [vmem:[#allocation2 + $0x60] sm:$0xff] %vm4215, %v5112
      %5324 = vst.msk [vmem:[#allocation2 + $0x68] sm:$0x1f] %vm5316, %v5117
      %5325 = vst.msk [vmem:[#allocation2 + $0x70] sm:$0xff] %vm4215, %v5187
      %5326 = vst.msk [vmem:[#allocation2 + $0x78] sm:$0xff] %vm4215, %v5190
      %5327 = vst.msk [vmem:[#allocation2 + $0x80] sm:$0xff] %vm4215, %v5195
      %5328 = vst.msk [vmem:[#allocation2 + $0x88] sm:$0xff] %vm4215, %v5198
      %5329 = vst.msk [vmem:[#allocation2 + $0x90] sm:$0xff] %vm4215, %v5203
      %5330 = vst.msk [vmem:[#allocation2 + $0x98] sm:$0xff] %vm4215, %v5206
      %5331 = vst.msk [vmem:[#allocation2 + $0xa0] sm:$0x1f] %vm5316, %v5211
      %5332 = vst.msk [vmem:[#allocation2 + $0xa8] sm:$0xff] %vm4215, %v5281
      %5333 = vst.msk [vmem:[#allocation2 + $0xb0] sm:$0xff] %vm4215, %v5284
      %5334 = vst.msk [vmem:[#allocation2 + $0xb8] sm:$0xff] %vm4215, %v5289
      %5335 = vst.msk [vmem:[#allocation2 + $0xc0] sm:$0xff] %vm4215, %v5292
      %5336 = vst.msk [vmem:[#allocation2 + $0xc8] sm:$0xff] %vm4215, %v5297
      %5337 = vst.msk [vmem:[#allocation2 + $0xd0] sm:$0xff] %vm4215, %v5300
      %5338 = vst.msk [vmem:[#allocation2 + $0xd8] sm:$0x1f] %vm5316, %v5305
      %5343 = vrot.lane.b32.xlu0 %v1671, 120
      %v5344 = vpop.permute.xlu0 %5343
      %5345 = vrot.lane.b32.xlu0 %v1672, 120
      %v5346 = vpop.permute.xlu0 %5345
      %5347 = vrot.lane.b32.xlu0 %v1673, 120
      %v5348 = vpop.permute.xlu0 %5347
      %5349 = vrot.lane.b32.xlu0 %v1674, 120
      %v5350 = vpop.permute.xlu0 %5349
      %5351 = vrot.lane.b32.xlu0 %v2943, 88
      %v5352 = vpop.permute.xlu0 %5351
      %5353 = vrot.lane.b32.xlu0 %v2944, 88
      %v5354 = vpop.permute.xlu0 %5353
      %5355 = vrot.lane.b32.xlu0 %v2945, 88
      %v5356 = vpop.permute.xlu0 %5355
      %5357 = vrot.lane.b32.xlu0 %v2946, 88
      %v5358 = vpop.permute.xlu0 %5357
      %v5360 = vsel %vm4215, %v5344, 0
      %v5363 = vsel %vm4215, %v5346, 0
      %v5366 = vsel %vm4215, %v5348, 0
      %v5369 = vsel %vm4215, %v5350, 0
      %v5372 = vsel %vm4215, %v5352, 0
      %v5375 = vsel %vm4215, %v5354, 0
      %v5378 = vsel %vm4215, %v5356, 0
      %v5381 = vsel %vm4215, %v5358, 0
      %5383 = vmatprep.subr.bf16.mxu0 0
      %5384 = vmatpush1.bf16.xpose.msra.mxu0 0
      %5385 = vmatprep.subr.bf16.mxu0 0
      %5386 = vmatpush1.bf16.xpose.msra.mxu0 0
      %5387 = vmatprep.subr.bf16.mxu0 0
      %5388 = vmatpush1.bf16.xpose.msra.mxu0 0
      %5389 = vmatprep.subr.bf16.mxu0 0
      %5390 = vmatpush1.bf16.xpose.msra.mxu0 0
      %5391 = vmatprep.subr.bf16.mxu0 0
      %5392 = vmatpush1.bf16.xpose.msra.mxu0 %v5381
      %5393 = vmatprep.subr.bf16.mxu0 0
      %5394 = vmatpush1.bf16.xpose.msra.mxu0 %v5378
      %5395 = vmatprep.subr.bf16.mxu0 0
      %5396 = vmatpush1.bf16.xpose.msra.mxu0 %v5375
      %5397 = vmatprep.subr.bf16.mxu0 0
      %5398 = vmatpush1.bf16.xpose.msra.mxu0 %v5372
      %5399 = vmatprep.subr.bf16.mxu0 0
      %5400 = vmatpush2.bf16.xpose.msra.mxu0 0
      %5401 = vmatprep.subr.bf16.mxu0 0
      %5402 = vmatpush2.bf16.xpose.msra.mxu0 0
      %5403 = vmatprep.subr.bf16.mxu0 0
      %5404 = vmatpush2.bf16.xpose.msra.mxu0 0
      %5405 = vmatprep.subr.bf16.mxu0 0
      %5406 = vmatpush2.bf16.xpose.msra.mxu0 0
      %5407 = vmatprep.subr.bf16.mxu0 0
      %5408 = vmatpush2.bf16.xpose.msra.mxu0 0
      %5409 = vmatprep.subr.bf16.mxu0 0
      %5410 = vmatpush2.bf16.xpose.msra.mxu0 0
      %5411 = vmatprep.subr.bf16.mxu0 0
      %5412 = vmatpush2.bf16.xpose.msra.mxu0 0
      %5413 = vmatprep.subr.bf16.mxu0 0
      %5414 = vmatpush2.bf16.xpose.msra.mxu0 0
      %5415 = vmatprep.mubr.bf16.mxu0 0
      %5416 = vmatmul.mubr.bf16.gmra.mxu0 %v5360
      %v5417 = vpop.f32.mrf.mxu0
      %v5418 = vadd.f32 0.0, %v5417
      %v5419 = vpop.f32.mrf.mxu0
      %v5420 = vpop.f32.mrf.mxu0
      %v5421 = vadd.f32 0.0, %v5420
      %v5422 = vpop.f32.mrf.mxu0
      %5423 = vmatprep.mubr.bf16.mxu0 0
      %5424 = vmatmul.mubr.bf16.gmra.mxu0 %v5363
      %v5425 = vpop.f32.mrf.mxu0
      %v5426 = vadd.f32 0.0, %v5425
      %v5427 = vpop.f32.mrf.mxu0
      %v5428 = vpop.f32.mrf.mxu0
      %v5429 = vadd.f32 0.0, %v5428
      %v5430 = vpop.f32.mrf.mxu0
      %5431 = vmatprep.mubr.bf16.mxu0 0
      %5432 = vmatmul.mubr.bf16.gmra.mxu0 %v5366
      %v5433 = vpop.f32.mrf.mxu0
      %v5434 = vadd.f32 0.0, %v5433
      %v5435 = vpop.f32.mrf.mxu0
      %v5436 = vpop.f32.mrf.mxu0
      %v5437 = vadd.f32 0.0, %v5436
      %v5438 = vpop.f32.mrf.mxu0
      %5439 = vmatprep.mubr.bf16.mxu0 0
      %5440 = vmatmul.mubr.bf16.gmra.mxu0 %v5369
      %v5441 = vpop.f32.mrf.mxu0
      %v5442 = vadd.f32 0.0, %v5441
      %v5443 = vpop.f32.mrf.mxu0
      %v5444 = vpop.f32.mrf.mxu0
      %v5445 = vpop.f32.mrf.mxu0
      %5446 = vdwg.mxu0
      %5451 = vrot.lane.b32.xlu0 %v1675, 120
      %v5452 = vpop.permute.xlu0 %5451
      %5453 = vrot.lane.b32.xlu0 %v1676, 120
      %v5454 = vpop.permute.xlu0 %5453
      %5455 = vrot.lane.b32.xlu0 %v1677, 120
      %v5456 = vpop.permute.xlu0 %5455
      %5457 = vrot.lane.b32.xlu0 %v1678, 120
      %v5458 = vpop.permute.xlu0 %5457
      %5459 = vrot.lane.b32.xlu0 %v2947, 88
      %v5460 = vpop.permute.xlu0 %5459
      %5461 = vrot.lane.b32.xlu0 %v2948, 88
      %v5462 = vpop.permute.xlu0 %5461
      %5463 = vrot.lane.b32.xlu0 %v2949, 88
      %v5464 = vpop.permute.xlu0 %5463
      %5465 = vrot.lane.b32.xlu0 %v2950, 88
      %v5466 = vpop.permute.xlu0 %5465
      %v5468 = vsel %vm4215, %v5452, 0
      %v5471 = vsel %vm4215, %v5454, 0
      %v5474 = vsel %vm4215, %v5456, 0
      %v5477 = vsel %vm4215, %v5458, 0
      %v5480 = vsel %vm4215, %v5460, 0
      %v5483 = vsel %vm4215, %v5462, 0
      %v5486 = vsel %vm4215, %v5464, 0
      %v5489 = vsel %vm4215, %v5466, 0
      %5491 = vmatprep.subr.bf16.mxu0 0
      %5492 = vmatpush1.bf16.xpose.msra.mxu0 0
      %5493 = vmatprep.subr.bf16.mxu0 0
      %5494 = vmatpush1.bf16.xpose.msra.mxu0 0
      %5495 = vmatprep.subr.bf16.mxu0 0
      %5496 = vmatpush1.bf16.xpose.msra.mxu0 0
      %5497 = vmatprep.subr.bf16.mxu0 0
      %5498 = vmatpush1.bf16.xpose.msra.mxu0 0
      %5499 = vmatprep.subr.bf16.mxu0 0
      %5500 = vmatpush1.bf16.xpose.msra.mxu0 %v5489
      %5501 = vmatprep.subr.bf16.mxu0 0
      %5502 = vmatpush1.bf16.xpose.msra.mxu0 %v5486
      %5503 = vmatprep.subr.bf16.mxu0 0
      %5504 = vmatpush1.bf16.xpose.msra.mxu0 %v5483
      %5505 = vmatprep.subr.bf16.mxu0 0
      %5506 = vmatpush1.bf16.xpose.msra.mxu0 %v5480
      %5507 = vmatprep.subr.bf16.mxu0 0
      %5508 = vmatpush2.bf16.xpose.msra.mxu0 0
      %5509 = vmatprep.subr.bf16.mxu0 0
      %5510 = vmatpush2.bf16.xpose.msra.mxu0 0
      %5511 = vmatprep.subr.bf16.mxu0 0
      %5512 = vmatpush2.bf16.xpose.msra.mxu0 0
      %5513 = vmatprep.subr.bf16.mxu0 0
      %5514 = vmatpush2.bf16.xpose.msra.mxu0 0
      %5515 = vmatprep.subr.bf16.mxu0 0
      %5516 = vmatpush2.bf16.xpose.msra.mxu0 0
      %5517 = vmatprep.subr.bf16.mxu0 0
      %5518 = vmatpush2.bf16.xpose.msra.mxu0 0
      %5519 = vmatprep.subr.bf16.mxu0 0
      %5520 = vmatpush2.bf16.xpose.msra.mxu0 0
      %5521 = vmatprep.subr.bf16.mxu0 0
      %5522 = vmatpush2.bf16.xpose.msra.mxu0 0
      %5523 = vmatprep.mubr.bf16.mxu0 0
      %5524 = vmatmul.mubr.bf16.gmra.mxu0 %v5468
      %v5525 = vpop.f32.mrf.mxu0
      %v5526 = vadd.f32 0.0, %v5525
      %v5527 = vpop.f32.mrf.mxu0
      %v5528 = vpop.f32.mrf.mxu0
      %v5529 = vadd.f32 0.0, %v5528
      %v5530 = vpop.f32.mrf.mxu0
      %5531 = vmatprep.mubr.bf16.mxu0 0
      %5532 = vmatmul.mubr.bf16.gmra.mxu0 %v5471
      %v5533 = vpop.f32.mrf.mxu0
      %v5534 = vadd.f32 0.0, %v5533
      %v5535 = vpop.f32.mrf.mxu0
      %v5536 = vpop.f32.mrf.mxu0
      %v5537 = vadd.f32 0.0, %v5536
      %v5538 = vpop.f32.mrf.mxu0
      %5539 = vmatprep.mubr.bf16.mxu0 0
      %5540 = vmatmul.mubr.bf16.gmra.mxu0 %v5474
      %v5541 = vpop.f32.mrf.mxu0
      %v5542 = vadd.f32 0.0, %v5541
      %v5543 = vpop.f32.mrf.mxu0
      %v5544 = vpop.f32.mrf.mxu0
      %v5545 = vadd.f32 0.0, %v5544
      %v5546 = vpop.f32.mrf.mxu0
      %5547 = vmatprep.mubr.bf16.mxu0 0
      %5548 = vmatmul.mubr.bf16.gmra.mxu0 %v5477
      %v5549 = vpop.f32.mrf.mxu0
      %v5550 = vadd.f32 0.0, %v5549
      %v5551 = vpop.f32.mrf.mxu0
      %v5552 = vpop.f32.mrf.mxu0
      %v5553 = vpop.f32.mrf.mxu0
      %5554 = vdwg.mxu0
      %5559 = vrot.lane.b32.xlu0 %v1679, 120
      %v5560 = vpop.permute.xlu0 %5559
      %5561 = vrot.lane.b32.xlu0 %v1680, 120
      %v5562 = vpop.permute.xlu0 %5561
      %5563 = vrot.lane.b32.xlu0 %v1681, 120
      %v5564 = vpop.permute.xlu0 %5563
      %5565 = vrot.lane.b32.xlu0 %v1682, 120
      %v5566 = vpop.permute.xlu0 %5565
      %5567 = vrot.lane.b32.xlu0 %v2951, 88
      %v5568 = vpop.permute.xlu0 %5567
      %5569 = vrot.lane.b32.xlu0 %v2952, 88
      %v5570 = vpop.permute.xlu0 %5569
      %5571 = vrot.lane.b32.xlu0 %v2953, 88
      %v5572 = vpop.permute.xlu0 %5571
      %5573 = vrot.lane.b32.xlu0 %v2954, 88
      %v5574 = vpop.permute.xlu0 %5573
      %v5576 = vsel %vm4215, %v5560, 0
      %v5579 = vsel %vm4215, %v5562, 0
      %v5582 = vsel %vm4215, %v5564, 0
      %v5585 = vsel %vm4215, %v5566, 0
      %v5588 = vsel %vm4215, %v5568, 0
      %v5591 = vsel %vm4215, %v5570, 0
      %v5594 = vsel %vm4215, %v5572, 0
      %v5597 = vsel %vm4215, %v5574, 0
      %5599 = vmatprep.subr.bf16.mxu0 0
      %5600 = vmatpush1.bf16.xpose.msra.mxu0 0
      %5601 = vmatprep.subr.bf16.mxu0 0
      %5602 = vmatpush1.bf16.xpose.msra.mxu0 0
      %5603 = vmatprep.subr.bf16.mxu0 0
      %5604 = vmatpush1.bf16.xpose.msra.mxu0 0
      %5605 = vmatprep.subr.bf16.mxu0 0
      %5606 = vmatpush1.bf16.xpose.msra.mxu0 0
      %5607 = vmatprep.subr.bf16.mxu0 0
      %5608 = vmatpush1.bf16.xpose.msra.mxu0 %v5597
      %5609 = vmatprep.subr.bf16.mxu0 0
      %5610 = vmatpush1.bf16.xpose.msra.mxu0 %v5594
      %5611 = vmatprep.subr.bf16.mxu0 0
      %5612 = vmatpush1.bf16.xpose.msra.mxu0 %v5591
      %5613 = vmatprep.subr.bf16.mxu0 0
      %5614 = vmatpush1.bf16.xpose.msra.mxu0 %v5588
      %5615 = vmatprep.subr.bf16.mxu0 0
      %5616 = vmatpush2.bf16.xpose.msra.mxu0 0
      %5617 = vmatprep.subr.bf16.mxu0 0
      %5618 = vmatpush2.bf16.xpose.msra.mxu0 0
      %5619 = vmatprep.subr.bf16.mxu0 0
      %5620 = vmatpush2.bf16.xpose.msra.mxu0 0
      %5621 = vmatprep.subr.bf16.mxu0 0
      %5622 = vmatpush2.bf16.xpose.msra.mxu0 0
      %5623 = vmatprep.subr.bf16.mxu0 0
      %5624 = vmatpush2.bf16.xpose.msra.mxu0 0
      %5625 = vmatprep.subr.bf16.mxu0 0
      %5626 = vmatpush2.bf16.xpose.msra.mxu0 0
      %5627 = vmatprep.subr.bf16.mxu0 0
      %5628 = vmatpush2.bf16.xpose.msra.mxu0 0
      %5629 = vmatprep.subr.bf16.mxu0 0
      %5630 = vmatpush2.bf16.xpose.msra.mxu0 0
      %5631 = vmatprep.mubr.bf16.mxu0 0
      %5632 = vmatmul.mubr.bf16.gmra.mxu0 %v5576
      %v5633 = vpop.f32.mrf.mxu0
      %v5634 = vadd.f32 0.0, %v5633
      %v5635 = vpop.f32.mrf.mxu0
      %v5636 = vpop.f32.mrf.mxu0
      %v5637 = vadd.f32 0.0, %v5636
      %v5638 = vpop.f32.mrf.mxu0
      %5639 = vmatprep.mubr.bf16.mxu0 0
      %5640 = vmatmul.mubr.bf16.gmra.mxu0 %v5579
      %v5641 = vpop.f32.mrf.mxu0
      %v5642 = vadd.f32 0.0, %v5641
      %v5643 = vpop.f32.mrf.mxu0
      %v5644 = vpop.f32.mrf.mxu0
      %v5645 = vadd.f32 0.0, %v5644
      %v5646 = vpop.f32.mrf.mxu0
      %5647 = vmatprep.mubr.bf16.mxu0 0
      %5648 = vmatmul.mubr.bf16.gmra.mxu0 %v5582
      %v5649 = vpop.f32.mrf.mxu0
      %v5650 = vadd.f32 0.0, %v5649
      %v5651 = vpop.f32.mrf.mxu0
      %v5652 = vpop.f32.mrf.mxu0
      %v5653 = vadd.f32 0.0, %v5652
      %v5654 = vpop.f32.mrf.mxu0
      %5655 = vmatprep.mubr.bf16.mxu0 0
      %5656 = vmatmul.mubr.bf16.gmra.mxu0 %v5585
      %v5657 = vpop.f32.mrf.mxu0
      %v5658 = vadd.f32 0.0, %v5657
      %v5659 = vpop.f32.mrf.mxu0
      %v5660 = vpop.f32.mrf.mxu0
      %v5661 = vpop.f32.mrf.mxu0
      %5662 = vdwg.mxu0
      %5667 = vrot.lane.b32.xlu0 %v1683, 120
      %v5668 = vpop.permute.xlu0 %5667
      %5669 = vrot.lane.b32.xlu0 %v1684, 120
      %v5670 = vpop.permute.xlu0 %5669
      %5671 = vrot.lane.b32.xlu0 %v1685, 120
      %v5672 = vpop.permute.xlu0 %5671
      %5673 = vrot.lane.b32.xlu0 %v1686, 120
      %v5674 = vpop.permute.xlu0 %5673
      %5675 = vrot.lane.b32.xlu0 %v2955, 88
      %v5676 = vpop.permute.xlu0 %5675
      %5677 = vrot.lane.b32.xlu0 %v2956, 88
      %v5678 = vpop.permute.xlu0 %5677
      %5679 = vrot.lane.b32.xlu0 %v2957, 88
      %v5680 = vpop.permute.xlu0 %5679
      %5681 = vrot.lane.b32.xlu0 %v2958, 88
      %v5682 = vpop.permute.xlu0 %5681
      %v5684 = vsel %vm4215, %v5668, 0
      %v5687 = vsel %vm4215, %v5670, 0
      %v5690 = vsel %vm4215, %v5672, 0
      %v5693 = vsel %vm4215, %v5674, 0
      %v5696 = vsel %vm4215, %v5676, 0
      %v5699 = vsel %vm4215, %v5678, 0
      %v5702 = vsel %vm4215, %v5680, 0
      %v5705 = vsel %vm4215, %v5682, 0
      %5707 = vmatprep.subr.bf16.mxu0 0
      %5708 = vmatpush1.bf16.xpose.msra.mxu0 0
      %5709 = vmatprep.subr.bf16.mxu0 0
      %5710 = vmatpush1.bf16.xpose.msra.mxu0 0
      %5711 = vmatprep.subr.bf16.mxu0 0
      %5712 = vmatpush1.bf16.xpose.msra.mxu0 0
      %5713 = vmatprep.subr.bf16.mxu0 0
      %5714 = vmatpush1.bf16.xpose.msra.mxu0 0
      %5715 = vmatprep.subr.bf16.mxu0 0
      %5716 = vmatpush1.bf16.xpose.msra.mxu0 %v5705
      %5717 = vmatprep.subr.bf16.mxu0 0
      %5718 = vmatpush1.bf16.xpose.msra.mxu0 %v5702
      %5719 = vmatprep.subr.bf16.mxu0 0
      %5720 = vmatpush1.bf16.xpose.msra.mxu0 %v5699
      %5721 = vmatprep.subr.bf16.mxu0 0
      %5722 = vmatpush1.bf16.xpose.msra.mxu0 %v5696
      %5723 = vmatprep.subr.bf16.mxu0 0
      %5724 = vmatpush2.bf16.xpose.msra.mxu0 0
      %5725 = vmatprep.subr.bf16.mxu0 0
      %5726 = vmatpush2.bf16.xpose.msra.mxu0 0
      %5727 = vmatprep.subr.bf16.mxu0 0
      %5728 = vmatpush2.bf16.xpose.msra.mxu0 0
      %5729 = vmatprep.subr.bf16.mxu0 0
      %5730 = vmatpush2.bf16.xpose.msra.mxu0 0
      %5731 = vmatprep.subr.bf16.mxu0 0
      %5732 = vmatpush2.bf16.xpose.msra.mxu0 0
      %5733 = vmatprep.subr.bf16.mxu0 0
      %5734 = vmatpush2.bf16.xpose.msra.mxu0 0
      %5735 = vmatprep.subr.bf16.mxu0 0
      %5736 = vmatpush2.bf16.xpose.msra.mxu0 0
      %5737 = vmatprep.subr.bf16.mxu0 0
      %5738 = vmatpush2.bf16.xpose.msra.mxu0 0
      %5739 = vmatprep.mubr.bf16.mxu0 0
      %5740 = vmatmul.mubr.bf16.gmra.mxu0 %v5684
      %v5741 = vpop.f32.mrf.mxu0
      %v5742 = vadd.f32 0.0, %v5741
      %v5743 = vpop.f32.mrf.mxu0
      %v5744 = vpop.f32.mrf.mxu0
      %v5745 = vadd.f32 0.0, %v5744
      %v5746 = vpop.f32.mrf.mxu0
      %5747 = vmatprep.mubr.bf16.mxu0 0
      %5748 = vmatmul.mubr.bf16.gmra.mxu0 %v5687
      %v5749 = vpop.f32.mrf.mxu0
      %v5750 = vadd.f32 0.0, %v5749
      %v5751 = vpop.f32.mrf.mxu0
      %v5752 = vpop.f32.mrf.mxu0
      %v5753 = vadd.f32 0.0, %v5752
      %v5754 = vpop.f32.mrf.mxu0
      %5755 = vmatprep.mubr.bf16.mxu0 0
      %5756 = vmatmul.mubr.bf16.gmra.mxu0 %v5690
      %v5757 = vpop.f32.mrf.mxu0
      %v5758 = vadd.f32 0.0, %v5757
      %v5759 = vpop.f32.mrf.mxu0
      %v5760 = vpop.f32.mrf.mxu0
      %v5761 = vadd.f32 0.0, %v5760
      %v5762 = vpop.f32.mrf.mxu0
      %5763 = vmatprep.mubr.bf16.mxu0 0
      %5764 = vmatmul.mubr.bf16.gmra.mxu0 %v5693
      %v5765 = vpop.f32.mrf.mxu0
      %v5766 = vadd.f32 0.0, %v5765
      %v5767 = vpop.f32.mrf.mxu0
      %v5768 = vpop.f32.mrf.mxu0
      %v5769 = vpop.f32.mrf.mxu0
      %5770 = vdwg.mxu0
      %v5771 = vsel %vm4604, %v5418, -inf
      %5772 = vmax.xlane.f32.xlu0 %v5771
      %v5773 = vpop.xlane.xlu0 %5772
      %v5774 = vsel %vm4604, %v5421, -inf
      %5775 = vmax.xlane.f32.xlu0 %v5774
      %v5776 = vpop.xlane.xlu0 %5775
      %v5777 = vsel %vm4604, %v5426, -inf
      %5778 = vmax.xlane.f32.xlu0 %v5777
      %v5779 = vpop.xlane.xlu0 %5778
      %v5780 = vsel %vm4604, %v5429, -inf
      %5781 = vmax.xlane.f32.xlu0 %v5780
      %v5782 = vpop.xlane.xlu0 %5781
      %v5783 = vsel %vm4604, %v5434, -inf
      %5784 = vmax.xlane.f32.xlu0 %v5783
      %v5785 = vpop.xlane.xlu0 %5784
      %v5786 = vsel %vm4604, %v5437, -inf
      %5787 = vmax.xlane.f32.xlu0 %v5786
      %v5788 = vpop.xlane.xlu0 %5787
      %v5789 = vsel %vm4623, %v5442, -inf
      %5790 = vmax.xlane.f32.xlu0 %v5789
      %v5791 = vpop.xlane.xlu0 %5790
      %v5792 = vsel %vm4604, %v5526, -inf
      %5793 = vmax.xlane.f32.xlu0 %v5792
      %v5794 = vpop.xlane.xlu0 %5793
      %v5795 = vsel %vm4604, %v5529, -inf
      %5796 = vmax.xlane.f32.xlu0 %v5795
      %v5797 = vpop.xlane.xlu0 %5796
      %v5798 = vsel %vm4604, %v5534, -inf
      %5799 = vmax.xlane.f32.xlu0 %v5798
      %v5800 = vpop.xlane.xlu0 %5799
      %v5801 = vsel %vm4604, %v5537, -inf
      %5802 = vmax.xlane.f32.xlu0 %v5801
      %v5803 = vpop.xlane.xlu0 %5802
      %v5804 = vsel %vm4604, %v5542, -inf
      %5805 = vmax.xlane.f32.xlu0 %v5804
      %v5806 = vpop.xlane.xlu0 %5805
      %v5807 = vsel %vm4604, %v5545, -inf
      %5808 = vmax.xlane.f32.xlu0 %v5807
      %v5809 = vpop.xlane.xlu0 %5808
      %v5810 = vsel %vm4623, %v5550, -inf
      %5811 = vmax.xlane.f32.xlu0 %v5810
      %v5812 = vpop.xlane.xlu0 %5811
      %v5813 = vsel %vm4604, %v5634, -inf
      %5814 = vmax.xlane.f32.xlu0 %v5813
      %v5815 = vpop.xlane.xlu0 %5814
      %v5816 = vsel %vm4604, %v5637, -inf
      %5817 = vmax.xlane.f32.xlu0 %v5816
      %v5818 = vpop.xlane.xlu0 %5817
      %v5819 = vsel %vm4604, %v5642, -inf
      %5820 = vmax.xlane.f32.xlu0 %v5819
      %v5821 = vpop.xlane.xlu0 %5820
      %v5822 = vsel %vm4604, %v5645, -inf
      %5823 = vmax.xlane.f32.xlu0 %v5822
      %v5824 = vpop.xlane.xlu0 %5823
      %v5825 = vsel %vm4604, %v5650, -inf
      %5826 = vmax.xlane.f32.xlu0 %v5825
      %v5827 = vpop.xlane.xlu0 %5826
      %v5828 = vsel %vm4604, %v5653, -inf
      %5829 = vmax.xlane.f32.xlu0 %v5828
      %v5830 = vpop.xlane.xlu0 %5829
      %v5831 = vsel %vm4623, %v5658, -inf
      %5832 = vmax.xlane.f32.xlu0 %v5831
      %v5833 = vpop.xlane.xlu0 %5832
      %v5834 = vsel %vm4604, %v5742, -inf
      %5835 = vmax.xlane.f32.xlu0 %v5834
      %v5836 = vpop.xlane.xlu0 %5835
      %v5837 = vsel %vm4604, %v5745, -inf
      %5838 = vmax.xlane.f32.xlu0 %v5837
      %v5839 = vpop.xlane.xlu0 %5838
      %v5840 = vsel %vm4604, %v5750, -inf
      %5841 = vmax.xlane.f32.xlu0 %v5840
      %v5842 = vpop.xlane.xlu0 %5841
      %v5843 = vsel %vm4604, %v5753, -inf
      %5844 = vmax.xlane.f32.xlu0 %v5843
      %v5845 = vpop.xlane.xlu0 %5844
      %v5846 = vsel %vm4604, %v5758, -inf
      %5847 = vmax.xlane.f32.xlu0 %v5846
      %v5848 = vpop.xlane.xlu0 %5847
      %v5849 = vsel %vm4604, %v5761, -inf
      %5850 = vmax.xlane.f32.xlu0 %v5849
      %v5851 = vpop.xlane.xlu0 %5850
      %v5852 = vsel %vm4623, %v5766, -inf
      %5853 = vmax.xlane.f32.xlu0 %v5852
      %v5854 = vpop.xlane.xlu0 %5853
      %v5855 = vsub.f32 %v5418, %v5773
      %v5856 = vsub.f32 %v5421, %v5776
      %v5857 = vsub.f32 %v5426, %v5779
      %v5858 = vsub.f32 %v5429, %v5782
      %v5859 = vsub.f32 %v5434, %v5785
      %v5860 = vsub.f32 %v5437, %v5788
      %v5861 = vsub.f32 %v5442, %v5791
      %v5862 = vsub.f32 %v5526, %v5794
      %v5863 = vsub.f32 %v5529, %v5797
      %v5864 = vsub.f32 %v5534, %v5800
      %v5865 = vsub.f32 %v5537, %v5803
      %v5866 = vsub.f32 %v5542, %v5806
      %v5867 = vsub.f32 %v5545, %v5809
      %v5868 = vsub.f32 %v5550, %v5812
      %v5869 = vsub.f32 %v5634, %v5815
      %v5870 = vsub.f32 %v5637, %v5818
      %v5871 = vsub.f32 %v5642, %v5821
      %v5872 = vsub.f32 %v5645, %v5824
      %v5873 = vsub.f32 %v5650, %v5827
      %v5874 = vsub.f32 %v5653, %v5830
      %v5875 = vsub.f32 %v5658, %v5833
      %v5876 = vsub.f32 %v5742, %v5836
      %v5877 = vsub.f32 %v5745, %v5839
      %v5878 = vsub.f32 %v5750, %v5842
      %v5879 = vsub.f32 %v5753, %v5845
      %v5880 = vsub.f32 %v5758, %v5848
      %v5881 = vsub.f32 %v5761, %v5851
      %v5882 = vsub.f32 %v5766, %v5854
      %v5883 = vmul.f32 %v5855, 1.442695
      %v5884 = vpow.pop %v5883
      %v5885 = vmul.f32 %v5856, 1.442695
      %v5886 = vpow.pop %v5885
      %v5887 = vmul.f32 %v5857, 1.442695
      %v5888 = vpow.pop %v5887
      %v5889 = vmul.f32 %v5858, 1.442695
      %v5890 = vpow.pop %v5889
      %v5891 = vmul.f32 %v5859, 1.442695
      %v5892 = vpow.pop %v5891
      %v5893 = vmul.f32 %v5860, 1.442695
      %v5894 = vpow.pop %v5893
      %v5895 = vmul.f32 %v5861, 1.442695
      %v5896 = vpow.pop %v5895
      %v5897 = vmul.f32 %v5862, 1.442695
      %v5898 = vpow.pop %v5897
      %v5899 = vmul.f32 %v5863, 1.442695
      %v5900 = vpow.pop %v5899
      %v5901 = vmul.f32 %v5864, 1.442695
      %v5902 = vpow.pop %v5901
      %v5903 = vmul.f32 %v5865, 1.442695
      %v5904 = vpow.pop %v5903
      %v5905 = vmul.f32 %v5866, 1.442695
      %v5906 = vpow.pop %v5905
      %v5907 = vmul.f32 %v5867, 1.442695
      %v5908 = vpow.pop %v5907
      %v5909 = vmul.f32 %v5868, 1.442695
      %v5910 = vpow.pop %v5909
      %v5911 = vmul.f32 %v5869, 1.442695
      %v5912 = vpow.pop %v5911
      %v5913 = vmul.f32 %v5870, 1.442695
      %v5914 = vpow.pop %v5913
      %v5915 = vmul.f32 %v5871, 1.442695
      %v5916 = vpow.pop %v5915
      %v5917 = vmul.f32 %v5872, 1.442695
      %v5918 = vpow.pop %v5917
      %v5919 = vmul.f32 %v5873, 1.442695
      %v5920 = vpow.pop %v5919
      %v5921 = vmul.f32 %v5874, 1.442695
      %v5922 = vpow.pop %v5921
      %v5923 = vmul.f32 %v5875, 1.442695
      %v5924 = vpow.pop %v5923
      %v5925 = vmul.f32 %v5876, 1.442695
      %v5926 = vpow.pop %v5925
      %v5927 = vmul.f32 %v5877, 1.442695
      %v5928 = vpow.pop %v5927
      %v5929 = vmul.f32 %v5878, 1.442695
      %v5930 = vpow.pop %v5929
      %v5931 = vmul.f32 %v5879, 1.442695
      %v5932 = vpow.pop %v5931
      %v5933 = vmul.f32 %v5880, 1.442695
      %v5934 = vpow.pop %v5933
      %v5935 = vmul.f32 %v5881, 1.442695
      %v5936 = vpow.pop %v5935
      %v5937 = vmul.f32 %v5882, 1.442695
      %v5938 = vpow.pop %v5937
      %v5939 = vsel %vm4604, %v5884, 0.0
      %5940 = vadd.xlane.f32.xlu0 %v5939
      %v5941 = vpop.xlane.xlu0 %5940
      %v5942 = vsel %vm4604, %v5886, 0.0
      %5943 = vadd.xlane.f32.xlu0 %v5942
      %v5944 = vpop.xlane.xlu0 %5943
      %v5945 = vsel %vm4604, %v5888, 0.0
      %5946 = vadd.xlane.f32.xlu0 %v5945
      %v5947 = vpop.xlane.xlu0 %5946
      %v5948 = vsel %vm4604, %v5890, 0.0
      %5949 = vadd.xlane.f32.xlu0 %v5948
      %v5950 = vpop.xlane.xlu0 %5949
      %v5951 = vsel %vm4604, %v5892, 0.0
      %5952 = vadd.xlane.f32.xlu0 %v5951
      %v5953 = vpop.xlane.xlu0 %5952
      %v5954 = vsel %vm4604, %v5894, 0.0
      %5955 = vadd.xlane.f32.xlu0 %v5954
      %v5956 = vpop.xlane.xlu0 %5955
      %v5957 = vsel %vm4623, %v5896, 0.0
      %5958 = vadd.xlane.f32.xlu0 %v5957
      %v5959 = vpop.xlane.xlu0 %5958
      %v5960 = vsel %vm4604, %v5898, 0.0
      %5961 = vadd.xlane.f32.xlu0 %v5960
      %v5962 = vpop.xlane.xlu0 %5961
      %v5963 = vsel %vm4604, %v5900, 0.0
      %5964 = vadd.xlane.f32.xlu0 %v5963
      %v5965 = vpop.xlane.xlu0 %5964
      %v5966 = vsel %vm4604, %v5902, 0.0
      %5967 = vadd.xlane.f32.xlu0 %v5966
      %v5968 = vpop.xlane.xlu0 %5967
      %v5969 = vsel %vm4604, %v5904, 0.0
      %5970 = vadd.xlane.f32.xlu0 %v5969
      %v5971 = vpop.xlane.xlu0 %5970
      %v5972 = vsel %vm4604, %v5906, 0.0
      %5973 = vadd.xlane.f32.xlu0 %v5972
      %v5974 = vpop.xlane.xlu0 %5973
      %v5975 = vsel %vm4604, %v5908, 0.0
      %5976 = vadd.xlane.f32.xlu0 %v5975
      %v5977 = vpop.xlane.xlu0 %5976
      %v5978 = vsel %vm4623, %v5910, 0.0
      %5979 = vadd.xlane.f32.xlu0 %v5978
      %v5980 = vpop.xlane.xlu0 %5979
      %v5981 = vsel %vm4604, %v5912, 0.0
      %5982 = vadd.xlane.f32.xlu0 %v5981
      %v5983 = vpop.xlane.xlu0 %5982
      %v5984 = vsel %vm4604, %v5914, 0.0
      %5985 = vadd.xlane.f32.xlu0 %v5984
      %v5986 = vpop.xlane.xlu0 %5985
      %v5987 = vsel %vm4604, %v5916, 0.0
      %5988 = vadd.xlane.f32.xlu0 %v5987
      %v5989 = vpop.xlane.xlu0 %5988
      %v5990 = vsel %vm4604, %v5918, 0.0
      %5991 = vadd.xlane.f32.xlu0 %v5990
      %v5992 = vpop.xlane.xlu0 %5991
      %v5993 = vsel %vm4604, %v5920, 0.0
      %5994 = vadd.xlane.f32.xlu0 %v5993
      %v5995 = vpop.xlane.xlu0 %5994
      %v5996 = vsel %vm4604, %v5922, 0.0
      %5997 = vadd.xlane.f32.xlu0 %v5996
      %v5998 = vpop.xlane.xlu0 %5997
      %v5999 = vsel %vm4623, %v5924, 0.0
      %6000 = vadd.xlane.f32.xlu0 %v5999
      %v6001 = vpop.xlane.xlu0 %6000
      %v6002 = vsel %vm4604, %v5926, 0.0
      %6003 = vadd.xlane.f32.xlu0 %v6002
      %v6004 = vpop.xlane.xlu0 %6003
      %v6005 = vsel %vm4604, %v5928, 0.0
      %6006 = vadd.xlane.f32.xlu0 %v6005
      %v6007 = vpop.xlane.xlu0 %6006
      %v6008 = vsel %vm4604, %v5930, 0.0
      %6009 = vadd.xlane.f32.xlu0 %v6008
      %v6010 = vpop.xlane.xlu0 %6009
      %v6011 = vsel %vm4604, %v5932, 0.0
      %6012 = vadd.xlane.f32.xlu0 %v6011
      %v6013 = vpop.xlane.xlu0 %6012
      %v6014 = vsel %vm4604, %v5934, 0.0
      %6015 = vadd.xlane.f32.xlu0 %v6014
      %v6016 = vpop.xlane.xlu0 %6015
      %v6017 = vsel %vm4604, %v5936, 0.0
      %6018 = vadd.xlane.f32.xlu0 %v6017
      %v6019 = vpop.xlane.xlu0 %6018
      %v6020 = vsel %vm4623, %v5938, 0.0
      %6021 = vadd.xlane.f32.xlu0 %v6020
      %v6022 = vpop.xlane.xlu0 %6021
      %v6023 = vrcp.pop %v5941
      %v6024 = vrcp.pop %v5944
      %v6025 = vrcp.pop %v5947
      %v6026 = vrcp.pop %v5950
      %v6027 = vrcp.pop %v5953
      %v6028 = vrcp.pop %v5956
      %v6029 = vrcp.pop %v5959
      %v6030 = vrcp.pop %v5962
      %v6031 = vrcp.pop %v5965
      %v6032 = vrcp.pop %v5968
      %v6033 = vrcp.pop %v5971
      %v6034 = vrcp.pop %v5974
      %v6035 = vrcp.pop %v5977
      %v6036 = vrcp.pop %v5980
      %v6037 = vrcp.pop %v5983
      %v6038 = vrcp.pop %v5986
      %v6039 = vrcp.pop %v5989
      %v6040 = vrcp.pop %v5992
      %v6041 = vrcp.pop %v5995
      %v6042 = vrcp.pop %v5998
      %v6043 = vrcp.pop %v6001
      %v6044 = vrcp.pop %v6004
      %v6045 = vrcp.pop %v6007
      %v6046 = vrcp.pop %v6010
      %v6047 = vrcp.pop %v6013
      %v6048 = vrcp.pop %v6016
      %v6049 = vrcp.pop %v6019
      %v6050 = vrcp.pop %v6022
      %v6051 = vmul.f32 %v5884, %v6023
      %v6052 = vmul.f32 %v5886, %v6024
      %v6053 = vmul.f32 %v5888, %v6025
      %v6054 = vmul.f32 %v5890, %v6026
      %v6055 = vmul.f32 %v5892, %v6027
      %v6056 = vmul.f32 %v5894, %v6028
      %v6057 = vmul.f32 %v5896, %v6029
      %v6058 = vmul.f32 %v5898, %v6030
      %v6059 = vmul.f32 %v5900, %v6031
      %v6060 = vmul.f32 %v5902, %v6032
      %v6061 = vmul.f32 %v5904, %v6033
      %v6062 = vmul.f32 %v5906, %v6034
      %v6063 = vmul.f32 %v5908, %v6035
      %v6064 = vmul.f32 %v5910, %v6036
      %v6065 = vmul.f32 %v5912, %v6037
      %v6066 = vmul.f32 %v5914, %v6038
      %v6067 = vmul.f32 %v5916, %v6039
      %v6068 = vmul.f32 %v5918, %v6040
      %v6069 = vmul.f32 %v5920, %v6041
      %v6070 = vmul.f32 %v5922, %v6042
      %v6071 = vmul.f32 %v5924, %v6043
      %v6072 = vmul.f32 %v5926, %v6044
      %v6073 = vmul.f32 %v5928, %v6045
      %v6074 = vmul.f32 %v5930, %v6046
      %v6075 = vmul.f32 %v5932, %v6047
      %v6076 = vmul.f32 %v5934, %v6048
      %v6077 = vmul.f32 %v5936, %v6049
      %v6078 = vmul.f32 %v5938, %v6050
      %v6079 = vpack.c.bf16 %v6052, %v6051
      %v6080 = vpack.c.bf16 %v6054, %v6053
      %v6081 = vpack.c.bf16 %v6056, %v6055
      %v6082 = vpack.c.bf16 %v6057, %v6057
      %v6083 = vpack.c.bf16 %v6059, %v6058
      %v6084 = vpack.c.bf16 %v6061, %v6060
      %v6085 = vpack.c.bf16 %v6063, %v6062
      %v6086 = vpack.c.bf16 %v6064, %v6064
      %v6087 = vpack.c.bf16 %v6066, %v6065
      %v6088 = vpack.c.bf16 %v6068, %v6067
      %v6089 = vpack.c.bf16 %v6070, %v6069
      %v6090 = vpack.c.bf16 %v6071, %v6071
      %v6091 = vpack.c.bf16 %v6073, %v6072
      %v6092 = vpack.c.bf16 %v6075, %v6074
      %v6093 = vpack.c.bf16 %v6077, %v6076
      %v6094 = vpack.c.bf16 %v6078, %v6078
      %6095 = vrot.lane.b32.xlu0 %v4187, 56
      %v6096 = vpop.permute.xlu0 %6095
      %6097 = vrot.lane.b32.xlu0 %v4188, 56
      %v6098 = vpop.permute.xlu0 %6097
      %6099 = vrot.lane.b32.xlu0 %v4189, 56
      %v6100 = vpop.permute.xlu0 %6099
      %6101 = vrot.lane.b32.xlu0 %v4190, 56
      %v6102 = vpop.permute.xlu0 %6101
      %v6107 = vsel %vm4604, %v6079, 0
      %v6110 = vsel %vm4604, %v6080, 0
      %v6113 = vsel %vm4604, %v6081, 0
      %v6116 = vsel %vm4604, %v6082, 0
      %v6119 = vand.u32 %v6102, %v4960
      %6121 = vmatprep.subr.bf16.mxu0 0
      %6122 = vmatpush1.bf16.msra.mxu0 0
      %6123 = vmatprep.subr.bf16.mxu0 0
      %6124 = vmatpush1.bf16.msra.mxu0 0
      %6125 = vmatprep.subr.bf16.mxu0 0
      %6126 = vmatpush1.bf16.msra.mxu0 0
      %6127 = vmatprep.subr.bf16.mxu0 0
      %6128 = vmatpush1.bf16.msra.mxu0 0
      %6129 = vmatprep.subr.bf16.mxu0 0
      %6130 = vmatpush1.bf16.msra.mxu0 %v6119
      %6131 = vmatprep.subr.bf16.mxu0 0
      %6132 = vmatpush1.bf16.msra.mxu0 %v6100
      %6133 = vmatprep.subr.bf16.mxu0 0
      %6134 = vmatpush1.bf16.msra.mxu0 %v6098
      %6135 = vmatprep.subr.bf16.mxu0 0
      %6136 = vmatpush1.bf16.msra.mxu0 %v6096
      %6137 = vmatprep.subr.bf16.mxu0 0
      %6138 = vmatpush2.bf16.msra.mxu0 0
      %6139 = vmatprep.subr.bf16.mxu0 0
      %6140 = vmatpush2.bf16.msra.mxu0 0
      %6141 = vmatprep.subr.bf16.mxu0 0
      %6142 = vmatpush2.bf16.msra.mxu0 0
      %6143 = vmatprep.subr.bf16.mxu0 0
      %6144 = vmatpush2.bf16.msra.mxu0 0
      %6145 = vmatprep.subr.bf16.mxu0 0
      %6146 = vmatpush2.bf16.msra.mxu0 0
      %6147 = vmatprep.subr.bf16.mxu0 0
      %6148 = vmatpush2.bf16.msra.mxu0 0
      %6149 = vmatprep.subr.bf16.mxu0 0
      %6150 = vmatpush2.bf16.msra.mxu0 0
      %6151 = vmatprep.subr.bf16.mxu0 0
      %6152 = vmatpush2.bf16.msra.mxu0 0
      %6153 = vmatprep.mubr.bf16.mxu0 0
      %6154 = vmatmul.mubr.bf16.gmra.mxu0 %v6107
      %v6155 = vpop.f32.mrf.mxu0
      %v6156 = vadd.f32 0.0, %v6155
      %v6157 = vpop.f32.mrf.mxu0
      %v6158 = vpop.f32.mrf.mxu0
      %v6159 = vadd.f32 0.0, %v6158
      %v6160 = vpop.f32.mrf.mxu0
      %6161 = vmatprep.mubr.bf16.mxu0 0
      %6162 = vmatmul.mubr.bf16.gmra.mxu0 %v6110
      %v6163 = vpop.f32.mrf.mxu0
      %v6164 = vadd.f32 0.0, %v6163
      %v6165 = vpop.f32.mrf.mxu0
      %v6166 = vpop.f32.mrf.mxu0
      %v6167 = vadd.f32 0.0, %v6166
      %v6168 = vpop.f32.mrf.mxu0
      %6169 = vmatprep.mubr.bf16.mxu0 0
      %6170 = vmatmul.mubr.bf16.gmra.mxu0 %v6113
      %v6171 = vpop.f32.mrf.mxu0
      %v6172 = vadd.f32 0.0, %v6171
      %v6173 = vpop.f32.mrf.mxu0
      %v6174 = vpop.f32.mrf.mxu0
      %v6175 = vadd.f32 0.0, %v6174
      %v6176 = vpop.f32.mrf.mxu0
      %6177 = vmatprep.mubr.bf16.mxu0 0
      %6178 = vmatmul.mubr.bf16.gmra.mxu0 %v6116
      %v6179 = vpop.f32.mrf.mxu0
      %v6180 = vadd.f32 0.0, %v6179
      %v6181 = vpop.f32.mrf.mxu0
      %v6182 = vpop.f32.mrf.mxu0
      %v6183 = vpop.f32.mrf.mxu0
      %6184 = vdwg.mxu0
      %6185 = vrot.lane.b32.xlu0 %v4191, 56
      %v6186 = vpop.permute.xlu0 %6185
      %6187 = vrot.lane.b32.xlu0 %v4192, 56
      %v6188 = vpop.permute.xlu0 %6187
      %6189 = vrot.lane.b32.xlu0 %v4193, 56
      %v6190 = vpop.permute.xlu0 %6189
      %6191 = vrot.lane.b32.xlu0 %v4194, 56
      %v6192 = vpop.permute.xlu0 %6191
      %v6197 = vsel %vm4604, %v6083, 0
      %v6200 = vsel %vm4604, %v6084, 0
      %v6203 = vsel %vm4604, %v6085, 0
      %v6206 = vsel %vm4604, %v6086, 0
      %v6209 = vand.u32 %v6192, %v4960
      %6211 = vmatprep.subr.bf16.mxu0 0
      %6212 = vmatpush1.bf16.msra.mxu0 0
      %6213 = vmatprep.subr.bf16.mxu0 0
      %6214 = vmatpush1.bf16.msra.mxu0 0
      %6215 = vmatprep.subr.bf16.mxu0 0
      %6216 = vmatpush1.bf16.msra.mxu0 0
      %6217 = vmatprep.subr.bf16.mxu0 0
      %6218 = vmatpush1.bf16.msra.mxu0 0
      %6219 = vmatprep.subr.bf16.mxu0 0
      %6220 = vmatpush1.bf16.msra.mxu0 %v6209
      %6221 = vmatprep.subr.bf16.mxu0 0
      %6222 = vmatpush1.bf16.msra.mxu0 %v6190
      %6223 = vmatprep.subr.bf16.mxu0 0
      %6224 = vmatpush1.bf16.msra.mxu0 %v6188
      %6225 = vmatprep.subr.bf16.mxu0 0
      %6226 = vmatpush1.bf16.msra.mxu0 %v6186
      %6227 = vmatprep.subr.bf16.mxu0 0
      %6228 = vmatpush2.bf16.msra.mxu0 0
      %6229 = vmatprep.subr.bf16.mxu0 0
      %6230 = vmatpush2.bf16.msra.mxu0 0
      %6231 = vmatprep.subr.bf16.mxu0 0
      %6232 = vmatpush2.bf16.msra.mxu0 0
      %6233 = vmatprep.subr.bf16.mxu0 0
      %6234 = vmatpush2.bf16.msra.mxu0 0
      %6235 = vmatprep.subr.bf16.mxu0 0
      %6236 = vmatpush2.bf16.msra.mxu0 0
      %6237 = vmatprep.subr.bf16.mxu0 0
      %6238 = vmatpush2.bf16.msra.mxu0 0
      %6239 = vmatprep.subr.bf16.mxu0 0
      %6240 = vmatpush2.bf16.msra.mxu0 0
      %6241 = vmatprep.subr.bf16.mxu0 0
      %6242 = vmatpush2.bf16.msra.mxu0 0
      %6243 = vmatprep.mubr.bf16.mxu0 0
      %6244 = vmatmul.mubr.bf16.gmra.mxu0 %v6197
      %v6245 = vpop.f32.mrf.mxu0
      %v6246 = vadd.f32 0.0, %v6245
      %v6247 = vpop.f32.mrf.mxu0
      %v6248 = vpop.f32.mrf.mxu0
      %v6249 = vadd.f32 0.0, %v6248
      %v6250 = vpop.f32.mrf.mxu0
      %6251 = vmatprep.mubr.bf16.mxu0 0
      %6252 = vmatmul.mubr.bf16.gmra.mxu0 %v6200
      %v6253 = vpop.f32.mrf.mxu0
      %v6254 = vadd.f32 0.0, %v6253
      %v6255 = vpop.f32.mrf.mxu0
      %v6256 = vpop.f32.mrf.mxu0
      %v6257 = vadd.f32 0.0, %v6256
      %v6258 = vpop.f32.mrf.mxu0
      %6259 = vmatprep.mubr.bf16.mxu0 0
      %6260 = vmatmul.mubr.bf16.gmra.mxu0 %v6203
      %v6261 = vpop.f32.mrf.mxu0
      %v6262 = vadd.f32 0.0, %v6261
      %v6263 = vpop.f32.mrf.mxu0
      %v6264 = vpop.f32.mrf.mxu0
      %v6265 = vadd.f32 0.0, %v6264
      %v6266 = vpop.f32.mrf.mxu0
      %6267 = vmatprep.mubr.bf16.mxu0 0
      %6268 = vmatmul.mubr.bf16.gmra.mxu0 %v6206
      %v6269 = vpop.f32.mrf.mxu0
      %v6270 = vadd.f32 0.0, %v6269
      %v6271 = vpop.f32.mrf.mxu0
      %v6272 = vpop.f32.mrf.mxu0
      %v6273 = vpop.f32.mrf.mxu0
      %6274 = vdwg.mxu0
      %6275 = vrot.lane.b32.xlu0 %v4195, 56
      %v6276 = vpop.permute.xlu0 %6275
      %6277 = vrot.lane.b32.xlu0 %v4196, 56
      %v6278 = vpop.permute.xlu0 %6277
      %6279 = vrot.lane.b32.xlu0 %v4197, 56
      %v6280 = vpop.permute.xlu0 %6279
      %6281 = vrot.lane.b32.xlu0 %v4198, 56
      %v6282 = vpop.permute.xlu0 %6281
      %v6287 = vsel %vm4604, %v6087, 0
      %v6290 = vsel %vm4604, %v6088, 0
      %v6293 = vsel %vm4604, %v6089, 0
      %v6296 = vsel %vm4604, %v6090, 0
      %v6299 = vand.u32 %v6282, %v4960
      %6301 = vmatprep.subr.bf16.mxu0 0
      %6302 = vmatpush1.bf16.msra.mxu0 0
      %6303 = vmatprep.subr.bf16.mxu0 0
      %6304 = vmatpush1.bf16.msra.mxu0 0
      %6305 = vmatprep.subr.bf16.mxu0 0
      %6306 = vmatpush1.bf16.msra.mxu0 0
      %6307 = vmatprep.subr.bf16.mxu0 0
      %6308 = vmatpush1.bf16.msra.mxu0 0
      %6309 = vmatprep.subr.bf16.mxu0 0
      %6310 = vmatpush1.bf16.msra.mxu0 %v6299
      %6311 = vmatprep.subr.bf16.mxu0 0
      %6312 = vmatpush1.bf16.msra.mxu0 %v6280
      %6313 = vmatprep.subr.bf16.mxu0 0
      %6314 = vmatpush1.bf16.msra.mxu0 %v6278
      %6315 = vmatprep.subr.bf16.mxu0 0
      %6316 = vmatpush1.bf16.msra.mxu0 %v6276
      %6317 = vmatprep.subr.bf16.mxu0 0
      %6318 = vmatpush2.bf16.msra.mxu0 0
      %6319 = vmatprep.subr.bf16.mxu0 0
      %6320 = vmatpush2.bf16.msra.mxu0 0
      %6321 = vmatprep.subr.bf16.mxu0 0
      %6322 = vmatpush2.bf16.msra.mxu0 0
      %6323 = vmatprep.subr.bf16.mxu0 0
      %6324 = vmatpush2.bf16.msra.mxu0 0
      %6325 = vmatprep.subr.bf16.mxu0 0
      %6326 = vmatpush2.bf16.msra.mxu0 0
      %6327 = vmatprep.subr.bf16.mxu0 0
      %6328 = vmatpush2.bf16.msra.mxu0 0
      %6329 = vmatprep.subr.bf16.mxu0 0
      %6330 = vmatpush2.bf16.msra.mxu0 0
      %6331 = vmatprep.subr.bf16.mxu0 0
      %6332 = vmatpush2.bf16.msra.mxu0 0
      %6333 = vmatprep.mubr.bf16.mxu0 0
      %6334 = vmatmul.mubr.bf16.gmra.mxu0 %v6287
      %v6335 = vpop.f32.mrf.mxu0
      %v6336 = vadd.f32 0.0, %v6335
      %v6337 = vpop.f32.mrf.mxu0
      %v6338 = vpop.f32.mrf.mxu0
      %v6339 = vadd.f32 0.0, %v6338
      %v6340 = vpop.f32.mrf.mxu0
      %6341 = vmatprep.mubr.bf16.mxu0 0
      %6342 = vmatmul.mubr.bf16.gmra.mxu0 %v6290
      %v6343 = vpop.f32.mrf.mxu0
      %v6344 = vadd.f32 0.0, %v6343
      %v6345 = vpop.f32.mrf.mxu0
      %v6346 = vpop.f32.mrf.mxu0
      %v6347 = vadd.f32 0.0, %v6346
      %v6348 = vpop.f32.mrf.mxu0
      %6349 = vmatprep.mubr.bf16.mxu0 0
      %6350 = vmatmul.mubr.bf16.gmra.mxu0 %v6293
      %v6351 = vpop.f32.mrf.mxu0
      %v6352 = vadd.f32 0.0, %v6351
      %v6353 = vpop.f32.mrf.mxu0
      %v6354 = vpop.f32.mrf.mxu0
      %v6355 = vadd.f32 0.0, %v6354
      %v6356 = vpop.f32.mrf.mxu0
      %6357 = vmatprep.mubr.bf16.mxu0 0
      %6358 = vmatmul.mubr.bf16.gmra.mxu0 %v6296
      %v6359 = vpop.f32.mrf.mxu0
      %v6360 = vadd.f32 0.0, %v6359
      %v6361 = vpop.f32.mrf.mxu0
      %v6362 = vpop.f32.mrf.mxu0
      %v6363 = vpop.f32.mrf.mxu0
      %6364 = vdwg.mxu0
      %6365 = vrot.lane.b32.xlu0 %v4199, 56
      %v6366 = vpop.permute.xlu0 %6365
      %6367 = vrot.lane.b32.xlu0 %v4200, 56
      %v6368 = vpop.permute.xlu0 %6367
      %6369 = vrot.lane.b32.xlu0 %v4201, 56
      %v6370 = vpop.permute.xlu0 %6369
      %6371 = vrot.lane.b32.xlu0 %v4202, 56
      %v6372 = vpop.permute.xlu0 %6371
      %v6377 = vsel %vm4604, %v6091, 0
      %v6380 = vsel %vm4604, %v6092, 0
      %v6383 = vsel %vm4604, %v6093, 0
      %v6386 = vsel %vm4604, %v6094, 0
      %v6389 = vand.u32 %v6372, %v4960
      %6391 = vmatprep.subr.bf16.mxu0 0
      %6392 = vmatpush1.bf16.msra.mxu0 0
      %6393 = vmatprep.subr.bf16.mxu0 0
      %6394 = vmatpush1.bf16.msra.mxu0 0
      %6395 = vmatprep.subr.bf16.mxu0 0
      %6396 = vmatpush1.bf16.msra.mxu0 0
      %6397 = vmatprep.subr.bf16.mxu0 0
      %6398 = vmatpush1.bf16.msra.mxu0 0
      %6399 = vmatprep.subr.bf16.mxu0 0
      %6400 = vmatpush1.bf16.msra.mxu0 %v6389
      %6401 = vmatprep.subr.bf16.mxu0 0
      %6402 = vmatpush1.bf16.msra.mxu0 %v6370
      %6403 = vmatprep.subr.bf16.mxu0 0
      %6404 = vmatpush1.bf16.msra.mxu0 %v6368
      %6405 = vmatprep.subr.bf16.mxu0 0
      %6406 = vmatpush1.bf16.msra.mxu0 %v6366
      %6407 = vmatprep.subr.bf16.mxu0 0
      %6408 = vmatpush2.bf16.msra.mxu0 0
      %6409 = vmatprep.subr.bf16.mxu0 0
      %6410 = vmatpush2.bf16.msra.mxu0 0
      %6411 = vmatprep.subr.bf16.mxu0 0
      %6412 = vmatpush2.bf16.msra.mxu0 0
      %6413 = vmatprep.subr.bf16.mxu0 0
      %6414 = vmatpush2.bf16.msra.mxu0 0
      %6415 = vmatprep.subr.bf16.mxu0 0
      %6416 = vmatpush2.bf16.msra.mxu0 0
      %6417 = vmatprep.subr.bf16.mxu0 0
      %6418 = vmatpush2.bf16.msra.mxu0 0
      %6419 = vmatprep.subr.bf16.mxu0 0
      %6420 = vmatpush2.bf16.msra.mxu0 0
      %6421 = vmatprep.subr.bf16.mxu0 0
      %6422 = vmatpush2.bf16.msra.mxu0 0
      %6423 = vmatprep.mubr.bf16.mxu0 0
      %6424 = vmatmul.mubr.bf16.gmra.mxu0 %v6377
      %v6425 = vpop.f32.mrf.mxu0
      %v6426 = vadd.f32 0.0, %v6425
      %v6427 = vpop.f32.mrf.mxu0
      %v6428 = vpop.f32.mrf.mxu0
      %v6429 = vadd.f32 0.0, %v6428
      %v6430 = vpop.f32.mrf.mxu0
      %6431 = vmatprep.mubr.bf16.mxu0 0
      %6432 = vmatmul.mubr.bf16.gmra.mxu0 %v6380
      %v6433 = vpop.f32.mrf.mxu0
      %v6434 = vadd.f32 0.0, %v6433
      %v6435 = vpop.f32.mrf.mxu0
      %v6436 = vpop.f32.mrf.mxu0
      %v6437 = vadd.f32 0.0, %v6436
      %v6438 = vpop.f32.mrf.mxu0
      %6439 = vmatprep.mubr.bf16.mxu0 0
      %6440 = vmatmul.mubr.bf16.gmra.mxu0 %v6383
      %v6441 = vpop.f32.mrf.mxu0
      %v6442 = vadd.f32 0.0, %v6441
      %v6443 = vpop.f32.mrf.mxu0
      %v6444 = vpop.f32.mrf.mxu0
      %v6445 = vadd.f32 0.0, %v6444
      %v6446 = vpop.f32.mrf.mxu0
      %6447 = vmatprep.mubr.bf16.mxu0 0
      %6448 = vmatmul.mubr.bf16.gmra.mxu0 %v6386
      %v6449 = vpop.f32.mrf.mxu0
      %v6450 = vadd.f32 0.0, %v6449
      %v6451 = vpop.f32.mrf.mxu0
      %v6452 = vpop.f32.mrf.mxu0
      %v6453 = vpop.f32.mrf.mxu0
      %6454 = vdwg.mxu0
      %6483 = vrot.lane.b32.xlu0 %v6156, 8
      %v6484 = vpop.permute.xlu0 %6483
      %6485 = vrot.lane.b32.xlu0 %v6159, 8
      %v6486 = vpop.permute.xlu0 %6485
      %6487 = vrot.lane.b32.xlu0 %v6164, 8
      %v6488 = vpop.permute.xlu0 %6487
      %6489 = vrot.lane.b32.xlu0 %v6167, 8
      %v6490 = vpop.permute.xlu0 %6489
      %6491 = vrot.lane.b32.xlu0 %v6172, 8
      %v6492 = vpop.permute.xlu0 %6491
      %6493 = vrot.lane.b32.xlu0 %v6175, 8
      %v6494 = vpop.permute.xlu0 %6493
      %6495 = vrot.lane.b32.xlu0 %v6180, 8
      %v6496 = vpop.permute.xlu0 %6495
      %6497 = vrot.lane.b32.xlu0 %v6246, 8
      %v6498 = vpop.permute.xlu0 %6497
      %6499 = vrot.lane.b32.xlu0 %v6249, 8
      %v6500 = vpop.permute.xlu0 %6499
      %6501 = vrot.lane.b32.xlu0 %v6254, 8
      %v6502 = vpop.permute.xlu0 %6501
      %6503 = vrot.lane.b32.xlu0 %v6257, 8
      %v6504 = vpop.permute.xlu0 %6503
      %6505 = vrot.lane.b32.xlu0 %v6262, 8
      %v6506 = vpop.permute.xlu0 %6505
      %6507 = vrot.lane.b32.xlu0 %v6265, 8
      %v6508 = vpop.permute.xlu0 %6507
      %6509 = vrot.lane.b32.xlu0 %v6270, 8
      %v6510 = vpop.permute.xlu0 %6509
      %6511 = vrot.lane.b32.xlu0 %v6336, 8
      %v6512 = vpop.permute.xlu0 %6511
      %6513 = vrot.lane.b32.xlu0 %v6339, 8
      %v6514 = vpop.permute.xlu0 %6513
      %6515 = vrot.lane.b32.xlu0 %v6344, 8
      %v6516 = vpop.permute.xlu0 %6515
      %6517 = vrot.lane.b32.xlu0 %v6347, 8
      %v6518 = vpop.permute.xlu0 %6517
      %6519 = vrot.lane.b32.xlu0 %v6352, 8
      %v6520 = vpop.permute.xlu0 %6519
      %6521 = vrot.lane.b32.xlu0 %v6355, 8
      %v6522 = vpop.permute.xlu0 %6521
      %6523 = vrot.lane.b32.xlu0 %v6360, 8
      %v6524 = vpop.permute.xlu0 %6523
      %6525 = vrot.lane.b32.xlu0 %v6426, 8
      %v6526 = vpop.permute.xlu0 %6525
      %6527 = vrot.lane.b32.xlu0 %v6429, 8
      %v6528 = vpop.permute.xlu0 %6527
      %6529 = vrot.lane.b32.xlu0 %v6434, 8
      %v6530 = vpop.permute.xlu0 %6529
      %6531 = vrot.lane.b32.xlu0 %v6437, 8
      %v6532 = vpop.permute.xlu0 %6531
      %6533 = vrot.lane.b32.xlu0 %v6442, 8
      %v6534 = vpop.permute.xlu0 %6533
      %6535 = vrot.lane.b32.xlu0 %v6445, 8
      %v6536 = vpop.permute.xlu0 %6535
      %6537 = vrot.lane.b32.xlu0 %v6450, 8
      %v6538 = vpop.permute.xlu0 %6537
      %vm6567 = vcmask 130112
      %6568 = vst.msk [vmem:[#allocation2] sm:$0xff] %vm6567, %v6484
      %6569 = vst.msk [vmem:[#allocation2 + $0x8] sm:$0xff] %vm6567, %v6486
      %6570 = vst.msk [vmem:[#allocation2 + $0x10] sm:$0xff] %vm6567, %v6488
      %6571 = vst.msk [vmem:[#allocation2 + $0x18] sm:$0xff] %vm6567, %v6490
      %6572 = vst.msk [vmem:[#allocation2 + $0x20] sm:$0xff] %vm6567, %v6492
      %6573 = vst.msk [vmem:[#allocation2 + $0x28] sm:$0xff] %vm6567, %v6494
      %vm6574 = vcmask 127040
      %6575 = vst.msk [vmem:[#allocation2 + $0x30] sm:$0x1f] %vm6574, %v6496
      %6576 = vst.msk [vmem:[#allocation2 + $0x38] sm:$0xff] %vm6567, %v6498
      %6577 = vst.msk [vmem:[#allocation2 + $0x40] sm:$0xff] %vm6567, %v6500
      %6578 = vst.msk [vmem:[#allocation2 + $0x48] sm:$0xff] %vm6567, %v6502
      %6579 = vst.msk [vmem:[#allocation2 + $0x50] sm:$0xff] %vm6567, %v6504
      %6580 = vst.msk [vmem:[#allocation2 + $0x58] sm:$0xff] %vm6567, %v6506
      %6581 = vst.msk [vmem:[#allocation2 + $0x60] sm:$0xff] %vm6567, %v6508
      %6582 = vst.msk [vmem:[#allocation2 + $0x68] sm:$0x1f] %vm6574, %v6510
      %6583 = vst.msk [vmem:[#allocation2 + $0x70] sm:$0xff] %vm6567, %v6512
      %6584 = vst.msk [vmem:[#allocation2 + $0x78] sm:$0xff] %vm6567, %v6514
      %6585 = vst.msk [vmem:[#allocation2 + $0x80] sm:$0xff] %vm6567, %v6516
      %6586 = vst.msk [vmem:[#allocation2 + $0x88] sm:$0xff] %vm6567, %v6518
      %6587 = vst.msk [vmem:[#allocation2 + $0x90] sm:$0xff] %vm6567, %v6520
      %6588 = vst.msk [vmem:[#allocation2 + $0x98] sm:$0xff] %vm6567, %v6522
      %6589 = vst.msk [vmem:[#allocation2 + $0xa0] sm:$0x1f] %vm6574, %v6524
      %6590 = vst.msk [vmem:[#allocation2 + $0xa8] sm:$0xff] %vm6567, %v6526
      %6591 = vst.msk [vmem:[#allocation2 + $0xb0] sm:$0xff] %vm6567, %v6528
      %6592 = vst.msk [vmem:[#allocation2 + $0xb8] sm:$0xff] %vm6567, %v6530
      %6593 = vst.msk [vmem:[#allocation2 + $0xc0] sm:$0xff] %vm6567, %v6532
      %6594 = vst.msk [vmem:[#allocation2 + $0xc8] sm:$0xff] %vm6567, %v6534
      %6595 = vst.msk [vmem:[#allocation2 + $0xd0] sm:$0xff] %vm6567, %v6536
      %6596 = vst.msk [vmem:[#allocation2 + $0xd8] sm:$0x1f] %vm6574, %v6538
      %6597 = vrot.lane.b32.xlu0 %v1671, 112
      %v6598 = vpop.permute.xlu0 %6597
      %6599 = vrot.lane.b32.xlu0 %v1672, 112
      %v6600 = vpop.permute.xlu0 %6599
      %6601 = vrot.lane.b32.xlu0 %v1673, 112
      %v6602 = vpop.permute.xlu0 %6601
      %6603 = vrot.lane.b32.xlu0 %v1674, 112
      %v6604 = vpop.permute.xlu0 %6603
      %6605 = vrot.lane.b32.xlu0 %v2943, 80
      %v6606 = vpop.permute.xlu0 %6605
      %6607 = vrot.lane.b32.xlu0 %v2944, 80
      %v6608 = vpop.permute.xlu0 %6607
      %6609 = vrot.lane.b32.xlu0 %v2945, 80
      %v6610 = vpop.permute.xlu0 %6609
      %6611 = vrot.lane.b32.xlu0 %v2946, 80
      %v6612 = vpop.permute.xlu0 %6611
      %v6614 = vsel %vm4215, %v6598, 0
      %v6617 = vsel %vm4215, %v6600, 0
      %v6620 = vsel %vm4215, %v6602, 0
      %v6623 = vsel %vm4215, %v6604, 0
      %v6626 = vsel %vm4215, %v6606, 0
      %v6629 = vsel %vm4215, %v6608, 0
      %v6632 = vsel %vm4215, %v6610, 0
      %v6635 = vsel %vm4215, %v6612, 0
      %6637 = vmatprep.subr.bf16.mxu0 0
      %6638 = vmatpush1.bf16.xpose.msra.mxu0 0
      %6639 = vmatprep.subr.bf16.mxu0 0
      %6640 = vmatpush1.bf16.xpose.msra.mxu0 0
      %6641 = vmatprep.subr.bf16.mxu0 0
      %6642 = vmatpush1.bf16.xpose.msra.mxu0 0
      %6643 = vmatprep.subr.bf16.mxu0 0
      %6644 = vmatpush1.bf16.xpose.msra.mxu0 0
      %6645 = vmatprep.subr.bf16.mxu0 0
      %6646 = vmatpush1.bf16.xpose.msra.mxu0 %v6635
      %6647 = vmatprep.subr.bf16.mxu0 0
      %6648 = vmatpush1.bf16.xpose.msra.mxu0 %v6632
      %6649 = vmatprep.subr.bf16.mxu0 0
      %6650 = vmatpush1.bf16.xpose.msra.mxu0 %v6629
      %6651 = vmatprep.subr.bf16.mxu0 0
      %6652 = vmatpush1.bf16.xpose.msra.mxu0 %v6626
      %6653 = vmatprep.subr.bf16.mxu0 0
      %6654 = vmatpush2.bf16.xpose.msra.mxu0 0
      %6655 = vmatprep.subr.bf16.mxu0 0
      %6656 = vmatpush2.bf16.xpose.msra.mxu0 0
      %6657 = vmatprep.subr.bf16.mxu0 0
      %6658 = vmatpush2.bf16.xpose.msra.mxu0 0
      %6659 = vmatprep.subr.bf16.mxu0 0
      %6660 = vmatpush2.bf16.xpose.msra.mxu0 0
      %6661 = vmatprep.subr.bf16.mxu0 0
      %6662 = vmatpush2.bf16.xpose.msra.mxu0 0
      %6663 = vmatprep.subr.bf16.mxu0 0
      %6664 = vmatpush2.bf16.xpose.msra.mxu0 0
      %6665 = vmatprep.subr.bf16.mxu0 0
      %6666 = vmatpush2.bf16.xpose.msra.mxu0 0
      %6667 = vmatprep.subr.bf16.mxu0 0
      %6668 = vmatpush2.bf16.xpose.msra.mxu0 0
      %6669 = vmatprep.mubr.bf16.mxu0 0
      %6670 = vmatmul.mubr.bf16.gmra.mxu0 %v6614
      %v6671 = vpop.f32.mrf.mxu0
      %v6672 = vadd.f32 0.0, %v6671
      %v6673 = vpop.f32.mrf.mxu0
      %v6674 = vpop.f32.mrf.mxu0
      %v6675 = vadd.f32 0.0, %v6674
      %v6676 = vpop.f32.mrf.mxu0
      %6677 = vmatprep.mubr.bf16.mxu0 0
      %6678 = vmatmul.mubr.bf16.gmra.mxu0 %v6617
      %v6679 = vpop.f32.mrf.mxu0
      %v6680 = vadd.f32 0.0, %v6679
      %v6681 = vpop.f32.mrf.mxu0
      %v6682 = vpop.f32.mrf.mxu0
      %v6683 = vadd.f32 0.0, %v6682
      %v6684 = vpop.f32.mrf.mxu0
      %6685 = vmatprep.mubr.bf16.mxu0 0
      %6686 = vmatmul.mubr.bf16.gmra.mxu0 %v6620
      %v6687 = vpop.f32.mrf.mxu0
      %v6688 = vadd.f32 0.0, %v6687
      %v6689 = vpop.f32.mrf.mxu0
      %v6690 = vpop.f32.mrf.mxu0
      %v6691 = vadd.f32 0.0, %v6690
      %v6692 = vpop.f32.mrf.mxu0
      %6693 = vmatprep.mubr.bf16.mxu0 0
      %6694 = vmatmul.mubr.bf16.gmra.mxu0 %v6623
      %v6695 = vpop.f32.mrf.mxu0
      %v6696 = vadd.f32 0.0, %v6695
      %v6697 = vpop.f32.mrf.mxu0
      %v6698 = vpop.f32.mrf.mxu0
      %v6699 = vpop.f32.mrf.mxu0
      %6700 = vdwg.mxu0
      %6701 = vrot.lane.b32.xlu0 %v1675, 112
      %v6702 = vpop.permute.xlu0 %6701
      %6703 = vrot.lane.b32.xlu0 %v1676, 112
      %v6704 = vpop.permute.xlu0 %6703
      %6705 = vrot.lane.b32.xlu0 %v1677, 112
      %v6706 = vpop.permute.xlu0 %6705
      %6707 = vrot.lane.b32.xlu0 %v1678, 112
      %v6708 = vpop.permute.xlu0 %6707
      %6709 = vrot.lane.b32.xlu0 %v2947, 80
      %v6710 = vpop.permute.xlu0 %6709
      %6711 = vrot.lane.b32.xlu0 %v2948, 80
      %v6712 = vpop.permute.xlu0 %6711
      %6713 = vrot.lane.b32.xlu0 %v2949, 80
      %v6714 = vpop.permute.xlu0 %6713
      %6715 = vrot.lane.b32.xlu0 %v2950, 80
      %v6716 = vpop.permute.xlu0 %6715
      %v6718 = vsel %vm4215, %v6702, 0
      %v6721 = vsel %vm4215, %v6704, 0
      %v6724 = vsel %vm4215, %v6706, 0
      %v6727 = vsel %vm4215, %v6708, 0
      %v6730 = vsel %vm4215, %v6710, 0
      %v6733 = vsel %vm4215, %v6712, 0
      %v6736 = vsel %vm4215, %v6714, 0
      %v6739 = vsel %vm4215, %v6716, 0
      %6741 = vmatprep.subr.bf16.mxu0 0
      %6742 = vmatpush1.bf16.xpose.msra.mxu0 0
      %6743 = vmatprep.subr.bf16.mxu0 0
      %6744 = vmatpush1.bf16.xpose.msra.mxu0 0
      %6745 = vmatprep.subr.bf16.mxu0 0
      %6746 = vmatpush1.bf16.xpose.msra.mxu0 0
      %6747 = vmatprep.subr.bf16.mxu0 0
      %6748 = vmatpush1.bf16.xpose.msra.mxu0 0
      %6749 = vmatprep.subr.bf16.mxu0 0
      %6750 = vmatpush1.bf16.xpose.msra.mxu0 %v6739
      %6751 = vmatprep.subr.bf16.mxu0 0
      %6752 = vmatpush1.bf16.xpose.msra.mxu0 %v6736
      %6753 = vmatprep.subr.bf16.mxu0 0
      %6754 = vmatpush1.bf16.xpose.msra.mxu0 %v6733
      %6755 = vmatprep.subr.bf16.mxu0 0
      %6756 = vmatpush1.bf16.xpose.msra.mxu0 %v6730
      %6757 = vmatprep.subr.bf16.mxu0 0
      %6758 = vmatpush2.bf16.xpose.msra.mxu0 0
      %6759 = vmatprep.subr.bf16.mxu0 0
      %6760 = vmatpush2.bf16.xpose.msra.mxu0 0
      %6761 = vmatprep.subr.bf16.mxu0 0
      %6762 = vmatpush2.bf16.xpose.msra.mxu0 0
      %6763 = vmatprep.subr.bf16.mxu0 0
      %6764 = vmatpush2.bf16.xpose.msra.mxu0 0
      %6765 = vmatprep.subr.bf16.mxu0 0
      %6766 = vmatpush2.bf16.xpose.msra.mxu0 0
      %6767 = vmatprep.subr.bf16.mxu0 0
      %6768 = vmatpush2.bf16.xpose.msra.mxu0 0
      %6769 = vmatprep.subr.bf16.mxu0 0
      %6770 = vmatpush2.bf16.xpose.msra.mxu0 0
      %6771 = vmatprep.subr.bf16.mxu0 0
      %6772 = vmatpush2.bf16.xpose.msra.mxu0 0
      %6773 = vmatprep.mubr.bf16.mxu0 0
      %6774 = vmatmul.mubr.bf16.gmra.mxu0 %v6718
      %v6775 = vpop.f32.mrf.mxu0
      %v6776 = vadd.f32 0.0, %v6775
      %v6777 = vpop.f32.mrf.mxu0
      %v6778 = vpop.f32.mrf.mxu0
      %v6779 = vadd.f32 0.0, %v6778
      %v6780 = vpop.f32.mrf.mxu0
      %6781 = vmatprep.mubr.bf16.mxu0 0
      %6782 = vmatmul.mubr.bf16.gmra.mxu0 %v6721
      %v6783 = vpop.f32.mrf.mxu0
      %v6784 = vadd.f32 0.0, %v6783
      %v6785 = vpop.f32.mrf.mxu0
      %v6786 = vpop.f32.mrf.mxu0
      %v6787 = vadd.f32 0.0, %v6786
      %v6788 = vpop.f32.mrf.mxu0
      %6789 = vmatprep.mubr.bf16.mxu0 0
      %6790 = vmatmul.mubr.bf16.gmra.mxu0 %v6724
      %v6791 = vpop.f32.mrf.mxu0
      %v6792 = vadd.f32 0.0, %v6791
      %v6793 = vpop.f32.mrf.mxu0
      %v6794 = vpop.f32.mrf.mxu0
      %v6795 = vadd.f32 0.0, %v6794
      %v6796 = vpop.f32.mrf.mxu0
      %6797 = vmatprep.mubr.bf16.mxu0 0
      %6798 = vmatmul.mubr.bf16.gmra.mxu0 %v6727
      %v6799 = vpop.f32.mrf.mxu0
      %v6800 = vadd.f32 0.0, %v6799
      %v6801 = vpop.f32.mrf.mxu0
      %v6802 = vpop.f32.mrf.mxu0
      %v6803 = vpop.f32.mrf.mxu0
      %6804 = vdwg.mxu0
      %6805 = vrot.lane.b32.xlu0 %v1679, 112
      %v6806 = vpop.permute.xlu0 %6805
      %6807 = vrot.lane.b32.xlu0 %v1680, 112
      %v6808 = vpop.permute.xlu0 %6807
      %6809 = vrot.lane.b32.xlu0 %v1681, 112
      %v6810 = vpop.permute.xlu0 %6809
      %6811 = vrot.lane.b32.xlu0 %v1682, 112
      %v6812 = vpop.permute.xlu0 %6811
      %6813 = vrot.lane.b32.xlu0 %v2951, 80
      %v6814 = vpop.permute.xlu0 %6813
      %6815 = vrot.lane.b32.xlu0 %v2952, 80
      %v6816 = vpop.permute.xlu0 %6815
      %6817 = vrot.lane.b32.xlu0 %v2953, 80
      %v6818 = vpop.permute.xlu0 %6817
      %6819 = vrot.lane.b32.xlu0 %v2954, 80
      %v6820 = vpop.permute.xlu0 %6819
      %v6822 = vsel %vm4215, %v6806, 0
      %v6825 = vsel %vm4215, %v6808, 0
      %v6828 = vsel %vm4215, %v6810, 0
      %v6831 = vsel %vm4215, %v6812, 0
      %v6834 = vsel %vm4215, %v6814, 0
      %v6837 = vsel %vm4215, %v6816, 0
      %v6840 = vsel %vm4215, %v6818, 0
      %v6843 = vsel %vm4215, %v6820, 0
      %6845 = vmatprep.subr.bf16.mxu0 0
      %6846 = vmatpush1.bf16.xpose.msra.mxu0 0
      %6847 = vmatprep.subr.bf16.mxu0 0
      %6848 = vmatpush1.bf16.xpose.msra.mxu0 0
      %6849 = vmatprep.subr.bf16.mxu0 0
      %6850 = vmatpush1.bf16.xpose.msra.mxu0 0
      %6851 = vmatprep.subr.bf16.mxu0 0
      %6852 = vmatpush1.bf16.xpose.msra.mxu0 0
      %6853 = vmatprep.subr.bf16.mxu0 0
      %6854 = vmatpush1.bf16.xpose.msra.mxu0 %v6843
      %6855 = vmatprep.subr.bf16.mxu0 0
      %6856 = vmatpush1.bf16.xpose.msra.mxu0 %v6840
      %6857 = vmatprep.subr.bf16.mxu0 0
      %6858 = vmatpush1.bf16.xpose.msra.mxu0 %v6837
      %6859 = vmatprep.subr.bf16.mxu0 0
      %6860 = vmatpush1.bf16.xpose.msra.mxu0 %v6834
      %6861 = vmatprep.subr.bf16.mxu0 0
      %6862 = vmatpush2.bf16.xpose.msra.mxu0 0
      %6863 = vmatprep.subr.bf16.mxu0 0
      %6864 = vmatpush2.bf16.xpose.msra.mxu0 0
      %6865 = vmatprep.subr.bf16.mxu0 0
      %6866 = vmatpush2.bf16.xpose.msra.mxu0 0
      %6867 = vmatprep.subr.bf16.mxu0 0
      %6868 = vmatpush2.bf16.xpose.msra.mxu0 0
      %6869 = vmatprep.subr.bf16.mxu0 0
      %6870 = vmatpush2.bf16.xpose.msra.mxu0 0
      %6871 = vmatprep.subr.bf16.mxu0 0
      %6872 = vmatpush2.bf16.xpose.msra.mxu0 0
      %6873 = vmatprep.subr.bf16.mxu0 0
      %6874 = vmatpush2.bf16.xpose.msra.mxu0 0
      %6875 = vmatprep.subr.bf16.mxu0 0
      %6876 = vmatpush2.bf16.xpose.msra.mxu0 0
      %6877 = vmatprep.mubr.bf16.mxu0 0
      %6878 = vmatmul.mubr.bf16.gmra.mxu0 %v6822
      %v6879 = vpop.f32.mrf.mxu0
      %v6880 = vadd.f32 0.0, %v6879
      %v6881 = vpop.f32.mrf.mxu0
      %v6882 = vpop.f32.mrf.mxu0
      %v6883 = vadd.f32 0.0, %v6882
      %v6884 = vpop.f32.mrf.mxu0
      %6885 = vmatprep.mubr.bf16.mxu0 0
      %6886 = vmatmul.mubr.bf16.gmra.mxu0 %v6825
      %v6887 = vpop.f32.mrf.mxu0
      %v6888 = vadd.f32 0.0, %v6887
      %v6889 = vpop.f32.mrf.mxu0
      %v6890 = vpop.f32.mrf.mxu0
      %v6891 = vadd.f32 0.0, %v6890
      %v6892 = vpop.f32.mrf.mxu0
      %6893 = vmatprep.mubr.bf16.mxu0 0
      %6894 = vmatmul.mubr.bf16.gmra.mxu0 %v6828
      %v6895 = vpop.f32.mrf.mxu0
      %v6896 = vadd.f32 0.0, %v6895
      %v6897 = vpop.f32.mrf.mxu0
      %v6898 = vpop.f32.mrf.mxu0
      %v6899 = vadd.f32 0.0, %v6898
      %v6900 = vpop.f32.mrf.mxu0
      %6901 = vmatprep.mubr.bf16.mxu0 0
      %6902 = vmatmul.mubr.bf16.gmra.mxu0 %v6831
      %v6903 = vpop.f32.mrf.mxu0
      %v6904 = vadd.f32 0.0, %v6903
      %v6905 = vpop.f32.mrf.mxu0
      %v6906 = vpop.f32.mrf.mxu0
      %v6907 = vpop.f32.mrf.mxu0
      %6908 = vdwg.mxu0
      %6909 = vrot.lane.b32.xlu0 %v1683, 112
      %v6910 = vpop.permute.xlu0 %6909
      %6911 = vrot.lane.b32.xlu0 %v1684, 112
      %v6912 = vpop.permute.xlu0 %6911
      %6913 = vrot.lane.b32.xlu0 %v1685, 112
      %v6914 = vpop.permute.xlu0 %6913
      %6915 = vrot.lane.b32.xlu0 %v1686, 112
      %v6916 = vpop.permute.xlu0 %6915
      %6917 = vrot.lane.b32.xlu0 %v2955, 80
      %v6918 = vpop.permute.xlu0 %6917
      %6919 = vrot.lane.b32.xlu0 %v2956, 80
      %v6920 = vpop.permute.xlu0 %6919
      %6921 = vrot.lane.b32.xlu0 %v2957, 80
      %v6922 = vpop.permute.xlu0 %6921
      %6923 = vrot.lane.b32.xlu0 %v2958, 80
      %v6924 = vpop.permute.xlu0 %6923
      %v6926 = vsel %vm4215, %v6910, 0
      %v6929 = vsel %vm4215, %v6912, 0
      %v6932 = vsel %vm4215, %v6914, 0
      %v6935 = vsel %vm4215, %v6916, 0
      %v6938 = vsel %vm4215, %v6918, 0
      %v6941 = vsel %vm4215, %v6920, 0
      %v6944 = vsel %vm4215, %v6922, 0
      %v6947 = vsel %vm4215, %v6924, 0
      %6949 = vmatprep.subr.bf16.mxu0 0
      %6950 = vmatpush1.bf16.xpose.msra.mxu0 0
      %6951 = vmatprep.subr.bf16.mxu0 0
      %6952 = vmatpush1.bf16.xpose.msra.mxu0 0
      %6953 = vmatprep.subr.bf16.mxu0 0
      %6954 = vmatpush1.bf16.xpose.msra.mxu0 0
      %6955 = vmatprep.subr.bf16.mxu0 0
      %6956 = vmatpush1.bf16.xpose.msra.mxu0 0
      %6957 = vmatprep.subr.bf16.mxu0 0
      %6958 = vmatpush1.bf16.xpose.msra.mxu0 %v6947
      %6959 = vmatprep.subr.bf16.mxu0 0
      %6960 = vmatpush1.bf16.xpose.msra.mxu0 %v6944
      %6961 = vmatprep.subr.bf16.mxu0 0
      %6962 = vmatpush1.bf16.xpose.msra.mxu0 %v6941
      %6963 = vmatprep.subr.bf16.mxu0 0
      %6964 = vmatpush1.bf16.xpose.msra.mxu0 %v6938
      %6965 = vmatprep.subr.bf16.mxu0 0
      %6966 = vmatpush2.bf16.xpose.msra.mxu0 0
      %6967 = vmatprep.subr.bf16.mxu0 0
      %6968 = vmatpush2.bf16.xpose.msra.mxu0 0
      %6969 = vmatprep.subr.bf16.mxu0 0
      %6970 = vmatpush2.bf16.xpose.msra.mxu0 0
      %6971 = vmatprep.subr.bf16.mxu0 0
      %6972 = vmatpush2.bf16.xpose.msra.mxu0 0
      %6973 = vmatprep.subr.bf16.mxu0 0
      %6974 = vmatpush2.bf16.xpose.msra.mxu0 0
      %6975 = vmatprep.subr.bf16.mxu0 0
      %6976 = vmatpush2.bf16.xpose.msra.mxu0 0
      %6977 = vmatprep.subr.bf16.mxu0 0
      %6978 = vmatpush2.bf16.xpose.msra.mxu0 0
      %6979 = vmatprep.subr.bf16.mxu0 0
      %6980 = vmatpush2.bf16.xpose.msra.mxu0 0
      %6981 = vmatprep.mubr.bf16.mxu0 0
      %6982 = vmatmul.mubr.bf16.gmra.mxu0 %v6926
      %v6983 = vpop.f32.mrf.mxu0
      %v6984 = vadd.f32 0.0, %v6983
      %v6985 = vpop.f32.mrf.mxu0
      %v6986 = vpop.f32.mrf.mxu0
      %v6987 = vadd.f32 0.0, %v6986
      %v6988 = vpop.f32.mrf.mxu0
      %6989 = vmatprep.mubr.bf16.mxu0 0
      %6990 = vmatmul.mubr.bf16.gmra.mxu0 %v6929
      %v6991 = vpop.f32.mrf.mxu0
      %v6992 = vadd.f32 0.0, %v6991
      %v6993 = vpop.f32.mrf.mxu0
      %v6994 = vpop.f32.mrf.mxu0
      %v6995 = vadd.f32 0.0, %v6994
      %v6996 = vpop.f32.mrf.mxu0
      %6997 = vmatprep.mubr.bf16.mxu0 0
      %6998 = vmatmul.mubr.bf16.gmra.mxu0 %v6932
      %v6999 = vpop.f32.mrf.mxu0
      %v7000 = vadd.f32 0.0, %v6999
      %v7001 = vpop.f32.mrf.mxu0
      %v7002 = vpop.f32.mrf.mxu0
      %v7003 = vadd.f32 0.0, %v7002
      %v7004 = vpop.f32.mrf.mxu0
      %7005 = vmatprep.mubr.bf16.mxu0 0
      %7006 = vmatmul.mubr.bf16.gmra.mxu0 %v6935
      %v7007 = vpop.f32.mrf.mxu0
      %v7008 = vadd.f32 0.0, %v7007
      %v7009 = vpop.f32.mrf.mxu0
      %v7010 = vpop.f32.mrf.mxu0
      %v7011 = vpop.f32.mrf.mxu0
      %7012 = vdwg.mxu0
      %v7013 = vsel %vm4604, %v6672, -inf
      %7014 = vmax.xlane.f32.xlu0 %v7013
      %v7015 = vpop.xlane.xlu0 %7014
      %v7016 = vsel %vm4604, %v6675, -inf
      %7017 = vmax.xlane.f32.xlu0 %v7016
      %v7018 = vpop.xlane.xlu0 %7017
      %v7019 = vsel %vm4604, %v6680, -inf
      %7020 = vmax.xlane.f32.xlu0 %v7019
      %v7021 = vpop.xlane.xlu0 %7020
      %v7022 = vsel %vm4604, %v6683, -inf
      %7023 = vmax.xlane.f32.xlu0 %v7022
      %v7024 = vpop.xlane.xlu0 %7023
      %v7025 = vsel %vm4604, %v6688, -inf
      %7026 = vmax.xlane.f32.xlu0 %v7025
      %v7027 = vpop.xlane.xlu0 %7026
      %v7028 = vsel %vm4604, %v6691, -inf
      %7029 = vmax.xlane.f32.xlu0 %v7028
      %v7030 = vpop.xlane.xlu0 %7029
      %v7031 = vsel %vm4623, %v6696, -inf
      %7032 = vmax.xlane.f32.xlu0 %v7031
      %v7033 = vpop.xlane.xlu0 %7032
      %v7034 = vsel %vm4604, %v6776, -inf
      %7035 = vmax.xlane.f32.xlu0 %v7034
      %v7036 = vpop.xlane.xlu0 %7035
      %v7037 = vsel %vm4604, %v6779, -inf
      %7038 = vmax.xlane.f32.xlu0 %v7037
      %v7039 = vpop.xlane.xlu0 %7038
      %v7040 = vsel %vm4604, %v6784, -inf
      %7041 = vmax.xlane.f32.xlu0 %v7040
      %v7042 = vpop.xlane.xlu0 %7041
      %v7043 = vsel %vm4604, %v6787, -inf
      %7044 = vmax.xlane.f32.xlu0 %v7043
      %v7045 = vpop.xlane.xlu0 %7044
      %v7046 = vsel %vm4604, %v6792, -inf
      %7047 = vmax.xlane.f32.xlu0 %v7046
      %v7048 = vpop.xlane.xlu0 %7047
      %v7049 = vsel %vm4604, %v6795, -inf
      %7050 = vmax.xlane.f32.xlu0 %v7049
      %v7051 = vpop.xlane.xlu0 %7050
      %v7052 = vsel %vm4623, %v6800, -inf
      %7053 = vmax.xlane.f32.xlu0 %v7052
      %v7054 = vpop.xlane.xlu0 %7053
      %v7055 = vsel %vm4604, %v6880, -inf
      %7056 = vmax.xlane.f32.xlu0 %v7055
      %v7057 = vpop.xlane.xlu0 %7056
      %v7058 = vsel %vm4604, %v6883, -inf
      %7059 = vmax.xlane.f32.xlu0 %v7058
      %v7060 = vpop.xlane.xlu0 %7059
      %v7061 = vsel %vm4604, %v6888, -inf
      %7062 = vmax.xlane.f32.xlu0 %v7061
      %v7063 = vpop.xlane.xlu0 %7062
      %v7064 = vsel %vm4604, %v6891, -inf
      %7065 = vmax.xlane.f32.xlu0 %v7064
      %v7066 = vpop.xlane.xlu0 %7065
      %v7067 = vsel %vm4604, %v6896, -inf
      %7068 = vmax.xlane.f32.xlu0 %v7067
      %v7069 = vpop.xlane.xlu0 %7068
      %v7070 = vsel %vm4604, %v6899, -inf
      %7071 = vmax.xlane.f32.xlu0 %v7070
      %v7072 = vpop.xlane.xlu0 %7071
      %v7073 = vsel %vm4623, %v6904, -inf
      %7074 = vmax.xlane.f32.xlu0 %v7073
      %v7075 = vpop.xlane.xlu0 %7074
      %v7076 = vsel %vm4604, %v6984, -inf
      %7077 = vmax.xlane.f32.xlu0 %v7076
      %v7078 = vpop.xlane.xlu0 %7077
      %v7079 = vsel %vm4604, %v6987, -inf
      %7080 = vmax.xlane.f32.xlu0 %v7079
      %v7081 = vpop.xlane.xlu0 %7080
      %v7082 = vsel %vm4604, %v6992, -inf
      %7083 = vmax.xlane.f32.xlu0 %v7082
      %v7084 = vpop.xlane.xlu0 %7083
      %v7085 = vsel %vm4604, %v6995, -inf
      %7086 = vmax.xlane.f32.xlu0 %v7085
      %v7087 = vpop.xlane.xlu0 %7086
      %v7088 = vsel %vm4604, %v7000, -inf
      %7089 = vmax.xlane.f32.xlu0 %v7088
      %v7090 = vpop.xlane.xlu0 %7089
      %v7091 = vsel %vm4604, %v7003, -inf
      %7092 = vmax.xlane.f32.xlu0 %v7091
      %v7093 = vpop.xlane.xlu0 %7092
      %v7094 = vsel %vm4623, %v7008, -inf
      %7095 = vmax.xlane.f32.xlu0 %v7094
      %v7096 = vpop.xlane.xlu0 %7095
      %v7097 = vsub.f32 %v6672, %v7015
      %v7098 = vsub.f32 %v6675, %v7018
      %v7099 = vsub.f32 %v6680, %v7021
      %v7100 = vsub.f32 %v6683, %v7024
      %v7101 = vsub.f32 %v6688, %v7027
      %v7102 = vsub.f32 %v6691, %v7030
      %v7103 = vsub.f32 %v6696, %v7033
      %v7104 = vsub.f32 %v6776, %v7036
      %v7105 = vsub.f32 %v6779, %v7039
      %v7106 = vsub.f32 %v6784, %v7042
      %v7107 = vsub.f32 %v6787, %v7045
      %v7108 = vsub.f32 %v6792, %v7048
      %v7109 = vsub.f32 %v6795, %v7051
      %v7110 = vsub.f32 %v6800, %v7054
      %v7111 = vsub.f32 %v6880, %v7057
      %v7112 = vsub.f32 %v6883, %v7060
      %v7113 = vsub.f32 %v6888, %v7063
      %v7114 = vsub.f32 %v6891, %v7066
      %v7115 = vsub.f32 %v6896, %v7069
      %v7116 = vsub.f32 %v6899, %v7072
      %v7117 = vsub.f32 %v6904, %v7075
      %v7118 = vsub.f32 %v6984, %v7078
      %v7119 = vsub.f32 %v6987, %v7081
      %v7120 = vsub.f32 %v6992, %v7084
      %v7121 = vsub.f32 %v6995, %v7087
      %v7122 = vsub.f32 %v7000, %v7090
      %v7123 = vsub.f32 %v7003, %v7093
      %v7124 = vsub.f32 %v7008, %v7096
      %v7125 = vmul.f32 %v7097, 1.442695
      %v7126 = vpow.pop %v7125
      %v7127 = vmul.f32 %v7098, 1.442695
      %v7128 = vpow.pop %v7127
      %v7129 = vmul.f32 %v7099, 1.442695
      %v7130 = vpow.pop %v7129
      %v7131 = vmul.f32 %v7100, 1.442695
      %v7132 = vpow.pop %v7131
      %v7133 = vmul.f32 %v7101, 1.442695
      %v7134 = vpow.pop %v7133
      %v7135 = vmul.f32 %v7102, 1.442695
      %v7136 = vpow.pop %v7135
      %v7137 = vmul.f32 %v7103, 1.442695
      %v7138 = vpow.pop %v7137
      %v7139 = vmul.f32 %v7104, 1.442695
      %v7140 = vpow.pop %v7139
      %v7141 = vmul.f32 %v7105, 1.442695
      %v7142 = vpow.pop %v7141
      %v7143 = vmul.f32 %v7106, 1.442695
      %v7144 = vpow.pop %v7143
      %v7145 = vmul.f32 %v7107, 1.442695
      %v7146 = vpow.pop %v7145
      %v7147 = vmul.f32 %v7108, 1.442695
      %v7148 = vpow.pop %v7147
      %v7149 = vmul.f32 %v7109, 1.442695
      %v7150 = vpow.pop %v7149
      %v7151 = vmul.f32 %v7110, 1.442695
      %v7152 = vpow.pop %v7151
      %v7153 = vmul.f32 %v7111, 1.442695
      %v7154 = vpow.pop %v7153
      %v7155 = vmul.f32 %v7112, 1.442695
      %v7156 = vpow.pop %v7155
      %v7157 = vmul.f32 %v7113, 1.442695
      %v7158 = vpow.pop %v7157
      %v7159 = vmul.f32 %v7114, 1.442695
      %v7160 = vpow.pop %v7159
      %v7161 = vmul.f32 %v7115, 1.442695
      %v7162 = vpow.pop %v7161
      %v7163 = vmul.f32 %v7116, 1.442695
      %v7164 = vpow.pop %v7163
      %v7165 = vmul.f32 %v7117, 1.442695
      %v7166 = vpow.pop %v7165
      %v7167 = vmul.f32 %v7118, 1.442695
      %v7168 = vpow.pop %v7167
      %v7169 = vmul.f32 %v7119, 1.442695
      %v7170 = vpow.pop %v7169
      %v7171 = vmul.f32 %v7120, 1.442695
      %v7172 = vpow.pop %v7171
      %v7173 = vmul.f32 %v7121, 1.442695
      %v7174 = vpow.pop %v7173
      %v7175 = vmul.f32 %v7122, 1.442695
      %v7176 = vpow.pop %v7175
      %v7177 = vmul.f32 %v7123, 1.442695
      %v7178 = vpow.pop %v7177
      %v7179 = vmul.f32 %v7124, 1.442695
      %v7180 = vpow.pop %v7179
      %v7181 = vsel %vm4604, %v7126, 0.0
      %7182 = vadd.xlane.f32.xlu0 %v7181
      %v7183 = vpop.xlane.xlu0 %7182
      %v7184 = vsel %vm4604, %v7128, 0.0
      %7185 = vadd.xlane.f32.xlu0 %v7184
      %v7186 = vpop.xlane.xlu0 %7185
      %v7187 = vsel %vm4604, %v7130, 0.0
      %7188 = vadd.xlane.f32.xlu0 %v7187
      %v7189 = vpop.xlane.xlu0 %7188
      %v7190 = vsel %vm4604, %v7132, 0.0
      %7191 = vadd.xlane.f32.xlu0 %v7190
      %v7192 = vpop.xlane.xlu0 %7191
      %v7193 = vsel %vm4604, %v7134, 0.0
      %7194 = vadd.xlane.f32.xlu0 %v7193
      %v7195 = vpop.xlane.xlu0 %7194
      %v7196 = vsel %vm4604, %v7136, 0.0
      %7197 = vadd.xlane.f32.xlu0 %v7196
      %v7198 = vpop.xlane.xlu0 %7197
      %v7199 = vsel %vm4623, %v7138, 0.0
      %7200 = vadd.xlane.f32.xlu0 %v7199
      %v7201 = vpop.xlane.xlu0 %7200
      %v7202 = vsel %vm4604, %v7140, 0.0
      %7203 = vadd.xlane.f32.xlu0 %v7202
      %v7204 = vpop.xlane.xlu0 %7203
      %v7205 = vsel %vm4604, %v7142, 0.0
      %7206 = vadd.xlane.f32.xlu0 %v7205
      %v7207 = vpop.xlane.xlu0 %7206
      %v7208 = vsel %vm4604, %v7144, 0.0
      %7209 = vadd.xlane.f32.xlu0 %v7208
      %v7210 = vpop.xlane.xlu0 %7209
      %v7211 = vsel %vm4604, %v7146, 0.0
      %7212 = vadd.xlane.f32.xlu0 %v7211
      %v7213 = vpop.xlane.xlu0 %7212
      %v7214 = vsel %vm4604, %v7148, 0.0
      %7215 = vadd.xlane.f32.xlu0 %v7214
      %v7216 = vpop.xlane.xlu0 %7215
      %v7217 = vsel %vm4604, %v7150, 0.0
      %7218 = vadd.xlane.f32.xlu0 %v7217
      %v7219 = vpop.xlane.xlu0 %7218
      %v7220 = vsel %vm4623, %v7152, 0.0
      %7221 = vadd.xlane.f32.xlu0 %v7220
      %v7222 = vpop.xlane.xlu0 %7221
      %v7223 = vsel %vm4604, %v7154, 0.0
      %7224 = vadd.xlane.f32.xlu0 %v7223
      %v7225 = vpop.xlane.xlu0 %7224
      %v7226 = vsel %vm4604, %v7156, 0.0
      %7227 = vadd.xlane.f32.xlu0 %v7226
      %v7228 = vpop.xlane.xlu0 %7227
      %v7229 = vsel %vm4604, %v7158, 0.0
      %7230 = vadd.xlane.f32.xlu0 %v7229
      %v7231 = vpop.xlane.xlu0 %7230
      %v7232 = vsel %vm4604, %v7160, 0.0
      %7233 = vadd.xlane.f32.xlu0 %v7232
      %v7234 = vpop.xlane.xlu0 %7233
      %v7235 = vsel %vm4604, %v7162, 0.0
      %7236 = vadd.xlane.f32.xlu0 %v7235
      %v7237 = vpop.xlane.xlu0 %7236
      %v7238 = vsel %vm4604, %v7164, 0.0
      %7239 = vadd.xlane.f32.xlu0 %v7238
      %v7240 = vpop.xlane.xlu0 %7239
      %v7241 = vsel %vm4623, %v7166, 0.0
      %7242 = vadd.xlane.f32.xlu0 %v7241
      %v7243 = vpop.xlane.xlu0 %7242
      %v7244 = vsel %vm4604, %v7168, 0.0
      %7245 = vadd.xlane.f32.xlu0 %v7244
      %v7246 = vpop.xlane.xlu0 %7245
      %v7247 = vsel %vm4604, %v7170, 0.0
      %7248 = vadd.xlane.f32.xlu0 %v7247
      %v7249 = vpop.xlane.xlu0 %7248
      %v7250 = vsel %vm4604, %v7172, 0.0
      %7251 = vadd.xlane.f32.xlu0 %v7250
      %v7252 = vpop.xlane.xlu0 %7251
      %v7253 = vsel %vm4604, %v7174, 0.0
      %7254 = vadd.xlane.f32.xlu0 %v7253
      %v7255 = vpop.xlane.xlu0 %7254
      %v7256 = vsel %vm4604, %v7176, 0.0
      %7257 = vadd.xlane.f32.xlu0 %v7256
      %v7258 = vpop.xlane.xlu0 %7257
      %v7259 = vsel %vm4604, %v7178, 0.0
      %7260 = vadd.xlane.f32.xlu0 %v7259
      %v7261 = vpop.xlane.xlu0 %7260
      %v7262 = vsel %vm4623, %v7180, 0.0
      %7263 = vadd.xlane.f32.xlu0 %v7262
      %v7264 = vpop.xlane.xlu0 %7263
      %v7265 = vrcp.pop %v7183
      %v7266 = vrcp.pop %v7186
      %v7267 = vrcp.pop %v7189
      %v7268 = vrcp.pop %v7192
      %v7269 = vrcp.pop %v7195
      %v7270 = vrcp.pop %v7198
      %v7271 = vrcp.pop %v7201
      %v7272 = vrcp.pop %v7204
      %v7273 = vrcp.pop %v7207
      %v7274 = vrcp.pop %v7210
      %v7275 = vrcp.pop %v7213
      %v7276 = vrcp.pop %v7216
      %v7277 = vrcp.pop %v7219
      %v7278 = vrcp.pop %v7222
      %v7279 = vrcp.pop %v7225
      %v7280 = vrcp.pop %v7228
      %v7281 = vrcp.pop %v7231
      %v7282 = vrcp.pop %v7234
      %v7283 = vrcp.pop %v7237
      %v7284 = vrcp.pop %v7240
      %v7285 = vrcp.pop %v7243
      %v7286 = vrcp.pop %v7246
      %v7287 = vrcp.pop %v7249
      %v7288 = vrcp.pop %v7252
      %v7289 = vrcp.pop %v7255
      %v7290 = vrcp.pop %v7258
      %v7291 = vrcp.pop %v7261
      %v7292 = vrcp.pop %v7264
      %v7293 = vmul.f32 %v7126, %v7265
      %v7294 = vmul.f32 %v7128, %v7266
      %v7295 = vmul.f32 %v7130, %v7267
      %v7296 = vmul.f32 %v7132, %v7268
      %v7297 = vmul.f32 %v7134, %v7269
      %v7298 = vmul.f32 %v7136, %v7270
      %v7299 = vmul.f32 %v7138, %v7271
      %v7300 = vmul.f32 %v7140, %v7272
      %v7301 = vmul.f32 %v7142, %v7273
      %v7302 = vmul.f32 %v7144, %v7274
      %v7303 = vmul.f32 %v7146, %v7275
      %v7304 = vmul.f32 %v7148, %v7276
      %v7305 = vmul.f32 %v7150, %v7277
      %v7306 = vmul.f32 %v7152, %v7278
      %v7307 = vmul.f32 %v7154, %v7279
      %v7308 = vmul.f32 %v7156, %v7280
      %v7309 = vmul.f32 %v7158, %v7281
      %v7310 = vmul.f32 %v7160, %v7282
      %v7311 = vmul.f32 %v7162, %v7283
      %v7312 = vmul.f32 %v7164, %v7284
      %v7313 = vmul.f32 %v7166, %v7285
      %v7314 = vmul.f32 %v7168, %v7286
      %v7315 = vmul.f32 %v7170, %v7287
      %v7316 = vmul.f32 %v7172, %v7288
      %v7317 = vmul.f32 %v7174, %v7289
      %v7318 = vmul.f32 %v7176, %v7290
      %v7319 = vmul.f32 %v7178, %v7291
      %v7320 = vmul.f32 %v7180, %v7292
      %v7321 = vpack.c.bf16 %v7294, %v7293
      %v7322 = vpack.c.bf16 %v7296, %v7295
      %v7323 = vpack.c.bf16 %v7298, %v7297
      %v7324 = vpack.c.bf16 %v7299, %v7299
      %v7325 = vpack.c.bf16 %v7301, %v7300
      %v7326 = vpack.c.bf16 %v7303, %v7302
      %v7327 = vpack.c.bf16 %v7305, %v7304
      %v7328 = vpack.c.bf16 %v7306, %v7306
      %v7329 = vpack.c.bf16 %v7308, %v7307
      %v7330 = vpack.c.bf16 %v7310, %v7309
      %v7331 = vpack.c.bf16 %v7312, %v7311
      %v7332 = vpack.c.bf16 %v7313, %v7313
      %v7333 = vpack.c.bf16 %v7315, %v7314
      %v7334 = vpack.c.bf16 %v7317, %v7316
      %v7335 = vpack.c.bf16 %v7319, %v7318
      %v7336 = vpack.c.bf16 %v7320, %v7320
      %7337 = vrot.lane.b32.xlu0 %v4187, 48
      %v7338 = vpop.permute.xlu0 %7337
      %7339 = vrot.lane.b32.xlu0 %v4188, 48
      %v7340 = vpop.permute.xlu0 %7339
      %7341 = vrot.lane.b32.xlu0 %v4189, 48
      %v7342 = vpop.permute.xlu0 %7341
      %7343 = vrot.lane.b32.xlu0 %v4190, 48
      %v7344 = vpop.permute.xlu0 %7343
      %v7349 = vsel %vm4604, %v7321, 0
      %v7352 = vsel %vm4604, %v7322, 0
      %v7355 = vsel %vm4604, %v7323, 0
      %v7358 = vsel %vm4604, %v7324, 0
      %v7361 = vand.u32 %v7344, %v4960
      %7363 = vmatprep.subr.bf16.mxu0 0
      %7364 = vmatpush1.bf16.msra.mxu0 0
      %7365 = vmatprep.subr.bf16.mxu0 0
      %7366 = vmatpush1.bf16.msra.mxu0 0
      %7367 = vmatprep.subr.bf16.mxu0 0
      %7368 = vmatpush1.bf16.msra.mxu0 0
      %7369 = vmatprep.subr.bf16.mxu0 0
      %7370 = vmatpush1.bf16.msra.mxu0 0
      %7371 = vmatprep.subr.bf16.mxu0 0
      %7372 = vmatpush1.bf16.msra.mxu0 %v7361
      %7373 = vmatprep.subr.bf16.mxu0 0
      %7374 = vmatpush1.bf16.msra.mxu0 %v7342
      %7375 = vmatprep.subr.bf16.mxu0 0
      %7376 = vmatpush1.bf16.msra.mxu0 %v7340
      %7377 = vmatprep.subr.bf16.mxu0 0
      %7378 = vmatpush1.bf16.msra.mxu0 %v7338
      %7379 = vmatprep.subr.bf16.mxu0 0
      %7380 = vmatpush2.bf16.msra.mxu0 0
      %7381 = vmatprep.subr.bf16.mxu0 0
      %7382 = vmatpush2.bf16.msra.mxu0 0
      %7383 = vmatprep.subr.bf16.mxu0 0
      %7384 = vmatpush2.bf16.msra.mxu0 0
      %7385 = vmatprep.subr.bf16.mxu0 0
      %7386 = vmatpush2.bf16.msra.mxu0 0
      %7387 = vmatprep.subr.bf16.mxu0 0
      %7388 = vmatpush2.bf16.msra.mxu0 0
      %7389 = vmatprep.subr.bf16.mxu0 0
      %7390 = vmatpush2.bf16.msra.mxu0 0
      %7391 = vmatprep.subr.bf16.mxu0 0
      %7392 = vmatpush2.bf16.msra.mxu0 0
      %7393 = vmatprep.subr.bf16.mxu0 0
      %7394 = vmatpush2.bf16.msra.mxu0 0
      %7395 = vmatprep.mubr.bf16.mxu0 0
      %7396 = vmatmul.mubr.bf16.gmra.mxu0 %v7349
      %v7397 = vpop.f32.mrf.mxu0
      %v7398 = vadd.f32 0.0, %v7397
      %v7399 = vpop.f32.mrf.mxu0
      %v7400 = vpop.f32.mrf.mxu0
      %v7401 = vadd.f32 0.0, %v7400
      %v7402 = vpop.f32.mrf.mxu0
      %7403 = vmatprep.mubr.bf16.mxu0 0
      %7404 = vmatmul.mubr.bf16.gmra.mxu0 %v7352
      %v7405 = vpop.f32.mrf.mxu0
      %v7406 = vadd.f32 0.0, %v7405
      %v7407 = vpop.f32.mrf.mxu0
      %v7408 = vpop.f32.mrf.mxu0
      %v7409 = vadd.f32 0.0, %v7408
      %v7410 = vpop.f32.mrf.mxu0
      %7411 = vmatprep.mubr.bf16.mxu0 0
      %7412 = vmatmul.mubr.bf16.gmra.mxu0 %v7355
      %v7413 = vpop.f32.mrf.mxu0
      %v7414 = vadd.f32 0.0, %v7413
      %v7415 = vpop.f32.mrf.mxu0
      %v7416 = vpop.f32.mrf.mxu0
      %v7417 = vadd.f32 0.0, %v7416
      %v7418 = vpop.f32.mrf.mxu0
      %7419 = vmatprep.mubr.bf16.mxu0 0
      %7420 = vmatmul.mubr.bf16.gmra.mxu0 %v7358
      %v7421 = vpop.f32.mrf.mxu0
      %v7422 = vadd.f32 0.0, %v7421
      %v7423 = vpop.f32.mrf.mxu0
      %v7424 = vpop.f32.mrf.mxu0
      %v7425 = vpop.f32.mrf.mxu0
      %7426 = vdwg.mxu0
      %7427 = vrot.lane.b32.xlu0 %v4191, 48
      %v7428 = vpop.permute.xlu0 %7427
      %7429 = vrot.lane.b32.xlu0 %v4192, 48
      %v7430 = vpop.permute.xlu0 %7429
      %7431 = vrot.lane.b32.xlu0 %v4193, 48
      %v7432 = vpop.permute.xlu0 %7431
      %7433 = vrot.lane.b32.xlu0 %v4194, 48
      %v7434 = vpop.permute.xlu0 %7433
      %v7439 = vsel %vm4604, %v7325, 0
      %v7442 = vsel %vm4604, %v7326, 0
      %v7445 = vsel %vm4604, %v7327, 0
      %v7448 = vsel %vm4604, %v7328, 0
      %v7451 = vand.u32 %v7434, %v4960
      %7453 = vmatprep.subr.bf16.mxu0 0
      %7454 = vmatpush1.bf16.msra.mxu0 0
      %7455 = vmatprep.subr.bf16.mxu0 0
      %7456 = vmatpush1.bf16.msra.mxu0 0
      %7457 = vmatprep.subr.bf16.mxu0 0
      %7458 = vmatpush1.bf16.msra.mxu0 0
      %7459 = vmatprep.subr.bf16.mxu0 0
      %7460 = vmatpush1.bf16.msra.mxu0 0
      %7461 = vmatprep.subr.bf16.mxu0 0
      %7462 = vmatpush1.bf16.msra.mxu0 %v7451
      %7463 = vmatprep.subr.bf16.mxu0 0
      %7464 = vmatpush1.bf16.msra.mxu0 %v7432
      %7465 = vmatprep.subr.bf16.mxu0 0
      %7466 = vmatpush1.bf16.msra.mxu0 %v7430
      %7467 = vmatprep.subr.bf16.mxu0 0
      %7468 = vmatpush1.bf16.msra.mxu0 %v7428
      %7469 = vmatprep.subr.bf16.mxu0 0
      %7470 = vmatpush2.bf16.msra.mxu0 0
      %7471 = vmatprep.subr.bf16.mxu0 0
      %7472 = vmatpush2.bf16.msra.mxu0 0
      %7473 = vmatprep.subr.bf16.mxu0 0
      %7474 = vmatpush2.bf16.msra.mxu0 0
      %7475 = vmatprep.subr.bf16.mxu0 0
      %7476 = vmatpush2.bf16.msra.mxu0 0
      %7477 = vmatprep.subr.bf16.mxu0 0
      %7478 = vmatpush2.bf16.msra.mxu0 0
      %7479 = vmatprep.subr.bf16.mxu0 0
      %7480 = vmatpush2.bf16.msra.mxu0 0
      %7481 = vmatprep.subr.bf16.mxu0 0
      %7482 = vmatpush2.bf16.msra.mxu0 0
      %7483 = vmatprep.subr.bf16.mxu0 0
      %7484 = vmatpush2.bf16.msra.mxu0 0
      %7485 = vmatprep.mubr.bf16.mxu0 0
      %7486 = vmatmul.mubr.bf16.gmra.mxu0 %v7439
      %v7487 = vpop.f32.mrf.mxu0
      %v7488 = vadd.f32 0.0, %v7487
      %v7489 = vpop.f32.mrf.mxu0
      %v7490 = vpop.f32.mrf.mxu0
      %v7491 = vadd.f32 0.0, %v7490
      %v7492 = vpop.f32.mrf.mxu0
      %7493 = vmatprep.mubr.bf16.mxu0 0
      %7494 = vmatmul.mubr.bf16.gmra.mxu0 %v7442
      %v7495 = vpop.f32.mrf.mxu0
      %v7496 = vadd.f32 0.0, %v7495
      %v7497 = vpop.f32.mrf.mxu0
      %v7498 = vpop.f32.mrf.mxu0
      %v7499 = vadd.f32 0.0, %v7498
      %v7500 = vpop.f32.mrf.mxu0
      %7501 = vmatprep.mubr.bf16.mxu0 0
      %7502 = vmatmul.mubr.bf16.gmra.mxu0 %v7445
      %v7503 = vpop.f32.mrf.mxu0
      %v7504 = vadd.f32 0.0, %v7503
      %v7505 = vpop.f32.mrf.mxu0
      %v7506 = vpop.f32.mrf.mxu0
      %v7507 = vadd.f32 0.0, %v7506
      %v7508 = vpop.f32.mrf.mxu0
      %7509 = vmatprep.mubr.bf16.mxu0 0
      %7510 = vmatmul.mubr.bf16.gmra.mxu0 %v7448
      %v7511 = vpop.f32.mrf.mxu0
      %v7512 = vadd.f32 0.0, %v7511
      %v7513 = vpop.f32.mrf.mxu0
      %v7514 = vpop.f32.mrf.mxu0
      %v7515 = vpop.f32.mrf.mxu0
      %7516 = vdwg.mxu0
      %7517 = vrot.lane.b32.xlu0 %v4195, 48
      %v7518 = vpop.permute.xlu0 %7517
      %7519 = vrot.lane.b32.xlu0 %v4196, 48
      %v7520 = vpop.permute.xlu0 %7519
      %7521 = vrot.lane.b32.xlu0 %v4197, 48
      %v7522 = vpop.permute.xlu0 %7521
      %7523 = vrot.lane.b32.xlu0 %v4198, 48
      %v7524 = vpop.permute.xlu0 %7523
      %v7529 = vsel %vm4604, %v7329, 0
      %v7532 = vsel %vm4604, %v7330, 0
      %v7535 = vsel %vm4604, %v7331, 0
      %v7538 = vsel %vm4604, %v7332, 0
      %v7541 = vand.u32 %v7524, %v4960
      %7543 = vmatprep.subr.bf16.mxu0 0
      %7544 = vmatpush1.bf16.msra.mxu0 0
      %7545 = vmatprep.subr.bf16.mxu0 0
      %7546 = vmatpush1.bf16.msra.mxu0 0
      %7547 = vmatprep.subr.bf16.mxu0 0
      %7548 = vmatpush1.bf16.msra.mxu0 0
      %7549 = vmatprep.subr.bf16.mxu0 0
      %7550 = vmatpush1.bf16.msra.mxu0 0
      %7551 = vmatprep.subr.bf16.mxu0 0
      %7552 = vmatpush1.bf16.msra.mxu0 %v7541
      %7553 = vmatprep.subr.bf16.mxu0 0
      %7554 = vmatpush1.bf16.msra.mxu0 %v7522
      %7555 = vmatprep.subr.bf16.mxu0 0
      %7556 = vmatpush1.bf16.msra.mxu0 %v7520
      %7557 = vmatprep.subr.bf16.mxu0 0
      %7558 = vmatpush1.bf16.msra.mxu0 %v7518
      %7559 = vmatprep.subr.bf16.mxu0 0
      %7560 = vmatpush2.bf16.msra.mxu0 0
      %7561 = vmatprep.subr.bf16.mxu0 0
      %7562 = vmatpush2.bf16.msra.mxu0 0
      %7563 = vmatprep.subr.bf16.mxu0 0
      %7564 = vmatpush2.bf16.msra.mxu0 0
      %7565 = vmatprep.subr.bf16.mxu0 0
      %7566 = vmatpush2.bf16.msra.mxu0 0
      %7567 = vmatprep.subr.bf16.mxu0 0
      %7568 = vmatpush2.bf16.msra.mxu0 0
      %7569 = vmatprep.subr.bf16.mxu0 0
      %7570 = vmatpush2.bf16.msra.mxu0 0
      %7571 = vmatprep.subr.bf16.mxu0 0
      %7572 = vmatpush2.bf16.msra.mxu0 0
      %7573 = vmatprep.subr.bf16.mxu0 0
      %7574 = vmatpush2.bf16.msra.mxu0 0
      %7575 = vmatprep.mubr.bf16.mxu0 0
      %7576 = vmatmul.mubr.bf16.gmra.mxu0 %v7529
      %v7577 = vpop.f32.mrf.mxu0
      %v7578 = vadd.f32 0.0, %v7577
      %v7579 = vpop.f32.mrf.mxu0
      %v7580 = vpop.f32.mrf.mxu0
      %v7581 = vadd.f32 0.0, %v7580
      %v7582 = vpop.f32.mrf.mxu0
      %7583 = vmatprep.mubr.bf16.mxu0 0
      %7584 = vmatmul.mubr.bf16.gmra.mxu0 %v7532
      %v7585 = vpop.f32.mrf.mxu0
      %v7586 = vadd.f32 0.0, %v7585
      %v7587 = vpop.f32.mrf.mxu0
      %v7588 = vpop.f32.mrf.mxu0
      %v7589 = vadd.f32 0.0, %v7588
      %v7590 = vpop.f32.mrf.mxu0
      %7591 = vmatprep.mubr.bf16.mxu0 0
      %7592 = vmatmul.mubr.bf16.gmra.mxu0 %v7535
      %v7593 = vpop.f32.mrf.mxu0
      %v7594 = vadd.f32 0.0, %v7593
      %v7595 = vpop.f32.mrf.mxu0
      %v7596 = vpop.f32.mrf.mxu0
      %v7597 = vadd.f32 0.0, %v7596
      %v7598 = vpop.f32.mrf.mxu0
      %7599 = vmatprep.mubr.bf16.mxu0 0
      %7600 = vmatmul.mubr.bf16.gmra.mxu0 %v7538
      %v7601 = vpop.f32.mrf.mxu0
      %v7602 = vadd.f32 0.0, %v7601
      %v7603 = vpop.f32.mrf.mxu0
      %v7604 = vpop.f32.mrf.mxu0
      %v7605 = vpop.f32.mrf.mxu0
      %7606 = vdwg.mxu0
      %7607 = vrot.lane.b32.xlu0 %v4199, 48
      %v7608 = vpop.permute.xlu0 %7607
      %7609 = vrot.lane.b32.xlu0 %v4200, 48
      %v7610 = vpop.permute.xlu0 %7609
      %7611 = vrot.lane.b32.xlu0 %v4201, 48
      %v7612 = vpop.permute.xlu0 %7611
      %7613 = vrot.lane.b32.xlu0 %v4202, 48
      %v7614 = vpop.permute.xlu0 %7613
      %v7619 = vsel %vm4604, %v7333, 0
      %v7622 = vsel %vm4604, %v7334, 0
      %v7625 = vsel %vm4604, %v7335, 0
      %v7628 = vsel %vm4604, %v7336, 0
      %v7631 = vand.u32 %v7614, %v4960
      %7633 = vmatprep.subr.bf16.mxu0 0
      %7634 = vmatpush1.bf16.msra.mxu0 0
      %7635 = vmatprep.subr.bf16.mxu0 0
      %7636 = vmatpush1.bf16.msra.mxu0 0
      %7637 = vmatprep.subr.bf16.mxu0 0
      %7638 = vmatpush1.bf16.msra.mxu0 0
      %7639 = vmatprep.subr.bf16.mxu0 0
      %7640 = vmatpush1.bf16.msra.mxu0 0
      %7641 = vmatprep.subr.bf16.mxu0 0
      %7642 = vmatpush1.bf16.msra.mxu0 %v7631
      %7643 = vmatprep.subr.bf16.mxu0 0
      %7644 = vmatpush1.bf16.msra.mxu0 %v7612
      %7645 = vmatprep.subr.bf16.mxu0 0
      %7646 = vmatpush1.bf16.msra.mxu0 %v7610
      %7647 = vmatprep.subr.bf16.mxu0 0
      %7648 = vmatpush1.bf16.msra.mxu0 %v7608
      %7649 = vmatprep.subr.bf16.mxu0 0
      %7650 = vmatpush2.bf16.msra.mxu0 0
      %7651 = vmatprep.subr.bf16.mxu0 0
      %7652 = vmatpush2.bf16.msra.mxu0 0
      %7653 = vmatprep.subr.bf16.mxu0 0
      %7654 = vmatpush2.bf16.msra.mxu0 0
      %7655 = vmatprep.subr.bf16.mxu0 0
      %7656 = vmatpush2.bf16.msra.mxu0 0
      %7657 = vmatprep.subr.bf16.mxu0 0
      %7658 = vmatpush2.bf16.msra.mxu0 0
      %7659 = vmatprep.subr.bf16.mxu0 0
      %7660 = vmatpush2.bf16.msra.mxu0 0
      %7661 = vmatprep.subr.bf16.mxu0 0
      %7662 = vmatpush2.bf16.msra.mxu0 0
      %7663 = vmatprep.subr.bf16.mxu0 0
      %7664 = vmatpush2.bf16.msra.mxu0 0
      %7665 = vmatprep.mubr.bf16.mxu0 0
      %7666 = vmatmul.mubr.bf16.gmra.mxu0 %v7619
      %v7667 = vpop.f32.mrf.mxu0
      %v7668 = vadd.f32 0.0, %v7667
      %v7669 = vpop.f32.mrf.mxu0
      %v7670 = vpop.f32.mrf.mxu0
      %v7671 = vadd.f32 0.0, %v7670
      %v7672 = vpop.f32.mrf.mxu0
      %7673 = vmatprep.mubr.bf16.mxu0 0
      %7674 = vmatmul.mubr.bf16.gmra.mxu0 %v7622
      %v7675 = vpop.f32.mrf.mxu0
      %v7676 = vadd.f32 0.0, %v7675
      %v7677 = vpop.f32.mrf.mxu0
      %v7678 = vpop.f32.mrf.mxu0
      %v7679 = vadd.f32 0.0, %v7678
      %v7680 = vpop.f32.mrf.mxu0
      %7681 = vmatprep.mubr.bf16.mxu0 0
      %7682 = vmatmul.mubr.bf16.gmra.mxu0 %v7625
      %v7683 = vpop.f32.mrf.mxu0
      %v7684 = vadd.f32 0.0, %v7683
      %v7685 = vpop.f32.mrf.mxu0
      %v7686 = vpop.f32.mrf.mxu0
      %v7687 = vadd.f32 0.0, %v7686
      %v7688 = vpop.f32.mrf.mxu0
      %7689 = vmatprep.mubr.bf16.mxu0 0
      %7690 = vmatmul.mubr.bf16.gmra.mxu0 %v7628
      %v7691 = vpop.f32.mrf.mxu0
      %v7692 = vadd.f32 0.0, %v7691
      %v7693 = vpop.f32.mrf.mxu0
      %v7694 = vpop.f32.mrf.mxu0
      %v7695 = vpop.f32.mrf.mxu0
      %7696 = vdwg.mxu0
      %7725 = vrot.lane.b32.xlu0 %v7398, 16
      %v7726 = vpop.permute.xlu0 %7725
      %7727 = vrot.lane.b32.xlu0 %v7401, 16
      %v7728 = vpop.permute.xlu0 %7727
      %7729 = vrot.lane.b32.xlu0 %v7406, 16
      %v7730 = vpop.permute.xlu0 %7729
      %7731 = vrot.lane.b32.xlu0 %v7409, 16
      %v7732 = vpop.permute.xlu0 %7731
      %7733 = vrot.lane.b32.xlu0 %v7414, 16
      %v7734 = vpop.permute.xlu0 %7733
      %7735 = vrot.lane.b32.xlu0 %v7417, 16
      %v7736 = vpop.permute.xlu0 %7735
      %7737 = vrot.lane.b32.xlu0 %v7422, 16
      %v7738 = vpop.permute.xlu0 %7737
      %7739 = vrot.lane.b32.xlu0 %v7488, 16
      %v7740 = vpop.permute.xlu0 %7739
      %7741 = vrot.lane.b32.xlu0 %v7491, 16
      %v7742 = vpop.permute.xlu0 %7741
      %7743 = vrot.lane.b32.xlu0 %v7496, 16
      %v7744 = vpop.permute.xlu0 %7743
      %7745 = vrot.lane.b32.xlu0 %v7499, 16
      %v7746 = vpop.permute.xlu0 %7745
      %7747 = vrot.lane.b32.xlu0 %v7504, 16
      %v7748 = vpop.permute.xlu0 %7747
      %7749 = vrot.lane.b32.xlu0 %v7507, 16
      %v7750 = vpop.permute.xlu0 %7749
      %7751 = vrot.lane.b32.xlu0 %v7512, 16
      %v7752 = vpop.permute.xlu0 %7751
      %7753 = vrot.lane.b32.xlu0 %v7578, 16
      %v7754 = vpop.permute.xlu0 %7753
      %7755 = vrot.lane.b32.xlu0 %v7581, 16
      %v7756 = vpop.permute.xlu0 %7755
      %7757 = vrot.lane.b32.xlu0 %v7586, 16
      %v7758 = vpop.permute.xlu0 %7757
      %7759 = vrot.lane.b32.xlu0 %v7589, 16
      %v7760 = vpop.permute.xlu0 %7759
      %7761 = vrot.lane.b32.xlu0 %v7594, 16
      %v7762 = vpop.permute.xlu0 %7761
      %7763 = vrot.lane.b32.xlu0 %v7597, 16
      %v7764 = vpop.permute.xlu0 %7763
      %7765 = vrot.lane.b32.xlu0 %v7602, 16
      %v7766 = vpop.permute.xlu0 %7765
      %7767 = vrot.lane.b32.xlu0 %v7668, 16
      %v7768 = vpop.permute.xlu0 %7767
      %7769 = vrot.lane.b32.xlu0 %v7671, 16
      %v7770 = vpop.permute.xlu0 %7769
      %7771 = vrot.lane.b32.xlu0 %v7676, 16
      %v7772 = vpop.permute.xlu0 %7771
      %7773 = vrot.lane.b32.xlu0 %v7679, 16
      %v7774 = vpop.permute.xlu0 %7773
      %7775 = vrot.lane.b32.xlu0 %v7684, 16
      %v7776 = vpop.permute.xlu0 %7775
      %7777 = vrot.lane.b32.xlu0 %v7687, 16
      %v7778 = vpop.permute.xlu0 %7777
      %7779 = vrot.lane.b32.xlu0 %v7692, 16
      %v7780 = vpop.permute.xlu0 %7779
      %vm7809 = vcmask 195712
      %7810 = vst.msk [vmem:[#allocation2] sm:$0xff] %vm7809, %v7726
      %7811 = vst.msk [vmem:[#allocation2 + $0x8] sm:$0xff] %vm7809, %v7728
      %7812 = vst.msk [vmem:[#allocation2 + $0x10] sm:$0xff] %vm7809, %v7730
      %7813 = vst.msk [vmem:[#allocation2 + $0x18] sm:$0xff] %vm7809, %v7732
      %7814 = vst.msk [vmem:[#allocation2 + $0x20] sm:$0xff] %vm7809, %v7734
      %7815 = vst.msk [vmem:[#allocation2 + $0x28] sm:$0xff] %vm7809, %v7736
      %vm7816 = vcmask 192640
      %7817 = vst.msk [vmem:[#allocation2 + $0x30] sm:$0x1f] %vm7816, %v7738
      %7818 = vst.msk [vmem:[#allocation2 + $0x38] sm:$0xff] %vm7809, %v7740
      %7819 = vst.msk [vmem:[#allocation2 + $0x40] sm:$0xff] %vm7809, %v7742
      %7820 = vst.msk [vmem:[#allocation2 + $0x48] sm:$0xff] %vm7809, %v7744
      %7821 = vst.msk [vmem:[#allocation2 + $0x50] sm:$0xff] %vm7809, %v7746
      %7822 = vst.msk [vmem:[#allocation2 + $0x58] sm:$0xff] %vm7809, %v7748
      %7823 = vst.msk [vmem:[#allocation2 + $0x60] sm:$0xff] %vm7809, %v7750
      %7824 = vst.msk [vmem:[#allocation2 + $0x68] sm:$0x1f] %vm7816, %v7752
      %7825 = vst.msk [vmem:[#allocation2 + $0x70] sm:$0xff] %vm7809, %v7754
      %7826 = vst.msk [vmem:[#allocation2 + $0x78] sm:$0xff] %vm7809, %v7756
      %7827 = vst.msk [vmem:[#allocation2 + $0x80] sm:$0xff] %vm7809, %v7758
      %7828 = vst.msk [vmem:[#allocation2 + $0x88] sm:$0xff] %vm7809, %v7760
      %7829 = vst.msk [vmem:[#allocation2 + $0x90] sm:$0xff] %vm7809, %v7762
      %7830 = vst.msk [vmem:[#allocation2 + $0x98] sm:$0xff] %vm7809, %v7764
      %7831 = vst.msk [vmem:[#allocation2 + $0xa0] sm:$0x1f] %vm7816, %v7766
      %7832 = vst.msk [vmem:[#allocation2 + $0xa8] sm:$0xff] %vm7809, %v7768
      %7833 = vst.msk [vmem:[#allocation2 + $0xb0] sm:$0xff] %vm7809, %v7770
      %7834 = vst.msk [vmem:[#allocation2 + $0xb8] sm:$0xff] %vm7809, %v7772
      %7835 = vst.msk [vmem:[#allocation2 + $0xc0] sm:$0xff] %vm7809, %v7774
      %7836 = vst.msk [vmem:[#allocation2 + $0xc8] sm:$0xff] %vm7809, %v7776
      %7837 = vst.msk [vmem:[#allocation2 + $0xd0] sm:$0xff] %vm7809, %v7778
      %7838 = vst.msk [vmem:[#allocation2 + $0xd8] sm:$0x1f] %vm7816, %v7780
      %7839 = vrot.lane.b32.xlu0 %v1671, 104
      %v7840 = vpop.permute.xlu0 %7839
      %7841 = vrot.lane.b32.xlu0 %v1672, 104
      %v7842 = vpop.permute.xlu0 %7841
      %7843 = vrot.lane.b32.xlu0 %v1673, 104
      %v7844 = vpop.permute.xlu0 %7843
      %7845 = vrot.lane.b32.xlu0 %v1674, 104
      %v7846 = vpop.permute.xlu0 %7845
      %7847 = vrot.lane.b32.xlu0 %v2943, 72
      %v7848 = vpop.permute.xlu0 %7847
      %7849 = vrot.lane.b32.xlu0 %v2944, 72
      %v7850 = vpop.permute.xlu0 %7849
      %7851 = vrot.lane.b32.xlu0 %v2945, 72
      %v7852 = vpop.permute.xlu0 %7851
      %7853 = vrot.lane.b32.xlu0 %v2946, 72
      %v7854 = vpop.permute.xlu0 %7853
      %v7856 = vsel %vm4215, %v7840, 0
      %v7859 = vsel %vm4215, %v7842, 0
      %v7862 = vsel %vm4215, %v7844, 0
      %v7865 = vsel %vm4215, %v7846, 0
      %v7868 = vsel %vm4215, %v7848, 0
      %v7871 = vsel %vm4215, %v7850, 0
      %v7874 = vsel %vm4215, %v7852, 0
      %v7877 = vsel %vm4215, %v7854, 0
      %7879 = vmatprep.subr.bf16.mxu0 0
      %7880 = vmatpush1.bf16.xpose.msra.mxu0 0
      %7881 = vmatprep.subr.bf16.mxu0 0
      %7882 = vmatpush1.bf16.xpose.msra.mxu0 0
      %7883 = vmatprep.subr.bf16.mxu0 0
      %7884 = vmatpush1.bf16.xpose.msra.mxu0 0
      %7885 = vmatprep.subr.bf16.mxu0 0
      %7886 = vmatpush1.bf16.xpose.msra.mxu0 0
      %7887 = vmatprep.subr.bf16.mxu0 0
      %7888 = vmatpush1.bf16.xpose.msra.mxu0 %v7877
      %7889 = vmatprep.subr.bf16.mxu0 0
      %7890 = vmatpush1.bf16.xpose.msra.mxu0 %v7874
      %7891 = vmatprep.subr.bf16.mxu0 0
      %7892 = vmatpush1.bf16.xpose.msra.mxu0 %v7871
      %7893 = vmatprep.subr.bf16.mxu0 0
      %7894 = vmatpush1.bf16.xpose.msra.mxu0 %v7868
      %7895 = vmatprep.subr.bf16.mxu0 0
      %7896 = vmatpush2.bf16.xpose.msra.mxu0 0
      %7897 = vmatprep.subr.bf16.mxu0 0
      %7898 = vmatpush2.bf16.xpose.msra.mxu0 0
      %7899 = vmatprep.subr.bf16.mxu0 0
      %7900 = vmatpush2.bf16.xpose.msra.mxu0 0
      %7901 = vmatprep.subr.bf16.mxu0 0
      %7902 = vmatpush2.bf16.xpose.msra.mxu0 0
      %7903 = vmatprep.subr.bf16.mxu0 0
      %7904 = vmatpush2.bf16.xpose.msra.mxu0 0
      %7905 = vmatprep.subr.bf16.mxu0 0
      %7906 = vmatpush2.bf16.xpose.msra.mxu0 0
      %7907 = vmatprep.subr.bf16.mxu0 0
      %7908 = vmatpush2.bf16.xpose.msra.mxu0 0
      %7909 = vmatprep.subr.bf16.mxu0 0
      %7910 = vmatpush2.bf16.xpose.msra.mxu0 0
      %7911 = vmatprep.mubr.bf16.mxu0 0
      %7912 = vmatmul.mubr.bf16.gmra.mxu0 %v7856
      %v7913 = vpop.f32.mrf.mxu0
      %v7914 = vadd.f32 0.0, %v7913
      %v7915 = vpop.f32.mrf.mxu0
      %v7916 = vpop.f32.mrf.mxu0
      %v7917 = vadd.f32 0.0, %v7916
      %v7918 = vpop.f32.mrf.mxu0
      %7919 = vmatprep.mubr.bf16.mxu0 0
      %7920 = vmatmul.mubr.bf16.gmra.mxu0 %v7859
      %v7921 = vpop.f32.mrf.mxu0
      %v7922 = vadd.f32 0.0, %v7921
      %v7923 = vpop.f32.mrf.mxu0
      %v7924 = vpop.f32.mrf.mxu0
      %v7925 = vadd.f32 0.0, %v7924
      %v7926 = vpop.f32.mrf.mxu0
      %7927 = vmatprep.mubr.bf16.mxu0 0
      %7928 = vmatmul.mubr.bf16.gmra.mxu0 %v7862
      %v7929 = vpop.f32.mrf.mxu0
      %v7930 = vadd.f32 0.0, %v7929
      %v7931 = vpop.f32.mrf.mxu0
      %v7932 = vpop.f32.mrf.mxu0
      %v7933 = vadd.f32 0.0, %v7932
      %v7934 = vpop.f32.mrf.mxu0
      %7935 = vmatprep.mubr.bf16.mxu0 0
      %7936 = vmatmul.mubr.bf16.gmra.mxu0 %v7865
      %v7937 = vpop.f32.mrf.mxu0
      %v7938 = vadd.f32 0.0, %v7937
      %v7939 = vpop.f32.mrf.mxu0
      %v7940 = vpop.f32.mrf.mxu0
      %v7941 = vpop.f32.mrf.mxu0
      %7942 = vdwg.mxu0
      %7943 = vrot.lane.b32.xlu0 %v1675, 104
      %v7944 = vpop.permute.xlu0 %7943
      %7945 = vrot.lane.b32.xlu0 %v1676, 104
      %v7946 = vpop.permute.xlu0 %7945
      %7947 = vrot.lane.b32.xlu0 %v1677, 104
      %v7948 = vpop.permute.xlu0 %7947
      %7949 = vrot.lane.b32.xlu0 %v1678, 104
      %v7950 = vpop.permute.xlu0 %7949
      %7951 = vrot.lane.b32.xlu0 %v2947, 72
      %v7952 = vpop.permute.xlu0 %7951
      %7953 = vrot.lane.b32.xlu0 %v2948, 72
      %v7954 = vpop.permute.xlu0 %7953
      %7955 = vrot.lane.b32.xlu0 %v2949, 72
      %v7956 = vpop.permute.xlu0 %7955
      %7957 = vrot.lane.b32.xlu0 %v2950, 72
      %v7958 = vpop.permute.xlu0 %7957
      %v7960 = vsel %vm4215, %v7944, 0
      %v7963 = vsel %vm4215, %v7946, 0
      %v7966 = vsel %vm4215, %v7948, 0
      %v7969 = vsel %vm4215, %v7950, 0
      %v7972 = vsel %vm4215, %v7952, 0
      %v7975 = vsel %vm4215, %v7954, 0
      %v7978 = vsel %vm4215, %v7956, 0
      %v7981 = vsel %vm4215, %v7958, 0
      %7983 = vmatprep.subr.bf16.mxu0 0
      %7984 = vmatpush1.bf16.xpose.msra.mxu0 0
      %7985 = vmatprep.subr.bf16.mxu0 0
      %7986 = vmatpush1.bf16.xpose.msra.mxu0 0
      %7987 = vmatprep.subr.bf16.mxu0 0
      %7988 = vmatpush1.bf16.xpose.msra.mxu0 0
      %7989 = vmatprep.subr.bf16.mxu0 0
      %7990 = vmatpush1.bf16.xpose.msra.mxu0 0
      %7991 = vmatprep.subr.bf16.mxu0 0
      %7992 = vmatpush1.bf16.xpose.msra.mxu0 %v7981
      %7993 = vmatprep.subr.bf16.mxu0 0
      %7994 = vmatpush1.bf16.xpose.msra.mxu0 %v7978
      %7995 = vmatprep.subr.bf16.mxu0 0
      %7996 = vmatpush1.bf16.xpose.msra.mxu0 %v7975
      %7997 = vmatprep.subr.bf16.mxu0 0
      %7998 = vmatpush1.bf16.xpose.msra.mxu0 %v7972
      %7999 = vmatprep.subr.bf16.mxu0 0
      %8000 = vmatpush2.bf16.xpose.msra.mxu0 0
      %8001 = vmatprep.subr.bf16.mxu0 0
      %8002 = vmatpush2.bf16.xpose.msra.mxu0 0
      %8003 = vmatprep.subr.bf16.mxu0 0
      %8004 = vmatpush2.bf16.xpose.msra.mxu0 0
      %8005 = vmatprep.subr.bf16.mxu0 0
      %8006 = vmatpush2.bf16.xpose.msra.mxu0 0
      %8007 = vmatprep.subr.bf16.mxu0 0
      %8008 = vmatpush2.bf16.xpose.msra.mxu0 0
      %8009 = vmatprep.subr.bf16.mxu0 0
      %8010 = vmatpush2.bf16.xpose.msra.mxu0 0
      %8011 = vmatprep.subr.bf16.mxu0 0
      %8012 = vmatpush2.bf16.xpose.msra.mxu0 0
      %8013 = vmatprep.subr.bf16.mxu0 0
      %8014 = vmatpush2.bf16.xpose.msra.mxu0 0
      %8015 = vmatprep.mubr.bf16.mxu0 0
      %8016 = vmatmul.mubr.bf16.gmra.mxu0 %v7960
      %v8017 = vpop.f32.mrf.mxu0
      %v8018 = vadd.f32 0.0, %v8017
      %v8019 = vpop.f32.mrf.mxu0
      %v8020 = vpop.f32.mrf.mxu0
      %v8021 = vadd.f32 0.0, %v8020
      %v8022 = vpop.f32.mrf.mxu0
      %8023 = vmatprep.mubr.bf16.mxu0 0
      %8024 = vmatmul.mubr.bf16.gmra.mxu0 %v7963
      %v8025 = vpop.f32.mrf.mxu0
      %v8026 = vadd.f32 0.0, %v8025
      %v8027 = vpop.f32.mrf.mxu0
      %v8028 = vpop.f32.mrf.mxu0
      %v8029 = vadd.f32 0.0, %v8028
      %v8030 = vpop.f32.mrf.mxu0
      %8031 = vmatprep.mubr.bf16.mxu0 0
      %8032 = vmatmul.mubr.bf16.gmra.mxu0 %v7966
      %v8033 = vpop.f32.mrf.mxu0
      %v8034 = vadd.f32 0.0, %v8033
      %v8035 = vpop.f32.mrf.mxu0
      %v8036 = vpop.f32.mrf.mxu0
      %v8037 = vadd.f32 0.0, %v8036
      %v8038 = vpop.f32.mrf.mxu0
      %8039 = vmatprep.mubr.bf16.mxu0 0
      %8040 = vmatmul.mubr.bf16.gmra.mxu0 %v7969
      %v8041 = vpop.f32.mrf.mxu0
      %v8042 = vadd.f32 0.0, %v8041
      %v8043 = vpop.f32.mrf.mxu0
      %v8044 = vpop.f32.mrf.mxu0
      %v8045 = vpop.f32.mrf.mxu0
      %8046 = vdwg.mxu0
      %8047 = vrot.lane.b32.xlu0 %v1679, 104
      %v8048 = vpop.permute.xlu0 %8047
      %8049 = vrot.lane.b32.xlu0 %v1680, 104
      %v8050 = vpop.permute.xlu0 %8049
      %8051 = vrot.lane.b32.xlu0 %v1681, 104
      %v8052 = vpop.permute.xlu0 %8051
      %8053 = vrot.lane.b32.xlu0 %v1682, 104
      %v8054 = vpop.permute.xlu0 %8053
      %8055 = vrot.lane.b32.xlu0 %v2951, 72
      %v8056 = vpop.permute.xlu0 %8055
      %8057 = vrot.lane.b32.xlu0 %v2952, 72
      %v8058 = vpop.permute.xlu0 %8057
      %8059 = vrot.lane.b32.xlu0 %v2953, 72
      %v8060 = vpop.permute.xlu0 %8059
      %8061 = vrot.lane.b32.xlu0 %v2954, 72
      %v8062 = vpop.permute.xlu0 %8061
      %v8064 = vsel %vm4215, %v8048, 0
      %v8067 = vsel %vm4215, %v8050, 0
      %v8070 = vsel %vm4215, %v8052, 0
      %v8073 = vsel %vm4215, %v8054, 0
      %v8076 = vsel %vm4215, %v8056, 0
      %v8079 = vsel %vm4215, %v8058, 0
      %v8082 = vsel %vm4215, %v8060, 0
      %v8085 = vsel %vm4215, %v8062, 0
      %8087 = vmatprep.subr.bf16.mxu0 0
      %8088 = vmatpush1.bf16.xpose.msra.mxu0 0
      %8089 = vmatprep.subr.bf16.mxu0 0
      %8090 = vmatpush1.bf16.xpose.msra.mxu0 0
      %8091 = vmatprep.subr.bf16.mxu0 0
      %8092 = vmatpush1.bf16.xpose.msra.mxu0 0
      %8093 = vmatprep.subr.bf16.mxu0 0
      %8094 = vmatpush1.bf16.xpose.msra.mxu0 0
      %8095 = vmatprep.subr.bf16.mxu0 0
      %8096 = vmatpush1.bf16.xpose.msra.mxu0 %v8085
      %8097 = vmatprep.subr.bf16.mxu0 0
      %8098 = vmatpush1.bf16.xpose.msra.mxu0 %v8082
      %8099 = vmatprep.subr.bf16.mxu0 0
      %8100 = vmatpush1.bf16.xpose.msra.mxu0 %v8079
      %8101 = vmatprep.subr.bf16.mxu0 0
      %8102 = vmatpush1.bf16.xpose.msra.mxu0 %v8076
      %8103 = vmatprep.subr.bf16.mxu0 0
      %8104 = vmatpush2.bf16.xpose.msra.mxu0 0
      %8105 = vmatprep.subr.bf16.mxu0 0
      %8106 = vmatpush2.bf16.xpose.msra.mxu0 0
      %8107 = vmatprep.subr.bf16.mxu0 0
      %8108 = vmatpush2.bf16.xpose.msra.mxu0 0
      %8109 = vmatprep.subr.bf16.mxu0 0
      %8110 = vmatpush2.bf16.xpose.msra.mxu0 0
      %8111 = vmatprep.subr.bf16.mxu0 0
      %8112 = vmatpush2.bf16.xpose.msra.mxu0 0
      %8113 = vmatprep.subr.bf16.mxu0 0
      %8114 = vmatpush2.bf16.xpose.msra.mxu0 0
      %8115 = vmatprep.subr.bf16.mxu0 0
      %8116 = vmatpush2.bf16.xpose.msra.mxu0 0
      %8117 = vmatprep.subr.bf16.mxu0 0
      %8118 = vmatpush2.bf16.xpose.msra.mxu0 0
      %8119 = vmatprep.mubr.bf16.mxu0 0
      %8120 = vmatmul.mubr.bf16.gmra.mxu0 %v8064
      %v8121 = vpop.f32.mrf.mxu0
      %v8122 = vadd.f32 0.0, %v8121
      %v8123 = vpop.f32.mrf.mxu0
      %v8124 = vpop.f32.mrf.mxu0
      %v8125 = vadd.f32 0.0, %v8124
      %v8126 = vpop.f32.mrf.mxu0
      %8127 = vmatprep.mubr.bf16.mxu0 0
      %8128 = vmatmul.mubr.bf16.gmra.mxu0 %v8067
      %v8129 = vpop.f32.mrf.mxu0
      %v8130 = vadd.f32 0.0, %v8129
      %v8131 = vpop.f32.mrf.mxu0
      %v8132 = vpop.f32.mrf.mxu0
      %v8133 = vadd.f32 0.0, %v8132
      %v8134 = vpop.f32.mrf.mxu0
      %8135 = vmatprep.mubr.bf16.mxu0 0
      %8136 = vmatmul.mubr.bf16.gmra.mxu0 %v8070
      %v8137 = vpop.f32.mrf.mxu0
      %v8138 = vadd.f32 0.0, %v8137
      %v8139 = vpop.f32.mrf.mxu0
      %v8140 = vpop.f32.mrf.mxu0
      %v8141 = vadd.f32 0.0, %v8140
      %v8142 = vpop.f32.mrf.mxu0
      %8143 = vmatprep.mubr.bf16.mxu0 0
      %8144 = vmatmul.mubr.bf16.gmra.mxu0 %v8073
      %v8145 = vpop.f32.mrf.mxu0
      %v8146 = vadd.f32 0.0, %v8145
      %v8147 = vpop.f32.mrf.mxu0
      %v8148 = vpop.f32.mrf.mxu0
      %v8149 = vpop.f32.mrf.mxu0
      %8150 = vdwg.mxu0
      %8151 = vrot.lane.b32.xlu0 %v1683, 104
      %v8152 = vpop.permute.xlu0 %8151
      %8153 = vrot.lane.b32.xlu0 %v1684, 104
      %v8154 = vpop.permute.xlu0 %8153
      %8155 = vrot.lane.b32.xlu0 %v1685, 104
      %v8156 = vpop.permute.xlu0 %8155
      %8157 = vrot.lane.b32.xlu0 %v1686, 104
      %v8158 = vpop.permute.xlu0 %8157
      %8159 = vrot.lane.b32.xlu0 %v2955, 72
      %v8160 = vpop.permute.xlu0 %8159
      %8161 = vrot.lane.b32.xlu0 %v2956, 72
      %v8162 = vpop.permute.xlu0 %8161
      %8163 = vrot.lane.b32.xlu0 %v2957, 72
      %v8164 = vpop.permute.xlu0 %8163
      %8165 = vrot.lane.b32.xlu0 %v2958, 72
      %v8166 = vpop.permute.xlu0 %8165
      %v8168 = vsel %vm4215, %v8152, 0
      %v8171 = vsel %vm4215, %v8154, 0
      %v8174 = vsel %vm4215, %v8156, 0
      %v8177 = vsel %vm4215, %v8158, 0
      %v8180 = vsel %vm4215, %v8160, 0
      %v8183 = vsel %vm4215, %v8162, 0
      %v8186 = vsel %vm4215, %v8164, 0
      %v8189 = vsel %vm4215, %v8166, 0
      %8191 = vmatprep.subr.bf16.mxu0 0
      %8192 = vmatpush1.bf16.xpose.msra.mxu0 0
      %8193 = vmatprep.subr.bf16.mxu0 0
      %8194 = vmatpush1.bf16.xpose.msra.mxu0 0
      %8195 = vmatprep.subr.bf16.mxu0 0
      %8196 = vmatpush1.bf16.xpose.msra.mxu0 0
      %8197 = vmatprep.subr.bf16.mxu0 0
      %8198 = vmatpush1.bf16.xpose.msra.mxu0 0
      %8199 = vmatprep.subr.bf16.mxu0 0
      %8200 = vmatpush1.bf16.xpose.msra.mxu0 %v8189
      %8201 = vmatprep.subr.bf16.mxu0 0
      %8202 = vmatpush1.bf16.xpose.msra.mxu0 %v8186
      %8203 = vmatprep.subr.bf16.mxu0 0
      %8204 = vmatpush1.bf16.xpose.msra.mxu0 %v8183
      %8205 = vmatprep.subr.bf16.mxu0 0
      %8206 = vmatpush1.bf16.xpose.msra.mxu0 %v8180
      %8207 = vmatprep.subr.bf16.mxu0 0
      %8208 = vmatpush2.bf16.xpose.msra.mxu0 0
      %8209 = vmatprep.subr.bf16.mxu0 0
      %8210 = vmatpush2.bf16.xpose.msra.mxu0 0
      %8211 = vmatprep.subr.bf16.mxu0 0
      %8212 = vmatpush2.bf16.xpose.msra.mxu0 0
      %8213 = vmatprep.subr.bf16.mxu0 0
      %8214 = vmatpush2.bf16.xpose.msra.mxu0 0
      %8215 = vmatprep.subr.bf16.mxu0 0
      %8216 = vmatpush2.bf16.xpose.msra.mxu0 0
      %8217 = vmatprep.subr.bf16.mxu0 0
      %8218 = vmatpush2.bf16.xpose.msra.mxu0 0
      %8219 = vmatprep.subr.bf16.mxu0 0
      %8220 = vmatpush2.bf16.xpose.msra.mxu0 0
      %8221 = vmatprep.subr.bf16.mxu0 0
      %8222 = vmatpush2.bf16.xpose.msra.mxu0 0
      %8223 = vmatprep.mubr.bf16.mxu0 0
      %8224 = vmatmul.mubr.bf16.gmra.mxu0 %v8168
      %v8225 = vpop.f32.mrf.mxu0
      %v8226 = vadd.f32 0.0, %v8225
      %v8227 = vpop.f32.mrf.mxu0
      %v8228 = vpop.f32.mrf.mxu0
      %v8229 = vadd.f32 0.0, %v8228
      %v8230 = vpop.f32.mrf.mxu0
      %8231 = vmatprep.mubr.bf16.mxu0 0
      %8232 = vmatmul.mubr.bf16.gmra.mxu0 %v8171
      %v8233 = vpop.f32.mrf.mxu0
      %v8234 = vadd.f32 0.0, %v8233
      %v8235 = vpop.f32.mrf.mxu0
      %v8236 = vpop.f32.mrf.mxu0
      %v8237 = vadd.f32 0.0, %v8236
      %v8238 = vpop.f32.mrf.mxu0
      %8239 = vmatprep.mubr.bf16.mxu0 0
      %8240 = vmatmul.mubr.bf16.gmra.mxu0 %v8174
      %v8241 = vpop.f32.mrf.mxu0
      %v8242 = vadd.f32 0.0, %v8241
      %v8243 = vpop.f32.mrf.mxu0
      %v8244 = vpop.f32.mrf.mxu0
      %v8245 = vadd.f32 0.0, %v8244
      %v8246 = vpop.f32.mrf.mxu0
      %8247 = vmatprep.mubr.bf16.mxu0 0
      %8248 = vmatmul.mubr.bf16.gmra.mxu0 %v8177
      %v8249 = vpop.f32.mrf.mxu0
      %v8250 = vadd.f32 0.0, %v8249
      %v8251 = vpop.f32.mrf.mxu0
      %v8252 = vpop.f32.mrf.mxu0
      %v8253 = vpop.f32.mrf.mxu0
      %8254 = vdwg.mxu0
      %v8255 = vsel %vm4604, %v7914, -inf
      %8256 = vmax.xlane.f32.xlu0 %v8255
      %v8257 = vpop.xlane.xlu0 %8256
      %v8258 = vsel %vm4604, %v7917, -inf
      %8259 = vmax.xlane.f32.xlu0 %v8258
      %v8260 = vpop.xlane.xlu0 %8259
      %v8261 = vsel %vm4604, %v7922, -inf
      %8262 = vmax.xlane.f32.xlu0 %v8261
      %v8263 = vpop.xlane.xlu0 %8262
      %v8264 = vsel %vm4604, %v7925, -inf
      %8265 = vmax.xlane.f32.xlu0 %v8264
      %v8266 = vpop.xlane.xlu0 %8265
      %v8267 = vsel %vm4604, %v7930, -inf
      %8268 = vmax.xlane.f32.xlu0 %v8267
      %v8269 = vpop.xlane.xlu0 %8268
      %v8270 = vsel %vm4604, %v7933, -inf
      %8271 = vmax.xlane.f32.xlu0 %v8270
      %v8272 = vpop.xlane.xlu0 %8271
      %v8273 = vsel %vm4623, %v7938, -inf
      %8274 = vmax.xlane.f32.xlu0 %v8273
      %v8275 = vpop.xlane.xlu0 %8274
      %v8276 = vsel %vm4604, %v8018, -inf
      %8277 = vmax.xlane.f32.xlu0 %v8276
      %v8278 = vpop.xlane.xlu0 %8277
      %v8279 = vsel %vm4604, %v8021, -inf
      %8280 = vmax.xlane.f32.xlu0 %v8279
      %v8281 = vpop.xlane.xlu0 %8280
      %v8282 = vsel %vm4604, %v8026, -inf
      %8283 = vmax.xlane.f32.xlu0 %v8282
      %v8284 = vpop.xlane.xlu0 %8283
      %v8285 = vsel %vm4604, %v8029, -inf
      %8286 = vmax.xlane.f32.xlu0 %v8285
      %v8287 = vpop.xlane.xlu0 %8286
      %v8288 = vsel %vm4604, %v8034, -inf
      %8289 = vmax.xlane.f32.xlu0 %v8288
      %v8290 = vpop.xlane.xlu0 %8289
      %v8291 = vsel %vm4604, %v8037, -inf
      %8292 = vmax.xlane.f32.xlu0 %v8291
      %v8293 = vpop.xlane.xlu0 %8292
      %v8294 = vsel %vm4623, %v8042, -inf
      %8295 = vmax.xlane.f32.xlu0 %v8294
      %v8296 = vpop.xlane.xlu0 %8295
      %v8297 = vsel %vm4604, %v8122, -inf
      %8298 = vmax.xlane.f32.xlu0 %v8297
      %v8299 = vpop.xlane.xlu0 %8298
      %v8300 = vsel %vm4604, %v8125, -inf
      %8301 = vmax.xlane.f32.xlu0 %v8300
      %v8302 = vpop.xlane.xlu0 %8301
      %v8303 = vsel %vm4604, %v8130, -inf
      %8304 = vmax.xlane.f32.xlu0 %v8303
      %v8305 = vpop.xlane.xlu0 %8304
      %v8306 = vsel %vm4604, %v8133, -inf
      %8307 = vmax.xlane.f32.xlu0 %v8306
      %v8308 = vpop.xlane.xlu0 %8307
      %v8309 = vsel %vm4604, %v8138, -inf
      %8310 = vmax.xlane.f32.xlu0 %v8309
      %v8311 = vpop.xlane.xlu0 %8310
      %v8312 = vsel %vm4604, %v8141, -inf
      %8313 = vmax.xlane.f32.xlu0 %v8312
      %v8314 = vpop.xlane.xlu0 %8313
      %v8315 = vsel %vm4623, %v8146, -inf
      %8316 = vmax.xlane.f32.xlu0 %v8315
      %v8317 = vpop.xlane.xlu0 %8316
      %v8318 = vsel %vm4604, %v8226, -inf
      %8319 = vmax.xlane.f32.xlu0 %v8318
      %v8320 = vpop.xlane.xlu0 %8319
      %v8321 = vsel %vm4604, %v8229, -inf
      %8322 = vmax.xlane.f32.xlu0 %v8321
      %v8323 = vpop.xlane.xlu0 %8322
      %v8324 = vsel %vm4604, %v8234, -inf
      %8325 = vmax.xlane.f32.xlu0 %v8324
      %v8326 = vpop.xlane.xlu0 %8325
      %v8327 = vsel %vm4604, %v8237, -inf
      %8328 = vmax.xlane.f32.xlu0 %v8327
      %v8329 = vpop.xlane.xlu0 %8328
      %v8330 = vsel %vm4604, %v8242, -inf
      %8331 = vmax.xlane.f32.xlu0 %v8330
      %v8332 = vpop.xlane.xlu0 %8331
      %v8333 = vsel %vm4604, %v8245, -inf
      %8334 = vmax.xlane.f32.xlu0 %v8333
      %v8335 = vpop.xlane.xlu0 %8334
      %v8336 = vsel %vm4623, %v8250, -inf
      %8337 = vmax.xlane.f32.xlu0 %v8336
      %v8338 = vpop.xlane.xlu0 %8337
      %v8339 = vsub.f32 %v7914, %v8257
      %v8340 = vsub.f32 %v7917, %v8260
      %v8341 = vsub.f32 %v7922, %v8263
      %v8342 = vsub.f32 %v7925, %v8266
      %v8343 = vsub.f32 %v7930, %v8269
      %v8344 = vsub.f32 %v7933, %v8272
      %v8345 = vsub.f32 %v7938, %v8275
      %v8346 = vsub.f32 %v8018, %v8278
      %v8347 = vsub.f32 %v8021, %v8281
      %v8348 = vsub.f32 %v8026, %v8284
      %v8349 = vsub.f32 %v8029, %v8287
      %v8350 = vsub.f32 %v8034, %v8290
      %v8351 = vsub.f32 %v8037, %v8293
      %v8352 = vsub.f32 %v8042, %v8296
      %v8353 = vsub.f32 %v8122, %v8299
      %v8354 = vsub.f32 %v8125, %v8302
      %v8355 = vsub.f32 %v8130, %v8305
      %v8356 = vsub.f32 %v8133, %v8308
      %v8357 = vsub.f32 %v8138, %v8311
      %v8358 = vsub.f32 %v8141, %v8314
      %v8359 = vsub.f32 %v8146, %v8317
      %v8360 = vsub.f32 %v8226, %v8320
      %v8361 = vsub.f32 %v8229, %v8323
      %v8362 = vsub.f32 %v8234, %v8326
      %v8363 = vsub.f32 %v8237, %v8329
      %v8364 = vsub.f32 %v8242, %v8332
      %v8365 = vsub.f32 %v8245, %v8335
      %v8366 = vsub.f32 %v8250, %v8338
      %v8367 = vmul.f32 %v8339, 1.442695
      %v8368 = vpow.pop %v8367
      %v8369 = vmul.f32 %v8340, 1.442695
      %v8370 = vpow.pop %v8369
      %v8371 = vmul.f32 %v8341, 1.442695
      %v8372 = vpow.pop %v8371
      %v8373 = vmul.f32 %v8342, 1.442695
      %v8374 = vpow.pop %v8373
      %v8375 = vmul.f32 %v8343, 1.442695
      %v8376 = vpow.pop %v8375
      %v8377 = vmul.f32 %v8344, 1.442695
      %v8378 = vpow.pop %v8377
      %v8379 = vmul.f32 %v8345, 1.442695
      %v8380 = vpow.pop %v8379
      %v8381 = vmul.f32 %v8346, 1.442695
      %v8382 = vpow.pop %v8381
      %v8383 = vmul.f32 %v8347, 1.442695
      %v8384 = vpow.pop %v8383
      %v8385 = vmul.f32 %v8348, 1.442695
      %v8386 = vpow.pop %v8385
      %v8387 = vmul.f32 %v8349, 1.442695
      %v8388 = vpow.pop %v8387
      %v8389 = vmul.f32 %v8350, 1.442695
      %v8390 = vpow.pop %v8389
      %v8391 = vmul.f32 %v8351, 1.442695
      %v8392 = vpow.pop %v8391
      %v8393 = vmul.f32 %v8352, 1.442695
      %v8394 = vpow.pop %v8393
      %v8395 = vmul.f32 %v8353, 1.442695
      %v8396 = vpow.pop %v8395
      %v8397 = vmul.f32 %v8354, 1.442695
      %v8398 = vpow.pop %v8397
      %v8399 = vmul.f32 %v8355, 1.442695
      %v8400 = vpow.pop %v8399
      %v8401 = vmul.f32 %v8356, 1.442695
      %v8402 = vpow.pop %v8401
      %v8403 = vmul.f32 %v8357, 1.442695
      %v8404 = vpow.pop %v8403
      %v8405 = vmul.f32 %v8358, 1.442695
      %v8406 = vpow.pop %v8405
      %v8407 = vmul.f32 %v8359, 1.442695
      %v8408 = vpow.pop %v8407
      %v8409 = vmul.f32 %v8360, 1.442695
      %v8410 = vpow.pop %v8409
      %v8411 = vmul.f32 %v8361, 1.442695
      %v8412 = vpow.pop %v8411
      %v8413 = vmul.f32 %v8362, 1.442695
      %v8414 = vpow.pop %v8413
      %v8415 = vmul.f32 %v8363, 1.442695
      %v8416 = vpow.pop %v8415
      %v8417 = vmul.f32 %v8364, 1.442695
      %v8418 = vpow.pop %v8417
      %v8419 = vmul.f32 %v8365, 1.442695
      %v8420 = vpow.pop %v8419
      %v8421 = vmul.f32 %v8366, 1.442695
      %v8422 = vpow.pop %v8421
      %v8423 = vsel %vm4604, %v8368, 0.0
      %8424 = vadd.xlane.f32.xlu0 %v8423
      %v8425 = vpop.xlane.xlu0 %8424
      %v8426 = vsel %vm4604, %v8370, 0.0
      %8427 = vadd.xlane.f32.xlu0 %v8426
      %v8428 = vpop.xlane.xlu0 %8427
      %v8429 = vsel %vm4604, %v8372, 0.0
      %8430 = vadd.xlane.f32.xlu0 %v8429
      %v8431 = vpop.xlane.xlu0 %8430
      %v8432 = vsel %vm4604, %v8374, 0.0
      %8433 = vadd.xlane.f32.xlu0 %v8432
      %v8434 = vpop.xlane.xlu0 %8433
      %v8435 = vsel %vm4604, %v8376, 0.0
      %8436 = vadd.xlane.f32.xlu0 %v8435
      %v8437 = vpop.xlane.xlu0 %8436
      %v8438 = vsel %vm4604, %v8378, 0.0
      %8439 = vadd.xlane.f32.xlu0 %v8438
      %v8440 = vpop.xlane.xlu0 %8439
      %v8441 = vsel %vm4623, %v8380, 0.0
      %8442 = vadd.xlane.f32.xlu0 %v8441
      %v8443 = vpop.xlane.xlu0 %8442
      %v8444 = vsel %vm4604, %v8382, 0.0
      %8445 = vadd.xlane.f32.xlu0 %v8444
      %v8446 = vpop.xlane.xlu0 %8445
      %v8447 = vsel %vm4604, %v8384, 0.0
      %8448 = vadd.xlane.f32.xlu0 %v8447
      %v8449 = vpop.xlane.xlu0 %8448
      %v8450 = vsel %vm4604, %v8386, 0.0
      %8451 = vadd.xlane.f32.xlu0 %v8450
      %v8452 = vpop.xlane.xlu0 %8451
      %v8453 = vsel %vm4604, %v8388, 0.0
      %8454 = vadd.xlane.f32.xlu0 %v8453
      %v8455 = vpop.xlane.xlu0 %8454
      %v8456 = vsel %vm4604, %v8390, 0.0
      %8457 = vadd.xlane.f32.xlu0 %v8456
      %v8458 = vpop.xlane.xlu0 %8457
      %v8459 = vsel %vm4604, %v8392, 0.0
      %8460 = vadd.xlane.f32.xlu0 %v8459
      %v8461 = vpop.xlane.xlu0 %8460
      %v8462 = vsel %vm4623, %v8394, 0.0
      %8463 = vadd.xlane.f32.xlu0 %v8462
      %v8464 = vpop.xlane.xlu0 %8463
      %v8465 = vsel %vm4604, %v8396, 0.0
      %8466 = vadd.xlane.f32.xlu0 %v8465
      %v8467 = vpop.xlane.xlu0 %8466
      %v8468 = vsel %vm4604, %v8398, 0.0
      %8469 = vadd.xlane.f32.xlu0 %v8468
      %v8470 = vpop.xlane.xlu0 %8469
      %v8471 = vsel %vm4604, %v8400, 0.0
      %8472 = vadd.xlane.f32.xlu0 %v8471
      %v8473 = vpop.xlane.xlu0 %8472
      %v8474 = vsel %vm4604, %v8402, 0.0
      %8475 = vadd.xlane.f32.xlu0 %v8474
      %v8476 = vpop.xlane.xlu0 %8475
      %v8477 = vsel %vm4604, %v8404, 0.0
      %8478 = vadd.xlane.f32.xlu0 %v8477
      %v8479 = vpop.xlane.xlu0 %8478
      %v8480 = vsel %vm4604, %v8406, 0.0
      %8481 = vadd.xlane.f32.xlu0 %v8480
      %v8482 = vpop.xlane.xlu0 %8481
      %v8483 = vsel %vm4623, %v8408, 0.0
      %8484 = vadd.xlane.f32.xlu0 %v8483
      %v8485 = vpop.xlane.xlu0 %8484
      %v8486 = vsel %vm4604, %v8410, 0.0
      %8487 = vadd.xlane.f32.xlu0 %v8486
      %v8488 = vpop.xlane.xlu0 %8487
      %v8489 = vsel %vm4604, %v8412, 0.0
      %8490 = vadd.xlane.f32.xlu0 %v8489
      %v8491 = vpop.xlane.xlu0 %8490
      %v8492 = vsel %vm4604, %v8414, 0.0
      %8493 = vadd.xlane.f32.xlu0 %v8492
      %v8494 = vpop.xlane.xlu0 %8493
      %v8495 = vsel %vm4604, %v8416, 0.0
      %8496 = vadd.xlane.f32.xlu0 %v8495
      %v8497 = vpop.xlane.xlu0 %8496
      %v8498 = vsel %vm4604, %v8418, 0.0
      %8499 = vadd.xlane.f32.xlu0 %v8498
      %v8500 = vpop.xlane.xlu0 %8499
      %v8501 = vsel %vm4604, %v8420, 0.0
      %8502 = vadd.xlane.f32.xlu0 %v8501
      %v8503 = vpop.xlane.xlu0 %8502
      %v8504 = vsel %vm4623, %v8422, 0.0
      %8505 = vadd.xlane.f32.xlu0 %v8504
      %v8506 = vpop.xlane.xlu0 %8505
      %v8507 = vrcp.pop %v8425
      %v8508 = vrcp.pop %v8428
      %v8509 = vrcp.pop %v8431
      %v8510 = vrcp.pop %v8434
      %v8511 = vrcp.pop %v8437
      %v8512 = vrcp.pop %v8440
      %v8513 = vrcp.pop %v8443
      %v8514 = vrcp.pop %v8446
      %v8515 = vrcp.pop %v8449
      %v8516 = vrcp.pop %v8452
      %v8517 = vrcp.pop %v8455
      %v8518 = vrcp.pop %v8458
      %v8519 = vrcp.pop %v8461
      %v8520 = vrcp.pop %v8464
      %v8521 = vrcp.pop %v8467
      %v8522 = vrcp.pop %v8470
      %v8523 = vrcp.pop %v8473
      %v8524 = vrcp.pop %v8476
      %v8525 = vrcp.pop %v8479
      %v8526 = vrcp.pop %v8482
      %v8527 = vrcp.pop %v8485
      %v8528 = vrcp.pop %v8488
      %v8529 = vrcp.pop %v8491
      %v8530 = vrcp.pop %v8494
      %v8531 = vrcp.pop %v8497
      %v8532 = vrcp.pop %v8500
      %v8533 = vrcp.pop %v8503
      %v8534 = vrcp.pop %v8506
      %v8535 = vmul.f32 %v8368, %v8507
      %v8536 = vmul.f32 %v8370, %v8508
      %v8537 = vmul.f32 %v8372, %v8509
      %v8538 = vmul.f32 %v8374, %v8510
      %v8539 = vmul.f32 %v8376, %v8511
      %v8540 = vmul.f32 %v8378, %v8512
      %v8541 = vmul.f32 %v8380, %v8513
      %v8542 = vmul.f32 %v8382, %v8514
      %v8543 = vmul.f32 %v8384, %v8515
      %v8544 = vmul.f32 %v8386, %v8516
      %v8545 = vmul.f32 %v8388, %v8517
      %v8546 = vmul.f32 %v8390, %v8518
      %v8547 = vmul.f32 %v8392, %v8519
      %v8548 = vmul.f32 %v8394, %v8520
      %v8549 = vmul.f32 %v8396, %v8521
      %v8550 = vmul.f32 %v8398, %v8522
      %v8551 = vmul.f32 %v8400, %v8523
      %v8552 = vmul.f32 %v8402, %v8524
      %v8553 = vmul.f32 %v8404, %v8525
      %v8554 = vmul.f32 %v8406, %v8526
      %v8555 = vmul.f32 %v8408, %v8527
      %v8556 = vmul.f32 %v8410, %v8528
      %v8557 = vmul.f32 %v8412, %v8529
      %v8558 = vmul.f32 %v8414, %v8530
      %v8559 = vmul.f32 %v8416, %v8531
      %v8560 = vmul.f32 %v8418, %v8532
      %v8561 = vmul.f32 %v8420, %v8533
      %v8562 = vmul.f32 %v8422, %v8534
      %v8563 = vpack.c.bf16 %v8536, %v8535
      %v8564 = vpack.c.bf16 %v8538, %v8537
      %v8565 = vpack.c.bf16 %v8540, %v8539
      %v8566 = vpack.c.bf16 %v8541, %v8541
      %v8567 = vpack.c.bf16 %v8543, %v8542
      %v8568 = vpack.c.bf16 %v8545, %v8544
      %v8569 = vpack.c.bf16 %v8547, %v8546
      %v8570 = vpack.c.bf16 %v8548, %v8548
      %v8571 = vpack.c.bf16 %v8550, %v8549
      %v8572 = vpack.c.bf16 %v8552, %v8551
      %v8573 = vpack.c.bf16 %v8554, %v8553
      %v8574 = vpack.c.bf16 %v8555, %v8555
      %v8575 = vpack.c.bf16 %v8557, %v8556
      %v8576 = vpack.c.bf16 %v8559, %v8558
      %v8577 = vpack.c.bf16 %v8561, %v8560
      %v8578 = vpack.c.bf16 %v8562, %v8562
      %8579 = vrot.lane.b32.xlu0 %v4187, 40
      %v8580 = vpop.permute.xlu0 %8579
      %8581 = vrot.lane.b32.xlu0 %v4188, 40
      %v8582 = vpop.permute.xlu0 %8581
      %8583 = vrot.lane.b32.xlu0 %v4189, 40
      %v8584 = vpop.permute.xlu0 %8583
      %8585 = vrot.lane.b32.xlu0 %v4190, 40
      %v8586 = vpop.permute.xlu0 %8585
      %v8591 = vsel %vm4604, %v8563, 0
      %v8594 = vsel %vm4604, %v8564, 0
      %v8597 = vsel %vm4604, %v8565, 0
      %v8600 = vsel %vm4604, %v8566, 0
      %v8603 = vand.u32 %v8586, %v4960
      %8605 = vmatprep.subr.bf16.mxu0 0
      %8606 = vmatpush1.bf16.msra.mxu0 0
      %8607 = vmatprep.subr.bf16.mxu0 0
      %8608 = vmatpush1.bf16.msra.mxu0 0
      %8609 = vmatprep.subr.bf16.mxu0 0
      %8610 = vmatpush1.bf16.msra.mxu0 0
      %8611 = vmatprep.subr.bf16.mxu0 0
      %8612 = vmatpush1.bf16.msra.mxu0 0
      %8613 = vmatprep.subr.bf16.mxu0 0
      %8614 = vmatpush1.bf16.msra.mxu0 %v8603
      %8615 = vmatprep.subr.bf16.mxu0 0
      %8616 = vmatpush1.bf16.msra.mxu0 %v8584
      %8617 = vmatprep.subr.bf16.mxu0 0
      %8618 = vmatpush1.bf16.msra.mxu0 %v8582
      %8619 = vmatprep.subr.bf16.mxu0 0
      %8620 = vmatpush1.bf16.msra.mxu0 %v8580
      %8621 = vmatprep.subr.bf16.mxu0 0
      %8622 = vmatpush2.bf16.msra.mxu0 0
      %8623 = vmatprep.subr.bf16.mxu0 0
      %8624 = vmatpush2.bf16.msra.mxu0 0
      %8625 = vmatprep.subr.bf16.mxu0 0
      %8626 = vmatpush2.bf16.msra.mxu0 0
      %8627 = vmatprep.subr.bf16.mxu0 0
      %8628 = vmatpush2.bf16.msra.mxu0 0
      %8629 = vmatprep.subr.bf16.mxu0 0
      %8630 = vmatpush2.bf16.msra.mxu0 0
      %8631 = vmatprep.subr.bf16.mxu0 0
      %8632 = vmatpush2.bf16.msra.mxu0 0
      %8633 = vmatprep.subr.bf16.mxu0 0
      %8634 = vmatpush2.bf16.msra.mxu0 0
      %8635 = vmatprep.subr.bf16.mxu0 0
      %8636 = vmatpush2.bf16.msra.mxu0 0
      %8637 = vmatprep.mubr.bf16.mxu0 0
      %8638 = vmatmul.mubr.bf16.gmra.mxu0 %v8591
      %v8639 = vpop.f32.mrf.mxu0
      %v8640 = vadd.f32 0.0, %v8639
      %v8641 = vpop.f32.mrf.mxu0
      %v8642 = vpop.f32.mrf.mxu0
      %v8643 = vadd.f32 0.0, %v8642
      %v8644 = vpop.f32.mrf.mxu0
      %8645 = vmatprep.mubr.bf16.mxu0 0
      %8646 = vmatmul.mubr.bf16.gmra.mxu0 %v8594
      %v8647 = vpop.f32.mrf.mxu0
      %v8648 = vadd.f32 0.0, %v8647
      %v8649 = vpop.f32.mrf.mxu0
      %v8650 = vpop.f32.mrf.mxu0
      %v8651 = vadd.f32 0.0, %v8650
      %v8652 = vpop.f32.mrf.mxu0
      %8653 = vmatprep.mubr.bf16.mxu0 0
      %8654 = vmatmul.mubr.bf16.gmra.mxu0 %v8597
      %v8655 = vpop.f32.mrf.mxu0
      %v8656 = vadd.f32 0.0, %v8655
      %v8657 = vpop.f32.mrf.mxu0
      %v8658 = vpop.f32.mrf.mxu0
      %v8659 = vadd.f32 0.0, %v8658
      %v8660 = vpop.f32.mrf.mxu0
      %8661 = vmatprep.mubr.bf16.mxu0 0
      %8662 = vmatmul.mubr.bf16.gmra.mxu0 %v8600
      %v8663 = vpop.f32.mrf.mxu0
      %v8664 = vadd.f32 0.0, %v8663
      %v8665 = vpop.f32.mrf.mxu0
      %v8666 = vpop.f32.mrf.mxu0
      %v8667 = vpop.f32.mrf.mxu0
      %8668 = vdwg.mxu0
      %8669 = vrot.lane.b32.xlu0 %v4191, 40
      %v8670 = vpop.permute.xlu0 %8669
      %8671 = vrot.lane.b32.xlu0 %v4192, 40
      %v8672 = vpop.permute.xlu0 %8671
      %8673 = vrot.lane.b32.xlu0 %v4193, 40
      %v8674 = vpop.permute.xlu0 %8673
      %8675 = vrot.lane.b32.xlu0 %v4194, 40
      %v8676 = vpop.permute.xlu0 %8675
      %v8681 = vsel %vm4604, %v8567, 0
      %v8684 = vsel %vm4604, %v8568, 0
      %v8687 = vsel %vm4604, %v8569, 0
      %v8690 = vsel %vm4604, %v8570, 0
      %v8693 = vand.u32 %v8676, %v4960
      %8695 = vmatprep.subr.bf16.mxu0 0
      %8696 = vmatpush1.bf16.msra.mxu0 0
      %8697 = vmatprep.subr.bf16.mxu0 0
      %8698 = vmatpush1.bf16.msra.mxu0 0
      %8699 = vmatprep.subr.bf16.mxu0 0
      %8700 = vmatpush1.bf16.msra.mxu0 0
      %8701 = vmatprep.subr.bf16.mxu0 0
      %8702 = vmatpush1.bf16.msra.mxu0 0
      %8703 = vmatprep.subr.bf16.mxu0 0
      %8704 = vmatpush1.bf16.msra.mxu0 %v8693
      %8705 = vmatprep.subr.bf16.mxu0 0
      %8706 = vmatpush1.bf16.msra.mxu0 %v8674
      %8707 = vmatprep.subr.bf16.mxu0 0
      %8708 = vmatpush1.bf16.msra.mxu0 %v8672
      %8709 = vmatprep.subr.bf16.mxu0 0
      %8710 = vmatpush1.bf16.msra.mxu0 %v8670
      %8711 = vmatprep.subr.bf16.mxu0 0
      %8712 = vmatpush2.bf16.msra.mxu0 0
      %8713 = vmatprep.subr.bf16.mxu0 0
      %8714 = vmatpush2.bf16.msra.mxu0 0
      %8715 = vmatprep.subr.bf16.mxu0 0
      %8716 = vmatpush2.bf16.msra.mxu0 0
      %8717 = vmatprep.subr.bf16.mxu0 0
      %8718 = vmatpush2.bf16.msra.mxu0 0
      %8719 = vmatprep.subr.bf16.mxu0 0
      %8720 = vmatpush2.bf16.msra.mxu0 0
      %8721 = vmatprep.subr.bf16.mxu0 0
      %8722 = vmatpush2.bf16.msra.mxu0 0
      %8723 = vmatprep.subr.bf16.mxu0 0
      %8724 = vmatpush2.bf16.msra.mxu0 0
      %8725 = vmatprep.subr.bf16.mxu0 0
      %8726 = vmatpush2.bf16.msra.mxu0 0
      %8727 = vmatprep.mubr.bf16.mxu0 0
      %8728 = vmatmul.mubr.bf16.gmra.mxu0 %v8681
      %v8729 = vpop.f32.mrf.mxu0
      %v8730 = vadd.f32 0.0, %v8729
      %v8731 = vpop.f32.mrf.mxu0
      %v8732 = vpop.f32.mrf.mxu0
      %v8733 = vadd.f32 0.0, %v8732
      %v8734 = vpop.f32.mrf.mxu0
      %8735 = vmatprep.mubr.bf16.mxu0 0
      %8736 = vmatmul.mubr.bf16.gmra.mxu0 %v8684
      %v8737 = vpop.f32.mrf.mxu0
      %v8738 = vadd.f32 0.0, %v8737
      %v8739 = vpop.f32.mrf.mxu0
      %v8740 = vpop.f32.mrf.mxu0
      %v8741 = vadd.f32 0.0, %v8740
      %v8742 = vpop.f32.mrf.mxu0
      %8743 = vmatprep.mubr.bf16.mxu0 0
      %8744 = vmatmul.mubr.bf16.gmra.mxu0 %v8687
      %v8745 = vpop.f32.mrf.mxu0
      %v8746 = vadd.f32 0.0, %v8745
      %v8747 = vpop.f32.mrf.mxu0
      %v8748 = vpop.f32.mrf.mxu0
      %v8749 = vadd.f32 0.0, %v8748
      %v8750 = vpop.f32.mrf.mxu0
      %8751 = vmatprep.mubr.bf16.mxu0 0
      %8752 = vmatmul.mubr.bf16.gmra.mxu0 %v8690
      %v8753 = vpop.f32.mrf.mxu0
      %v8754 = vadd.f32 0.0, %v8753
      %v8755 = vpop.f32.mrf.mxu0
      %v8756 = vpop.f32.mrf.mxu0
      %v8757 = vpop.f32.mrf.mxu0
      %8758 = vdwg.mxu0
      %8759 = vrot.lane.b32.xlu0 %v4195, 40
      %v8760 = vpop.permute.xlu0 %8759
      %8761 = vrot.lane.b32.xlu0 %v4196, 40
      %v8762 = vpop.permute.xlu0 %8761
      %8763 = vrot.lane.b32.xlu0 %v4197, 40
      %v8764 = vpop.permute.xlu0 %8763
      %8765 = vrot.lane.b32.xlu0 %v4198, 40
      %v8766 = vpop.permute.xlu0 %8765
      %v8771 = vsel %vm4604, %v8571, 0
      %v8774 = vsel %vm4604, %v8572, 0
      %v8777 = vsel %vm4604, %v8573, 0
      %v8780 = vsel %vm4604, %v8574, 0
      %v8783 = vand.u32 %v8766, %v4960
      %8785 = vmatprep.subr.bf16.mxu0 0
      %8786 = vmatpush1.bf16.msra.mxu0 0
      %8787 = vmatprep.subr.bf16.mxu0 0
      %8788 = vmatpush1.bf16.msra.mxu0 0
      %8789 = vmatprep.subr.bf16.mxu0 0
      %8790 = vmatpush1.bf16.msra.mxu0 0
      %8791 = vmatprep.subr.bf16.mxu0 0
      %8792 = vmatpush1.bf16.msra.mxu0 0
      %8793 = vmatprep.subr.bf16.mxu0 0
      %8794 = vmatpush1.bf16.msra.mxu0 %v8783
      %8795 = vmatprep.subr.bf16.mxu0 0
      %8796 = vmatpush1.bf16.msra.mxu0 %v8764
      %8797 = vmatprep.subr.bf16.mxu0 0
      %8798 = vmatpush1.bf16.msra.mxu0 %v8762
      %8799 = vmatprep.subr.bf16.mxu0 0
      %8800 = vmatpush1.bf16.msra.mxu0 %v8760
      %8801 = vmatprep.subr.bf16.mxu0 0
      %8802 = vmatpush2.bf16.msra.mxu0 0
      %8803 = vmatprep.subr.bf16.mxu0 0
      %8804 = vmatpush2.bf16.msra.mxu0 0
      %8805 = vmatprep.subr.bf16.mxu0 0
      %8806 = vmatpush2.bf16.msra.mxu0 0
      %8807 = vmatprep.subr.bf16.mxu0 0
      %8808 = vmatpush2.bf16.msra.mxu0 0
      %8809 = vmatprep.subr.bf16.mxu0 0
      %8810 = vmatpush2.bf16.msra.mxu0 0
      %8811 = vmatprep.subr.bf16.mxu0 0
      %8812 = vmatpush2.bf16.msra.mxu0 0
      %8813 = vmatprep.subr.bf16.mxu0 0
      %8814 = vmatpush2.bf16.msra.mxu0 0
      %8815 = vmatprep.subr.bf16.mxu0 0
      %8816 = vmatpush2.bf16.msra.mxu0 0
      %8817 = vmatprep.mubr.bf16.mxu0 0
      %8818 = vmatmul.mubr.bf16.gmra.mxu0 %v8771
      %v8819 = vpop.f32.mrf.mxu0
      %v8820 = vadd.f32 0.0, %v8819
      %v8821 = vpop.f32.mrf.mxu0
      %v8822 = vpop.f32.mrf.mxu0
      %v8823 = vadd.f32 0.0, %v8822
      %v8824 = vpop.f32.mrf.mxu0
      %8825 = vmatprep.mubr.bf16.mxu0 0
      %8826 = vmatmul.mubr.bf16.gmra.mxu0 %v8774
      %v8827 = vpop.f32.mrf.mxu0
      %v8828 = vadd.f32 0.0, %v8827
      %v8829 = vpop.f32.mrf.mxu0
      %v8830 = vpop.f32.mrf.mxu0
      %v8831 = vadd.f32 0.0, %v8830
      %v8832 = vpop.f32.mrf.mxu0
      %8833 = vmatprep.mubr.bf16.mxu0 0
      %8834 = vmatmul.mubr.bf16.gmra.mxu0 %v8777
      %v8835 = vpop.f32.mrf.mxu0
      %v8836 = vadd.f32 0.0, %v8835
      %v8837 = vpop.f32.mrf.mxu0
      %v8838 = vpop.f32.mrf.mxu0
      %v8839 = vadd.f32 0.0, %v8838
      %v8840 = vpop.f32.mrf.mxu0
      %8841 = vmatprep.mubr.bf16.mxu0 0
      %8842 = vmatmul.mubr.bf16.gmra.mxu0 %v8780
      %v8843 = vpop.f32.mrf.mxu0
      %v8844 = vadd.f32 0.0, %v8843
      %v8845 = vpop.f32.mrf.mxu0
      %v8846 = vpop.f32.mrf.mxu0
      %v8847 = vpop.f32.mrf.mxu0
      %8848 = vdwg.mxu0
      %8849 = vrot.lane.b32.xlu0 %v4199, 40
      %v8850 = vpop.permute.xlu0 %8849
      %8851 = vrot.lane.b32.xlu0 %v4200, 40
      %v8852 = vpop.permute.xlu0 %8851
      %8853 = vrot.lane.b32.xlu0 %v4201, 40
      %v8854 = vpop.permute.xlu0 %8853
      %8855 = vrot.lane.b32.xlu0 %v4202, 40
      %v8856 = vpop.permute.xlu0 %8855
      %v8861 = vsel %vm4604, %v8575, 0
      %v8864 = vsel %vm4604, %v8576, 0
      %v8867 = vsel %vm4604, %v8577, 0
      %v8870 = vsel %vm4604, %v8578, 0
      %v8873 = vand.u32 %v8856, %v4960
      %8875 = vmatprep.subr.bf16.mxu0 0
      %8876 = vmatpush1.bf16.msra.mxu0 0
      %8877 = vmatprep.subr.bf16.mxu0 0
      %8878 = vmatpush1.bf16.msra.mxu0 0
      %8879 = vmatprep.subr.bf16.mxu0 0
      %8880 = vmatpush1.bf16.msra.mxu0 0
      %8881 = vmatprep.subr.bf16.mxu0 0
      %8882 = vmatpush1.bf16.msra.mxu0 0
      %8883 = vmatprep.subr.bf16.mxu0 0
      %8884 = vmatpush1.bf16.msra.mxu0 %v8873
      %8885 = vmatprep.subr.bf16.mxu0 0
      %8886 = vmatpush1.bf16.msra.mxu0 %v8854
      %8887 = vmatprep.subr.bf16.mxu0 0
      %8888 = vmatpush1.bf16.msra.mxu0 %v8852
      %8889 = vmatprep.subr.bf16.mxu0 0
      %8890 = vmatpush1.bf16.msra.mxu0 %v8850
      %8891 = vmatprep.subr.bf16.mxu0 0
      %8892 = vmatpush2.bf16.msra.mxu0 0
      %8893 = vmatprep.subr.bf16.mxu0 0
      %8894 = vmatpush2.bf16.msra.mxu0 0
      %8895 = vmatprep.subr.bf16.mxu0 0
      %8896 = vmatpush2.bf16.msra.mxu0 0
      %8897 = vmatprep.subr.bf16.mxu0 0
      %8898 = vmatpush2.bf16.msra.mxu0 0
      %8899 = vmatprep.subr.bf16.mxu0 0
      %8900 = vmatpush2.bf16.msra.mxu0 0
      %8901 = vmatprep.subr.bf16.mxu0 0
      %8902 = vmatpush2.bf16.msra.mxu0 0
      %8903 = vmatprep.subr.bf16.mxu0 0
      %8904 = vmatpush2.bf16.msra.mxu0 0
      %8905 = vmatprep.subr.bf16.mxu0 0
      %8906 = vmatpush2.bf16.msra.mxu0 0
      %8907 = vmatprep.mubr.bf16.mxu0 0
      %8908 = vmatmul.mubr.bf16.gmra.mxu0 %v8861
      %v8909 = vpop.f32.mrf.mxu0
      %v8910 = vadd.f32 0.0, %v8909
      %v8911 = vpop.f32.mrf.mxu0
      %v8912 = vpop.f32.mrf.mxu0
      %v8913 = vadd.f32 0.0, %v8912
      %v8914 = vpop.f32.mrf.mxu0
      %8915 = vmatprep.mubr.bf16.mxu0 0
      %8916 = vmatmul.mubr.bf16.gmra.mxu0 %v8864
      %v8917 = vpop.f32.mrf.mxu0
      %v8918 = vadd.f32 0.0, %v8917
      %v8919 = vpop.f32.mrf.mxu0
      %v8920 = vpop.f32.mrf.mxu0
      %v8921 = vadd.f32 0.0, %v8920
      %v8922 = vpop.f32.mrf.mxu0
      %8923 = vmatprep.mubr.bf16.mxu0 0
      %8924 = vmatmul.mubr.bf16.gmra.mxu0 %v8867
      %v8925 = vpop.f32.mrf.mxu0
      %v8926 = vadd.f32 0.0, %v8925
      %v8927 = vpop.f32.mrf.mxu0
      %v8928 = vpop.f32.mrf.mxu0
      %v8929 = vadd.f32 0.0, %v8928
      %v8930 = vpop.f32.mrf.mxu0
      %8931 = vmatprep.mubr.bf16.mxu0 0
      %8932 = vmatmul.mubr.bf16.gmra.mxu0 %v8870
      %v8933 = vpop.f32.mrf.mxu0
      %v8934 = vadd.f32 0.0, %v8933
      %v8935 = vpop.f32.mrf.mxu0
      %v8936 = vpop.f32.mrf.mxu0
      %v8937 = vpop.f32.mrf.mxu0
      %8938 = vdwg.mxu0
      %8967 = vrot.lane.b32.xlu0 %v8640, 24
      %v8968 = vpop.permute.xlu0 %8967
      %8969 = vrot.lane.b32.xlu0 %v8643, 24
      %v8970 = vpop.permute.xlu0 %8969
      %8971 = vrot.lane.b32.xlu0 %v8648, 24
      %v8972 = vpop.permute.xlu0 %8971
      %8973 = vrot.lane.b32.xlu0 %v8651, 24
      %v8974 = vpop.permute.xlu0 %8973
      %8975 = vrot.lane.b32.xlu0 %v8656, 24
      %v8976 = vpop.permute.xlu0 %8975
      %8977 = vrot.lane.b32.xlu0 %v8659, 24
      %v8978 = vpop.permute.xlu0 %8977
      %8979 = vrot.lane.b32.xlu0 %v8664, 24
      %v8980 = vpop.permute.xlu0 %8979
      %8981 = vrot.lane.b32.xlu0 %v8730, 24
      %v8982 = vpop.permute.xlu0 %8981
      %8983 = vrot.lane.b32.xlu0 %v8733, 24
      %v8984 = vpop.permute.xlu0 %8983
      %8985 = vrot.lane.b32.xlu0 %v8738, 24
      %v8986 = vpop.permute.xlu0 %8985
      %8987 = vrot.lane.b32.xlu0 %v8741, 24
      %v8988 = vpop.permute.xlu0 %8987
      %8989 = vrot.lane.b32.xlu0 %v8746, 24
      %v8990 = vpop.permute.xlu0 %8989
      %8991 = vrot.lane.b32.xlu0 %v8749, 24
      %v8992 = vpop.permute.xlu0 %8991
      %8993 = vrot.lane.b32.xlu0 %v8754, 24
      %v8994 = vpop.permute.xlu0 %8993
      %8995 = vrot.lane.b32.xlu0 %v8820, 24
      %v8996 = vpop.permute.xlu0 %8995
      %8997 = vrot.lane.b32.xlu0 %v8823, 24
      %v8998 = vpop.permute.xlu0 %8997
      %8999 = vrot.lane.b32.xlu0 %v8828, 24
      %v9000 = vpop.permute.xlu0 %8999
      %9001 = vrot.lane.b32.xlu0 %v8831, 24
      %v9002 = vpop.permute.xlu0 %9001
      %9003 = vrot.lane.b32.xlu0 %v8836, 24
      %v9004 = vpop.permute.xlu0 %9003
      %9005 = vrot.lane.b32.xlu0 %v8839, 24
      %v9006 = vpop.permute.xlu0 %9005
      %9007 = vrot.lane.b32.xlu0 %v8844, 24
      %v9008 = vpop.permute.xlu0 %9007
      %9009 = vrot.lane.b32.xlu0 %v8910, 24
      %v9010 = vpop.permute.xlu0 %9009
      %9011 = vrot.lane.b32.xlu0 %v8913, 24
      %v9012 = vpop.permute.xlu0 %9011
      %9013 = vrot.lane.b32.xlu0 %v8918, 24
      %v9014 = vpop.permute.xlu0 %9013
      %9015 = vrot.lane.b32.xlu0 %v8921, 24
      %v9016 = vpop.permute.xlu0 %9015
      %9017 = vrot.lane.b32.xlu0 %v8926, 24
      %v9018 = vpop.permute.xlu0 %9017
      %9019 = vrot.lane.b32.xlu0 %v8929, 24
      %v9020 = vpop.permute.xlu0 %9019
      %9021 = vrot.lane.b32.xlu0 %v8934, 24
      %v9022 = vpop.permute.xlu0 %9021
      %vm9051 = vcmask 261312
      %9052 = vst.msk [vmem:[#allocation2] sm:$0xff] %vm9051, %v8968
      %9053 = vst.msk [vmem:[#allocation2 + $0x8] sm:$0xff] %vm9051, %v8970
      %9054 = vst.msk [vmem:[#allocation2 + $0x10] sm:$0xff] %vm9051, %v8972
      %9055 = vst.msk [vmem:[#allocation2 + $0x18] sm:$0xff] %vm9051, %v8974
      %9056 = vst.msk [vmem:[#allocation2 + $0x20] sm:$0xff] %vm9051, %v8976
      %9057 = vst.msk [vmem:[#allocation2 + $0x28] sm:$0xff] %vm9051, %v8978
      %vm9058 = vcmask 258240
      %9059 = vst.msk [vmem:[#allocation2 + $0x30] sm:$0x1f] %vm9058, %v8980
      %9060 = vst.msk [vmem:[#allocation2 + $0x38] sm:$0xff] %vm9051, %v8982
      %9061 = vst.msk [vmem:[#allocation2 + $0x40] sm:$0xff] %vm9051, %v8984
      %9062 = vst.msk [vmem:[#allocation2 + $0x48] sm:$0xff] %vm9051, %v8986
      %9063 = vst.msk [vmem:[#allocation2 + $0x50] sm:$0xff] %vm9051, %v8988
      %9064 = vst.msk [vmem:[#allocation2 + $0x58] sm:$0xff] %vm9051, %v8990
      %9065 = vst.msk [vmem:[#allocation2 + $0x60] sm:$0xff] %vm9051, %v8992
      %9066 = vst.msk [vmem:[#allocation2 + $0x68] sm:$0x1f] %vm9058, %v8994
      %9067 = vst.msk [vmem:[#allocation2 + $0x70] sm:$0xff] %vm9051, %v8996
      %9068 = vst.msk [vmem:[#allocation2 + $0x78] sm:$0xff] %vm9051, %v8998
      %9069 = vst.msk [vmem:[#allocation2 + $0x80] sm:$0xff] %vm9051, %v9000
      %9070 = vst.msk [vmem:[#allocation2 + $0x88] sm:$0xff] %vm9051, %v9002
      %9071 = vst.msk [vmem:[#allocation2 + $0x90] sm:$0xff] %vm9051, %v9004
      %9072 = vst.msk [vmem:[#allocation2 + $0x98] sm:$0xff] %vm9051, %v9006
      %9073 = vst.msk [vmem:[#allocation2 + $0xa0] sm:$0x1f] %vm9058, %v9008
      %9074 = vst.msk [vmem:[#allocation2 + $0xa8] sm:$0xff] %vm9051, %v9010
      %9075 = vst.msk [vmem:[#allocation2 + $0xb0] sm:$0xff] %vm9051, %v9012
      %9076 = vst.msk [vmem:[#allocation2 + $0xb8] sm:$0xff] %vm9051, %v9014
      %9077 = vst.msk [vmem:[#allocation2 + $0xc0] sm:$0xff] %vm9051, %v9016
      %9078 = vst.msk [vmem:[#allocation2 + $0xc8] sm:$0xff] %vm9051, %v9018
      %9079 = vst.msk [vmem:[#allocation2 + $0xd0] sm:$0xff] %vm9051, %v9020
      %9080 = vst.msk [vmem:[#allocation2 + $0xd8] sm:$0x1f] %vm9058, %v9022
      %v9081 = vld [vmem:[#allocation2] sm:$0xff]
      %v9082 = vld [vmem:[#allocation2 + $0x8] sm:$0xff]
      %v9083 = vld [vmem:[#allocation2 + $0x10] sm:$0xff]
      %v9084 = vld [vmem:[#allocation2 + $0x18] sm:$0xff]
      %v9085 = vld [vmem:[#allocation2 + $0x20] sm:$0xff]
      %v9086 = vld [vmem:[#allocation2 + $0x28] sm:$0xff]
      %v9087 = vld [vmem:[#allocation2 + $0x30] sm:$0x1f]
      %v9088 = vld [vmem:[#allocation2 + $0x38] sm:$0xff]
      %v9089 = vld [vmem:[#allocation2 + $0x40] sm:$0xff]
      %v9090 = vld [vmem:[#allocation2 + $0x48] sm:$0xff]
      %v9091 = vld [vmem:[#allocation2 + $0x50] sm:$0xff]
      %v9092 = vld [vmem:[#allocation2 + $0x58] sm:$0xff]
      %v9093 = vld [vmem:[#allocation2 + $0x60] sm:$0xff]
      %v9094 = vld [vmem:[#allocation2 + $0x68] sm:$0x1f]
      %v9095 = vld [vmem:[#allocation2 + $0x70] sm:$0xff]
      %v9096 = vld [vmem:[#allocation2 + $0x78] sm:$0xff]
      %v9097 = vld [vmem:[#allocation2 + $0x80] sm:$0xff]
      %v9098 = vld [vmem:[#allocation2 + $0x88] sm:$0xff]
      %v9099 = vld [vmem:[#allocation2 + $0x90] sm:$0xff]
      %v9100 = vld [vmem:[#allocation2 + $0x98] sm:$0xff]
      %v9101 = vld [vmem:[#allocation2 + $0xa0] sm:$0x1f]
      %v9102 = vld [vmem:[#allocation2 + $0xa8] sm:$0xff]
      %v9103 = vld [vmem:[#allocation2 + $0xb0] sm:$0xff]
      %v9104 = vld [vmem:[#allocation2 + $0xb8] sm:$0xff]
      %v9105 = vld [vmem:[#allocation2 + $0xc0] sm:$0xff]
      %v9106 = vld [vmem:[#allocation2 + $0xc8] sm:$0xff]
      %v9107 = vld [vmem:[#allocation2 + $0xd0] sm:$0xff]
      %v9108 = vld [vmem:[#allocation2 + $0xd8] sm:$0x1f]
      %v9109 = vsel %vm208, %v9081, 0.0
      %9110 = vadd.xlane.f32.xlu0 %v9109
      %v9111 = vpop.xlane.xlu0 %9110
      %v9112 = vsel %vm208, %v9082, 0.0
      %9113 = vadd.xlane.f32.xlu0 %v9112
      %v9114 = vpop.xlane.xlu0 %9113
      %v9115 = vsel %vm208, %v9083, 0.0
      %9116 = vadd.xlane.f32.xlu0 %v9115
      %v9117 = vpop.xlane.xlu0 %9116
      %v9118 = vsel %vm208, %v9084, 0.0
      %9119 = vadd.xlane.f32.xlu0 %v9118
      %v9120 = vpop.xlane.xlu0 %9119
      %v9121 = vsel %vm208, %v9085, 0.0
      %9122 = vadd.xlane.f32.xlu0 %v9121
      %v9123 = vpop.xlane.xlu0 %9122
      %v9124 = vsel %vm208, %v9086, 0.0
      %9125 = vadd.xlane.f32.xlu0 %v9124
      %v9126 = vpop.xlane.xlu0 %9125
      %v9127 = vsel %vm227, %v9087, 0.0
      %9128 = vadd.xlane.f32.xlu0 %v9127
      %v9129 = vpop.xlane.xlu0 %9128
      %v9130 = vsel %vm208, %v9088, 0.0
      %9131 = vadd.xlane.f32.xlu0 %v9130
      %v9132 = vpop.xlane.xlu0 %9131
      %v9133 = vsel %vm208, %v9089, 0.0
      %9134 = vadd.xlane.f32.xlu0 %v9133
      %v9135 = vpop.xlane.xlu0 %9134
      %v9136 = vsel %vm208, %v9090, 0.0
      %9137 = vadd.xlane.f32.xlu0 %v9136
      %v9138 = vpop.xlane.xlu0 %9137
      %v9139 = vsel %vm208, %v9091, 0.0
      %9140 = vadd.xlane.f32.xlu0 %v9139
      %v9141 = vpop.xlane.xlu0 %9140
      %v9142 = vsel %vm208, %v9092, 0.0
      %9143 = vadd.xlane.f32.xlu0 %v9142
      %v9144 = vpop.xlane.xlu0 %9143
      %v9145 = vsel %vm208, %v9093, 0.0
      %9146 = vadd.xlane.f32.xlu0 %v9145
      %v9147 = vpop.xlane.xlu0 %9146
      %v9148 = vsel %vm227, %v9094, 0.0
      %9149 = vadd.xlane.f32.xlu0 %v9148
      %v9150 = vpop.xlane.xlu0 %9149
      %v9151 = vsel %vm208, %v9095, 0.0
      %9152 = vadd.xlane.f32.xlu0 %v9151
      %v9153 = vpop.xlane.xlu0 %9152
      %v9154 = vsel %vm208, %v9096, 0.0
      %9155 = vadd.xlane.f32.xlu0 %v9154
      %v9156 = vpop.xlane.xlu0 %9155
      %v9157 = vsel %vm208, %v9097, 0.0
      %9158 = vadd.xlane.f32.xlu0 %v9157
      %v9159 = vpop.xlane.xlu0 %9158
      %v9160 = vsel %vm208, %v9098, 0.0
      %9161 = vadd.xlane.f32.xlu0 %v9160
      %v9162 = vpop.xlane.xlu0 %9161
      %v9163 = vsel %vm208, %v9099, 0.0
      %9164 = vadd.xlane.f32.xlu0 %v9163
      %v9165 = vpop.xlane.xlu0 %9164
      %v9166 = vsel %vm208, %v9100, 0.0
      %9167 = vadd.xlane.f32.xlu0 %v9166
      %v9168 = vpop.xlane.xlu0 %9167
      %v9169 = vsel %vm227, %v9101, 0.0
      %9170 = vadd.xlane.f32.xlu0 %v9169
      %v9171 = vpop.xlane.xlu0 %9170
      %v9172 = vsel %vm208, %v9102, 0.0
      %9173 = vadd.xlane.f32.xlu0 %v9172
      %v9174 = vpop.xlane.xlu0 %9173
      %v9175 = vsel %vm208, %v9103, 0.0
      %9176 = vadd.xlane.f32.xlu0 %v9175
      %v9177 = vpop.xlane.xlu0 %9176
      %v9178 = vsel %vm208, %v9104, 0.0
      %9179 = vadd.xlane.f32.xlu0 %v9178
      %v9180 = vpop.xlane.xlu0 %9179
      %v9181 = vsel %vm208, %v9105, 0.0
      %9182 = vadd.xlane.f32.xlu0 %v9181
      %v9183 = vpop.xlane.xlu0 %9182
      %v9184 = vsel %vm208, %v9106, 0.0
      %9185 = vadd.xlane.f32.xlu0 %v9184
      %v9186 = vpop.xlane.xlu0 %9185
      %v9187 = vsel %vm208, %v9107, 0.0
      %9188 = vadd.xlane.f32.xlu0 %v9187
      %v9189 = vpop.xlane.xlu0 %9188
      %v9190 = vsel %vm227, %v9108, 0.0
      %9191 = vadd.xlane.f32.xlu0 %v9190
      %v9192 = vpop.xlane.xlu0 %9191
      %v9193 = vmul.f32 %v9111, %v294
      %v9194 = vmul.f32 %v9114, %v294
      %v9195 = vmul.f32 %v9117, %v294
      %v9196 = vmul.f32 %v9120, %v294
      %v9197 = vmul.f32 %v9123, %v294
      %v9198 = vmul.f32 %v9126, %v294
      %v9199 = vmul.f32 %v9129, %v294
      %v9200 = vmul.f32 %v9132, %v294
      %v9201 = vmul.f32 %v9135, %v294
      %v9202 = vmul.f32 %v9138, %v294
      %v9203 = vmul.f32 %v9141, %v294
      %v9204 = vmul.f32 %v9144, %v294
      %v9205 = vmul.f32 %v9147, %v294
      %v9206 = vmul.f32 %v9150, %v294
      %v9207 = vmul.f32 %v9153, %v294
      %v9208 = vmul.f32 %v9156, %v294
      %v9209 = vmul.f32 %v9159, %v294
      %v9210 = vmul.f32 %v9162, %v294
      %v9211 = vmul.f32 %v9165, %v294
      %v9212 = vmul.f32 %v9168, %v294
      %v9213 = vmul.f32 %v9171, %v294
      %v9214 = vmul.f32 %v9174, %v294
      %v9215 = vmul.f32 %v9177, %v294
      %v9216 = vmul.f32 %v9180, %v294
      %v9217 = vmul.f32 %v9183, %v294
      %v9218 = vmul.f32 %v9186, %v294
      %v9219 = vmul.f32 %v9189, %v294
      %v9220 = vmul.f32 %v9192, %v294
      %v9221 = vsub.f32 %v9081, %v9193
      %v9222 = vsub.f32 %v9082, %v9194
      %v9223 = vsub.f32 %v9083, %v9195
      %v9224 = vsub.f32 %v9084, %v9196
      %v9225 = vsub.f32 %v9085, %v9197
      %v9226 = vsub.f32 %v9086, %v9198
      %v9227 = vsub.f32 %v9087, %v9199
      %v9228 = vsub.f32 %v9088, %v9200
      %v9229 = vsub.f32 %v9089, %v9201
      %v9230 = vsub.f32 %v9090, %v9202
      %v9231 = vsub.f32 %v9091, %v9203
      %v9232 = vsub.f32 %v9092, %v9204
      %v9233 = vsub.f32 %v9093, %v9205
      %v9234 = vsub.f32 %v9094, %v9206
      %v9235 = vsub.f32 %v9095, %v9207
      %v9236 = vsub.f32 %v9096, %v9208
      %v9237 = vsub.f32 %v9097, %v9209
      %v9238 = vsub.f32 %v9098, %v9210
      %v9239 = vsub.f32 %v9099, %v9211
      %v9240 = vsub.f32 %v9100, %v9212
      %v9241 = vsub.f32 %v9101, %v9213
      %v9242 = vsub.f32 %v9102, %v9214
      %v9243 = vsub.f32 %v9103, %v9215
      %v9244 = vsub.f32 %v9104, %v9216
      %v9245 = vsub.f32 %v9105, %v9217
      %v9246 = vsub.f32 %v9106, %v9218
      %v9247 = vsub.f32 %v9107, %v9219
      %v9248 = vsub.f32 %v9108, %v9220
      %v9249 = vmul.f32 %v9221, %v9221
      %v9250 = vmul.f32 %v9222, %v9222
      %v9251 = vmul.f32 %v9223, %v9223
      %v9252 = vmul.f32 %v9224, %v9224
      %v9253 = vmul.f32 %v9225, %v9225
      %v9254 = vmul.f32 %v9226, %v9226
      %v9255 = vmul.f32 %v9227, %v9227
      %v9256 = vmul.f32 %v9228, %v9228
      %v9257 = vmul.f32 %v9229, %v9229
      %v9258 = vmul.f32 %v9230, %v9230
      %v9259 = vmul.f32 %v9231, %v9231
      %v9260 = vmul.f32 %v9232, %v9232
      %v9261 = vmul.f32 %v9233, %v9233
      %v9262 = vmul.f32 %v9234, %v9234
      %v9263 = vmul.f32 %v9235, %v9235
      %v9264 = vmul.f32 %v9236, %v9236
      %v9265 = vmul.f32 %v9237, %v9237
      %v9266 = vmul.f32 %v9238, %v9238
      %v9267 = vmul.f32 %v9239, %v9239
      %v9268 = vmul.f32 %v9240, %v9240
      %v9269 = vmul.f32 %v9241, %v9241
      %v9270 = vmul.f32 %v9242, %v9242
      %v9271 = vmul.f32 %v9243, %v9243
      %v9272 = vmul.f32 %v9244, %v9244
      %v9273 = vmul.f32 %v9245, %v9245
      %v9274 = vmul.f32 %v9246, %v9246
      %v9275 = vmul.f32 %v9247, %v9247
      %v9276 = vmul.f32 %v9248, %v9248
      %v9277 = vsel %vm208, %v9249, 0.0
      %9278 = vadd.xlane.f32.xlu0 %v9277
      %v9279 = vpop.xlane.xlu0 %9278
      %v9280 = vsel %vm208, %v9250, 0.0
      %9281 = vadd.xlane.f32.xlu0 %v9280
      %v9282 = vpop.xlane.xlu0 %9281
      %v9283 = vsel %vm208, %v9251, 0.0
      %9284 = vadd.xlane.f32.xlu0 %v9283
      %v9285 = vpop.xlane.xlu0 %9284
      %v9286 = vsel %vm208, %v9252, 0.0
      %9287 = vadd.xlane.f32.xlu0 %v9286
      %v9288 = vpop.xlane.xlu0 %9287
      %v9289 = vsel %vm208, %v9253, 0.0
      %9290 = vadd.xlane.f32.xlu0 %v9289
      %v9291 = vpop.xlane.xlu0 %9290
      %v9292 = vsel %vm208, %v9254, 0.0
      %9293 = vadd.xlane.f32.xlu0 %v9292
      %v9294 = vpop.xlane.xlu0 %9293
      %v9295 = vsel %vm227, %v9255, 0.0
      %9296 = vadd.xlane.f32.xlu0 %v9295
      %v9297 = vpop.xlane.xlu0 %9296
      %v9298 = vsel %vm208, %v9256, 0.0
      %9299 = vadd.xlane.f32.xlu0 %v9298
      %v9300 = vpop.xlane.xlu0 %9299
      %v9301 = vsel %vm208, %v9257, 0.0
      %9302 = vadd.xlane.f32.xlu0 %v9301
      %v9303 = vpop.xlane.xlu0 %9302
      %v9304 = vsel %vm208, %v9258, 0.0
      %9305 = vadd.xlane.f32.xlu0 %v9304
      %v9306 = vpop.xlane.xlu0 %9305
      %v9307 = vsel %vm208, %v9259, 0.0
      %9308 = vadd.xlane.f32.xlu0 %v9307
      %v9309 = vpop.xlane.xlu0 %9308
      %v9310 = vsel %vm208, %v9260, 0.0
      %9311 = vadd.xlane.f32.xlu0 %v9310
      %v9312 = vpop.xlane.xlu0 %9311
      %v9313 = vsel %vm208, %v9261, 0.0
      %9314 = vadd.xlane.f32.xlu0 %v9313
      %v9315 = vpop.xlane.xlu0 %9314
      %v9316 = vsel %vm227, %v9262, 0.0
      %9317 = vadd.xlane.f32.xlu0 %v9316
      %v9318 = vpop.xlane.xlu0 %9317
      %v9319 = vsel %vm208, %v9263, 0.0
      %9320 = vadd.xlane.f32.xlu0 %v9319
      %v9321 = vpop.xlane.xlu0 %9320
      %v9322 = vsel %vm208, %v9264, 0.0
      %9323 = vadd.xlane.f32.xlu0 %v9322
      %v9324 = vpop.xlane.xlu0 %9323
      %v9325 = vsel %vm208, %v9265, 0.0
      %9326 = vadd.xlane.f32.xlu0 %v9325
      %v9327 = vpop.xlane.xlu0 %9326
      %v9328 = vsel %vm208, %v9266, 0.0
      %9329 = vadd.xlane.f32.xlu0 %v9328
      %v9330 = vpop.xlane.xlu0 %9329
      %v9331 = vsel %vm208, %v9267, 0.0
      %9332 = vadd.xlane.f32.xlu0 %v9331
      %v9333 = vpop.xlane.xlu0 %9332
      %v9334 = vsel %vm208, %v9268, 0.0
      %9335 = vadd.xlane.f32.xlu0 %v9334
      %v9336 = vpop.xlane.xlu0 %9335
      %v9337 = vsel %vm227, %v9269, 0.0
      %9338 = vadd.xlane.f32.xlu0 %v9337
      %v9339 = vpop.xlane.xlu0 %9338
      %v9340 = vsel %vm208, %v9270, 0.0
      %9341 = vadd.xlane.f32.xlu0 %v9340
      %v9342 = vpop.xlane.xlu0 %9341
      %v9343 = vsel %vm208, %v9271, 0.0
      %9344 = vadd.xlane.f32.xlu0 %v9343
      %v9345 = vpop.xlane.xlu0 %9344
      %v9346 = vsel %vm208, %v9272, 0.0
      %9347 = vadd.xlane.f32.xlu0 %v9346
      %v9348 = vpop.xlane.xlu0 %9347
      %v9349 = vsel %vm208, %v9273, 0.0
      %9350 = vadd.xlane.f32.xlu0 %v9349
      %v9351 = vpop.xlane.xlu0 %9350
      %v9352 = vsel %vm208, %v9274, 0.0
      %9353 = vadd.xlane.f32.xlu0 %v9352
      %v9354 = vpop.xlane.xlu0 %9353
      %v9355 = vsel %vm208, %v9275, 0.0
      %9356 = vadd.xlane.f32.xlu0 %v9355
      %v9357 = vpop.xlane.xlu0 %9356
      %v9358 = vsel %vm227, %v9276, 0.0
      %9359 = vadd.xlane.f32.xlu0 %v9358
      %v9360 = vpop.xlane.xlu0 %9359
      %v9361 = vmul.f32 %v9279, %v294
      %v9362 = vmul.f32 %v9282, %v294
      %v9363 = vmul.f32 %v9285, %v294
      %v9364 = vmul.f32 %v9288, %v294
      %v9365 = vmul.f32 %v9291, %v294
      %v9366 = vmul.f32 %v9294, %v294
      %v9367 = vmul.f32 %v9297, %v294
      %v9368 = vmul.f32 %v9300, %v294
      %v9369 = vmul.f32 %v9303, %v294
      %v9370 = vmul.f32 %v9306, %v294
      %v9371 = vmul.f32 %v9309, %v294
      %v9372 = vmul.f32 %v9312, %v294
      %v9373 = vmul.f32 %v9315, %v294
      %v9374 = vmul.f32 %v9318, %v294
      %v9375 = vmul.f32 %v9321, %v294
      %v9376 = vmul.f32 %v9324, %v294
      %v9377 = vmul.f32 %v9327, %v294
      %v9378 = vmul.f32 %v9330, %v294
      %v9379 = vmul.f32 %v9333, %v294
      %v9380 = vmul.f32 %v9336, %v294
      %v9381 = vmul.f32 %v9339, %v294
      %v9382 = vmul.f32 %v9342, %v294
      %v9383 = vmul.f32 %v9345, %v294
      %v9384 = vmul.f32 %v9348, %v294
      %v9385 = vmul.f32 %v9351, %v294
      %v9386 = vmul.f32 %v9354, %v294
      %v9387 = vmul.f32 %v9357, %v294
      %v9388 = vmul.f32 %v9360, %v294
      %v9389 = vadd.f32 %v9361, 1e-12
      %v9390 = vadd.f32 %v9362, 1e-12
      %v9391 = vadd.f32 %v9363, 1e-12
      %v9392 = vadd.f32 %v9364, 1e-12
      %v9393 = vadd.f32 %v9365, 1e-12
      %v9394 = vadd.f32 %v9366, 1e-12
      %v9395 = vadd.f32 %v9367, 1e-12
      %v9396 = vadd.f32 %v9368, 1e-12
      %v9397 = vadd.f32 %v9369, 1e-12
      %v9398 = vadd.f32 %v9370, 1e-12
      %v9399 = vadd.f32 %v9371, 1e-12
      %v9400 = vadd.f32 %v9372, 1e-12
      %v9401 = vadd.f32 %v9373, 1e-12
      %v9402 = vadd.f32 %v9374, 1e-12
      %v9403 = vadd.f32 %v9375, 1e-12
      %v9404 = vadd.f32 %v9376, 1e-12
      %v9405 = vadd.f32 %v9377, 1e-12
      %v9406 = vadd.f32 %v9378, 1e-12
      %v9407 = vadd.f32 %v9379, 1e-12
      %v9408 = vadd.f32 %v9380, 1e-12
      %v9409 = vadd.f32 %v9381, 1e-12
      %v9410 = vadd.f32 %v9382, 1e-12
      %v9411 = vadd.f32 %v9383, 1e-12
      %v9412 = vadd.f32 %v9384, 1e-12
      %v9413 = vadd.f32 %v9385, 1e-12
      %v9414 = vadd.f32 %v9386, 1e-12
      %v9415 = vadd.f32 %v9387, 1e-12
      %v9416 = vadd.f32 %v9388, 1e-12
      %v9417 = vrsqrt.pop %v9389
      %v9418 = vrsqrt.pop %v9390
      %v9419 = vrsqrt.pop %v9391
      %v9420 = vrsqrt.pop %v9392
      %v9421 = vrsqrt.pop %v9393
      %v9422 = vrsqrt.pop %v9394
      %v9423 = vrsqrt.pop %v9395
      %v9424 = vrsqrt.pop %v9396
      %v9425 = vrsqrt.pop %v9397
      %v9426 = vrsqrt.pop %v9398
      %v9427 = vrsqrt.pop %v9399
      %v9428 = vrsqrt.pop %v9400
      %v9429 = vrsqrt.pop %v9401
      %v9430 = vrsqrt.pop %v9402
      %v9431 = vrsqrt.pop %v9403
      %v9432 = vrsqrt.pop %v9404
      %v9433 = vrsqrt.pop %v9405
      %v9434 = vrsqrt.pop %v9406
      %v9435 = vrsqrt.pop %v9407
      %v9436 = vrsqrt.pop %v9408
      %v9437 = vrsqrt.pop %v9409
      %v9438 = vrsqrt.pop %v9410
      %v9439 = vrsqrt.pop %v9411
      %v9440 = vrsqrt.pop %v9412
      %v9441 = vrsqrt.pop %v9413
      %v9442 = vrsqrt.pop %v9414
      %v9443 = vrsqrt.pop %v9415
      %v9444 = vrsqrt.pop %v9416
      %v9445 = vmul.f32 %v9221, %v9417
      %v9446 = vmul.f32 %v9222, %v9418
      %v9447 = vmul.f32 %v9223, %v9419
      %v9448 = vmul.f32 %v9224, %v9420
      %v9449 = vmul.f32 %v9225, %v9421
      %v9450 = vmul.f32 %v9226, %v9422
      %v9451 = vmul.f32 %v9227, %v9423
      %v9452 = vmul.f32 %v9228, %v9424
      %v9453 = vmul.f32 %v9229, %v9425
      %v9454 = vmul.f32 %v9230, %v9426
      %v9455 = vmul.f32 %v9231, %v9427
      %v9456 = vmul.f32 %v9232, %v9428
      %v9457 = vmul.f32 %v9233, %v9429
      %v9458 = vmul.f32 %v9234, %v9430
      %v9459 = vmul.f32 %v9235, %v9431
      %v9460 = vmul.f32 %v9236, %v9432
      %v9461 = vmul.f32 %v9237, %v9433
      %v9462 = vmul.f32 %v9238, %v9434
      %v9463 = vmul.f32 %v9239, %v9435
      %v9464 = vmul.f32 %v9240, %v9436
      %v9465 = vmul.f32 %v9241, %v9437
      %v9466 = vmul.f32 %v9242, %v9438
      %v9467 = vmul.f32 %v9243, %v9439
      %v9468 = vmul.f32 %v9244, %v9440
      %v9469 = vmul.f32 %v9245, %v9441
      %v9470 = vmul.f32 %v9246, %v9442
      %v9471 = vmul.f32 %v9247, %v9443
      %v9472 = vmul.f32 %v9248, %v9444
      %v9473 = vlaneseq
      %v9474 = vshrl.u32 %v9473, 7
      %v9475 = vsub.s32 7, %v9474
      %v9476 = vrot.slane %v202, %v9475
      %v9477 = vmul.f32 %v9445, %v9476
      %v9478 = vmul.f32 %v9446, %v9476
      %v9479 = vmul.f32 %v9447, %v9476
      %v9480 = vmul.f32 %v9448, %v9476
      %v9481 = vmul.f32 %v9449, %v9476
      %v9482 = vmul.f32 %v9450, %v9476
      %v9483 = vmul.f32 %v9451, %v9476
      %v9484 = vmul.f32 %v9452, %v9476
      %v9485 = vmul.f32 %v9453, %v9476
      %v9486 = vmul.f32 %v9454, %v9476
      %v9487 = vmul.f32 %v9455, %v9476
      %v9488 = vmul.f32 %v9456, %v9476
      %v9489 = vmul.f32 %v9457, %v9476
      %v9490 = vmul.f32 %v9458, %v9476
      %v9491 = vmul.f32 %v9459, %v9476
      %v9492 = vmul.f32 %v9460, %v9476
      %v9493 = vmul.f32 %v9461, %v9476
      %v9494 = vmul.f32 %v9462, %v9476
      %v9495 = vmul.f32 %v9463, %v9476
      %v9496 = vmul.f32 %v9464, %v9476
      %v9497 = vmul.f32 %v9465, %v9476
      %v9498 = vmul.f32 %v9466, %v9476
      %v9499 = vmul.f32 %v9467, %v9476
      %v9500 = vmul.f32 %v9468, %v9476
      %v9501 = vmul.f32 %v9469, %v9476
      %v9502 = vmul.f32 %v9470, %v9476
      %v9503 = vmul.f32 %v9471, %v9476
      %v9504 = vmul.f32 %v9472, %v9476
      %v9505 = vlaneseq
      %v9506 = vshrl.u32 %v9505, 7
      %v9507 = vsub.s32 0, %v9506
      %v9508 = vrot.slane %v203, %v9507
      %v9509 = vadd.f32 %v9477, %v9508
      %v9510 = vadd.f32 %v9478, %v9508
      %v9511 = vadd.f32 %v9479, %v9508
      %v9512 = vadd.f32 %v9480, %v9508
      %v9513 = vadd.f32 %v9481, %v9508
      %v9514 = vadd.f32 %v9482, %v9508
      %v9515 = vadd.f32 %v9483, %v9508
      %v9516 = vadd.f32 %v9484, %v9508
      %v9517 = vadd.f32 %v9485, %v9508
      %v9518 = vadd.f32 %v9486, %v9508
      %v9519 = vadd.f32 %v9487, %v9508
      %v9520 = vadd.f32 %v9488, %v9508
      %v9521 = vadd.f32 %v9489, %v9508
      %v9522 = vadd.f32 %v9490, %v9508
      %v9523 = vadd.f32 %v9491, %v9508
      %v9524 = vadd.f32 %v9492, %v9508
      %v9525 = vadd.f32 %v9493, %v9508
      %v9526 = vadd.f32 %v9494, %v9508
      %v9527 = vadd.f32 %v9495, %v9508
      %v9528 = vadd.f32 %v9496, %v9508
      %v9529 = vadd.f32 %v9497, %v9508
      %v9530 = vadd.f32 %v9498, %v9508
      %v9531 = vadd.f32 %v9499, %v9508
      %v9532 = vadd.f32 %v9500, %v9508
      %v9533 = vadd.f32 %v9501, %v9508
      %v9534 = vadd.f32 %v9502, %v9508
      %v9535 = vadd.f32 %v9503, %v9508
      %v9536 = vadd.f32 %v9504, %v9508
      %v9537 = vadd.f32 %v9509, %v1583
      %v9538 = vadd.f32 %v9510, %v1584
      %v9539 = vadd.f32 %v9511, %v1585
      %v9540 = vadd.f32 %v9512, %v1586
      %v9541 = vadd.f32 %v9513, %v1587
      %v9542 = vadd.f32 %v9514, %v1588
      %v9543 = vadd.f32 %v9515, %v1589
      %v9544 = vadd.f32 %v9516, %v1590
      %v9545 = vadd.f32 %v9517, %v1591
      %v9546 = vadd.f32 %v9518, %v1592
      %v9547 = vadd.f32 %v9519, %v1593
      %v9548 = vadd.f32 %v9520, %v1594
      %v9549 = vadd.f32 %v9521, %v1595
      %v9550 = vadd.f32 %v9522, %v1596
      %v9551 = vadd.f32 %v9523, %v1597
      %v9552 = vadd.f32 %v9524, %v1598
      %v9553 = vadd.f32 %v9525, %v1599
      %v9554 = vadd.f32 %v9526, %v1600
      %v9555 = vadd.f32 %v9527, %v1601
      %v9556 = vadd.f32 %v9528, %v1602
      %v9557 = vadd.f32 %v9529, %v1603
      %v9558 = vadd.f32 %v9530, %v1604
      %v9559 = vadd.f32 %v9531, %v1605
      %v9560 = vadd.f32 %v9532, %v1606
      %v9561 = vadd.f32 %v9533, %v1607
      %v9562 = vadd.f32 %v9534, %v1608
      %v9563 = vadd.f32 %v9535, %v1609
      %v9564 = vadd.f32 %v9536, %v1610
      %9593 = vrot.lane.b32.xlu0 %v2879, 96
      %v9594 = vpop.permute.xlu0 %9593
      %9595 = vrot.lane.b32.xlu0 %v2880, 96
      %v9596 = vpop.permute.xlu0 %9595
      %9597 = vrot.lane.b32.xlu0 %v2881, 96
      %v9598 = vpop.permute.xlu0 %9597
      %9599 = vrot.lane.b32.xlu0 %v2882, 96
      %v9600 = vpop.permute.xlu0 %9599
      %9601 = vrot.lane.b32.xlu0 %v2883, 96
      %v9602 = vpop.permute.xlu0 %9601
      %9603 = vrot.lane.b32.xlu0 %v2884, 96
      %v9604 = vpop.permute.xlu0 %9603
      %9605 = vrot.lane.b32.xlu0 %v2885, 96
      %v9606 = vpop.permute.xlu0 %9605
      %9607 = vrot.lane.b32.xlu0 %v2886, 96
      %v9608 = vpop.permute.xlu0 %9607
      %9609 = vrot.lane.b32.xlu0 %v2887, 96
      %v9610 = vpop.permute.xlu0 %9609
      %9611 = vrot.lane.b32.xlu0 %v2888, 96
      %v9612 = vpop.permute.xlu0 %9611
      %9613 = vrot.lane.b32.xlu0 %v2889, 96
      %v9614 = vpop.permute.xlu0 %9613
      %9615 = vrot.lane.b32.xlu0 %v2890, 96
      %v9616 = vpop.permute.xlu0 %9615
      %9617 = vrot.lane.b32.xlu0 %v2891, 96
      %v9618 = vpop.permute.xlu0 %9617
      %9619 = vrot.lane.b32.xlu0 %v2892, 96
      %v9620 = vpop.permute.xlu0 %9619
      %9621 = vrot.lane.b32.xlu0 %v2893, 96
      %v9622 = vpop.permute.xlu0 %9621
      %9623 = vrot.lane.b32.xlu0 %v2894, 96
      %v9624 = vpop.permute.xlu0 %9623
      %9625 = vrot.lane.b32.xlu0 %v2895, 96
      %v9626 = vpop.permute.xlu0 %9625
      %9627 = vrot.lane.b32.xlu0 %v2896, 96
      %v9628 = vpop.permute.xlu0 %9627
      %9629 = vrot.lane.b32.xlu0 %v2897, 96
      %v9630 = vpop.permute.xlu0 %9629
      %9631 = vrot.lane.b32.xlu0 %v2898, 96
      %v9632 = vpop.permute.xlu0 %9631
      %9633 = vrot.lane.b32.xlu0 %v2899, 96
      %v9634 = vpop.permute.xlu0 %9633
      %9635 = vrot.lane.b32.xlu0 %v2900, 96
      %v9636 = vpop.permute.xlu0 %9635
      %9637 = vrot.lane.b32.xlu0 %v2901, 96
      %v9638 = vpop.permute.xlu0 %9637
      %9639 = vrot.lane.b32.xlu0 %v2902, 96
      %v9640 = vpop.permute.xlu0 %9639
      %9641 = vrot.lane.b32.xlu0 %v2903, 96
      %v9642 = vpop.permute.xlu0 %9641
      %9643 = vrot.lane.b32.xlu0 %v2904, 96
      %v9644 = vpop.permute.xlu0 %9643
      %9645 = vrot.lane.b32.xlu0 %v2905, 96
      %v9646 = vpop.permute.xlu0 %9645
      %9647 = vrot.lane.b32.xlu0 %v2906, 96
      %v9648 = vpop.permute.xlu0 %9647
      %v9677 = vadd.f32 %v9537, %v9594
      %v9678 = vadd.f32 %v9538, %v9596
      %v9679 = vadd.f32 %v9539, %v9598
      %v9680 = vadd.f32 %v9540, %v9600
      %v9681 = vadd.f32 %v9541, %v9602
      %v9682 = vadd.f32 %v9542, %v9604
      %v9683 = vadd.f32 %v9543, %v9606
      %v9684 = vadd.f32 %v9544, %v9608
      %v9685 = vadd.f32 %v9545, %v9610
      %v9686 = vadd.f32 %v9546, %v9612
      %v9687 = vadd.f32 %v9547, %v9614
      %v9688 = vadd.f32 %v9548, %v9616
      %v9689 = vadd.f32 %v9549, %v9618
      %v9690 = vadd.f32 %v9550, %v9620
      %v9691 = vadd.f32 %v9551, %v9622
      %v9692 = vadd.f32 %v9552, %v9624
      %v9693 = vadd.f32 %v9553, %v9626
      %v9694 = vadd.f32 %v9554, %v9628
      %v9695 = vadd.f32 %v9555, %v9630
      %v9696 = vadd.f32 %v9556, %v9632
      %v9697 = vadd.f32 %v9557, %v9634
      %v9698 = vadd.f32 %v9558, %v9636
      %v9699 = vadd.f32 %v9559, %v9638
      %v9700 = vadd.f32 %v9560, %v9640
      %v9701 = vadd.f32 %v9561, %v9642
      %v9702 = vadd.f32 %v9562, %v9644
      %v9703 = vadd.f32 %v9563, %v9646
      %v9704 = vadd.f32 %v9564, %v9648
      %9733 = vrot.lane.b32.xlu0 %v4123, 64
      %v9734 = vpop.permute.xlu0 %9733
      %9735 = vrot.lane.b32.xlu0 %v4124, 64
      %v9736 = vpop.permute.xlu0 %9735
      %9737 = vrot.lane.b32.xlu0 %v4125, 64
      %v9738 = vpop.permute.xlu0 %9737
      %9739 = vrot.lane.b32.xlu0 %v4126, 64
      %v9740 = vpop.permute.xlu0 %9739
      %9741 = vrot.lane.b32.xlu0 %v4127, 64
      %v9742 = vpop.permute.xlu0 %9741
      %9743 = vrot.lane.b32.xlu0 %v4128, 64
      %v9744 = vpop.permute.xlu0 %9743
      %9745 = vrot.lane.b32.xlu0 %v4129, 64
      %v9746 = vpop.permute.xlu0 %9745
      %9747 = vrot.lane.b32.xlu0 %v4130, 64
      %v9748 = vpop.permute.xlu0 %9747
      %9749 = vrot.lane.b32.xlu0 %v4131, 64
      %v9750 = vpop.permute.xlu0 %9749
      %9751 = vrot.lane.b32.xlu0 %v4132, 64
      %v9752 = vpop.permute.xlu0 %9751
      %9753 = vrot.lane.b32.xlu0 %v4133, 64
      %v9754 = vpop.permute.xlu0 %9753
      %9755 = vrot.lane.b32.xlu0 %v4134, 64
      %v9756 = vpop.permute.xlu0 %9755
      %9757 = vrot.lane.b32.xlu0 %v4135, 64
      %v9758 = vpop.permute.xlu0 %9757
      %9759 = vrot.lane.b32.xlu0 %v4136, 64
      %v9760 = vpop.permute.xlu0 %9759
      %9761 = vrot.lane.b32.xlu0 %v4137, 64
      %v9762 = vpop.permute.xlu0 %9761
      %9763 = vrot.lane.b32.xlu0 %v4138, 64
      %v9764 = vpop.permute.xlu0 %9763
      %9765 = vrot.lane.b32.xlu0 %v4139, 64
      %v9766 = vpop.permute.xlu0 %9765
      %9767 = vrot.lane.b32.xlu0 %v4140, 64
      %v9768 = vpop.permute.xlu0 %9767
      %9769 = vrot.lane.b32.xlu0 %v4141, 64
      %v9770 = vpop.permute.xlu0 %9769
      %9771 = vrot.lane.b32.xlu0 %v4142, 64
      %v9772 = vpop.permute.xlu0 %9771
      %9773 = vrot.lane.b32.xlu0 %v4143, 64
      %v9774 = vpop.permute.xlu0 %9773
      %9775 = vrot.lane.b32.xlu0 %v4144, 64
      %v9776 = vpop.permute.xlu0 %9775
      %9777 = vrot.lane.b32.xlu0 %v4145, 64
      %v9778 = vpop.permute.xlu0 %9777
      %9779 = vrot.lane.b32.xlu0 %v4146, 64
      %v9780 = vpop.permute.xlu0 %9779
      %9781 = vrot.lane.b32.xlu0 %v4147, 64
      %v9782 = vpop.permute.xlu0 %9781
      %9783 = vrot.lane.b32.xlu0 %v4148, 64
      %v9784 = vpop.permute.xlu0 %9783
      %9785 = vrot.lane.b32.xlu0 %v4149, 64
      %v9786 = vpop.permute.xlu0 %9785
      %9787 = vrot.lane.b32.xlu0 %v4150, 64
      %v9788 = vpop.permute.xlu0 %9787
      %v9817 = vadd.f32 %v9677, %v9734
      %v9818 = vadd.f32 %v9678, %v9736
      %v9819 = vadd.f32 %v9679, %v9738
      %v9820 = vadd.f32 %v9680, %v9740
      %v9821 = vadd.f32 %v9681, %v9742
      %v9822 = vadd.f32 %v9682, %v9744
      %v9823 = vadd.f32 %v9683, %v9746
      %v9824 = vadd.f32 %v9684, %v9748
      %v9825 = vadd.f32 %v9685, %v9750
      %v9826 = vadd.f32 %v9686, %v9752
      %v9827 = vadd.f32 %v9687, %v9754
      %v9828 = vadd.f32 %v9688, %v9756
      %v9829 = vadd.f32 %v9689, %v9758
      %v9830 = vadd.f32 %v9690, %v9760
      %v9831 = vadd.f32 %v9691, %v9762
      %v9832 = vadd.f32 %v9692, %v9764
      %v9833 = vadd.f32 %v9693, %v9766
      %v9834 = vadd.f32 %v9694, %v9768
      %v9835 = vadd.f32 %v9695, %v9770
      %v9836 = vadd.f32 %v9696, %v9772
      %v9837 = vadd.f32 %v9697, %v9774
      %v9838 = vadd.f32 %v9698, %v9776
      %v9839 = vadd.f32 %v9699, %v9778
      %v9840 = vadd.f32 %v9700, %v9780
      %v9841 = vadd.f32 %v9701, %v9782
      %v9842 = vadd.f32 %v9702, %v9784
      %v9843 = vadd.f32 %v9703, %v9786
      %v9844 = vadd.f32 %v9704, %v9788
      %v9845 = vlaneseq
      %v9846 = vshrl.u32 %v9845, 7
      %v9847 = vsub.s32 1, %v9846
      %v9848 = vrot.slane %v203, %v9847
      %v9849 = vsub.f32 %v9817, %v9848
      %v9850 = vsub.f32 %v9818, %v9848
      %v9851 = vsub.f32 %v9819, %v9848
      %v9852 = vsub.f32 %v9820, %v9848
      %v9853 = vsub.f32 %v9821, %v9848
      %v9854 = vsub.f32 %v9822, %v9848
      %v9855 = vsub.f32 %v9823, %v9848
      %v9856 = vsub.f32 %v9824, %v9848
      %v9857 = vsub.f32 %v9825, %v9848
      %v9858 = vsub.f32 %v9826, %v9848
      %v9859 = vsub.f32 %v9827, %v9848
      %v9860 = vsub.f32 %v9828, %v9848
      %v9861 = vsub.f32 %v9829, %v9848
      %v9862 = vsub.f32 %v9830, %v9848
      %v9863 = vsub.f32 %v9831, %v9848
      %v9864 = vsub.f32 %v9832, %v9848
      %v9865 = vsub.f32 %v9833, %v9848
      %v9866 = vsub.f32 %v9834, %v9848
      %v9867 = vsub.f32 %v9835, %v9848
      %v9868 = vsub.f32 %v9836, %v9848
      %v9869 = vsub.f32 %v9837, %v9848
      %v9870 = vsub.f32 %v9838, %v9848
      %v9871 = vsub.f32 %v9839, %v9848
      %v9872 = vsub.f32 %v9840, %v9848
      %v9873 = vsub.f32 %v9841, %v9848
      %v9874 = vsub.f32 %v9842, %v9848
      %v9875 = vsub.f32 %v9843, %v9848
      %v9876 = vsub.f32 %v9844, %v9848
      %vm9877 = vcmp.ge.f32.partialorder %v9849, 0.0
      %vm9878 = vcmp.ge.f32.partialorder %v9850, 0.0
      %vm9879 = vcmp.ge.f32.partialorder %v9851, 0.0
      %vm9880 = vcmp.ge.f32.partialorder %v9852, 0.0
      %vm9881 = vcmp.ge.f32.partialorder %v9853, 0.0
      %vm9882 = vcmp.ge.f32.partialorder %v9854, 0.0
      %vm9883 = vcmp.ge.f32.partialorder %v9855, 0.0
      %vm9884 = vcmp.ge.f32.partialorder %v9856, 0.0
      %vm9885 = vcmp.ge.f32.partialorder %v9857, 0.0
      %vm9886 = vcmp.ge.f32.partialorder %v9858, 0.0
      %vm9887 = vcmp.ge.f32.partialorder %v9859, 0.0
      %vm9888 = vcmp.ge.f32.partialorder %v9860, 0.0
      %vm9889 = vcmp.ge.f32.partialorder %v9861, 0.0
      %vm9890 = vcmp.ge.f32.partialorder %v9862, 0.0
      %vm9891 = vcmp.ge.f32.partialorder %v9863, 0.0
      %vm9892 = vcmp.ge.f32.partialorder %v9864, 0.0
      %vm9893 = vcmp.ge.f32.partialorder %v9865, 0.0
      %vm9894 = vcmp.ge.f32.partialorder %v9866, 0.0
      %vm9895 = vcmp.ge.f32.partialorder %v9867, 0.0
      %vm9896 = vcmp.ge.f32.partialorder %v9868, 0.0
      %vm9897 = vcmp.ge.f32.partialorder %v9869, 0.0
      %vm9898 = vcmp.ge.f32.partialorder %v9870, 0.0
      %vm9899 = vcmp.ge.f32.partialorder %v9871, 0.0
      %vm9900 = vcmp.ge.f32.partialorder %v9872, 0.0
      %vm9901 = vcmp.ge.f32.partialorder %v9873, 0.0
      %vm9902 = vcmp.ge.f32.partialorder %v9874, 0.0
      %vm9903 = vcmp.ge.f32.partialorder %v9875, 0.0
      %vm9904 = vcmp.ge.f32.partialorder %v9876, 0.0
      %v9905 = vlaneseq
      %v9906 = vshrl.u32 %v9905, 7
      %v9907 = vsub.s32 2, %v9906
      %v9908 = vrot.slane %v203, %v9907
      %v9909 = vmul.f32 %v9908, %v9849
      %v9910 = vmul.f32 %v9908, %v9850
      %v9911 = vmul.f32 %v9908, %v9851
      %v9912 = vmul.f32 %v9908, %v9852
      %v9913 = vmul.f32 %v9908, %v9853
      %v9914 = vmul.f32 %v9908, %v9854
      %v9915 = vmul.f32 %v9908, %v9855
      %v9916 = vmul.f32 %v9908, %v9856
      %v9917 = vmul.f32 %v9908, %v9857
      %v9918 = vmul.f32 %v9908, %v9858
      %v9919 = vmul.f32 %v9908, %v9859
      %v9920 = vmul.f32 %v9908, %v9860
      %v9921 = vmul.f32 %v9908, %v9861
      %v9922 = vmul.f32 %v9908, %v9862
      %v9923 = vmul.f32 %v9908, %v9863
      %v9924 = vmul.f32 %v9908, %v9864
      %v9925 = vmul.f32 %v9908, %v9865
      %v9926 = vmul.f32 %v9908, %v9866
      %v9927 = vmul.f32 %v9908, %v9867
      %v9928 = vmul.f32 %v9908, %v9868
      %v9929 = vmul.f32 %v9908, %v9869
      %v9930 = vmul.f32 %v9908, %v9870
      %v9931 = vmul.f32 %v9908, %v9871
      %v9932 = vmul.f32 %v9908, %v9872
      %v9933 = vmul.f32 %v9908, %v9873
      %v9934 = vmul.f32 %v9908, %v9874
      %v9935 = vmul.f32 %v9908, %v9875
      %v9936 = vmul.f32 %v9908, %v9876
      %v9937 = vsel %vm9877, %v9849, %v9909
      %v9938 = vsel %vm9878, %v9850, %v9910
      %v9939 = vsel %vm9879, %v9851, %v9911
      %v9940 = vsel %vm9880, %v9852, %v9912
      %v9941 = vsel %vm9881, %v9853, %v9913
      %v9942 = vsel %vm9882, %v9854, %v9914
      %v9943 = vsel %vm9883, %v9855, %v9915
      %v9944 = vsel %vm9884, %v9856, %v9916
      %v9945 = vsel %vm9885, %v9857, %v9917
      %v9946 = vsel %vm9886, %v9858, %v9918
      %v9947 = vsel %vm9887, %v9859, %v9919
      %v9948 = vsel %vm9888, %v9860, %v9920
      %v9949 = vsel %vm9889, %v9861, %v9921
      %v9950 = vsel %vm9890, %v9862, %v9922
      %v9951 = vsel %vm9891, %v9863, %v9923
      %v9952 = vsel %vm9892, %v9864, %v9924
      %v9953 = vsel %vm9893, %v9865, %v9925
      %v9954 = vsel %vm9894, %v9866, %v9926
      %v9955 = vsel %vm9895, %v9867, %v9927
      %v9956 = vsel %vm9896, %v9868, %v9928
      %v9957 = vsel %vm9897, %v9869, %v9929
      %v9958 = vsel %vm9898, %v9870, %v9930
      %v9959 = vsel %vm9899, %v9871, %v9931
      %v9960 = vsel %vm9900, %v9872, %v9932
      %v9961 = vsel %vm9901, %v9873, %v9933
      %v9962 = vsel %vm9902, %v9874, %v9934
      %v9963 = vsel %vm9903, %v9875, %v9935
      %v9964 = vsel %vm9904, %v9876, %v9936
      %v9965 = vlaneseq
      %v9966 = vshrl.u32 %v9965, 7
      %v9967 = vsub.s32 3, %v9966
      %v9968 = vrot.slane %v203, %v9967
      %v9969 = vadd.f32 %v9937, %v9968
      %v9970 = vadd.f32 %v9938, %v9968
      %v9971 = vadd.f32 %v9939, %v9968
      %v9972 = vadd.f32 %v9940, %v9968
      %v9973 = vadd.f32 %v9941, %v9968
      %v9974 = vadd.f32 %v9942, %v9968
      %v9975 = vadd.f32 %v9943, %v9968
      %v9976 = vadd.f32 %v9944, %v9968
      %v9977 = vadd.f32 %v9945, %v9968
      %v9978 = vadd.f32 %v9946, %v9968
      %v9979 = vadd.f32 %v9947, %v9968
      %v9980 = vadd.f32 %v9948, %v9968
      %v9981 = vadd.f32 %v9949, %v9968
      %v9982 = vadd.f32 %v9950, %v9968
      %v9983 = vadd.f32 %v9951, %v9968
      %v9984 = vadd.f32 %v9952, %v9968
      %v9985 = vadd.f32 %v9953, %v9968
      %v9986 = vadd.f32 %v9954, %v9968
      %v9987 = vadd.f32 %v9955, %v9968
      %v9988 = vadd.f32 %v9956, %v9968
      %v9989 = vadd.f32 %v9957, %v9968
      %v9990 = vadd.f32 %v9958, %v9968
      %v9991 = vadd.f32 %v9959, %v9968
      %v9992 = vadd.f32 %v9960, %v9968
      %v9993 = vadd.f32 %v9961, %v9968
      %v9994 = vadd.f32 %v9962, %v9968
      %v9995 = vadd.f32 %v9963, %v9968
      %v9996 = vadd.f32 %v9964, %v9968
      %9997 = vst.msk [vmem:[%s170] sm:$0xff] %vm208, %v9969
      %9998 = vst.msk [vmem:[%s170 + $0x8] sm:$0xff] %vm208, %v9970
      %9999 = vst.msk [vmem:[%s170 + $0x10] sm:$0xff] %vm208, %v9971
      %10000 = vst.msk [vmem:[%s170 + $0x18] sm:$0xff] %vm208, %v9972
      %10001 = vst.msk [vmem:[%s170 + $0x20] sm:$0xff] %vm208, %v9973
      %10002 = vst.msk [vmem:[%s170 + $0x28] sm:$0xff] %vm208, %v9974
      %10003 = vst.msk [vmem:[%s170 + $0x30] sm:$0x1f] %vm227, %v9975
      %10004 = vst.msk [vmem:[%s170 + $0x38] sm:$0xff] %vm208, %v9976
      %10005 = vst.msk [vmem:[%s170 + $0x40] sm:$0xff] %vm208, %v9977
      %10006 = vst.msk [vmem:[%s170 + $0x48] sm:$0xff] %vm208, %v9978
      %10007 = vst.msk [vmem:[%s170 + $0x50] sm:$0xff] %vm208, %v9979
      %10008 = vst.msk [vmem:[%s170 + $0x58] sm:$0xff] %vm208, %v9980
      %10009 = vst.msk [vmem:[%s170 + $0x60] sm:$0xff] %vm208, %v9981
      %10010 = vst.msk [vmem:[%s170 + $0x68] sm:$0x1f] %vm227, %v9982
      %10011 = vst.msk [vmem:[%s170 + $0x70] sm:$0xff] %vm208, %v9983
      %10012 = vst.msk [vmem:[%s170 + $0x78] sm:$0xff] %vm208, %v9984
      %10013 = vst.msk [vmem:[%s170 + $0x80] sm:$0xff] %vm208, %v9985
      %10014 = vst.msk [vmem:[%s170 + $0x88] sm:$0xff] %vm208, %v9986
      %10015 = vst.msk [vmem:[%s170 + $0x90] sm:$0xff] %vm208, %v9987
      %10016 = vst.msk [vmem:[%s170 + $0x98] sm:$0xff] %vm208, %v9988
      %10017 = vst.msk [vmem:[%s170 + $0xa0] sm:$0x1f] %vm227, %v9989
      %10018 = vst.msk [vmem:[%s170 + $0xa8] sm:$0xff] %vm208, %v9990
      %10019 = vst.msk [vmem:[%s170 + $0xb0] sm:$0xff] %vm208, %v9991
      %10020 = vst.msk [vmem:[%s170 + $0xb8] sm:$0xff] %vm208, %v9992
      %10021 = vst.msk [vmem:[%s170 + $0xc0] sm:$0xff] %vm208, %v9993
      %10022 = vst.msk [vmem:[%s170 + $0xc8] sm:$0xff] %vm208, %v9994
      %10023 = vst.msk [vmem:[%s170 + $0xd0] sm:$0xff] %vm208, %v9995
      %10024 = vst.msk [vmem:[%s170 + $0xd8] sm:$0x1f] %vm227, %v9996
      %p10025 = scmp.lt.s32.totalorder %s14, 1
      %s10026 = scalar_select %p10025, %s14, 1
      %s10027 = smul.addr %s10026, 28
      %s10028 = smul.addr %s10027, 8
      %s10029 = scalar_lea.vmem %s3, %s10028
      // Predicated region
      $region33: #{bhvit_attention_forward.2} parent=31 // pred_check
        %p10030 = pneg %p100
      $region34: #{bhvit_attention_forward.2} parent=31 // pred_check_branch
        %10032 = sbr.rel (%p10030) target = $region36
      $region35: #{bhvit_attention_forward.2} parent=31 // pred_region
        _
      $region36: #{bhvit_attention_forward.2} parent=31 // pred_fallthru
        _
    $region32: #{bhvit_attention_forward.2} parent=5 // pred_fallthru
      _
    %p10033 = scmp.le.s32.totalorder 2, %s9
    // Predicated region
    $region37: #{bhvit_attention_forward.2} parent=5 // pred_check
      %p10034 = pneg %p10033
    $region38: #{bhvit_attention_forward.2} parent=5 // pred_check_branch
      %10036 = sbr.rel (%p10034) target = $region40
    $region39: #{bhvit_attention_forward.2} parent=5 // pred_region
      %s10037 = ssub.s32 %s9, 2
      // Predicated region
      $region41: #{bhvit_attention_forward.2} parent=39 // pred_check
        %p10038 = pneg %p106
      $region42: #{bhvit_attention_forward.2} parent=39 // pred_check_branch
        %10040 = sbr.rel (%p10038) target = $region44
      $region43: #{bhvit_attention_forward.2} parent=39 // pred_region
        %p10041 = scmp.lt.s32.totalorder %s15, 1
        %s10042 = scalar_select %p10041, %s15, 1
        %s10043 = smul.addr %s10042, 28
        %s10044 = smul.addr %s10043, 8
        %s10045 = scalar_lea.vmem %s3, %s10044
      $region44: #{bhvit_attention_forward.2} parent=39 // pred_fallthru
        _
    $region40: #{bhvit_attention_forward.2} parent=5 // pred_fallthru
      _
  $region6: #{bhvit_attention_forward.2} parent=0 // loop_footer
    %s13 = sadd.s32 1, %s9
  $region7: #{bhvit_attention_forward.2} parent=0 // loop_footer_branch
    %8 = sbr.rel target = $region3
  $region8: #{bhvit_attention_forward.2} parent=0 // loop_exit
    _

</llo_original>
